<compile_context>
chip_gen: v7x
topology: tpu7x:2x2x1
jax: 0.10.0
libtpu: 0.0.40
codegen_flags: <defaults>
</compile_context>

<pallas_src>
import numpy as np
import jax
import jax.numpy as jnp
from jax.experimental import pallas as pl
from jax.experimental.pallas import tpu as pltpu


# ----------------------------------------------------------------------------
# Architecture constants (VisualCNN / AudioCNN analogues)
# ----------------------------------------------------------------------------
VIS_CONVS = ((32, 8, 4), (64, 4, 2), (32, 3, 1))   # (Cout, kernel, stride), VALID padding
AUD_CONVS = ((32, 4, 2), (64, 3, 2), (32, 3, 1))
VIS_IN_C, VIS_HW = 4, 64                           # rgb(3)+depth(1), 64x64 observations
AUD_IN_C = 32                                      # 2 * 16 frequency groups


def _out_hw(hw, k, s):
    return (hw - k) // s + 1


def _pad16(n):
    return ((n + 15) // 16) * 16


def _geom(ih, iw, in_c, convs):
    g = []
    h, w, c = ih, iw, in_c
    for (cout, k, s) in convs:
        oh, ow = _out_hw(h, k, s), _out_hw(w, k, s)
        g.append(dict(k=k, s=s, ih=h, iw=w, oh=oh, ow=ow, cin=c, cout=cout,
                      m_out=oh * ow, m_out_p=_pad16(oh * ow)))
        h, w, c = oh, ow, cout
    return g


def _full_spec(shape):
    # Whole-array block (grid-less call): block_shape == array dims satisfies the
    # (8,128) rule via the "equals full dims" escape hatch.
    return pl.BlockSpec(shape, lambda: (0,) * len(shape))


# ----------------------------------------------------------------------------
# Fused Pallas kernel (3 CNN encoders + concat + GRU step)
# ----------------------------------------------------------------------------

def _make_policy_kernel(B, H, vg, ag, fc_moutp):
    f32, bf16 = jnp.float32, jnp.bfloat16

    def gathered(act_ref, m_in_p, s_ref, w_ref, b_ref, col_ref, m_out_p, c_in, relu=True):
        """One conv layer: per-sample one-hot gather (single MXU matmul, taps stacked on
        rows) -> lane-offset writes into the (B*M_out_p, P*Cin) col scratch -> ONE
        K-aligned bf16 weight matmul (+bias, optional ReLU)."""
        P = s_ref.shape[0] // m_out_p
        s = s_ref[...]                                               # (P*m_out_p, m_in_p)
        for b in range(B):
            xb = act_ref[b * m_in_p:(b + 1) * m_in_p, :]             # (m_in_p, c_in)
            g = jnp.dot(s, xb, preferred_element_type=f32).astype(bf16)
            for p in range(P):                                       # static, unrolled
                col_ref[b * m_out_p:(b + 1) * m_out_p, p * c_in:(p + 1) * c_in] = (
                    g[p * m_out_p:(p + 1) * m_out_p, :])
        y = jnp.dot(col_ref[...], w_ref[...], preferred_element_type=f32) + b_ref[...]
        return jnp.maximum(y, 0.0) if relu else y

    def kernel(a1_v, w1_v, b1_v, s2_v, w2_v, b2_v, s3_v, w3_v, b3_v,
               sfc_v, wfc_v, bfc_v,
               s2_a, s3_a,
               a1_b, w1_b, b1_b, w2_b, b2_b, w3_b, b3_b, wfc_b, bfc_b,
               a1_m, w1_m, b1_m, w2_m, b2_m, w3_m, b3_m, wfc_m, bfc_m,
               h_ref, mask_ref, wih_ref, bih_ref, whh_ref, bhh_ref,
               out_ref,
               act1_v, col2_v, act2_v, col3_v, act3_v, colfc_v,
               act1_b, col2_b, act2_b, col3_b,
               act1_m, col2_m, act2_m, col3_m,
               feat_ref):
        # ----- visual encoder: conv1 -> conv2 -> conv3 -> flatten -> FC -----
        x = jnp.dot(a1_v[...], w1_v[...], preferred_element_type=f32)
        act1_v[...] = jnp.maximum(x + b1_v[...], 0.0).astype(bf16)
        y = gathered(act1_v, vg[0]["m_out_p"], s2_v, w2_v, b2_v,
                     col2_v, vg[1]["m_out_p"], vg[0]["cout"])
        act2_v[...] = y.astype(bf16)
        # TODO(synk): no ReLU after conv3 (habitat SimpleCNN-style cnn: conv3->Flatten->FC->ReLU).
        y = gathered(act2_v, vg[1]["m_out_p"], s3_v, w3_v, b3_v,
                     col3_v, vg[2]["m_out_p"], vg[1]["cout"], relu=False)
        act3_v[...] = y.astype(bf16)
        y = gathered(act3_v, vg[2]["m_out_p"], sfc_v, wfc_v, bfc_v,
                     colfc_v, fc_moutp, vg[2]["cout"])                 # FC (+ReLU)
        for b in range(B):
            feat_ref[b:b + 1, 0:H] = y[b * fc_moutp:b * fc_moutp + 1, :]

        # ----- audio encoders (bin / mono+monoFromMem) share the gather matrices -----
        def audio_encoder(a1, w1, b1, w2, b2, w3, b3, wfc, bfc,
                          act1, col2, act2, col3, lane0):
            x = jnp.dot(a1[...], w1[...], preferred_element_type=f32)
            act1[...] = jnp.maximum(x + b1[...], 0.0).astype(bf16)
            y = gathered(act1, ag[0]["m_out_p"], s2_a, w2, b2,
                         col2, ag[1]["m_out_p"], ag[0]["cout"])
            act2[...] = y.astype(bf16)
            y = gathered(act2, ag[1]["m_out_p"], s3_a, w3, b3,
                         col3, ag[2]["m_out_p"], ag[1]["cout"], relu=False)
            # FC: conv3 output has a single spatial position -> plain dot, no gather.
            yf = jnp.dot(y.astype(bf16), wfc[...], preferred_element_type=f32) + bfc[...]
            yf = jnp.maximum(yf, 0.0)
            m3p = ag[2]["m_out_p"]
            for b in range(B):
                feat_ref[b:b + 1, lane0:lane0 + H] = yf[b * m3p:b * m3p + 1, :]

        audio_encoder(a1_b, w1_b, b1_b, w2_b, b2_b, w3_b, b3_b, wfc_b, bfc_b,
                      act1_b, col2_b, act2_b, col3_b, H)
        audio_encoder(a1_m, w1_m, b1_m, w2_m, b2_m, w3_m, b3_m, wfc_m, bfc_m,
                      act1_m, col2_m, act2_m, col3_m, 2 * H)

        # ----- fused concat + single-step GRU (PyTorch gate semantics, masked hidden) -----
        h = h_ref[...] * mask_ref[...]                                 # (B, H) f32
        gi = jnp.dot(feat_ref[...].astype(bf16), wih_ref[...],
                     preferred_element_type=f32) + bih_ref[...]        # single K=3H dot
        gh = jnp.dot(h.astype(bf16), whh_ref[...],
                     preferred_element_type=f32) + bhh_ref[...]
        r = jax.nn.sigmoid(gi[:, 0:H] + gh[:, 0:H])
        z = jax.nn.sigmoid(gi[:, H:2 * H] + gh[:, H:2 * H])
        n = jnp.tanh(gi[:, 2 * H:3 * H] + r * gh[:, 2 * H:3 * H])
        out_ref[...] = ((1.0 - z) * n + z * h).astype(out_ref.dtype)

    return kernel


def _policy_call(kp, vg, ag, B, H, a1_v, a1_b, a1_m, h0, mask):
    vis, binp, monop, gru = kp["visual"], kp["bin"], kp["mono"], kp["gru"]
    fc_moutp = _pad16(1)

    inputs = [
        a1_v, vis["w1"], vis["b1"], vis["s2"], vis["w2"], vis["b2"],
        vis["s3"], vis["w3"], vis["b3"], vis["sfc"], vis["wl"], vis["bl"],
        kp["aud_s2"], kp["aud_s3"],
        a1_b, binp["w1"], binp["b1"], binp["w2"], binp["b2"],
        binp["w3"], binp["b3"], binp["wl"], binp["bl"],
        a1_m, monop["w1"], monop["b1"], monop["w2"], monop["b2"],
        monop["w3"], monop["b3"], monop["wl"], monop["bl"],
        h0, mask, gru["wi"], gru["bi"], gru["wh"], gru["bh"],
    ]

    bf = jnp.bfloat16

    def enc_scratch(g, with_fc_gather):
        sh = [
            pltpu.VMEM((B * g[0]["m_out_p"], g[0]["cout"]), bf),                       # act1
            pltpu.VMEM((B * g[1]["m_out_p"], g[1]["k"] ** 2 * g[0]["cout"]), bf),      # col2
            pltpu.VMEM((B * g[1]["m_out_p"], g[1]["cout"]), bf),                       # act2
            pltpu.VMEM((B * g[2]["m_out_p"], g[2]["k"] ** 2 * g[1]["cout"]), bf),      # col3
        ]
        if with_fc_gather:
            sh += [
                pltpu.VMEM((B * g[2]["m_out_p"], g[2]["cout"]), bf),                   # act3
                pltpu.VMEM((B * fc_moutp, g[2]["m_out"] * g[2]["cout"]), bf),          # colfc
            ]
        return sh

    scratch = (enc_scratch(vg, True)
               + enc_scratch(ag, False)
               + enc_scratch(ag, False)
               + [pltpu.VMEM((B, 3 * H), jnp.float32)])                                # feat

    kernel = _make_policy_kernel(B, H, vg, ag, fc_moutp)
    return pl.pallas_call(
        kernel,
        out_shape=jax.ShapeDtypeStruct((B, H), jnp.float32),
        in_specs=[_full_spec(x.shape) for x in inputs],
        out_specs=_full_spec((B, H)),
        scratch_shapes=scratch,
    )(*inputs)


# ----------------------------------------------------------------------------
# JAX-side glue: first-layer im2col + observation preprocessing (NHWC, no NCHW)
# ----------------------------------------------------------------------------

def _im2col_first(x, k, s, m_out_p):
    """x: (B,H,W,C) NHWC -> (B*m_out_p, k*k*C); rows (b, oh*OW+ow), cols ((i*k+j)*C + c).
    Padded rows (>= OH*OW per sample) are zero."""
    B, Hh, Ww, C = x.shape
    oh, ow = _out_hw(Hh, k, s), _out_hw(Ww, k, s)
    cols = []
    for i in range(k):
        for j in range(k):
            cols.append(x[:, i:i + s * oh:s, j:j + s * ow:s, :])      # (B, oh, ow, C)
    patches = jnp.stack(cols, axis=3)                                  # (B, oh, ow, k*k, C)
    lhs = patches.reshape(B, oh * ow, k * k * C)
    if m_out_p > oh * ow:
        lhs = jnp.pad(lhs, ((0, 0), (0, m_out_p - oh * ow), (0, 0)))
    return lhs.reshape(B * m_out_p, k * k * C).astype(jnp.bfloat16)


def _audio_obs_to_nhwc(spec):
    # (B, F, T, 2) -> NCHW (B, 2*16, F//16, T) (matches summary(cnn, (2*16, F//16, T)))
    # -> NHWC (B, F//16, T, 32).
    # TODO(synk): exact AudioCNN frequency-grouping order not given; assumed here.
    B, F, T, C = spec.shape
    x = jnp.transpose(spec, (0, 3, 1, 2))                              # (B, 2, F, T)
    x = x.reshape(B, C, 16, F // 16, T).reshape(B, C * 16, F // 16, T)
    return jnp.transpose(x, (0, 2, 3, 1))                              # (B, F//16, T, 32)


def policy_forward(kp, observations, rnn_hidden_states, masks,
                   pred_binSepMasks, pred_mono, pred_monoFromMem):
    B = observations["rgb"].shape[0]
    H = kp["gru"]["wh"].shape[0]

    # 1) visual input (rgb/255 + depth, channels-last throughout)
    # TODO(synk): depth left un-normalized while rgb/255 — matches common SoundSpaces code.
    vis_in = jnp.concatenate(
        [observations["rgb"].astype(jnp.float32) / 255.0,
         observations["depth"].astype(jnp.float32)], axis=-1)          # (B, 64, 64, 4)

    # 2) audio inputs
    # TODO(synk): bin_encoder input assumed to be mixture * pred_binSepMasks.
    bin_in = _audio_obs_to_nhwc(observations["mixed_bin_audio_mag"] * pred_binSepMasks)
    mono_in = _audio_obs_to_nhwc(jnp.concatenate([pred_mono, pred_monoFromMem], axis=3))

    vg = _geom(vis_in.shape[1], vis_in.shape[2], vis_in.shape[3], VIS_CONVS)
    ag = _geom(bin_in.shape[1], bin_in.shape[2], bin_in.shape[3], AUD_CONVS)

    a1_v = _im2col_first(vis_in, VIS_CONVS[0][1], VIS_CONVS[0][2], vg[0]["m_out_p"])
    a1_b = _im2col_first(bin_in, AUD_CONVS[0][1], AUD_CONVS[0][2], ag[0]["m_out_p"])
    a1_m = _im2col_first(mono_in, AUD_CONVS[0][1], AUD_CONVS[0][2], ag[0]["m_out_p"])

    h_new = _policy_call(kp, vg, ag, B, H, a1_v, a1_b, a1_m,
                         rnn_hidden_states[0],
                         masks.reshape(B, 1).astype(jnp.float32))
    return h_new, h_new[None]                                          # x2, new hidden (1,B,H)


# ----------------------------------------------------------------------------
# Parameters: PyTorch-layout init + conversion to kernel-ready (bf16, flattened) layout
# ----------------------------------------------------------------------------

def init_params(key, hidden=32, vis_shape=(VIS_HW, VIS_HW, VIS_IN_C), aud_spatial=(16, 16)):
    ks = iter(jax.random.split(key, 32))

    def rnd(shape, scale=0.05):
        return jax.random.normal(next(ks), shape, jnp.float32) * scale

    vg = _geom(vis_shape[0], vis_shape[1], vis_shape[2], VIS_CONVS)
    ag = _geom(aud_spatial[0], aud_spatial[1], AUD_IN_C, AUD_CONVS)

    def cnn(in_c, convs, g):
        (c1, k1, _), (c2, k2, _), (c3, k3, _) = convs
        return dict(
            conv1_w=rnd((c1, in_c, k1, k1)), conv1_b=rnd((c1,), 0.01),
            conv2_w=rnd((c2, c1, k2, k2)),   conv2_b=rnd((c2,), 0.01),
            conv3_w=rnd((c3, c2, k3, k3)),   conv3_b=rnd((c3,), 0.01),
            fc_w=rnd((hidden, c3 * g[2]["m_out"])), fc_b=rnd((hidden,), 0.01),
        )

    gru = dict(
        weight_ih=rnd((3 * hidden, 3 * hidden), 0.1),   # PyTorch (3H, input)
        weight_hh=rnd((3 * hidden, hidden), 0.1),       # PyTorch (3H, H)
        bias_ih=rnd((3 * hidden,), 0.01),
        bias_hh=rnd((3 * hidden,), 0.01),
    )
    return dict(visual=cnn(vis_shape[2], VIS_CONVS, vg),
                bin=cnn(AUD_IN_C, AUD_CONVS, ag),
                mono=cnn(AUD_IN_C, AUD_CONVS, ag),
                gru=gru)


def _prep_conv(w, b):
    cout, cin, kh, kw = w.shape
    wm = jnp.transpose(w, (2, 3, 1, 0)).reshape(kh * kw * cin, cout).astype(jnp.bfloat16)
    return wm, b.reshape(1, cout).astype(jnp.float32)


def _prep_fc(w, b, n_pos):
    # PyTorch flatten of NCHW is (c, p); remap to col layout [p*C + c] -> (P*C, hidden).
    hidden, cp = w.shape
    c = cp // n_pos
    wk = (w.T.reshape(c, n_pos, hidden).transpose(1, 0, 2)
          .reshape(n_pos * c, hidden).astype(jnp.bfloat16))
    return wk, b.reshape(1, hidden).astype(jnp.float32)


def _build_select(g_in, g_out):
    """Batch-independent one-hot gather, taps stacked on rows:
    S[(i*k+j)*M_out_p + oh*OW+ow, ih_in*IW_in + iw_in] = 1; padded rows/cols stay zero."""
    k, s = g_out["k"], g_out["s"]
    oh, ow, ow_in = g_out["oh"], g_out["ow"], g_in["ow"]
    S = np.zeros((k * k * g_out["m_out_p"], g_in["m_out_p"]), np.float32)
    for i in range(k):
        for j in range(k):
            base = (i * k + j) * g_out["m_out_p"]
            for a in range(oh):
                for c in range(ow):
                    S[base + a * ow + c, (a * s + i) * ow_in + (c * s + j)] = 1.0
    return jnp.asarray(S, jnp.bfloat16)


def _build_fc_select(n_pos, m_in_p, fc_moutp):
    """FC gather: row 0 of tap-block p picks conv3 position p (per sample)."""
    S = np.zeros((n_pos * fc_moutp, m_in_p), np.float32)
    for p in range(n_pos):
        S[p * fc_moutp, p] = 1.0
    return jnp.asarray(S, jnp.bfloat16)


def prep_kernel_params(params, vis_shape=(VIS_HW, VIS_HW, VIS_IN_C), aud_spatial=(16, 16)):
    vg = _geom(vis_shape[0], vis_shape[1], vis_shape[2], VIS_CONVS)
    ag = _geom(aud_spatial[0], aud_spatial[1], AUD_IN_C, AUD_CONVS)

    def enc(p, g):
        w1, b1 = _prep_conv(p["conv1_w"], p["conv1_b"])
        w2, b2 = _prep_conv(p["conv2_w"], p["conv2_b"])
        w3, b3 = _prep_conv(p["conv3_w"], p["conv3_b"])
        wl, bl = _prep_fc(p["fc_w"], p["fc_b"], g[2]["m_out"])
        return dict(w1=w1, b1=b1, w2=w2, b2=b2, w3=w3, b3=b3, wl=wl, bl=bl)

    out = dict(visual=enc(params["visual"], vg),
               bin=enc(params["bin"], ag),
               mono=enc(params["mono"], ag))
    out["visual"]["s2"] = _build_select(vg[0], vg[1])
    out["visual"]["s3"] = _build_select(vg[1], vg[2])
    out["visual"]["sfc"] = _build_fc_select(vg[2]["m_out"], vg[2]["m_out_p"], _pad16(1))
    # the two audio encoders share identical geometry -> share their gather matrices
    out["aud_s2"] = _build_select(ag[0], ag[1])
    out["aud_s3"] = _build_select(ag[1], ag[2])

    g = params["gru"]
    out["gru"] = dict(
        wi=g["weight_ih"].T.astype(jnp.bfloat16),            # (3H_in, 3H)
        wh=g["weight_hh"].T.astype(jnp.bfloat16),             # (H, 3H)
        bi=g["bias_ih"].reshape(1, -1).astype(jnp.float32),
        bh=g["bias_hh"].reshape(1, -1).astype(jnp.float32),
    )
    return out


# ----------------------------------------------------------------------------
# Main
# ----------------------------------------------------------------------------

if __name__ == "__main__":
    B, H = 2, 32
    F, T = 256, 16                                 # mixed_bin_audio_mag freq/time bins

    keys = jax.random.split(jax.random.PRNGKey(0), 8)
    observations = {
        "rgb": jax.random.uniform(keys[0], (B, VIS_HW, VIS_HW, 3), jnp.float32) * 255.0,
        "depth": jax.random.uniform(keys[1], (B, VIS_HW, VIS_HW, 1), jnp.float32),
        "mixed_bin_audio_mag": jax.random.uniform(keys[2], (B, F, T, 2), jnp.float32),
    }
    pred_binSepMasks = jax.random.uniform(keys[3], (B, F, T, 2), jnp.float32)
    pred_mono = jax.random.uniform(keys[4], (B, F, T, 1), jnp.float32)
    pred_monoFromMem = jax.random.uniform(keys[5], (B, F, T, 1), jnp.float32)
    rnn_hidden_states = jax.random.normal(keys[6], (1, B, H), jnp.float32) * 0.1
    masks = jnp.ones((B, 1), jnp.float32)

    params = init_params(jax.random.PRNGKey(42), hidden=H,
                         vis_shape=(VIS_HW, VIS_HW, VIS_IN_C), aud_spatial=(F // 16, T))
    kparams = prep_kernel_params(params, vis_shape=(VIS_HW, VIS_HW, VIS_IN_C),
                                 aud_spatial=(F // 16, T))

    fwd = jax.jit(policy_forward)
    x2, new_hidden = fwd(kparams, observations, rnn_hidden_states, masks,
                         pred_binSepMasks, pred_mono, pred_monoFromMem)
    jax.block_until_ready((x2, new_hidden))

    assert x2.shape == (B, H), x2.shape
    assert new_hidden.shape == (1, B, H), new_hidden.shape
    assert not bool(jnp.isnan(x2).any().item())    # mirrors the torch.isnan assert
    print("KERNEL_OK")
</pallas_src>

<mosaic_0001>
module attributes {stable_mosaic.version = 11 : i64} {
  func.func @kernel(%arg0: memref<480x256xbf16, #tpu.memory_space<vmem>>, %arg1: memref<256x32xbf16, #tpu.memory_space<vmem>>, %arg2: memref<1x32xf32, #tpu.memory_space<vmem>>, %arg3: memref<768x240xbf16, #tpu.memory_space<vmem>>, %arg4: memref<512x64xbf16, #tpu.memory_space<vmem>>, %arg5: memref<1x64xf32, #tpu.memory_space<vmem>>, %arg6: memref<144x48xbf16, #tpu.memory_space<vmem>>, %arg7: memref<576x32xbf16, #tpu.memory_space<vmem>>, %arg8: memref<1x32xf32, #tpu.memory_space<vmem>>, %arg9: memref<256x16xbf16, #tpu.memory_space<vmem>>, %arg10: memref<512x32xbf16, #tpu.memory_space<vmem>>, %arg11: memref<1x32xf32, #tpu.memory_space<vmem>>, %arg12: memref<144x64xbf16, #tpu.memory_space<vmem>>, %arg13: memref<144x16xbf16, #tpu.memory_space<vmem>>, %arg14: memref<128x512xbf16, #tpu.memory_space<vmem>>, %arg15: memref<512x32xbf16, #tpu.memory_space<vmem>>, %arg16: memref<1x32xf32, #tpu.memory_space<vmem>>, %arg17: memref<288x64xbf16, #tpu.memory_space<vmem>>, %arg18: memref<1x64xf32, #tpu.memory_space<vmem>>, %arg19: memref<576x32xbf16, #tpu.memory_space<vmem>>, %arg20: memref<1x32xf32, #tpu.memory_space<vmem>>, %arg21: memref<32x32xbf16, #tpu.memory_space<vmem>>, %arg22: memref<1x32xf32, #tpu.memory_space<vmem>>, %arg23: memref<128x512xbf16, #tpu.memory_space<vmem>>, %arg24: memref<512x32xbf16, #tpu.memory_space<vmem>>, %arg25: memref<1x32xf32, #tpu.memory_space<vmem>>, %arg26: memref<288x64xbf16, #tpu.memory_space<vmem>>, %arg27: memref<1x64xf32, #tpu.memory_space<vmem>>, %arg28: memref<576x32xbf16, #tpu.memory_space<vmem>>, %arg29: memref<1x32xf32, #tpu.memory_space<vmem>>, %arg30: memref<32x32xbf16, #tpu.memory_space<vmem>>, %arg31: memref<1x32xf32, #tpu.memory_space<vmem>>, %arg32: memref<2x32xf32, #tpu.memory_space<vmem>>, %arg33: memref<2x1xf32, #tpu.memory_space<vmem>>, %arg34: memref<96x96xbf16, #tpu.memory_space<vmem>>, %arg35: memref<1x96xf32, #tpu.memory_space<vmem>>, %arg36: memref<32x96xbf16, #tpu.memory_space<vmem>>, %arg37: memref<1x96xf32, #tpu.memory_space<vmem>>, %arg38: memref<2x32xf32, #tpu.memory_space<vmem>>, %arg39: memref<480x32xbf16, #tpu.memory_space<vmem>>, %arg40: memref<96x512xbf16, #tpu.memory_space<vmem>>, %arg41: memref<96x64xbf16, #tpu.memory_space<vmem>>, %arg42: memref<32x576xbf16, #tpu.memory_space<vmem>>, %arg43: memref<32x32xbf16, #tpu.memory_space<vmem>>, %arg44: memref<32x512xbf16, #tpu.memory_space<vmem>>, %arg45: memref<128x32xbf16, #tpu.memory_space<vmem>>, %arg46: memref<32x288xbf16, #tpu.memory_space<vmem>>, %arg47: memref<32x64xbf16, #tpu.memory_space<vmem>>, %arg48: memref<32x576xbf16, #tpu.memory_space<vmem>>, %arg49: memref<128x32xbf16, #tpu.memory_space<vmem>>, %arg50: memref<32x288xbf16, #tpu.memory_space<vmem>>, %arg51: memref<32x64xbf16, #tpu.memory_space<vmem>>, %arg52: memref<32x576xbf16, #tpu.memory_space<vmem>>, %arg53: memref<2x96xf32, #tpu.memory_space<vmem>>) attributes {dimension_semantics = [], scalar_prefetch = 0 : i64, scratch_operands = 15 : i64, tpu.core_type = #tpu.core_type<tc>} {
    %c0 = arith.constant 0 : index
    %c0_0 = arith.constant 0 : index
    %0 = vector.load %arg0[%c0, %c0_0] : memref<480x256xbf16, #tpu.memory_space<vmem>>, vector<480x256xbf16>
    %c0_1 = arith.constant 0 : index
    %c0_2 = arith.constant 0 : index
    %1 = vector.load %arg1[%c0_1, %c0_2] : memref<256x32xbf16, #tpu.memory_space<vmem>>, vector<256x32xbf16>
    %cst = arith.constant dense<0.000000e+00> : vector<480x32xf32>
    %2 = tpu.matmul %0, %1, %cst {dimension_numbers = #tpu.dot_dimension_numbers<[1], [0], [0], [1], [0, 0, 1, 1], [], []>} : vector<480x256xbf16>, vector<256x32xbf16>, vector<480x32xf32> -> vector<480x32xf32>
    %c0_3 = arith.constant 0 : index
    %c0_4 = arith.constant 0 : index
    %3 = vector.load %arg2[%c0_3, %c0_4] : memref<1x32xf32, #tpu.memory_space<vmem>>, vector<1x32xf32>
    %4 = vector.broadcast %3 : vector<1x32xf32> to vector<480x32xf32>
    %5 = arith.addf %2, %4 : vector<480x32xf32>
    %cst_5 = arith.constant 0.000000e+00 : f32
    %6 = vector.broadcast %cst_5 : f32 to vector<480x32xf32>
    %7 = arith.maximumf %5, %6 : vector<480x32xf32>
    %8 = arith.truncf %7 : vector<480x32xf32> to vector<480x32xbf16>
    %c0_6 = arith.constant 0 : index
    %c0_7 = arith.constant 0 : index
    %9 = vector.load %arg39[%c0_6, %c0_7] : memref<480x32xbf16, #tpu.memory_space<vmem>>, vector<480x32xbf16>
    tpu.vector_store %arg39[%c0_6, %c0_7], %8 {strides = array<i32>} : memref<480x32xbf16, #tpu.memory_space<vmem>>, vector<480x32xbf16>,
    %c0_8 = arith.constant 0 : index
    %c0_9 = arith.constant 0 : index
    %10 = vector.load %arg3[%c0_8, %c0_9] : memref<768x240xbf16, #tpu.memory_space<vmem>>, vector<768x240xbf16>
    %c0_10 = arith.constant 0 : index
    %c0_11 = arith.constant 0 : index
    %11 = vector.load %arg39[%c0_10, %c0_11] : memref<480x32xbf16, #tpu.memory_space<vmem>>, vector<240x32xbf16>
    %cst_12 = arith.constant dense<0.000000e+00> : vector<768x32xf32>
    %12 = tpu.matmul %10, %11, %cst_12 {dimension_numbers = #tpu.dot_dimension_numbers<[1], [0], [0], [1], [0, 0, 1, 1], [], []>} : vector<768x240xbf16>, vector<240x32xbf16>, vector<768x32xf32> -> vector<768x32xf32>
    %13 = arith.truncf %12 : vector<768x32xf32> to vector<768x32xbf16>
    %14 = vector.extract_strided_slice %13 {offsets = [0, 0], sizes = [48, 32], strides = [1, 1]} : vector<768x32xbf16> to vector<48x32xbf16>
    %c0_13 = arith.constant 0 : index
    %c0_14 = arith.constant 0 : index
    %15 = vector.load %arg40[%c0_13, %c0_14] : memref<96x512xbf16, #tpu.memory_space<vmem>>, vector<48x32xbf16>
    tpu.vector_store %arg40[%c0_13, %c0_14], %14 {strides = array<i32>} : memref<96x512xbf16, #tpu.memory_space<vmem>>, vector<48x32xbf16>,
    %16 = vector.extract_strided_slice %13 {offsets = [48, 0], sizes = [48, 32], strides = [1, 1]} : vector<768x32xbf16> to vector<48x32xbf16>
    %c0_15 = arith.constant 0 : index
    %c32 = arith.constant 32 : index
    %17 = vector.load %arg40[%c0_15, %c32] : memref<96x512xbf16, #tpu.memory_space<vmem>>, vector<48x32xbf16>
    tpu.vector_store %arg40[%c0_15, %c32], %16 {strides = array<i32>} : memref<96x512xbf16, #tpu.memory_space<vmem>>, vector<48x32xbf16>,
    %18 = vector.extract_strided_slice %13 {offsets = [96, 0], sizes = [48, 32], strides = [1, 1]} : vector<768x32xbf16> to vector<48x32xbf16>
    %c0_16 = arith.constant 0 : index
    %c64 = arith.constant 64 : index
    %19 = vector.load %arg40[%c0_16, %c64] : memref<96x512xbf16, #tpu.memory_space<vmem>>, vector<48x32xbf16>
    tpu.vector_store %arg40[%c0_16, %c64], %18 {strides = array<i32>} : memref<96x512xbf16, #tpu.memory_space<vmem>>, vector<48x32xbf16>,
    %20 = vector.extract_strided_slice %13 {offsets = [144, 0], sizes = [48, 32], strides = [1, 1]} : vector<768x32xbf16> to vector<48x32xbf16>
    %c0_17 = arith.constant 0 : index
    %c96 = arith.constant 96 : index
    %21 = vector.load %arg40[%c0_17, %c96] : memref<96x512xbf16, #tpu.memory_space<vmem>>, vector<48x32xbf16>
    tpu.vector_store %arg40[%c0_17, %c96], %20 {strides = array<i32>} : memref<96x512xbf16, #tpu.memory_space<vmem>>, vector<48x32xbf16>,
    %22 = vector.extract_strided_slice %13 {offsets = [192, 0], sizes = [48, 32], strides = [1, 1]} : vector<768x32xbf16> to vector<48x32xbf16>
    %c0_18 = arith.constant 0 : index
    %c128 = arith.constant 128 : index
    %23 = vector.load %arg40[%c0_18, %c128] : memref<96x512xbf16, #tpu.memory_space<vmem>>, vector<48x32xbf16>
    tpu.vector_store %arg40[%c0_18, %c128], %22 {strides = array<i32>} : memref<96x512xbf16, #tpu.memory_space<vmem>>, vector<48x32xbf16>,
    %24 = vector.extract_strided_slice %13 {offsets = [240, 0], sizes = [48, 32], strides = [1, 1]} : vector<768x32xbf16> to vector<48x32xbf16>
    %c0_19 = arith.constant 0 : index
    %c160 = arith.constant 160 : index
    %25 = vector.load %arg40[%c0_19, %c160] : memref<96x512xbf16, #tpu.memory_space<vmem>>, vector<48x32xbf16>
    tpu.vector_store %arg40[%c0_19, %c160], %24 {strides = array<i32>} : memref<96x512xbf16, #tpu.memory_space<vmem>>, vector<48x32xbf16>,
    %26 = vector.extract_strided_slice %13 {offsets = [288, 0], sizes = [48, 32], strides = [1, 1]} : vector<768x32xbf16> to vector<48x32xbf16>
    %c0_20 = arith.constant 0 : index
    %c192 = arith.constant 192 : index
    %27 = vector.load %arg40[%c0_20, %c192] : memref<96x512xbf16, #tpu.memory_space<vmem>>, vector<48x32xbf16>
    tpu.vector_store %arg40[%c0_20, %c192], %26 {strides = array<i32>} : memref<96x512xbf16, #tpu.memory_space<vmem>>, vector<48x32xbf16>,
    %28 = vector.extract_strided_slice %13 {offsets = [336, 0], sizes = [48, 32], strides = [1, 1]} : vector<768x32xbf16> to vector<48x32xbf16>
    %c0_21 = arith.constant 0 : index
    %c224 = arith.constant 224 : index
    %29 = vector.load %arg40[%c0_21, %c224] : memref<96x512xbf16, #tpu.memory_space<vmem>>, vector<48x32xbf16>
    tpu.vector_store %arg40[%c0_21, %c224], %28 {strides = array<i32>} : memref<96x512xbf16, #tpu.memory_space<vmem>>, vector<48x32xbf16>,
    %30 = vector.extract_strided_slice %13 {offsets = [384, 0], sizes = [48, 32], strides = [1, 1]} : vector<768x32xbf16> to vector<48x32xbf16>
    %c0_22 = arith.constant 0 : index
    %c256 = arith.constant 256 : index
    %31 = vector.load %arg40[%c0_22, %c256] : memref<96x512xbf16, #tpu.memory_space<vmem>>, vector<48x32xbf16>
    tpu.vector_store %arg40[%c0_22, %c256], %30 {strides = array<i32>} : memref<96x512xbf16, #tpu.memory_space<vmem>>, vector<48x32xbf16>,
    %32 = vector.extract_strided_slice %13 {offsets = [432, 0], sizes = [48, 32], strides = [1, 1]} : vector<768x32xbf16> to vector<48x32xbf16>
    %c0_23 = arith.constant 0 : index
    %c288 = arith.constant 288 : index
    %33 = vector.load %arg40[%c0_23, %c288] : memref<96x512xbf16, #tpu.memory_space<vmem>>, vector<48x32xbf16>
    tpu.vector_store %arg40[%c0_23, %c288], %32 {strides = array<i32>} : memref<96x512xbf16, #tpu.memory_space<vmem>>, vector<48x32xbf16>,
    %34 = vector.extract_strided_slice %13 {offsets = [480, 0], sizes = [48, 32], strides = [1, 1]} : vector<768x32xbf16> to vector<48x32xbf16>
    %c0_24 = arith.constant 0 : index
    %c320 = arith.constant 320 : index
    %35 = vector.load %arg40[%c0_24, %c320] : memref<96x512xbf16, #tpu.memory_space<vmem>>, vector<48x32xbf16>
    tpu.vector_store %arg40[%c0_24, %c320], %34 {strides = array<i32>} : memref<96x512xbf16, #tpu.memory_space<vmem>>, vector<48x32xbf16>,
    %36 = vector.extract_strided_slice %13 {offsets = [528, 0], sizes = [48, 32], strides = [1, 1]} : vector<768x32xbf16> to vector<48x32xbf16>
    %c0_25 = arith.constant 0 : index
    %c352 = arith.constant 352 : index
    %37 = vector.load %arg40[%c0_25, %c352] : memref<96x512xbf16, #tpu.memory_space<vmem>>, vector<48x32xbf16>
    tpu.vector_store %arg40[%c0_25, %c352], %36 {strides = array<i32>} : memref<96x512xbf16, #tpu.memory_space<vmem>>, vector<48x32xbf16>,
    %38 = vector.extract_strided_slice %13 {offsets = [576, 0], sizes = [48, 32], strides = [1, 1]} : vector<768x32xbf16> to vector<48x32xbf16>
    %c0_26 = arith.constant 0 : index
    %c384 = arith.constant 384 : index
    %39 = vector.load %arg40[%c0_26, %c384] : memref<96x512xbf16, #tpu.memory_space<vmem>>, vector<48x32xbf16>
    tpu.vector_store %arg40[%c0_26, %c384], %38 {strides = array<i32>} : memref<96x512xbf16, #tpu.memory_space<vmem>>, vector<48x32xbf16>,
    %40 = vector.extract_strided_slice %13 {offsets = [624, 0], sizes = [48, 32], strides = [1, 1]} : vector<768x32xbf16> to vector<48x32xbf16>
    %c0_27 = arith.constant 0 : index
    %c416 = arith.constant 416 : index
    %41 = vector.load %arg40[%c0_27, %c416] : memref<96x512xbf16, #tpu.memory_space<vmem>>, vector<48x32xbf16>
    tpu.vector_store %arg40[%c0_27, %c416], %40 {strides = array<i32>} : memref<96x512xbf16, #tpu.memory_space<vmem>>, vector<48x32xbf16>,
    %42 = vector.extract_strided_slice %13 {offsets = [672, 0], sizes = [48, 32], strides = [1, 1]} : vector<768x32xbf16> to vector<48x32xbf16>
    %c0_28 = arith.constant 0 : index
    %c448 = arith.constant 448 : index
    %43 = vector.load %arg40[%c0_28, %c448] : memref<96x512xbf16, #tpu.memory_space<vmem>>, vector<48x32xbf16>
    tpu.vector_store %arg40[%c0_28, %c448], %42 {strides = array<i32>} : memref<96x512xbf16, #tpu.memory_space<vmem>>, vector<48x32xbf16>,
    %44 = vector.extract_strided_slice %13 {offsets = [720, 0], sizes = [48, 32], strides = [1, 1]} : vector<768x32xbf16> to vector<48x32xbf16>
    %c0_29 = arith.constant 0 : index
    %c480 = arith.constant 480 : index
    %45 = vector.load %arg40[%c0_29, %c480] : memref<96x512xbf16, #tpu.memory_space<vmem>>, vector<48x32xbf16>
    tpu.vector_store %arg40[%c0_29, %c480], %44 {strides = array<i32>} : memref<96x512xbf16, #tpu.memory_space<vmem>>, vector<48x32xbf16>,
    %c240 = arith.constant 240 : index
    %c0_30 = arith.constant 0 : index
    %46 = vector.load %arg39[%c240, %c0_30] : memref<480x32xbf16, #tpu.memory_space<vmem>>, vector<240x32xbf16>
    %cst_31 = arith.constant dense<0.000000e+00> : vector<768x32xf32>
    %47 = tpu.matmul %10, %46, %cst_31 {dimension_numbers = #tpu.dot_dimension_numbers<[1], [0], [0], [1], [0, 0, 1, 1], [], []>} : vector<768x240xbf16>, vector<240x32xbf16>, vector<768x32xf32> -> vector<768x32xf32>
    %48 = arith.truncf %47 : vector<768x32xf32> to vector<768x32xbf16>
    %49 = vector.extract_strided_slice %48 {offsets = [0, 0], sizes = [48, 32], strides = [1, 1]} : vector<768x32xbf16> to vector<48x32xbf16>
    %c48 = arith.constant 48 : index
    %c0_32 = arith.constant 0 : index
    %50 = vector.load %arg40[%c48, %c0_32] : memref<96x512xbf16, #tpu.memory_space<vmem>>, vector<48x32xbf16>
    tpu.vector_store %arg40[%c48, %c0_32], %49 {strides = array<i32>} : memref<96x512xbf16, #tpu.memory_space<vmem>>, vector<48x32xbf16>,
    %51 = vector.extract_strided_slice %48 {offsets = [48, 0], sizes = [48, 32], strides = [1, 1]} : vector<768x32xbf16> to vector<48x32xbf16>
    %c48_33 = arith.constant 48 : index
    %c32_34 = arith.constant 32 : index
    %52 = vector.load %arg40[%c48_33, %c32_34] : memref<96x512xbf16, #tpu.memory_space<vmem>>, vector<48x32xbf16>
    tpu.vector_store %arg40[%c48_33, %c32_34], %51 {strides = array<i32>} : memref<96x512xbf16, #tpu.memory_space<vmem>>, vector<48x32xbf16>,
    %53 = vector.extract_strided_slice %48 {offsets = [96, 0], sizes = [48, 32], strides = [1, 1]} : vector<768x32xbf16> to vector<48x32xbf16>
    %c48_35 = arith.constant 48 : index
    %c64_36 = arith.constant 64 : index
    %54 = vector.load %arg40[%c48_35, %c64_36] : memref<96x512xbf16, #tpu.memory_space<vmem>>, vector<48x32xbf16>
    tpu.vector_store %arg40[%c48_35, %c64_36], %53 {strides = array<i32>} : memref<96x512xbf16, #tpu.memory_space<vmem>>, vector<48x32xbf16>,
    %55 = vector.extract_strided_slice %48 {offsets = [144, 0], sizes = [48, 32], strides = [1, 1]} : vector<768x32xbf16> to vector<48x32xbf16>
    %c48_37 = arith.constant 48 : index
    %c96_38 = arith.constant 96 : index
    %56 = vector.load %arg40[%c48_37, %c96_38] : memref<96x512xbf16, #tpu.memory_space<vmem>>, vector<48x32xbf16>
    tpu.vector_store %arg40[%c48_37, %c96_38], %55 {strides = array<i32>} : memref<96x512xbf16, #tpu.memory_space<vmem>>, vector<48x32xbf16>,
    %57 = vector.extract_strided_slice %48 {offsets = [192, 0], sizes = [48, 32], strides = [1, 1]} : vector<768x32xbf16> to vector<48x32xbf16>
    %c48_39 = arith.constant 48 : index
    %c128_40 = arith.constant 128 : index
    %58 = vector.load %arg40[%c48_39, %c128_40] : memref<96x512xbf16, #tpu.memory_space<vmem>>, vector<48x32xbf16>
    tpu.vector_store %arg40[%c48_39, %c128_40], %57 {strides = array<i32>} : memref<96x512xbf16, #tpu.memory_space<vmem>>, vector<48x32xbf16>,
    %59 = vector.extract_strided_slice %48 {offsets = [240, 0], sizes = [48, 32], strides = [1, 1]} : vector<768x32xbf16> to vector<48x32xbf16>
    %c48_41 = arith.constant 48 : index
    %c160_42 = arith.constant 160 : index
    %60 = vector.load %arg40[%c48_41, %c160_42] : memref<96x512xbf16, #tpu.memory_space<vmem>>, vector<48x32xbf16>
    tpu.vector_store %arg40[%c48_41, %c160_42], %59 {strides = array<i32>} : memref<96x512xbf16, #tpu.memory_space<vmem>>, vector<48x32xbf16>,
    %61 = vector.extract_strided_slice %48 {offsets = [288, 0], sizes = [48, 32], strides = [1, 1]} : vector<768x32xbf16> to vector<48x32xbf16>
    %c48_43 = arith.constant 48 : index
    %c192_44 = arith.constant 192 : index
    %62 = vector.load %arg40[%c48_43, %c192_44] : memref<96x512xbf16, #tpu.memory_space<vmem>>, vector<48x32xbf16>
    tpu.vector_store %arg40[%c48_43, %c192_44], %61 {strides = array<i32>} : memref<96x512xbf16, #tpu.memory_space<vmem>>, vector<48x32xbf16>,
    %63 = vector.extract_strided_slice %48 {offsets = [336, 0], sizes = [48, 32], strides = [1, 1]} : vector<768x32xbf16> to vector<48x32xbf16>
    %c48_45 = arith.constant 48 : index
    %c224_46 = arith.constant 224 : index
    %64 = vector.load %arg40[%c48_45, %c224_46] : memref<96x512xbf16, #tpu.memory_space<vmem>>, vector<48x32xbf16>
    tpu.vector_store %arg40[%c48_45, %c224_46], %63 {strides = array<i32>} : memref<96x512xbf16, #tpu.memory_space<vmem>>, vector<48x32xbf16>,
    %65 = vector.extract_strided_slice %48 {offsets = [384, 0], sizes = [48, 32], strides = [1, 1]} : vector<768x32xbf16> to vector<48x32xbf16>
    %c48_47 = arith.constant 48 : index
    %c256_48 = arith.constant 256 : index
    %66 = vector.load %arg40[%c48_47, %c256_48] : memref<96x512xbf16, #tpu.memory_space<vmem>>, vector<48x32xbf16>
    tpu.vector_store %arg40[%c48_47, %c256_48], %65 {strides = array<i32>} : memref<96x512xbf16, #tpu.memory_space<vmem>>, vector<48x32xbf16>,
    %67 = vector.extract_strided_slice %48 {offsets = [432, 0], sizes = [48, 32], strides = [1, 1]} : vector<768x32xbf16> to vector<48x32xbf16>
    %c48_49 = arith.constant 48 : index
    %c288_50 = arith.constant 288 : index
    %68 = vector.load %arg40[%c48_49, %c288_50] : memref<96x512xbf16, #tpu.memory_space<vmem>>, vector<48x32xbf16>
    tpu.vector_store %arg40[%c48_49, %c288_50], %67 {strides = array<i32>} : memref<96x512xbf16, #tpu.memory_space<vmem>>, vector<48x32xbf16>,
    %69 = vector.extract_strided_slice %48 {offsets = [480, 0], sizes = [48, 32], strides = [1, 1]} : vector<768x32xbf16> to vector<48x32xbf16>
    %c48_51 = arith.constant 48 : index
    %c320_52 = arith.constant 320 : index
    %70 = vector.load %arg40[%c48_51, %c320_52] : memref<96x512xbf16, #tpu.memory_space<vmem>>, vector<48x32xbf16>
    tpu.vector_store %arg40[%c48_51, %c320_52], %69 {strides = array<i32>} : memref<96x512xbf16, #tpu.memory_space<vmem>>, vector<48x32xbf16>,
    %71 = vector.extract_strided_slice %48 {offsets = [528, 0], sizes = [48, 32], strides = [1, 1]} : vector<768x32xbf16> to vector<48x32xbf16>
    %c48_53 = arith.constant 48 : index
    %c352_54 = arith.constant 352 : index
    %72 = vector.load %arg40[%c48_53, %c352_54] : memref<96x512xbf16, #tpu.memory_space<vmem>>, vector<48x32xbf16>
    tpu.vector_store %arg40[%c48_53, %c352_54], %71 {strides = array<i32>} : memref<96x512xbf16, #tpu.memory_space<vmem>>, vector<48x32xbf16>,
    %73 = vector.extract_strided_slice %48 {offsets = [576, 0], sizes = [48, 32], strides = [1, 1]} : vector<768x32xbf16> to vector<48x32xbf16>
    %c48_55 = arith.constant 48 : index
    %c384_56 = arith.constant 384 : index
    %74 = vector.load %arg40[%c48_55, %c384_56] : memref<96x512xbf16, #tpu.memory_space<vmem>>, vector<48x32xbf16>
    tpu.vector_store %arg40[%c48_55, %c384_56], %73 {strides = array<i32>} : memref<96x512xbf16, #tpu.memory_space<vmem>>, vector<48x32xbf16>,
    %75 = vector.extract_strided_slice %48 {offsets = [624, 0], sizes = [48, 32], strides = [1, 1]} : vector<768x32xbf16> to vector<48x32xbf16>
    %c48_57 = arith.constant 48 : index
    %c416_58 = arith.constant 416 : index
    %76 = vector.load %arg40[%c48_57, %c416_58] : memref<96x512xbf16, #tpu.memory_space<vmem>>, vector<48x32xbf16>
    tpu.vector_store %arg40[%c48_57, %c416_58], %75 {strides = array<i32>} : memref<96x512xbf16, #tpu.memory_space<vmem>>, vector<48x32xbf16>,
    %77 = vector.extract_strided_slice %48 {offsets = [672, 0], sizes = [48, 32], strides = [1, 1]} : vector<768x32xbf16> to vector<48x32xbf16>
    %c48_59 = arith.constant 48 : index
    %c448_60 = arith.constant 448 : index
    %78 = vector.load %arg40[%c48_59, %c448_60] : memref<96x512xbf16, #tpu.memory_space<vmem>>, vector<48x32xbf16>
    tpu.vector_store %arg40[%c48_59, %c448_60], %77 {strides = array<i32>} : memref<96x512xbf16, #tpu.memory_space<vmem>>, vector<48x32xbf16>,
    %79 = vector.extract_strided_slice %48 {offsets = [720, 0], sizes = [48, 32], strides = [1, 1]} : vector<768x32xbf16> to vector<48x32xbf16>
    %c48_61 = arith.constant 48 : index
    %c480_62 = arith.constant 480 : index
    %80 = vector.load %arg40[%c48_61, %c480_62] : memref<96x512xbf16, #tpu.memory_space<vmem>>, vector<48x32xbf16>
    tpu.vector_store %arg40[%c48_61, %c480_62], %79 {strides = array<i32>} : memref<96x512xbf16, #tpu.memory_space<vmem>>, vector<48x32xbf16>,
    %c0_63 = arith.constant 0 : index
    %c0_64 = arith.constant 0 : index
    %81 = vector.load %arg40[%c0_63, %c0_64] : memref<96x512xbf16, #tpu.memory_space<vmem>>, vector<96x512xbf16>
    %c0_65 = arith.constant 0 : index
    %c0_66 = arith.constant 0 : index
    %82 = vector.load %arg4[%c0_65, %c0_66] : memref<512x64xbf16, #tpu.memory_space<vmem>>, vector<512x64xbf16>
    %cst_67 = arith.constant dense<0.000000e+00> : vector<96x64xf32>
    %83 = tpu.matmul %81, %82, %cst_67 {dimension_numbers = #tpu.dot_dimension_numbers<[1], [0], [0], [1], [0, 0, 1, 1], [], []>} : vector<96x512xbf16>, vector<512x64xbf16>, vector<96x64xf32> -> vector<96x64xf32>
    %c0_68 = arith.constant 0 : index
    %c0_69 = arith.constant 0 : index
    %84 = vector.load %arg5[%c0_68, %c0_69] : memref<1x64xf32, #tpu.memory_space<vmem>>, vector<1x64xf32>
    %85 = vector.broadcast %84 : vector<1x64xf32> to vector<96x64xf32>
    %86 = arith.addf %83, %85 : vector<96x64xf32>
    %cst_70 = arith.constant 0.000000e+00 : f32
    %87 = vector.broadcast %cst_70 : f32 to vector<96x64xf32>
    %88 = arith.maximumf %86, %87 : vector<96x64xf32>
    %89 = arith.truncf %88 : vector<96x64xf32> to vector<96x64xbf16>
    %c0_71 = arith.constant 0 : index
    %c0_72 = arith.constant 0 : index
    %90 = vector.load %arg41[%c0_71, %c0_72] : memref<96x64xbf16, #tpu.memory_space<vmem>>, vector<96x64xbf16>
    tpu.vector_store %arg41[%c0_71, %c0_72], %89 {strides = array<i32>} : memref<96x64xbf16, #tpu.memory_space<vmem>>, vector<96x64xbf16>,
    %c0_73 = arith.constant 0 : index
    %c0_74 = arith.constant 0 : index
    %91 = vector.load %arg6[%c0_73, %c0_74] : memref<144x48xbf16, #tpu.memory_space<vmem>>, vector<144x48xbf16>
    %c0_75 = arith.constant 0 : index
    %c0_76 = arith.constant 0 : index
    %92 = vector.load %arg41[%c0_75, %c0_76] : memref<96x64xbf16, #tpu.memory_space<vmem>>, vector<48x64xbf16>
    %cst_77 = arith.constant dense<0.000000e+00> : vector<144x64xf32>
    %93 = tpu.matmul %91, %92, %cst_77 {dimension_numbers = #tpu.dot_dimension_numbers<[1], [0], [0], [1], [0, 0, 1, 1], [], []>} : vector<144x48xbf16>, vector<48x64xbf16>, vector<144x64xf32> -> vector<144x64xf32>
    %94 = arith.truncf %93 : vector<144x64xf32> to vector<144x64xbf16>
    %95 = vector.extract_strided_slice %94 {offsets = [0, 0], sizes = [16, 64], strides = [1, 1]} : vector<144x64xbf16> to vector<16x64xbf16>
    %c0_78 = arith.constant 0 : index
    %c0_79 = arith.constant 0 : index
    %96 = vector.load %arg42[%c0_78, %c0_79] : memref<32x576xbf16, #tpu.memory_space<vmem>>, vector<16x64xbf16>
    tpu.vector_store %arg42[%c0_78, %c0_79], %95 {strides = array<i32>} : memref<32x576xbf16, #tpu.memory_space<vmem>>, vector<16x64xbf16>,
    %97 = vector.extract_strided_slice %94 {offsets = [16, 0], sizes = [16, 64], strides = [1, 1]} : vector<144x64xbf16> to vector<16x64xbf16>
    %c0_80 = arith.constant 0 : index
    %c64_81 = arith.constant 64 : index
    %98 = vector.load %arg42[%c0_80, %c64_81] : memref<32x576xbf16, #tpu.memory_space<vmem>>, vector<16x64xbf16>
    tpu.vector_store %arg42[%c0_80, %c64_81], %97 {strides = array<i32>} : memref<32x576xbf16, #tpu.memory_space<vmem>>, vector<16x64xbf16>,
    %99 = vector.extract_strided_slice %94 {offsets = [32, 0], sizes = [16, 64], strides = [1, 1]} : vector<144x64xbf16> to vector<16x64xbf16>
    %c0_82 = arith.constant 0 : index
    %c128_83 = arith.constant 128 : index
    %100 = vector.load %arg42[%c0_82, %c128_83] : memref<32x576xbf16, #tpu.memory_space<vmem>>, vector<16x64xbf16>
    tpu.vector_store %arg42[%c0_82, %c128_83], %99 {strides = array<i32>} : memref<32x576xbf16, #tpu.memory_space<vmem>>, vector<16x64xbf16>,
    %101 = vector.extract_strided_slice %94 {offsets = [48, 0], sizes = [16, 64], strides = [1, 1]} : vector<144x64xbf16> to vector<16x64xbf16>
    %c0_84 = arith.constant 0 : index
    %c192_85 = arith.constant 192 : index
    %102 = vector.load %arg42[%c0_84, %c192_85] : memref<32x576xbf16, #tpu.memory_space<vmem>>, vector<16x64xbf16>
    tpu.vector_store %arg42[%c0_84, %c192_85], %101 {strides = array<i32>} : memref<32x576xbf16, #tpu.memory_space<vmem>>, vector<16x64xbf16>,
    %103 = vector.extract_strided_slice %94 {offsets = [64, 0], sizes = [16, 64], strides = [1, 1]} : vector<144x64xbf16> to vector<16x64xbf16>
    %c0_86 = arith.constant 0 : index
    %c256_87 = arith.constant 256 : index
    %104 = vector.load %arg42[%c0_86, %c256_87] : memref<32x576xbf16, #tpu.memory_space<vmem>>, vector<16x64xbf16>
    tpu.vector_store %arg42[%c0_86, %c256_87], %103 {strides = array<i32>} : memref<32x576xbf16, #tpu.memory_space<vmem>>, vector<16x64xbf16>,
    %105 = vector.extract_strided_slice %94 {offsets = [80, 0], sizes = [16, 64], strides = [1, 1]} : vector<144x64xbf16> to vector<16x64xbf16>
    %c0_88 = arith.constant 0 : index
    %c320_89 = arith.constant 320 : index
    %106 = vector.load %arg42[%c0_88, %c320_89] : memref<32x576xbf16, #tpu.memory_space<vmem>>, vector<16x64xbf16>
    tpu.vector_store %arg42[%c0_88, %c320_89], %105 {strides = array<i32>} : memref<32x576xbf16, #tpu.memory_space<vmem>>, vector<16x64xbf16>,
    %107 = vector.extract_strided_slice %94 {offsets = [96, 0], sizes = [16, 64], strides = [1, 1]} : vector<144x64xbf16> to vector<16x64xbf16>
    %c0_90 = arith.constant 0 : index
    %c384_91 = arith.constant 384 : index
    %108 = vector.load %arg42[%c0_90, %c384_91] : memref<32x576xbf16, #tpu.memory_space<vmem>>, vector<16x64xbf16>
    tpu.vector_store %arg42[%c0_90, %c384_91], %107 {strides = array<i32>} : memref<32x576xbf16, #tpu.memory_space<vmem>>, vector<16x64xbf16>,
    %109 = vector.extract_strided_slice %94 {offsets = [112, 0], sizes = [16, 64], strides = [1, 1]} : vector<144x64xbf16> to vector<16x64xbf16>
    %c0_92 = arith.constant 0 : index
    %c448_93 = arith.constant 448 : index
    %110 = vector.load %arg42[%c0_92, %c448_93] : memref<32x576xbf16, #tpu.memory_space<vmem>>, vector<16x64xbf16>
    tpu.vector_store %arg42[%c0_92, %c448_93], %109 {strides = array<i32>} : memref<32x576xbf16, #tpu.memory_space<vmem>>, vector<16x64xbf16>,
    %111 = vector.extract_strided_slice %94 {offsets = [128, 0], sizes = [16, 64], strides = [1, 1]} : vector<144x64xbf16> to vector<16x64xbf16>
    %c0_94 = arith.constant 0 : index
    %c512 = arith.constant 512 : index
    %112 = vector.load %arg42[%c0_94, %c512] : memref<32x576xbf16, #tpu.memory_space<vmem>>, vector<16x64xbf16>
    tpu.vector_store %arg42[%c0_94, %c512], %111 {strides = array<i32>} : memref<32x576xbf16, #tpu.memory_space<vmem>>, vector<16x64xbf16>,
    %c48_95 = arith.constant 48 : index
    %c0_96 = arith.constant 0 : index
    %113 = vector.load %arg41[%c48_95, %c0_96] : memref<96x64xbf16, #tpu.memory_space<vmem>>, vector<48x64xbf16>
    %cst_97 = arith.constant dense<0.000000e+00> : vector<144x64xf32>
    %114 = tpu.matmul %91, %113, %cst_97 {dimension_numbers = #tpu.dot_dimension_numbers<[1], [0], [0], [1], [0, 0, 1, 1], [], []>} : vector<144x48xbf16>, vector<48x64xbf16>, vector<144x64xf32> -> vector<144x64xf32>
    %115 = arith.truncf %114 : vector<144x64xf32> to vector<144x64xbf16>
    %116 = vector.extract_strided_slice %115 {offsets = [0, 0], sizes = [16, 64], strides = [1, 1]} : vector<144x64xbf16> to vector<16x64xbf16>
    %c16 = arith.constant 16 : index
    %c0_98 = arith.constant 0 : index
    %117 = vector.load %arg42[%c16, %c0_98] : memref<32x576xbf16, #tpu.memory_space<vmem>>, vector<16x64xbf16>
    tpu.vector_store %arg42[%c16, %c0_98], %116 {strides = array<i32>} : memref<32x576xbf16, #tpu.memory_space<vmem>>, vector<16x64xbf16>,
    %118 = vector.extract_strided_slice %115 {offsets = [16, 0], sizes = [16, 64], strides = [1, 1]} : vector<144x64xbf16> to vector<16x64xbf16>
    %c16_99 = arith.constant 16 : index
    %c64_100 = arith.constant 64 : index
    %119 = vector.load %arg42[%c16_99, %c64_100] : memref<32x576xbf16, #tpu.memory_space<vmem>>, vector<16x64xbf16>
    tpu.vector_store %arg42[%c16_99, %c64_100], %118 {strides = array<i32>} : memref<32x576xbf16, #tpu.memory_space<vmem>>, vector<16x64xbf16>,
    %120 = vector.extract_strided_slice %115 {offsets = [32, 0], sizes = [16, 64], strides = [1, 1]} : vector<144x64xbf16> to vector<16x64xbf16>
    %c16_101 = arith.constant 16 : index
    %c128_102 = arith.constant 128 : index
    %121 = vector.load %arg42[%c16_101, %c128_102] : memref<32x576xbf16, #tpu.memory_space<vmem>>, vector<16x64xbf16>
    tpu.vector_store %arg42[%c16_101, %c128_102], %120 {strides = array<i32>} : memref<32x576xbf16, #tpu.memory_space<vmem>>, vector<16x64xbf16>,
    %122 = vector.extract_strided_slice %115 {offsets = [48, 0], sizes = [16, 64], strides = [1, 1]} : vector<144x64xbf16> to vector<16x64xbf16>
    %c16_103 = arith.constant 16 : index
    %c192_104 = arith.constant 192 : index
    %123 = vector.load %arg42[%c16_103, %c192_104] : memref<32x576xbf16, #tpu.memory_space<vmem>>, vector<16x64xbf16>
    tpu.vector_store %arg42[%c16_103, %c192_104], %122 {strides = array<i32>} : memref<32x576xbf16, #tpu.memory_space<vmem>>, vector<16x64xbf16>,
    %124 = vector.extract_strided_slice %115 {offsets = [64, 0], sizes = [16, 64], strides = [1, 1]} : vector<144x64xbf16> to vector<16x64xbf16>
    %c16_105 = arith.constant 16 : index
    %c256_106 = arith.constant 256 : index
    %125 = vector.load %arg42[%c16_105, %c256_106] : memref<32x576xbf16, #tpu.memory_space<vmem>>, vector<16x64xbf16>
    tpu.vector_store %arg42[%c16_105, %c256_106], %124 {strides = array<i32>} : memref<32x576xbf16, #tpu.memory_space<vmem>>, vector<16x64xbf16>,
    %126 = vector.extract_strided_slice %115 {offsets = [80, 0], sizes = [16, 64], strides = [1, 1]} : vector<144x64xbf16> to vector<16x64xbf16>
    %c16_107 = arith.constant 16 : index
    %c320_108 = arith.constant 320 : index
    %127 = vector.load %arg42[%c16_107, %c320_108] : memref<32x576xbf16, #tpu.memory_space<vmem>>, vector<16x64xbf16>
    tpu.vector_store %arg42[%c16_107, %c320_108], %126 {strides = array<i32>} : memref<32x576xbf16, #tpu.memory_space<vmem>>, vector<16x64xbf16>,
    %128 = vector.extract_strided_slice %115 {offsets = [96, 0], sizes = [16, 64], strides = [1, 1]} : vector<144x64xbf16> to vector<16x64xbf16>
    %c16_109 = arith.constant 16 : index
    %c384_110 = arith.constant 384 : index
    %129 = vector.load %arg42[%c16_109, %c384_110] : memref<32x576xbf16, #tpu.memory_space<vmem>>, vector<16x64xbf16>
    tpu.vector_store %arg42[%c16_109, %c384_110], %128 {strides = array<i32>} : memref<32x576xbf16, #tpu.memory_space<vmem>>, vector<16x64xbf16>,
    %130 = vector.extract_strided_slice %115 {offsets = [112, 0], sizes = [16, 64], strides = [1, 1]} : vector<144x64xbf16> to vector<16x64xbf16>
    %c16_111 = arith.constant 16 : index
    %c448_112 = arith.constant 448 : index
    %131 = vector.load %arg42[%c16_111, %c448_112] : memref<32x576xbf16, #tpu.memory_space<vmem>>, vector<16x64xbf16>
    tpu.vector_store %arg42[%c16_111, %c448_112], %130 {strides = array<i32>} : memref<32x576xbf16, #tpu.memory_space<vmem>>, vector<16x64xbf16>,
    %132 = vector.extract_strided_slice %115 {offsets = [128, 0], sizes = [16, 64], strides = [1, 1]} : vector<144x64xbf16> to vector<16x64xbf16>
    %c16_113 = arith.constant 16 : index
    %c512_114 = arith.constant 512 : index
    %133 = vector.load %arg42[%c16_113, %c512_114] : memref<32x576xbf16, #tpu.memory_space<vmem>>, vector<16x64xbf16>
    tpu.vector_store %arg42[%c16_113, %c512_114], %132 {strides = array<i32>} : memref<32x576xbf16, #tpu.memory_space<vmem>>, vector<16x64xbf16>,
    %c0_115 = arith.constant 0 : index
    %c0_116 = arith.constant 0 : index
    %134 = vector.load %arg42[%c0_115, %c0_116] : memref<32x576xbf16, #tpu.memory_space<vmem>>, vector<32x576xbf16>
    %c0_117 = arith.constant 0 : index
    %c0_118 = arith.constant 0 : index
    %135 = vector.load %arg7[%c0_117, %c0_118] : memref<576x32xbf16, #tpu.memory_space<vmem>>, vector<576x32xbf16>
    %cst_119 = arith.constant dense<0.000000e+00> : vector<32x32xf32>
    %136 = tpu.matmul %134, %135, %cst_119 {dimension_numbers = #tpu.dot_dimension_numbers<[1], [0], [0], [1], [0, 0, 1, 1], [], []>} : vector<32x576xbf16>, vector<576x32xbf16>, vector<32x32xf32> -> vector<32x32xf32>
    %c0_120 = arith.constant 0 : index
    %c0_121 = arith.constant 0 : index
    %137 = vector.load %arg8[%c0_120, %c0_121] : memref<1x32xf32, #tpu.memory_space<vmem>>, vector<1x32xf32>
    %138 = vector.broadcast %137 : vector<1x32xf32> to vector<32x32xf32>
    %139 = arith.addf %136, %138 : vector<32x32xf32>
    %140 = arith.truncf %139 : vector<32x32xf32> to vector<32x32xbf16>
    %c0_122 = arith.constant 0 : index
    %c0_123 = arith.constant 0 : index
    %141 = vector.load %arg43[%c0_122, %c0_123] : memref<32x32xbf16, #tpu.memory_space<vmem>>, vector<32x32xbf16>
    tpu.vector_store %arg43[%c0_122, %c0_123], %140 {strides = array<i32>} : memref<32x32xbf16, #tpu.memory_space<vmem>>, vector<32x32xbf16>,
    %c0_124 = arith.constant 0 : index
    %c0_125 = arith.constant 0 : index
    %142 = vector.load %arg9[%c0_124, %c0_125] : memref<256x16xbf16, #tpu.memory_space<vmem>>, vector<256x16xbf16>
    %c0_126 = arith.constant 0 : index
    %c0_127 = arith.constant 0 : index
    %143 = vector.load %arg43[%c0_126, %c0_127] : memref<32x32xbf16, #tpu.memory_space<vmem>>, vector<16x32xbf16>
    %cst_128 = arith.constant dense<0.000000e+00> : vector<256x32xf32>
    %144 = tpu.matmul %142, %143, %cst_128 {dimension_numbers = #tpu.dot_dimension_numbers<[1], [0], [0], [1], [0, 0, 1, 1], [], []>} : vector<256x16xbf16>, vector<16x32xbf16>, vector<256x32xf32> -> vector<256x32xf32>
    %145 = arith.truncf %144 : vector<256x32xf32> to vector<256x32xbf16>
    %146 = vector.extract_strided_slice %145 {offsets = [0, 0], sizes = [16, 32], strides = [1, 1]} : vector<256x32xbf16> to vector<16x32xbf16>
    %c0_129 = arith.constant 0 : index
    %c0_130 = arith.constant 0 : index
    %147 = vector.load %arg44[%c0_129, %c0_130] : memref<32x512xbf16, #tpu.memory_space<vmem>>, vector<16x32xbf16>
    tpu.vector_store %arg44[%c0_129, %c0_130], %146 {strides = array<i32>} : memref<32x512xbf16, #tpu.memory_space<vmem>>, vector<16x32xbf16>,
    %148 = vector.extract_strided_slice %145 {offsets = [16, 0], sizes = [16, 32], strides = [1, 1]} : vector<256x32xbf16> to vector<16x32xbf16>
    %c0_131 = arith.constant 0 : index
    %c32_132 = arith.constant 32 : index
    %149 = vector.load %arg44[%c0_131, %c32_132] : memref<32x512xbf16, #tpu.memory_space<vmem>>, vector<16x32xbf16>
    tpu.vector_store %arg44[%c0_131, %c32_132], %148 {strides = array<i32>} : memref<32x512xbf16, #tpu.memory_space<vmem>>, vector<16x32xbf16>,
    %150 = vector.extract_strided_slice %145 {offsets = [32, 0], sizes = [16, 32], strides = [1, 1]} : vector<256x32xbf16> to vector<16x32xbf16>
    %c0_133 = arith.constant 0 : index
    %c64_134 = arith.constant 64 : index
    %151 = vector.load %arg44[%c0_133, %c64_134] : memref<32x512xbf16, #tpu.memory_space<vmem>>, vector<16x32xbf16>
    tpu.vector_store %arg44[%c0_133, %c64_134], %150 {strides = array<i32>} : memref<32x512xbf16, #tpu.memory_space<vmem>>, vector<16x32xbf16>,
    %152 = vector.extract_strided_slice %145 {offsets = [48, 0], sizes = [16, 32], strides = [1, 1]} : vector<256x32xbf16> to vector<16x32xbf16>
    %c0_135 = arith.constant 0 : index
    %c96_136 = arith.constant 96 : index
    %153 = vector.load %arg44[%c0_135, %c96_136] : memref<32x512xbf16, #tpu.memory_space<vmem>>, vector<16x32xbf16>
    tpu.vector_store %arg44[%c0_135, %c96_136], %152 {strides = array<i32>} : memref<32x512xbf16, #tpu.memory_space<vmem>>, vector<16x32xbf16>,
    %154 = vector.extract_strided_slice %145 {offsets = [64, 0], sizes = [16, 32], strides = [1, 1]} : vector<256x32xbf16> to vector<16x32xbf16>
    %c0_137 = arith.constant 0 : index
    %c128_138 = arith.constant 128 : index
    %155 = vector.load %arg44[%c0_137, %c128_138] : memref<32x512xbf16, #tpu.memory_space<vmem>>, vector<16x32xbf16>
    tpu.vector_store %arg44[%c0_137, %c128_138], %154 {strides = array<i32>} : memref<32x512xbf16, #tpu.memory_space<vmem>>, vector<16x32xbf16>,
    %156 = vector.extract_strided_slice %145 {offsets = [80, 0], sizes = [16, 32], strides = [1, 1]} : vector<256x32xbf16> to vector<16x32xbf16>
    %c0_139 = arith.constant 0 : index
    %c160_140 = arith.constant 160 : index
    %157 = vector.load %arg44[%c0_139, %c160_140] : memref<32x512xbf16, #tpu.memory_space<vmem>>, vector<16x32xbf16>
    tpu.vector_store %arg44[%c0_139, %c160_140], %156 {strides = array<i32>} : memref<32x512xbf16, #tpu.memory_space<vmem>>, vector<16x32xbf16>,
    %158 = vector.extract_strided_slice %145 {offsets = [96, 0], sizes = [16, 32], strides = [1, 1]} : vector<256x32xbf16> to vector<16x32xbf16>
    %c0_141 = arith.constant 0 : index
    %c192_142 = arith.constant 192 : index
    %159 = vector.load %arg44[%c0_141, %c192_142] : memref<32x512xbf16, #tpu.memory_space<vmem>>, vector<16x32xbf16>
    tpu.vector_store %arg44[%c0_141, %c192_142], %158 {strides = array<i32>} : memref<32x512xbf16, #tpu.memory_space<vmem>>, vector<16x32xbf16>,
    %160 = vector.extract_strided_slice %145 {offsets = [112, 0], sizes = [16, 32], strides = [1, 1]} : vector<256x32xbf16> to vector<16x32xbf16>
    %c0_143 = arith.constant 0 : index
    %c224_144 = arith.constant 224 : index
    %161 = vector.load %arg44[%c0_143, %c224_144] : memref<32x512xbf16, #tpu.memory_space<vmem>>, vector<16x32xbf16>
    tpu.vector_store %arg44[%c0_143, %c224_144], %160 {strides = array<i32>} : memref<32x512xbf16, #tpu.memory_space<vmem>>, vector<16x32xbf16>,
    %162 = vector.extract_strided_slice %145 {offsets = [128, 0], sizes = [16, 32], strides = [1, 1]} : vector<256x32xbf16> to vector<16x32xbf16>
    %c0_145 = arith.constant 0 : index
    %c256_146 = arith.constant 256 : index
    %163 = vector.load %arg44[%c0_145, %c256_146] : memref<32x512xbf16, #tpu.memory_space<vmem>>, vector<16x32xbf16>
    tpu.vector_store %arg44[%c0_145, %c256_146], %162 {strides = array<i32>} : memref<32x512xbf16, #tpu.memory_space<vmem>>, vector<16x32xbf16>,
    %164 = vector.extract_strided_slice %145 {offsets = [144, 0], sizes = [16, 32], strides = [1, 1]} : vector<256x32xbf16> to vector<16x32xbf16>
    %c0_147 = arith.constant 0 : index
    %c288_148 = arith.constant 288 : index
    %165 = vector.load %arg44[%c0_147, %c288_148] : memref<32x512xbf16, #tpu.memory_space<vmem>>, vector<16x32xbf16>
    tpu.vector_store %arg44[%c0_147, %c288_148], %164 {strides = array<i32>} : memref<32x512xbf16, #tpu.memory_space<vmem>>, vector<16x32xbf16>,
    %166 = vector.extract_strided_slice %145 {offsets = [160, 0], sizes = [16, 32], strides = [1, 1]} : vector<256x32xbf16> to vector<16x32xbf16>
    %c0_149 = arith.constant 0 : index
    %c320_150 = arith.constant 320 : index
    %167 = vector.load %arg44[%c0_149, %c320_150] : memref<32x512xbf16, #tpu.memory_space<vmem>>, vector<16x32xbf16>
    tpu.vector_store %arg44[%c0_149, %c320_150], %166 {strides = array<i32>} : memref<32x512xbf16, #tpu.memory_space<vmem>>, vector<16x32xbf16>,
    %168 = vector.extract_strided_slice %145 {offsets = [176, 0], sizes = [16, 32], strides = [1, 1]} : vector<256x32xbf16> to vector<16x32xbf16>
    %c0_151 = arith.constant 0 : index
    %c352_152 = arith.constant 352 : index
    %169 = vector.load %arg44[%c0_151, %c352_152] : memref<32x512xbf16, #tpu.memory_space<vmem>>, vector<16x32xbf16>
    tpu.vector_store %arg44[%c0_151, %c352_152], %168 {strides = array<i32>} : memref<32x512xbf16, #tpu.memory_space<vmem>>, vector<16x32xbf16>,
    %170 = vector.extract_strided_slice %145 {offsets = [192, 0], sizes = [16, 32], strides = [1, 1]} : vector<256x32xbf16> to vector<16x32xbf16>
    %c0_153 = arith.constant 0 : index
    %c384_154 = arith.constant 384 : index
    %171 = vector.load %arg44[%c0_153, %c384_154] : memref<32x512xbf16, #tpu.memory_space<vmem>>, vector<16x32xbf16>
    tpu.vector_store %arg44[%c0_153, %c384_154], %170 {strides = array<i32>} : memref<32x512xbf16, #tpu.memory_space<vmem>>, vector<16x32xbf16>,
    %172 = vector.extract_strided_slice %145 {offsets = [208, 0], sizes = [16, 32], strides = [1, 1]} : vector<256x32xbf16> to vector<16x32xbf16>
    %c0_155 = arith.constant 0 : index
    %c416_156 = arith.constant 416 : index
    %173 = vector.load %arg44[%c0_155, %c416_156] : memref<32x512xbf16, #tpu.memory_space<vmem>>, vector<16x32xbf16>
    tpu.vector_store %arg44[%c0_155, %c416_156], %172 {strides = array<i32>} : memref<32x512xbf16, #tpu.memory_space<vmem>>, vector<16x32xbf16>,
    %174 = vector.extract_strided_slice %145 {offsets = [224, 0], sizes = [16, 32], strides = [1, 1]} : vector<256x32xbf16> to vector<16x32xbf16>
    %c0_157 = arith.constant 0 : index
    %c448_158 = arith.constant 448 : index
    %175 = vector.load %arg44[%c0_157, %c448_158] : memref<32x512xbf16, #tpu.memory_space<vmem>>, vector<16x32xbf16>
    tpu.vector_store %arg44[%c0_157, %c448_158], %174 {strides = array<i32>} : memref<32x512xbf16, #tpu.memory_space<vmem>>, vector<16x32xbf16>,
    %176 = vector.extract_strided_slice %145 {offsets = [240, 0], sizes = [16, 32], strides = [1, 1]} : vector<256x32xbf16> to vector<16x32xbf16>
    %c0_159 = arith.constant 0 : index
    %c480_160 = arith.constant 480 : index
    %177 = vector.load %arg44[%c0_159, %c480_160] : memref<32x512xbf16, #tpu.memory_space<vmem>>, vector<16x32xbf16>
    tpu.vector_store %arg44[%c0_159, %c480_160], %176 {strides = array<i32>} : memref<32x512xbf16, #tpu.memory_space<vmem>>, vector<16x32xbf16>,
    %c16_161 = arith.constant 16 : index
    %c0_162 = arith.constant 0 : index
    %178 = vector.load %arg43[%c16_161, %c0_162] : memref<32x32xbf16, #tpu.memory_space<vmem>>, vector<16x32xbf16>
    %cst_163 = arith.constant dense<0.000000e+00> : vector<256x32xf32>
    %179 = tpu.matmul %142, %178, %cst_163 {dimension_numbers = #tpu.dot_dimension_numbers<[1], [0], [0], [1], [0, 0, 1, 1], [], []>} : vector<256x16xbf16>, vector<16x32xbf16>, vector<256x32xf32> -> vector<256x32xf32>
    %180 = arith.truncf %179 : vector<256x32xf32> to vector<256x32xbf16>
    %181 = vector.extract_strided_slice %180 {offsets = [0, 0], sizes = [16, 32], strides = [1, 1]} : vector<256x32xbf16> to vector<16x32xbf16>
    %c16_164 = arith.constant 16 : index
    %c0_165 = arith.constant 0 : index
    %182 = vector.load %arg44[%c16_164, %c0_165] : memref<32x512xbf16, #tpu.memory_space<vmem>>, vector<16x32xbf16>
    tpu.vector_store %arg44[%c16_164, %c0_165], %181 {strides = array<i32>} : memref<32x512xbf16, #tpu.memory_space<vmem>>, vector<16x32xbf16>,
    %183 = vector.extract_strided_slice %180 {offsets = [16, 0], sizes = [16, 32], strides = [1, 1]} : vector<256x32xbf16> to vector<16x32xbf16>
    %c16_166 = arith.constant 16 : index
    %c32_167 = arith.constant 32 : index
    %184 = vector.load %arg44[%c16_166, %c32_167] : memref<32x512xbf16, #tpu.memory_space<vmem>>, vector<16x32xbf16>
    tpu.vector_store %arg44[%c16_166, %c32_167], %183 {strides = array<i32>} : memref<32x512xbf16, #tpu.memory_space<vmem>>, vector<16x32xbf16>,
    %185 = vector.extract_strided_slice %180 {offsets = [32, 0], sizes = [16, 32], strides = [1, 1]} : vector<256x32xbf16> to vector<16x32xbf16>
    %c16_168 = arith.constant 16 : index
    %c64_169 = arith.constant 64 : index
    %186 = vector.load %arg44[%c16_168, %c64_169] : memref<32x512xbf16, #tpu.memory_space<vmem>>, vector<16x32xbf16>
    tpu.vector_store %arg44[%c16_168, %c64_169], %185 {strides = array<i32>} : memref<32x512xbf16, #tpu.memory_space<vmem>>, vector<16x32xbf16>,
    %187 = vector.extract_strided_slice %180 {offsets = [48, 0], sizes = [16, 32], strides = [1, 1]} : vector<256x32xbf16> to vector<16x32xbf16>
    %c16_170 = arith.constant 16 : index
    %c96_171 = arith.constant 96 : index
    %188 = vector.load %arg44[%c16_170, %c96_171] : memref<32x512xbf16, #tpu.memory_space<vmem>>, vector<16x32xbf16>
    tpu.vector_store %arg44[%c16_170, %c96_171], %187 {strides = array<i32>} : memref<32x512xbf16, #tpu.memory_space<vmem>>, vector<16x32xbf16>,
    %189 = vector.extract_strided_slice %180 {offsets = [64, 0], sizes = [16, 32], strides = [1, 1]} : vector<256x32xbf16> to vector<16x32xbf16>
    %c16_172 = arith.constant 16 : index
    %c128_173 = arith.constant 128 : index
    %190 = vector.load %arg44[%c16_172, %c128_173] : memref<32x512xbf16, #tpu.memory_space<vmem>>, vector<16x32xbf16>
    tpu.vector_store %arg44[%c16_172, %c128_173], %189 {strides = array<i32>} : memref<32x512xbf16, #tpu.memory_space<vmem>>, vector<16x32xbf16>,
    %191 = vector.extract_strided_slice %180 {offsets = [80, 0], sizes = [16, 32], strides = [1, 1]} : vector<256x32xbf16> to vector<16x32xbf16>
    %c16_174 = arith.constant 16 : index
    %c160_175 = arith.constant 160 : index
    %192 = vector.load %arg44[%c16_174, %c160_175] : memref<32x512xbf16, #tpu.memory_space<vmem>>, vector<16x32xbf16>
    tpu.vector_store %arg44[%c16_174, %c160_175], %191 {strides = array<i32>} : memref<32x512xbf16, #tpu.memory_space<vmem>>, vector<16x32xbf16>,
    %193 = vector.extract_strided_slice %180 {offsets = [96, 0], sizes = [16, 32], strides = [1, 1]} : vector<256x32xbf16> to vector<16x32xbf16>
    %c16_176 = arith.constant 16 : index
    %c192_177 = arith.constant 192 : index
    %194 = vector.load %arg44[%c16_176, %c192_177] : memref<32x512xbf16, #tpu.memory_space<vmem>>, vector<16x32xbf16>
    tpu.vector_store %arg44[%c16_176, %c192_177], %193 {strides = array<i32>} : memref<32x512xbf16, #tpu.memory_space<vmem>>, vector<16x32xbf16>,
    %195 = vector.extract_strided_slice %180 {offsets = [112, 0], sizes = [16, 32], strides = [1, 1]} : vector<256x32xbf16> to vector<16x32xbf16>
    %c16_178 = arith.constant 16 : index
    %c224_179 = arith.constant 224 : index
    %196 = vector.load %arg44[%c16_178, %c224_179] : memref<32x512xbf16, #tpu.memory_space<vmem>>, vector<16x32xbf16>
    tpu.vector_store %arg44[%c16_178, %c224_179], %195 {strides = array<i32>} : memref<32x512xbf16, #tpu.memory_space<vmem>>, vector<16x32xbf16>,
    %197 = vector.extract_strided_slice %180 {offsets = [128, 0], sizes = [16, 32], strides = [1, 1]} : vector<256x32xbf16> to vector<16x32xbf16>
    %c16_180 = arith.constant 16 : index
    %c256_181 = arith.constant 256 : index
    %198 = vector.load %arg44[%c16_180, %c256_181] : memref<32x512xbf16, #tpu.memory_space<vmem>>, vector<16x32xbf16>
    tpu.vector_store %arg44[%c16_180, %c256_181], %197 {strides = array<i32>} : memref<32x512xbf16, #tpu.memory_space<vmem>>, vector<16x32xbf16>,
    %199 = vector.extract_strided_slice %180 {offsets = [144, 0], sizes = [16, 32], strides = [1, 1]} : vector<256x32xbf16> to vector<16x32xbf16>
    %c16_182 = arith.constant 16 : index
    %c288_183 = arith.constant 288 : index
    %200 = vector.load %arg44[%c16_182, %c288_183] : memref<32x512xbf16, #tpu.memory_space<vmem>>, vector<16x32xbf16>
    tpu.vector_store %arg44[%c16_182, %c288_183], %199 {strides = array<i32>} : memref<32x512xbf16, #tpu.memory_space<vmem>>, vector<16x32xbf16>,
    %201 = vector.extract_strided_slice %180 {offsets = [160, 0], sizes = [16, 32], strides = [1, 1]} : vector<256x32xbf16> to vector<16x32xbf16>
    %c16_184 = arith.constant 16 : index
    %c320_185 = arith.constant 320 : index
    %202 = vector.load %arg44[%c16_184, %c320_185] : memref<32x512xbf16, #tpu.memory_space<vmem>>, vector<16x32xbf16>
    tpu.vector_store %arg44[%c16_184, %c320_185], %201 {strides = array<i32>} : memref<32x512xbf16, #tpu.memory_space<vmem>>, vector<16x32xbf16>,
    %203 = vector.extract_strided_slice %180 {offsets = [176, 0], sizes = [16, 32], strides = [1, 1]} : vector<256x32xbf16> to vector<16x32xbf16>
    %c16_186 = arith.constant 16 : index
    %c352_187 = arith.constant 352 : index
    %204 = vector.load %arg44[%c16_186, %c352_187] : memref<32x512xbf16, #tpu.memory_space<vmem>>, vector<16x32xbf16>
    tpu.vector_store %arg44[%c16_186, %c352_187], %203 {strides = array<i32>} : memref<32x512xbf16, #tpu.memory_space<vmem>>, vector<16x32xbf16>,
    %205 = vector.extract_strided_slice %180 {offsets = [192, 0], sizes = [16, 32], strides = [1, 1]} : vector<256x32xbf16> to vector<16x32xbf16>
    %c16_188 = arith.constant 16 : index
    %c384_189 = arith.constant 384 : index
    %206 = vector.load %arg44[%c16_188, %c384_189] : memref<32x512xbf16, #tpu.memory_space<vmem>>, vector<16x32xbf16>
    tpu.vector_store %arg44[%c16_188, %c384_189], %205 {strides = array<i32>} : memref<32x512xbf16, #tpu.memory_space<vmem>>, vector<16x32xbf16>,
    %207 = vector.extract_strided_slice %180 {offsets = [208, 0], sizes = [16, 32], strides = [1, 1]} : vector<256x32xbf16> to vector<16x32xbf16>
    %c16_190 = arith.constant 16 : index
    %c416_191 = arith.constant 416 : index
    %208 = vector.load %arg44[%c16_190, %c416_191] : memref<32x512xbf16, #tpu.memory_space<vmem>>, vector<16x32xbf16>
    tpu.vector_store %arg44[%c16_190, %c416_191], %207 {strides = array<i32>} : memref<32x512xbf16, #tpu.memory_space<vmem>>, vector<16x32xbf16>,
    %209 = vector.extract_strided_slice %180 {offsets = [224, 0], sizes = [16, 32], strides = [1, 1]} : vector<256x32xbf16> to vector<16x32xbf16>
    %c16_192 = arith.constant 16 : index
    %c448_193 = arith.constant 448 : index
    %210 = vector.load %arg44[%c16_192, %c448_193] : memref<32x512xbf16, #tpu.memory_space<vmem>>, vector<16x32xbf16>
    tpu.vector_store %arg44[%c16_192, %c448_193], %209 {strides = array<i32>} : memref<32x512xbf16, #tpu.memory_space<vmem>>, vector<16x32xbf16>,
    %211 = vector.extract_strided_slice %180 {offsets = [240, 0], sizes = [16, 32], strides = [1, 1]} : vector<256x32xbf16> to vector<16x32xbf16>
    %c16_194 = arith.constant 16 : index
    %c480_195 = arith.constant 480 : index
    %212 = vector.load %arg44[%c16_194, %c480_195] : memref<32x512xbf16, #tpu.memory_space<vmem>>, vector<16x32xbf16>
    tpu.vector_store %arg44[%c16_194, %c480_195], %211 {strides = array<i32>} : memref<32x512xbf16, #tpu.memory_space<vmem>>, vector<16x32xbf16>,
    %c0_196 = arith.constant 0 : index
    %c0_197 = arith.constant 0 : index
    %213 = vector.load %arg44[%c0_196, %c0_197] : memref<32x512xbf16, #tpu.memory_space<vmem>>, vector<32x512xbf16>
    %c0_198 = arith.constant 0 : index
    %c0_199 = arith.constant 0 : index
    %214 = vector.load %arg10[%c0_198, %c0_199] : memref<512x32xbf16, #tpu.memory_space<vmem>>, vector<512x32xbf16>
    %cst_200 = arith.constant dense<0.000000e+00> : vector<32x32xf32>
    %215 = tpu.matmul %213, %214, %cst_200 {dimension_numbers = #tpu.dot_dimension_numbers<[1], [0], [0], [1], [0, 0, 1, 1], [], []>} : vector<32x512xbf16>, vector<512x32xbf16>, vector<32x32xf32> -> vector<32x32xf32>
    %c0_201 = arith.constant 0 : index
    %c0_202 = arith.constant 0 : index
    %216 = vector.load %arg11[%c0_201, %c0_202] : memref<1x32xf32, #tpu.memory_space<vmem>>, vector<1x32xf32>
    %217 = vector.broadcast %216 : vector<1x32xf32> to vector<32x32xf32>
    %218 = arith.addf %215, %217 : vector<32x32xf32>
    %cst_203 = arith.constant 0.000000e+00 : f32
    %219 = vector.broadcast %cst_203 : f32 to vector<32x32xf32>
    %220 = arith.maximumf %218, %219 : vector<32x32xf32>
    %221 = vector.extract_strided_slice %220 {offsets = [0, 0], sizes = [1, 32], strides = [1, 1]} : vector<32x32xf32> to vector<1x32xf32>
    %c0_204 = arith.constant 0 : index
    %c0_205 = arith.constant 0 : index
    %222 = vector.load %arg53[%c0_204, %c0_205] : memref<2x96xf32, #tpu.memory_space<vmem>>, vector<1x32xf32>
    tpu.vector_store %arg53[%c0_204, %c0_205], %221 {strides = array<i32>} : memref<2x96xf32, #tpu.memory_space<vmem>>, vector<1x32xf32>,
    %223 = vector.extract_strided_slice %220 {offsets = [16, 0], sizes = [1, 32], strides = [1, 1]} : vector<32x32xf32> to vector<1x32xf32>
    %c1 = arith.constant 1 : index
    %c0_206 = arith.constant 0 : index
    %224 = vector.load %arg53[%c1, %c0_206] : memref<2x96xf32, #tpu.memory_space<vmem>>, vector<1x32xf32>
    tpu.vector_store %arg53[%c1, %c0_206], %223 {strides = array<i32>} : memref<2x96xf32, #tpu.memory_space<vmem>>, vector<1x32xf32>,
    %c0_207 = arith.constant 0 : index
    %c0_208 = arith.constant 0 : index
    %225 = vector.load %arg14[%c0_207, %c0_208] : memref<128x512xbf16, #tpu.memory_space<vmem>>, vector<128x512xbf16>
    %c0_209 = arith.constant 0 : index
    %c0_210 = arith.constant 0 : index
    %226 = vector.load %arg15[%c0_209, %c0_210] : memref<512x32xbf16, #tpu.memory_space<vmem>>, vector<512x32xbf16>
    %cst_211 = arith.constant dense<0.000000e+00> : vector<128x32xf32>
    %227 = tpu.matmul %225, %226, %cst_211 {dimension_numbers = #tpu.dot_dimension_numbers<[1], [0], [0], [1], [0, 0, 1, 1], [], []>} : vector<128x512xbf16>, vector<512x32xbf16>, vector<128x32xf32> -> vector<128x32xf32>
    %c0_212 = arith.constant 0 : index
    %c0_213 = arith.constant 0 : index
    %228 = vector.load %arg16[%c0_212, %c0_213] : memref<1x32xf32, #tpu.memory_space<vmem>>, vector<1x32xf32>
    %229 = vector.broadcast %228 : vector<1x32xf32> to vector<128x32xf32>
    %230 = arith.addf %227, %229 : vector<128x32xf32>
    %cst_214 = arith.constant 0.000000e+00 : f32
    %231 = vector.broadcast %cst_214 : f32 to vector<128x32xf32>
    %232 = arith.maximumf %230, %231 : vector<128x32xf32>
    %233 = arith.truncf %232 : vector<128x32xf32> to vector<128x32xbf16>
    %c0_215 = arith.constant 0 : index
    %c0_216 = arith.constant 0 : index
    %234 = vector.load %arg45[%c0_215, %c0_216] : memref<128x32xbf16, #tpu.memory_space<vmem>>, vector<128x32xbf16>
    tpu.vector_store %arg45[%c0_215, %c0_216], %233 {strides = array<i32>} : memref<128x32xbf16, #tpu.memory_space<vmem>>, vector<128x32xbf16>,
    %c0_217 = arith.constant 0 : index
    %c0_218 = arith.constant 0 : index
    %235 = vector.load %arg12[%c0_217, %c0_218] : memref<144x64xbf16, #tpu.memory_space<vmem>>, vector<144x64xbf16>
    %c0_219 = arith.constant 0 : index
    %c0_220 = arith.constant 0 : index
    %236 = vector.load %arg45[%c0_219, %c0_220] : memref<128x32xbf16, #tpu.memory_space<vmem>>, vector<64x32xbf16>
    %cst_221 = arith.constant dense<0.000000e+00> : vector<144x32xf32>
    %237 = tpu.matmul %235, %236, %cst_221 {dimension_numbers = #tpu.dot_dimension_numbers<[1], [0], [0], [1], [0, 0, 1, 1], [], []>} : vector<144x64xbf16>, vector<64x32xbf16>, vector<144x32xf32> -> vector<144x32xf32>
    %238 = arith.truncf %237 : vector<144x32xf32> to vector<144x32xbf16>
    %239 = vector.extract_strided_slice %238 {offsets = [0, 0], sizes = [16, 32], strides = [1, 1]} : vector<144x32xbf16> to vector<16x32xbf16>
    %c0_222 = arith.constant 0 : index
    %c0_223 = arith.constant 0 : index
    %240 = vector.load %arg46[%c0_222, %c0_223] : memref<32x288xbf16, #tpu.memory_space<vmem>>, vector<16x32xbf16>
    tpu.vector_store %arg46[%c0_222, %c0_223], %239 {strides = array<i32>} : memref<32x288xbf16, #tpu.memory_space<vmem>>, vector<16x32xbf16>,
    %241 = vector.extract_strided_slice %238 {offsets = [16, 0], sizes = [16, 32], strides = [1, 1]} : vector<144x32xbf16> to vector<16x32xbf16>
    %c0_224 = arith.constant 0 : index
    %c32_225 = arith.constant 32 : index
    %242 = vector.load %arg46[%c0_224, %c32_225] : memref<32x288xbf16, #tpu.memory_space<vmem>>, vector<16x32xbf16>
    tpu.vector_store %arg46[%c0_224, %c32_225], %241 {strides = array<i32>} : memref<32x288xbf16, #tpu.memory_space<vmem>>, vector<16x32xbf16>,
    %243 = vector.extract_strided_slice %238 {offsets = [32, 0], sizes = [16, 32], strides = [1, 1]} : vector<144x32xbf16> to vector<16x32xbf16>
    %c0_226 = arith.constant 0 : index
    %c64_227 = arith.constant 64 : index
    %244 = vector.load %arg46[%c0_226, %c64_227] : memref<32x288xbf16, #tpu.memory_space<vmem>>, vector<16x32xbf16>
    tpu.vector_store %arg46[%c0_226, %c64_227], %243 {strides = array<i32>} : memref<32x288xbf16, #tpu.memory_space<vmem>>, vector<16x32xbf16>,
    %245 = vector.extract_strided_slice %238 {offsets = [48, 0], sizes = [16, 32], strides = [1, 1]} : vector<144x32xbf16> to vector<16x32xbf16>
    %c0_228 = arith.constant 0 : index
    %c96_229 = arith.constant 96 : index
    %246 = vector.load %arg46[%c0_228, %c96_229] : memref<32x288xbf16, #tpu.memory_space<vmem>>, vector<16x32xbf16>
    tpu.vector_store %arg46[%c0_228, %c96_229], %245 {strides = array<i32>} : memref<32x288xbf16, #tpu.memory_space<vmem>>, vector<16x32xbf16>,
    %247 = vector.extract_strided_slice %238 {offsets = [64, 0], sizes = [16, 32], strides = [1, 1]} : vector<144x32xbf16> to vector<16x32xbf16>
    %c0_230 = arith.constant 0 : index
    %c128_231 = arith.constant 128 : index
    %248 = vector.load %arg46[%c0_230, %c128_231] : memref<32x288xbf16, #tpu.memory_space<vmem>>, vector<16x32xbf16>
    tpu.vector_store %arg46[%c0_230, %c128_231], %247 {strides = array<i32>} : memref<32x288xbf16, #tpu.memory_space<vmem>>, vector<16x32xbf16>,
    %249 = vector.extract_strided_slice %238 {offsets = [80, 0], sizes = [16, 32], strides = [1, 1]} : vector<144x32xbf16> to vector<16x32xbf16>
    %c0_232 = arith.constant 0 : index
    %c160_233 = arith.constant 160 : index
    %250 = vector.load %arg46[%c0_232, %c160_233] : memref<32x288xbf16, #tpu.memory_space<vmem>>, vector<16x32xbf16>
    tpu.vector_store %arg46[%c0_232, %c160_233], %249 {strides = array<i32>} : memref<32x288xbf16, #tpu.memory_space<vmem>>, vector<16x32xbf16>,
    %251 = vector.extract_strided_slice %238 {offsets = [96, 0], sizes = [16, 32], strides = [1, 1]} : vector<144x32xbf16> to vector<16x32xbf16>
    %c0_234 = arith.constant 0 : index
    %c192_235 = arith.constant 192 : index
    %252 = vector.load %arg46[%c0_234, %c192_235] : memref<32x288xbf16, #tpu.memory_space<vmem>>, vector<16x32xbf16>
    tpu.vector_store %arg46[%c0_234, %c192_235], %251 {strides = array<i32>} : memref<32x288xbf16, #tpu.memory_space<vmem>>, vector<16x32xbf16>,
    %253 = vector.extract_strided_slice %238 {offsets = [112, 0], sizes = [16, 32], strides = [1, 1]} : vector<144x32xbf16> to vector<16x32xbf16>
    %c0_236 = arith.constant 0 : index
    %c224_237 = arith.constant 224 : index
    %254 = vector.load %arg46[%c0_236, %c224_237] : memref<32x288xbf16, #tpu.memory_space<vmem>>, vector<16x32xbf16>
    tpu.vector_store %arg46[%c0_236, %c224_237], %253 {strides = array<i32>} : memref<32x288xbf16, #tpu.memory_space<vmem>>, vector<16x32xbf16>,
    %255 = vector.extract_strided_slice %238 {offsets = [128, 0], sizes = [16, 32], strides = [1, 1]} : vector<144x32xbf16> to vector<16x32xbf16>
    %c0_238 = arith.constant 0 : index
    %c256_239 = arith.constant 256 : index
    %256 = vector.load %arg46[%c0_238, %c256_239] : memref<32x288xbf16, #tpu.memory_space<vmem>>, vector<16x32xbf16>
    tpu.vector_store %arg46[%c0_238, %c256_239], %255 {strides = array<i32>} : memref<32x288xbf16, #tpu.memory_space<vmem>>, vector<16x32xbf16>,
    %c64_240 = arith.constant 64 : index
    %c0_241 = arith.constant 0 : index
    %257 = vector.load %arg45[%c64_240, %c0_241] : memref<128x32xbf16, #tpu.memory_space<vmem>>, vector<64x32xbf16>
    %cst_242 = arith.constant dense<0.000000e+00> : vector<144x32xf32>
    %258 = tpu.matmul %235, %257, %cst_242 {dimension_numbers = #tpu.dot_dimension_numbers<[1], [0], [0], [1], [0, 0, 1, 1], [], []>} : vector<144x64xbf16>, vector<64x32xbf16>, vector<144x32xf32> -> vector<144x32xf32>
    %259 = arith.truncf %258 : vector<144x32xf32> to vector<144x32xbf16>
    %260 = vector.extract_strided_slice %259 {offsets = [0, 0], sizes = [16, 32], strides = [1, 1]} : vector<144x32xbf16> to vector<16x32xbf16>
    %c16_243 = arith.constant 16 : index
    %c0_244 = arith.constant 0 : index
    %261 = vector.load %arg46[%c16_243, %c0_244] : memref<32x288xbf16, #tpu.memory_space<vmem>>, vector<16x32xbf16>
    tpu.vector_store %arg46[%c16_243, %c0_244], %260 {strides = array<i32>} : memref<32x288xbf16, #tpu.memory_space<vmem>>, vector<16x32xbf16>,
    %262 = vector.extract_strided_slice %259 {offsets = [16, 0], sizes = [16, 32], strides = [1, 1]} : vector<144x32xbf16> to vector<16x32xbf16>
    %c16_245 = arith.constant 16 : index
    %c32_246 = arith.constant 32 : index
    %263 = vector.load %arg46[%c16_245, %c32_246] : memref<32x288xbf16, #tpu.memory_space<vmem>>, vector<16x32xbf16>
    tpu.vector_store %arg46[%c16_245, %c32_246], %262 {strides = array<i32>} : memref<32x288xbf16, #tpu.memory_space<vmem>>, vector<16x32xbf16>,
    %264 = vector.extract_strided_slice %259 {offsets = [32, 0], sizes = [16, 32], strides = [1, 1]} : vector<144x32xbf16> to vector<16x32xbf16>
    %c16_247 = arith.constant 16 : index
    %c64_248 = arith.constant 64 : index
    %265 = vector.load %arg46[%c16_247, %c64_248] : memref<32x288xbf16, #tpu.memory_space<vmem>>, vector<16x32xbf16>
    tpu.vector_store %arg46[%c16_247, %c64_248], %264 {strides = array<i32>} : memref<32x288xbf16, #tpu.memory_space<vmem>>, vector<16x32xbf16>,
    %266 = vector.extract_strided_slice %259 {offsets = [48, 0], sizes = [16, 32], strides = [1, 1]} : vector<144x32xbf16> to vector<16x32xbf16>
    %c16_249 = arith.constant 16 : index
    %c96_250 = arith.constant 96 : index
    %267 = vector.load %arg46[%c16_249, %c96_250] : memref<32x288xbf16, #tpu.memory_space<vmem>>, vector<16x32xbf16>
    tpu.vector_store %arg46[%c16_249, %c96_250], %266 {strides = array<i32>} : memref<32x288xbf16, #tpu.memory_space<vmem>>, vector<16x32xbf16>,
    %268 = vector.extract_strided_slice %259 {offsets = [64, 0], sizes = [16, 32], strides = [1, 1]} : vector<144x32xbf16> to vector<16x32xbf16>
    %c16_251 = arith.constant 16 : index
    %c128_252 = arith.constant 128 : index
    %269 = vector.load %arg46[%c16_251, %c128_252] : memref<32x288xbf16, #tpu.memory_space<vmem>>, vector<16x32xbf16>
    tpu.vector_store %arg46[%c16_251, %c128_252], %268 {strides = array<i32>} : memref<32x288xbf16, #tpu.memory_space<vmem>>, vector<16x32xbf16>,
    %270 = vector.extract_strided_slice %259 {offsets = [80, 0], sizes = [16, 32], strides = [1, 1]} : vector<144x32xbf16> to vector<16x32xbf16>
    %c16_253 = arith.constant 16 : index
    %c160_254 = arith.constant 160 : index
    %271 = vector.load %arg46[%c16_253, %c160_254] : memref<32x288xbf16, #tpu.memory_space<vmem>>, vector<16x32xbf16>
    tpu.vector_store %arg46[%c16_253, %c160_254], %270 {strides = array<i32>} : memref<32x288xbf16, #tpu.memory_space<vmem>>, vector<16x32xbf16>,
    %272 = vector.extract_strided_slice %259 {offsets = [96, 0], sizes = [16, 32], strides = [1, 1]} : vector<144x32xbf16> to vector<16x32xbf16>
    %c16_255 = arith.constant 16 : index
    %c192_256 = arith.constant 192 : index
    %273 = vector.load %arg46[%c16_255, %c192_256] : memref<32x288xbf16, #tpu.memory_space<vmem>>, vector<16x32xbf16>
    tpu.vector_store %arg46[%c16_255, %c192_256], %272 {strides = array<i32>} : memref<32x288xbf16, #tpu.memory_space<vmem>>, vector<16x32xbf16>,
    %274 = vector.extract_strided_slice %259 {offsets = [112, 0], sizes = [16, 32], strides = [1, 1]} : vector<144x32xbf16> to vector<16x32xbf16>
    %c16_257 = arith.constant 16 : index
    %c224_258 = arith.constant 224 : index
    %275 = vector.load %arg46[%c16_257, %c224_258] : memref<32x288xbf16, #tpu.memory_space<vmem>>, vector<16x32xbf16>
    tpu.vector_store %arg46[%c16_257, %c224_258], %274 {strides = array<i32>} : memref<32x288xbf16, #tpu.memory_space<vmem>>, vector<16x32xbf16>,
    %276 = vector.extract_strided_slice %259 {offsets = [128, 0], sizes = [16, 32], strides = [1, 1]} : vector<144x32xbf16> to vector<16x32xbf16>
    %c16_259 = arith.constant 16 : index
    %c256_260 = arith.constant 256 : index
    %277 = vector.load %arg46[%c16_259, %c256_260] : memref<32x288xbf16, #tpu.memory_space<vmem>>, vector<16x32xbf16>
    tpu.vector_store %arg46[%c16_259, %c256_260], %276 {strides = array<i32>} : memref<32x288xbf16, #tpu.memory_space<vmem>>, vector<16x32xbf16>,
    %c0_261 = arith.constant 0 : index
    %c0_262 = arith.constant 0 : index
    %278 = vector.load %arg46[%c0_261, %c0_262] : memref<32x288xbf16, #tpu.memory_space<vmem>>, vector<32x288xbf16>
    %c0_263 = arith.constant 0 : index
    %c0_264 = arith.constant 0 : index
    %279 = vector.load %arg17[%c0_263, %c0_264] : memref<288x64xbf16, #tpu.memory_space<vmem>>, vector<288x64xbf16>
    %cst_265 = arith.constant dense<0.000000e+00> : vector<32x64xf32>
    %280 = tpu.matmul %278, %279, %cst_265 {dimension_numbers = #tpu.dot_dimension_numbers<[1], [0], [0], [1], [0, 0, 1, 1], [], []>} : vector<32x288xbf16>, vector<288x64xbf16>, vector<32x64xf32> -> vector<32x64xf32>
    %c0_266 = arith.constant 0 : index
    %c0_267 = arith.constant 0 : index
    %281 = vector.load %arg18[%c0_266, %c0_267] : memref<1x64xf32, #tpu.memory_space<vmem>>, vector<1x64xf32>
    %282 = vector.broadcast %281 : vector<1x64xf32> to vector<32x64xf32>
    %283 = arith.addf %280, %282 : vector<32x64xf32>
    %cst_268 = arith.constant 0.000000e+00 : f32
    %284 = vector.broadcast %cst_268 : f32 to vector<32x64xf32>
    %285 = arith.maximumf %283, %284 : vector<32x64xf32>
    %286 = arith.truncf %285 : vector<32x64xf32> to vector<32x64xbf16>
    %c0_269 = arith.constant 0 : index
    %c0_270 = arith.constant 0 : index
    %287 = vector.load %arg47[%c0_269, %c0_270] : memref<32x64xbf16, #tpu.memory_space<vmem>>, vector<32x64xbf16>
    tpu.vector_store %arg47[%c0_269, %c0_270], %286 {strides = array<i32>} : memref<32x64xbf16, #tpu.memory_space<vmem>>, vector<32x64xbf16>,
    %c0_271 = arith.constant 0 : index
    %c0_272 = arith.constant 0 : index
    %288 = vector.load %arg13[%c0_271, %c0_272] : memref<144x16xbf16, #tpu.memory_space<vmem>>, vector<144x16xbf16>
    %c0_273 = arith.constant 0 : index
    %c0_274 = arith.constant 0 : index
    %289 = vector.load %arg47[%c0_273, %c0_274] : memref<32x64xbf16, #tpu.memory_space<vmem>>, vector<16x64xbf16>
    %cst_275 = arith.constant dense<0.000000e+00> : vector<144x64xf32>
    %290 = tpu.matmul %288, %289, %cst_275 {dimension_numbers = #tpu.dot_dimension_numbers<[1], [0], [0], [1], [0, 0, 1, 1], [], []>} : vector<144x16xbf16>, vector<16x64xbf16>, vector<144x64xf32> -> vector<144x64xf32>
    %291 = arith.truncf %290 : vector<144x64xf32> to vector<144x64xbf16>
    %292 = vector.extract_strided_slice %291 {offsets = [0, 0], sizes = [16, 64], strides = [1, 1]} : vector<144x64xbf16> to vector<16x64xbf16>
    %c0_276 = arith.constant 0 : index
    %c0_277 = arith.constant 0 : index
    %293 = vector.load %arg48[%c0_276, %c0_277] : memref<32x576xbf16, #tpu.memory_space<vmem>>, vector<16x64xbf16>
    tpu.vector_store %arg48[%c0_276, %c0_277], %292 {strides = array<i32>} : memref<32x576xbf16, #tpu.memory_space<vmem>>, vector<16x64xbf16>,
    %294 = vector.extract_strided_slice %291 {offsets = [16, 0], sizes = [16, 64], strides = [1, 1]} : vector<144x64xbf16> to vector<16x64xbf16>
    %c0_278 = arith.constant 0 : index
    %c64_279 = arith.constant 64 : index
    %295 = vector.load %arg48[%c0_278, %c64_279] : memref<32x576xbf16, #tpu.memory_space<vmem>>, vector<16x64xbf16>
    tpu.vector_store %arg48[%c0_278, %c64_279], %294 {strides = array<i32>} : memref<32x576xbf16, #tpu.memory_space<vmem>>, vector<16x64xbf16>,
    %296 = vector.extract_strided_slice %291 {offsets = [32, 0], sizes = [16, 64], strides = [1, 1]} : vector<144x64xbf16> to vector<16x64xbf16>
    %c0_280 = arith.constant 0 : index
    %c128_281 = arith.constant 128 : index
    %297 = vector.load %arg48[%c0_280, %c128_281] : memref<32x576xbf16, #tpu.memory_space<vmem>>, vector<16x64xbf16>
    tpu.vector_store %arg48[%c0_280, %c128_281], %296 {strides = array<i32>} : memref<32x576xbf16, #tpu.memory_space<vmem>>, vector<16x64xbf16>,
    %298 = vector.extract_strided_slice %291 {offsets = [48, 0], sizes = [16, 64], strides = [1, 1]} : vector<144x64xbf16> to vector<16x64xbf16>
    %c0_282 = arith.constant 0 : index
    %c192_283 = arith.constant 192 : index
    %299 = vector.load %arg48[%c0_282, %c192_283] : memref<32x576xbf16, #tpu.memory_space<vmem>>, vector<16x64xbf16>
    tpu.vector_store %arg48[%c0_282, %c192_283], %298 {strides = array<i32>} : memref<32x576xbf16, #tpu.memory_space<vmem>>, vector<16x64xbf16>,
    %300 = vector.extract_strided_slice %291 {offsets = [64, 0], sizes = [16, 64], strides = [1, 1]} : vector<144x64xbf16> to vector<16x64xbf16>
    %c0_284 = arith.constant 0 : index
    %c256_285 = arith.constant 256 : index
    %301 = vector.load %arg48[%c0_284, %c256_285] : memref<32x576xbf16, #tpu.memory_space<vmem>>, vector<16x64xbf16>
    tpu.vector_store %arg48[%c0_284, %c256_285], %300 {strides = array<i32>} : memref<32x576xbf16, #tpu.memory_space<vmem>>, vector<16x64xbf16>,
    %302 = vector.extract_strided_slice %291 {offsets = [80, 0], sizes = [16, 64], strides = [1, 1]} : vector<144x64xbf16> to vector<16x64xbf16>
    %c0_286 = arith.constant 0 : index
    %c320_287 = arith.constant 320 : index
    %303 = vector.load %arg48[%c0_286, %c320_287] : memref<32x576xbf16, #tpu.memory_space<vmem>>, vector<16x64xbf16>
    tpu.vector_store %arg48[%c0_286, %c320_287], %302 {strides = array<i32>} : memref<32x576xbf16, #tpu.memory_space<vmem>>, vector<16x64xbf16>,
    %304 = vector.extract_strided_slice %291 {offsets = [96, 0], sizes = [16, 64], strides = [1, 1]} : vector<144x64xbf16> to vector<16x64xbf16>
    %c0_288 = arith.constant 0 : index
    %c384_289 = arith.constant 384 : index
    %305 = vector.load %arg48[%c0_288, %c384_289] : memref<32x576xbf16, #tpu.memory_space<vmem>>, vector<16x64xbf16>
    tpu.vector_store %arg48[%c0_288, %c384_289], %304 {strides = array<i32>} : memref<32x576xbf16, #tpu.memory_space<vmem>>, vector<16x64xbf16>,
    %306 = vector.extract_strided_slice %291 {offsets = [112, 0], sizes = [16, 64], strides = [1, 1]} : vector<144x64xbf16> to vector<16x64xbf16>
    %c0_290 = arith.constant 0 : index
    %c448_291 = arith.constant 448 : index
    %307 = vector.load %arg48[%c0_290, %c448_291] : memref<32x576xbf16, #tpu.memory_space<vmem>>, vector<16x64xbf16>
    tpu.vector_store %arg48[%c0_290, %c448_291], %306 {strides = array<i32>} : memref<32x576xbf16, #tpu.memory_space<vmem>>, vector<16x64xbf16>,
    %308 = vector.extract_strided_slice %291 {offsets = [128, 0], sizes = [16, 64], strides = [1, 1]} : vector<144x64xbf16> to vector<16x64xbf16>
    %c0_292 = arith.constant 0 : index
    %c512_293 = arith.constant 512 : index
    %309 = vector.load %arg48[%c0_292, %c512_293] : memref<32x576xbf16, #tpu.memory_space<vmem>>, vector<16x64xbf16>
    tpu.vector_store %arg48[%c0_292, %c512_293], %308 {strides = array<i32>} : memref<32x576xbf16, #tpu.memory_space<vmem>>, vector<16x64xbf16>,
    %c16_294 = arith.constant 16 : index
    %c0_295 = arith.constant 0 : index
    %310 = vector.load %arg47[%c16_294, %c0_295] : memref<32x64xbf16, #tpu.memory_space<vmem>>, vector<16x64xbf16>
    %cst_296 = arith.constant dense<0.000000e+00> : vector<144x64xf32>
    %311 = tpu.matmul %288, %310, %cst_296 {dimension_numbers = #tpu.dot_dimension_numbers<[1], [0], [0], [1], [0, 0, 1, 1], [], []>} : vector<144x16xbf16>, vector<16x64xbf16>, vector<144x64xf32> -> vector<144x64xf32>
    %312 = arith.truncf %311 : vector<144x64xf32> to vector<144x64xbf16>
    %313 = vector.extract_strided_slice %312 {offsets = [0, 0], sizes = [16, 64], strides = [1, 1]} : vector<144x64xbf16> to vector<16x64xbf16>
    %c16_297 = arith.constant 16 : index
    %c0_298 = arith.constant 0 : index
    %314 = vector.load %arg48[%c16_297, %c0_298] : memref<32x576xbf16, #tpu.memory_space<vmem>>, vector<16x64xbf16>
    tpu.vector_store %arg48[%c16_297, %c0_298], %313 {strides = array<i32>} : memref<32x576xbf16, #tpu.memory_space<vmem>>, vector<16x64xbf16>,
    %315 = vector.extract_strided_slice %312 {offsets = [16, 0], sizes = [16, 64], strides = [1, 1]} : vector<144x64xbf16> to vector<16x64xbf16>
    %c16_299 = arith.constant 16 : index
    %c64_300 = arith.constant 64 : index
    %316 = vector.load %arg48[%c16_299, %c64_300] : memref<32x576xbf16, #tpu.memory_space<vmem>>, vector<16x64xbf16>
    tpu.vector_store %arg48[%c16_299, %c64_300], %315 {strides = array<i32>} : memref<32x576xbf16, #tpu.memory_space<vmem>>, vector<16x64xbf16>,
    %317 = vector.extract_strided_slice %312 {offsets = [32, 0], sizes = [16, 64], strides = [1, 1]} : vector<144x64xbf16> to vector<16x64xbf16>
    %c16_301 = arith.constant 16 : index
    %c128_302 = arith.constant 128 : index
    %318 = vector.load %arg48[%c16_301, %c128_302] : memref<32x576xbf16, #tpu.memory_space<vmem>>, vector<16x64xbf16>
    tpu.vector_store %arg48[%c16_301, %c128_302], %317 {strides = array<i32>} : memref<32x576xbf16, #tpu.memory_space<vmem>>, vector<16x64xbf16>,
    %319 = vector.extract_strided_slice %312 {offsets = [48, 0], sizes = [16, 64], strides = [1, 1]} : vector<144x64xbf16> to vector<16x64xbf16>
    %c16_303 = arith.constant 16 : index
    %c192_304 = arith.constant 192 : index
    %320 = vector.load %arg48[%c16_303, %c192_304] : memref<32x576xbf16, #tpu.memory_space<vmem>>, vector<16x64xbf16>
    tpu.vector_store %arg48[%c16_303, %c192_304], %319 {strides = array<i32>} : memref<32x576xbf16, #tpu.memory_space<vmem>>, vector<16x64xbf16>,
    %321 = vector.extract_strided_slice %312 {offsets = [64, 0], sizes = [16, 64], strides = [1, 1]} : vector<144x64xbf16> to vector<16x64xbf16>
    %c16_305 = arith.constant 16 : index
    %c256_306 = arith.constant 256 : index
    %322 = vector.load %arg48[%c16_305, %c256_306] : memref<32x576xbf16, #tpu.memory_space<vmem>>, vector<16x64xbf16>
    tpu.vector_store %arg48[%c16_305, %c256_306], %321 {strides = array<i32>} : memref<32x576xbf16, #tpu.memory_space<vmem>>, vector<16x64xbf16>,
    %323 = vector.extract_strided_slice %312 {offsets = [80, 0], sizes = [16, 64], strides = [1, 1]} : vector<144x64xbf16> to vector<16x64xbf16>
    %c16_307 = arith.constant 16 : index
    %c320_308 = arith.constant 320 : index
    %324 = vector.load %arg48[%c16_307, %c320_308] : memref<32x576xbf16, #tpu.memory_space<vmem>>, vector<16x64xbf16>
    tpu.vector_store %arg48[%c16_307, %c320_308], %323 {strides = array<i32>} : memref<32x576xbf16, #tpu.memory_space<vmem>>, vector<16x64xbf16>,
    %325 = vector.extract_strided_slice %312 {offsets = [96, 0], sizes = [16, 64], strides = [1, 1]} : vector<144x64xbf16> to vector<16x64xbf16>
    %c16_309 = arith.constant 16 : index
    %c384_310 = arith.constant 384 : index
    %326 = vector.load %arg48[%c16_309, %c384_310] : memref<32x576xbf16, #tpu.memory_space<vmem>>, vector<16x64xbf16>
    tpu.vector_store %arg48[%c16_309, %c384_310], %325 {strides = array<i32>} : memref<32x576xbf16, #tpu.memory_space<vmem>>, vector<16x64xbf16>,
    %327 = vector.extract_strided_slice %312 {offsets = [112, 0], sizes = [16, 64], strides = [1, 1]} : vector<144x64xbf16> to vector<16x64xbf16>
    %c16_311 = arith.constant 16 : index
    %c448_312 = arith.constant 448 : index
    %328 = vector.load %arg48[%c16_311, %c448_312] : memref<32x576xbf16, #tpu.memory_space<vmem>>, vector<16x64xbf16>
    tpu.vector_store %arg48[%c16_311, %c448_312], %327 {strides = array<i32>} : memref<32x576xbf16, #tpu.memory_space<vmem>>, vector<16x64xbf16>,
    %329 = vector.extract_strided_slice %312 {offsets = [128, 0], sizes = [16, 64], strides = [1, 1]} : vector<144x64xbf16> to vector<16x64xbf16>
    %c16_313 = arith.constant 16 : index
    %c512_314 = arith.constant 512 : index
    %330 = vector.load %arg48[%c16_313, %c512_314] : memref<32x576xbf16, #tpu.memory_space<vmem>>, vector<16x64xbf16>
    tpu.vector_store %arg48[%c16_313, %c512_314], %329 {strides = array<i32>} : memref<32x576xbf16, #tpu.memory_space<vmem>>, vector<16x64xbf16>,
    %c0_315 = arith.constant 0 : index
    %c0_316 = arith.constant 0 : index
    %331 = vector.load %arg48[%c0_315, %c0_316] : memref<32x576xbf16, #tpu.memory_space<vmem>>, vector<32x576xbf16>
    %c0_317 = arith.constant 0 : index
    %c0_318 = arith.constant 0 : index
    %332 = vector.load %arg19[%c0_317, %c0_318] : memref<576x32xbf16, #tpu.memory_space<vmem>>, vector<576x32xbf16>
    %cst_319 = arith.constant dense<0.000000e+00> : vector<32x32xf32>
    %333 = tpu.matmul %331, %332, %cst_319 {dimension_numbers = #tpu.dot_dimension_numbers<[1], [0], [0], [1], [0, 0, 1, 1], [], []>} : vector<32x576xbf16>, vector<576x32xbf16>, vector<32x32xf32> -> vector<32x32xf32>
    %c0_320 = arith.constant 0 : index
    %c0_321 = arith.constant 0 : index
    %334 = vector.load %arg20[%c0_320, %c0_321] : memref<1x32xf32, #tpu.memory_space<vmem>>, vector<1x32xf32>
    %335 = vector.broadcast %334 : vector<1x32xf32> to vector<32x32xf32>
    %336 = arith.addf %333, %335 : vector<32x32xf32>
    %337 = arith.truncf %336 : vector<32x32xf32> to vector<32x32xbf16>
    %c0_322 = arith.constant 0 : index
    %c0_323 = arith.constant 0 : index
    %338 = vector.load %arg21[%c0_322, %c0_323] : memref<32x32xbf16, #tpu.memory_space<vmem>>, vector<32x32xbf16>
    %cst_324 = arith.constant dense<0.000000e+00> : vector<32x32xf32>
    %339 = tpu.matmul %337, %338, %cst_324 {dimension_numbers = #tpu.dot_dimension_numbers<[1], [0], [0], [1], [0, 0, 1, 1], [], []>} : vector<32x32xbf16>, vector<32x32xbf16>, vector<32x32xf32> -> vector<32x32xf32>
    %c0_325 = arith.constant 0 : index
    %c0_326 = arith.constant 0 : index
    %340 = vector.load %arg22[%c0_325, %c0_326] : memref<1x32xf32, #tpu.memory_space<vmem>>, vector<1x32xf32>
    %341 = vector.broadcast %340 : vector<1x32xf32> to vector<32x32xf32>
    %342 = arith.addf %339, %341 : vector<32x32xf32>
    %cst_327 = arith.constant 0.000000e+00 : f32
    %343 = vector.broadcast %cst_327 : f32 to vector<32x32xf32>
    %344 = arith.maximumf %342, %343 : vector<32x32xf32>
    %345 = vector.extract_strided_slice %344 {offsets = [0, 0], sizes = [1, 32], strides = [1, 1]} : vector<32x32xf32> to vector<1x32xf32>
    %c0_328 = arith.constant 0 : index
    %c32_329 = arith.constant 32 : index
    %346 = vector.load %arg53[%c0_328, %c32_329] : memref<2x96xf32, #tpu.memory_space<vmem>>, vector<1x32xf32>
    tpu.vector_store %arg53[%c0_328, %c32_329], %345 {strides = array<i32>} : memref<2x96xf32, #tpu.memory_space<vmem>>, vector<1x32xf32>,
    %347 = vector.extract_strided_slice %344 {offsets = [16, 0], sizes = [1, 32], strides = [1, 1]} : vector<32x32xf32> to vector<1x32xf32>
    %c1_330 = arith.constant 1 : index
    %c32_331 = arith.constant 32 : index
    %348 = vector.load %arg53[%c1_330, %c32_331] : memref<2x96xf32, #tpu.memory_space<vmem>>, vector<1x32xf32>
    tpu.vector_store %arg53[%c1_330, %c32_331], %347 {strides = array<i32>} : memref<2x96xf32, #tpu.memory_space<vmem>>, vector<1x32xf32>,
    %c0_332 = arith.constant 0 : index
    %c0_333 = arith.constant 0 : index
    %349 = vector.load %arg23[%c0_332, %c0_333] : memref<128x512xbf16, #tpu.memory_space<vmem>>, vector<128x512xbf16>
    %c0_334 = arith.constant 0 : index
    %c0_335 = arith.constant 0 : index
    %350 = vector.load %arg24[%c0_334, %c0_335] : memref<512x32xbf16, #tpu.memory_space<vmem>>, vector<512x32xbf16>
    %cst_336 = arith.constant dense<0.000000e+00> : vector<128x32xf32>
    %351 = tpu.matmul %349, %350, %cst_336 {dimension_numbers = #tpu.dot_dimension_numbers<[1], [0], [0], [1], [0, 0, 1, 1], [], []>} : vector<128x512xbf16>, vector<512x32xbf16>, vector<128x32xf32> -> vector<128x32xf32>
    %c0_337 = arith.constant 0 : index
    %c0_338 = arith.constant 0 : index
    %352 = vector.load %arg25[%c0_337, %c0_338] : memref<1x32xf32, #tpu.memory_space<vmem>>, vector<1x32xf32>
    %353 = vector.broadcast %352 : vector<1x32xf32> to vector<128x32xf32>
    %354 = arith.addf %351, %353 : vector<128x32xf32>
    %cst_339 = arith.constant 0.000000e+00 : f32
    %355 = vector.broadcast %cst_339 : f32 to vector<128x32xf32>
    %356 = arith.maximumf %354, %355 : vector<128x32xf32>
    %357 = arith.truncf %356 : vector<128x32xf32> to vector<128x32xbf16>
    %c0_340 = arith.constant 0 : index
    %c0_341 = arith.constant 0 : index
    %358 = vector.load %arg49[%c0_340, %c0_341] : memref<128x32xbf16, #tpu.memory_space<vmem>>, vector<128x32xbf16>
    tpu.vector_store %arg49[%c0_340, %c0_341], %357 {strides = array<i32>} : memref<128x32xbf16, #tpu.memory_space<vmem>>, vector<128x32xbf16>,
    %c0_342 = arith.constant 0 : index
    %c0_343 = arith.constant 0 : index
    %359 = vector.load %arg12[%c0_342, %c0_343] : memref<144x64xbf16, #tpu.memory_space<vmem>>, vector<144x64xbf16>
    %c0_344 = arith.constant 0 : index
    %c0_345 = arith.constant 0 : index
    %360 = vector.load %arg49[%c0_344, %c0_345] : memref<128x32xbf16, #tpu.memory_space<vmem>>, vector<64x32xbf16>
    %cst_346 = arith.constant dense<0.000000e+00> : vector<144x32xf32>
    %361 = tpu.matmul %359, %360, %cst_346 {dimension_numbers = #tpu.dot_dimension_numbers<[1], [0], [0], [1], [0, 0, 1, 1], [], []>} : vector<144x64xbf16>, vector<64x32xbf16>, vector<144x32xf32> -> vector<144x32xf32>
    %362 = arith.truncf %361 : vector<144x32xf32> to vector<144x32xbf16>
    %363 = vector.extract_strided_slice %362 {offsets = [0, 0], sizes = [16, 32], strides = [1, 1]} : vector<144x32xbf16> to vector<16x32xbf16>
    %c0_347 = arith.constant 0 : index
    %c0_348 = arith.constant 0 : index
    %364 = vector.load %arg50[%c0_347, %c0_348] : memref<32x288xbf16, #tpu.memory_space<vmem>>, vector<16x32xbf16>
    tpu.vector_store %arg50[%c0_347, %c0_348], %363 {strides = array<i32>} : memref<32x288xbf16, #tpu.memory_space<vmem>>, vector<16x32xbf16>,
    %365 = vector.extract_strided_slice %362 {offsets = [16, 0], sizes = [16, 32], strides = [1, 1]} : vector<144x32xbf16> to vector<16x32xbf16>
    %c0_349 = arith.constant 0 : index
    %c32_350 = arith.constant 32 : index
    %366 = vector.load %arg50[%c0_349, %c32_350] : memref<32x288xbf16, #tpu.memory_space<vmem>>, vector<16x32xbf16>
    tpu.vector_store %arg50[%c0_349, %c32_350], %365 {strides = array<i32>} : memref<32x288xbf16, #tpu.memory_space<vmem>>, vector<16x32xbf16>,
    %367 = vector.extract_strided_slice %362 {offsets = [32, 0], sizes = [16, 32], strides = [1, 1]} : vector<144x32xbf16> to vector<16x32xbf16>
    %c0_351 = arith.constant 0 : index
    %c64_352 = arith.constant 64 : index
    %368 = vector.load %arg50[%c0_351, %c64_352] : memref<32x288xbf16, #tpu.memory_space<vmem>>, vector<16x32xbf16>
    tpu.vector_store %arg50[%c0_351, %c64_352], %367 {strides = array<i32>} : memref<32x288xbf16, #tpu.memory_space<vmem>>, vector<16x32xbf16>,
    %369 = vector.extract_strided_slice %362 {offsets = [48, 0], sizes = [16, 32], strides = [1, 1]} : vector<144x32xbf16> to vector<16x32xbf16>
    %c0_353 = arith.constant 0 : index
    %c96_354 = arith.constant 96 : index
    %370 = vector.load %arg50[%c0_353, %c96_354] : memref<32x288xbf16, #tpu.memory_space<vmem>>, vector<16x32xbf16>
    tpu.vector_store %arg50[%c0_353, %c96_354], %369 {strides = array<i32>} : memref<32x288xbf16, #tpu.memory_space<vmem>>, vector<16x32xbf16>,
    %371 = vector.extract_strided_slice %362 {offsets = [64, 0], sizes = [16, 32], strides = [1, 1]} : vector<144x32xbf16> to vector<16x32xbf16>
    %c0_355 = arith.constant 0 : index
    %c128_356 = arith.constant 128 : index
    %372 = vector.load %arg50[%c0_355, %c128_356] : memref<32x288xbf16, #tpu.memory_space<vmem>>, vector<16x32xbf16>
    tpu.vector_store %arg50[%c0_355, %c128_356], %371 {strides = array<i32>} : memref<32x288xbf16, #tpu.memory_space<vmem>>, vector<16x32xbf16>,
    %373 = vector.extract_strided_slice %362 {offsets = [80, 0], sizes = [16, 32], strides = [1, 1]} : vector<144x32xbf16> to vector<16x32xbf16>
    %c0_357 = arith.constant 0 : index
    %c160_358 = arith.constant 160 : index
    %374 = vector.load %arg50[%c0_357, %c160_358] : memref<32x288xbf16, #tpu.memory_space<vmem>>, vector<16x32xbf16>
    tpu.vector_store %arg50[%c0_357, %c160_358], %373 {strides = array<i32>} : memref<32x288xbf16, #tpu.memory_space<vmem>>, vector<16x32xbf16>,
    %375 = vector.extract_strided_slice %362 {offsets = [96, 0], sizes = [16, 32], strides = [1, 1]} : vector<144x32xbf16> to vector<16x32xbf16>
    %c0_359 = arith.constant 0 : index
    %c192_360 = arith.constant 192 : index
    %376 = vector.load %arg50[%c0_359, %c192_360] : memref<32x288xbf16, #tpu.memory_space<vmem>>, vector<16x32xbf16>
    tpu.vector_store %arg50[%c0_359, %c192_360], %375 {strides = array<i32>} : memref<32x288xbf16, #tpu.memory_space<vmem>>, vector<16x32xbf16>,
    %377 = vector.extract_strided_slice %362 {offsets = [112, 0], sizes = [16, 32], strides = [1, 1]} : vector<144x32xbf16> to vector<16x32xbf16>
    %c0_361 = arith.constant 0 : index
    %c224_362 = arith.constant 224 : index
    %378 = vector.load %arg50[%c0_361, %c224_362] : memref<32x288xbf16, #tpu.memory_space<vmem>>, vector<16x32xbf16>
    tpu.vector_store %arg50[%c0_361, %c224_362], %377 {strides = array<i32>} : memref<32x288xbf16, #tpu.memory_space<vmem>>, vector<16x32xbf16>,
    %379 = vector.extract_strided_slice %362 {offsets = [128, 0], sizes = [16, 32], strides = [1, 1]} : vector<144x32xbf16> to vector<16x32xbf16>
    %c0_363 = arith.constant 0 : index
    %c256_364 = arith.constant 256 : index
    %380 = vector.load %arg50[%c0_363, %c256_364] : memref<32x288xbf16, #tpu.memory_space<vmem>>, vector<16x32xbf16>
    tpu.vector_store %arg50[%c0_363, %c256_364], %379 {strides = array<i32>} : memref<32x288xbf16, #tpu.memory_space<vmem>>, vector<16x32xbf16>,
    %c64_365 = arith.constant 64 : index
    %c0_366 = arith.constant 0 : index
    %381 = vector.load %arg49[%c64_365, %c0_366] : memref<128x32xbf16, #tpu.memory_space<vmem>>, vector<64x32xbf16>
    %cst_367 = arith.constant dense<0.000000e+00> : vector<144x32xf32>
    %382 = tpu.matmul %359, %381, %cst_367 {dimension_numbers = #tpu.dot_dimension_numbers<[1], [0], [0], [1], [0, 0, 1, 1], [], []>} : vector<144x64xbf16>, vector<64x32xbf16>, vector<144x32xf32> -> vector<144x32xf32>
    %383 = arith.truncf %382 : vector<144x32xf32> to vector<144x32xbf16>
    %384 = vector.extract_strided_slice %383 {offsets = [0, 0], sizes = [16, 32], strides = [1, 1]} : vector<144x32xbf16> to vector<16x32xbf16>
    %c16_368 = arith.constant 16 : index
    %c0_369 = arith.constant 0 : index
    %385 = vector.load %arg50[%c16_368, %c0_369] : memref<32x288xbf16, #tpu.memory_space<vmem>>, vector<16x32xbf16>
    tpu.vector_store %arg50[%c16_368, %c0_369], %384 {strides = array<i32>} : memref<32x288xbf16, #tpu.memory_space<vmem>>, vector<16x32xbf16>,
    %386 = vector.extract_strided_slice %383 {offsets = [16, 0], sizes = [16, 32], strides = [1, 1]} : vector<144x32xbf16> to vector<16x32xbf16>
    %c16_370 = arith.constant 16 : index
    %c32_371 = arith.constant 32 : index
    %387 = vector.load %arg50[%c16_370, %c32_371] : memref<32x288xbf16, #tpu.memory_space<vmem>>, vector<16x32xbf16>
    tpu.vector_store %arg50[%c16_370, %c32_371], %386 {strides = array<i32>} : memref<32x288xbf16, #tpu.memory_space<vmem>>, vector<16x32xbf16>,
    %388 = vector.extract_strided_slice %383 {offsets = [32, 0], sizes = [16, 32], strides = [1, 1]} : vector<144x32xbf16> to vector<16x32xbf16>
    %c16_372 = arith.constant 16 : index
    %c64_373 = arith.constant 64 : index
    %389 = vector.load %arg50[%c16_372, %c64_373] : memref<32x288xbf16, #tpu.memory_space<vmem>>, vector<16x32xbf16>
    tpu.vector_store %arg50[%c16_372, %c64_373], %388 {strides = array<i32>} : memref<32x288xbf16, #tpu.memory_space<vmem>>, vector<16x32xbf16>,
    %390 = vector.extract_strided_slice %383 {offsets = [48, 0], sizes = [16, 32], strides = [1, 1]} : vector<144x32xbf16> to vector<16x32xbf16>
    %c16_374 = arith.constant 16 : index
    %c96_375 = arith.constant 96 : index
    %391 = vector.load %arg50[%c16_374, %c96_375] : memref<32x288xbf16, #tpu.memory_space<vmem>>, vector<16x32xbf16>
    tpu.vector_store %arg50[%c16_374, %c96_375], %390 {strides = array<i32>} : memref<32x288xbf16, #tpu.memory_space<vmem>>, vector<16x32xbf16>,
    %392 = vector.extract_strided_slice %383 {offsets = [64, 0], sizes = [16, 32], strides = [1, 1]} : vector<144x32xbf16> to vector<16x32xbf16>
    %c16_376 = arith.constant 16 : index
    %c128_377 = arith.constant 128 : index
    %393 = vector.load %arg50[%c16_376, %c128_377] : memref<32x288xbf16, #tpu.memory_space<vmem>>, vector<16x32xbf16>
    tpu.vector_store %arg50[%c16_376, %c128_377], %392 {strides = array<i32>} : memref<32x288xbf16, #tpu.memory_space<vmem>>, vector<16x32xbf16>,
    %394 = vector.extract_strided_slice %383 {offsets = [80, 0], sizes = [16, 32], strides = [1, 1]} : vector<144x32xbf16> to vector<16x32xbf16>
    %c16_378 = arith.constant 16 : index
    %c160_379 = arith.constant 160 : index
    %395 = vector.load %arg50[%c16_378, %c160_379] : memref<32x288xbf16, #tpu.memory_space<vmem>>, vector<16x32xbf16>
    tpu.vector_store %arg50[%c16_378, %c160_379], %394 {strides = array<i32>} : memref<32x288xbf16, #tpu.memory_space<vmem>>, vector<16x32xbf16>,
    %396 = vector.extract_strided_slice %383 {offsets = [96, 0], sizes = [16, 32], strides = [1, 1]} : vector<144x32xbf16> to vector<16x32xbf16>
    %c16_380 = arith.constant 16 : index
    %c192_381 = arith.constant 192 : index
    %397 = vector.load %arg50[%c16_380, %c192_381] : memref<32x288xbf16, #tpu.memory_space<vmem>>, vector<16x32xbf16>
    tpu.vector_store %arg50[%c16_380, %c192_381], %396 {strides = array<i32>} : memref<32x288xbf16, #tpu.memory_space<vmem>>, vector<16x32xbf16>,
    %398 = vector.extract_strided_slice %383 {offsets = [112, 0], sizes = [16, 32], strides = [1, 1]} : vector<144x32xbf16> to vector<16x32xbf16>
    %c16_382 = arith.constant 16 : index
    %c224_383 = arith.constant 224 : index
    %399 = vector.load %arg50[%c16_382, %c224_383] : memref<32x288xbf16, #tpu.memory_space<vmem>>, vector<16x32xbf16>
    tpu.vector_store %arg50[%c16_382, %c224_383], %398 {strides = array<i32>} : memref<32x288xbf16, #tpu.memory_space<vmem>>, vector<16x32xbf16>,
    %400 = vector.extract_strided_slice %383 {offsets = [128, 0], sizes = [16, 32], strides = [1, 1]} : vector<144x32xbf16> to vector<16x32xbf16>
    %c16_384 = arith.constant 16 : index
    %c256_385 = arith.constant 256 : index
    %401 = vector.load %arg50[%c16_384, %c256_385] : memref<32x288xbf16, #tpu.memory_space<vmem>>, vector<16x32xbf16>
    tpu.vector_store %arg50[%c16_384, %c256_385], %400 {strides = array<i32>} : memref<32x288xbf16, #tpu.memory_space<vmem>>, vector<16x32xbf16>,
    %c0_386 = arith.constant 0 : index
    %c0_387 = arith.constant 0 : index
    %402 = vector.load %arg50[%c0_386, %c0_387] : memref<32x288xbf16, #tpu.memory_space<vmem>>, vector<32x288xbf16>
    %c0_388 = arith.constant 0 : index
    %c0_389 = arith.constant 0 : index
    %403 = vector.load %arg26[%c0_388, %c0_389] : memref<288x64xbf16, #tpu.memory_space<vmem>>, vector<288x64xbf16>
    %cst_390 = arith.constant dense<0.000000e+00> : vector<32x64xf32>
    %404 = tpu.matmul %402, %403, %cst_390 {dimension_numbers = #tpu.dot_dimension_numbers<[1], [0], [0], [1], [0, 0, 1, 1], [], []>} : vector<32x288xbf16>, vector<288x64xbf16>, vector<32x64xf32> -> vector<32x64xf32>
    %c0_391 = arith.constant 0 : index
    %c0_392 = arith.constant 0 : index
    %405 = vector.load %arg27[%c0_391, %c0_392] : memref<1x64xf32, #tpu.memory_space<vmem>>, vector<1x64xf32>
    %406 = vector.broadcast %405 : vector<1x64xf32> to vector<32x64xf32>
    %407 = arith.addf %404, %406 : vector<32x64xf32>
    %cst_393 = arith.constant 0.000000e+00 : f32
    %408 = vector.broadcast %cst_393 : f32 to vector<32x64xf32>
    %409 = arith.maximumf %407, %408 : vector<32x64xf32>
    %410 = arith.truncf %409 : vector<32x64xf32> to vector<32x64xbf16>
    %c0_394 = arith.constant 0 : index
    %c0_395 = arith.constant 0 : index
    %411 = vector.load %arg51[%c0_394, %c0_395] : memref<32x64xbf16, #tpu.memory_space<vmem>>, vector<32x64xbf16>
    tpu.vector_store %arg51[%c0_394, %c0_395], %410 {strides = array<i32>} : memref<32x64xbf16, #tpu.memory_space<vmem>>, vector<32x64xbf16>,
    %c0_396 = arith.constant 0 : index
    %c0_397 = arith.constant 0 : index
    %412 = vector.load %arg13[%c0_396, %c0_397] : memref<144x16xbf16, #tpu.memory_space<vmem>>, vector<144x16xbf16>
    %c0_398 = arith.constant 0 : index
    %c0_399 = arith.constant 0 : index
    %413 = vector.load %arg51[%c0_398, %c0_399] : memref<32x64xbf16, #tpu.memory_space<vmem>>, vector<16x64xbf16>
    %cst_400 = arith.constant dense<0.000000e+00> : vector<144x64xf32>
    %414 = tpu.matmul %412, %413, %cst_400 {dimension_numbers = #tpu.dot_dimension_numbers<[1], [0], [0], [1], [0, 0, 1, 1], [], []>} : vector<144x16xbf16>, vector<16x64xbf16>, vector<144x64xf32> -> vector<144x64xf32>
    %415 = arith.truncf %414 : vector<144x64xf32> to vector<144x64xbf16>
    %416 = vector.extract_strided_slice %415 {offsets = [0, 0], sizes = [16, 64], strides = [1, 1]} : vector<144x64xbf16> to vector<16x64xbf16>
    %c0_401 = arith.constant 0 : index
    %c0_402 = arith.constant 0 : index
    %417 = vector.load %arg52[%c0_401, %c0_402] : memref<32x576xbf16, #tpu.memory_space<vmem>>, vector<16x64xbf16>
    tpu.vector_store %arg52[%c0_401, %c0_402], %416 {strides = array<i32>} : memref<32x576xbf16, #tpu.memory_space<vmem>>, vector<16x64xbf16>,
    %418 = vector.extract_strided_slice %415 {offsets = [16, 0], sizes = [16, 64], strides = [1, 1]} : vector<144x64xbf16> to vector<16x64xbf16>
    %c0_403 = arith.constant 0 : index
    %c64_404 = arith.constant 64 : index
    %419 = vector.load %arg52[%c0_403, %c64_404] : memref<32x576xbf16, #tpu.memory_space<vmem>>, vector<16x64xbf16>
    tpu.vector_store %arg52[%c0_403, %c64_404], %418 {strides = array<i32>} : memref<32x576xbf16, #tpu.memory_space<vmem>>, vector<16x64xbf16>,
    %420 = vector.extract_strided_slice %415 {offsets = [32, 0], sizes = [16, 64], strides = [1, 1]} : vector<144x64xbf16> to vector<16x64xbf16>
    %c0_405 = arith.constant 0 : index
    %c128_406 = arith.constant 128 : index
    %421 = vector.load %arg52[%c0_405, %c128_406] : memref<32x576xbf16, #tpu.memory_space<vmem>>, vector<16x64xbf16>
    tpu.vector_store %arg52[%c0_405, %c128_406], %420 {strides = array<i32>} : memref<32x576xbf16, #tpu.memory_space<vmem>>, vector<16x64xbf16>,
    %422 = vector.extract_strided_slice %415 {offsets = [48, 0], sizes = [16, 64], strides = [1, 1]} : vector<144x64xbf16> to vector<16x64xbf16>
    %c0_407 = arith.constant 0 : index
    %c192_408 = arith.constant 192 : index
    %423 = vector.load %arg52[%c0_407, %c192_408] : memref<32x576xbf16, #tpu.memory_space<vmem>>, vector<16x64xbf16>
    tpu.vector_store %arg52[%c0_407, %c192_408], %422 {strides = array<i32>} : memref<32x576xbf16, #tpu.memory_space<vmem>>, vector<16x64xbf16>,
    %424 = vector.extract_strided_slice %415 {offsets = [64, 0], sizes = [16, 64], strides = [1, 1]} : vector<144x64xbf16> to vector<16x64xbf16>
    %c0_409 = arith.constant 0 : index
    %c256_410 = arith.constant 256 : index
    %425 = vector.load %arg52[%c0_409, %c256_410] : memref<32x576xbf16, #tpu.memory_space<vmem>>, vector<16x64xbf16>
    tpu.vector_store %arg52[%c0_409, %c256_410], %424 {strides = array<i32>} : memref<32x576xbf16, #tpu.memory_space<vmem>>, vector<16x64xbf16>,
    %426 = vector.extract_strided_slice %415 {offsets = [80, 0], sizes = [16, 64], strides = [1, 1]} : vector<144x64xbf16> to vector<16x64xbf16>
    %c0_411 = arith.constant 0 : index
    %c320_412 = arith.constant 320 : index
    %427 = vector.load %arg52[%c0_411, %c320_412] : memref<32x576xbf16, #tpu.memory_space<vmem>>, vector<16x64xbf16>
    tpu.vector_store %arg52[%c0_411, %c320_412], %426 {strides = array<i32>} : memref<32x576xbf16, #tpu.memory_space<vmem>>, vector<16x64xbf16>,
    %428 = vector.extract_strided_slice %415 {offsets = [96, 0], sizes = [16, 64], strides = [1, 1]} : vector<144x64xbf16> to vector<16x64xbf16>
    %c0_413 = arith.constant 0 : index
    %c384_414 = arith.constant 384 : index
    %429 = vector.load %arg52[%c0_413, %c384_414] : memref<32x576xbf16, #tpu.memory_space<vmem>>, vector<16x64xbf16>
    tpu.vector_store %arg52[%c0_413, %c384_414], %428 {strides = array<i32>} : memref<32x576xbf16, #tpu.memory_space<vmem>>, vector<16x64xbf16>,
    %430 = vector.extract_strided_slice %415 {offsets = [112, 0], sizes = [16, 64], strides = [1, 1]} : vector<144x64xbf16> to vector<16x64xbf16>
    %c0_415 = arith.constant 0 : index
    %c448_416 = arith.constant 448 : index
    %431 = vector.load %arg52[%c0_415, %c448_416] : memref<32x576xbf16, #tpu.memory_space<vmem>>, vector<16x64xbf16>
    tpu.vector_store %arg52[%c0_415, %c448_416], %430 {strides = array<i32>} : memref<32x576xbf16, #tpu.memory_space<vmem>>, vector<16x64xbf16>,
    %432 = vector.extract_strided_slice %415 {offsets = [128, 0], sizes = [16, 64], strides = [1, 1]} : vector<144x64xbf16> to vector<16x64xbf16>
    %c0_417 = arith.constant 0 : index
    %c512_418 = arith.constant 512 : index
    %433 = vector.load %arg52[%c0_417, %c512_418] : memref<32x576xbf16, #tpu.memory_space<vmem>>, vector<16x64xbf16>
    tpu.vector_store %arg52[%c0_417, %c512_418], %432 {strides = array<i32>} : memref<32x576xbf16, #tpu.memory_space<vmem>>, vector<16x64xbf16>,
    %c16_419 = arith.constant 16 : index
    %c0_420 = arith.constant 0 : index
    %434 = vector.load %arg51[%c16_419, %c0_420] : memref<32x64xbf16, #tpu.memory_space<vmem>>, vector<16x64xbf16>
    %cst_421 = arith.constant dense<0.000000e+00> : vector<144x64xf32>
    %435 = tpu.matmul %412, %434, %cst_421 {dimension_numbers = #tpu.dot_dimension_numbers<[1], [0], [0], [1], [0, 0, 1, 1], [], []>} : vector<144x16xbf16>, vector<16x64xbf16>, vector<144x64xf32> -> vector<144x64xf32>
    %436 = arith.truncf %435 : vector<144x64xf32> to vector<144x64xbf16>
    %437 = vector.extract_strided_slice %436 {offsets = [0, 0], sizes = [16, 64], strides = [1, 1]} : vector<144x64xbf16> to vector<16x64xbf16>
    %c16_422 = arith.constant 16 : index
    %c0_423 = arith.constant 0 : index
    %438 = vector.load %arg52[%c16_422, %c0_423] : memref<32x576xbf16, #tpu.memory_space<vmem>>, vector<16x64xbf16>
    tpu.vector_store %arg52[%c16_422, %c0_423], %437 {strides = array<i32>} : memref<32x576xbf16, #tpu.memory_space<vmem>>, vector<16x64xbf16>,
    %439 = vector.extract_strided_slice %436 {offsets = [16, 0], sizes = [16, 64], strides = [1, 1]} : vector<144x64xbf16> to vector<16x64xbf16>
    %c16_424 = arith.constant 16 : index
    %c64_425 = arith.constant 64 : index
    %440 = vector.load %arg52[%c16_424, %c64_425] : memref<32x576xbf16, #tpu.memory_space<vmem>>, vector<16x64xbf16>
    tpu.vector_store %arg52[%c16_424, %c64_425], %439 {strides = array<i32>} : memref<32x576xbf16, #tpu.memory_space<vmem>>, vector<16x64xbf16>,
    %441 = vector.extract_strided_slice %436 {offsets = [32, 0], sizes = [16, 64], strides = [1, 1]} : vector<144x64xbf16> to vector<16x64xbf16>
    %c16_426 = arith.constant 16 : index
    %c128_427 = arith.constant 128 : index
    %442 = vector.load %arg52[%c16_426, %c128_427] : memref<32x576xbf16, #tpu.memory_space<vmem>>, vector<16x64xbf16>
    tpu.vector_store %arg52[%c16_426, %c128_427], %441 {strides = array<i32>} : memref<32x576xbf16, #tpu.memory_space<vmem>>, vector<16x64xbf16>,
    %443 = vector.extract_strided_slice %436 {offsets = [48, 0], sizes = [16, 64], strides = [1, 1]} : vector<144x64xbf16> to vector<16x64xbf16>
    %c16_428 = arith.constant 16 : index
    %c192_429 = arith.constant 192 : index
    %444 = vector.load %arg52[%c16_428, %c192_429] : memref<32x576xbf16, #tpu.memory_space<vmem>>, vector<16x64xbf16>
    tpu.vector_store %arg52[%c16_428, %c192_429], %443 {strides = array<i32>} : memref<32x576xbf16, #tpu.memory_space<vmem>>, vector<16x64xbf16>,
    %445 = vector.extract_strided_slice %436 {offsets = [64, 0], sizes = [16, 64], strides = [1, 1]} : vector<144x64xbf16> to vector<16x64xbf16>
    %c16_430 = arith.constant 16 : index
    %c256_431 = arith.constant 256 : index
    %446 = vector.load %arg52[%c16_430, %c256_431] : memref<32x576xbf16, #tpu.memory_space<vmem>>, vector<16x64xbf16>
    tpu.vector_store %arg52[%c16_430, %c256_431], %445 {strides = array<i32>} : memref<32x576xbf16, #tpu.memory_space<vmem>>, vector<16x64xbf16>,
    %447 = vector.extract_strided_slice %436 {offsets = [80, 0], sizes = [16, 64], strides = [1, 1]} : vector<144x64xbf16> to vector<16x64xbf16>
    %c16_432 = arith.constant 16 : index
    %c320_433 = arith.constant 320 : index
    %448 = vector.load %arg52[%c16_432, %c320_433] : memref<32x576xbf16, #tpu.memory_space<vmem>>, vector<16x64xbf16>
    tpu.vector_store %arg52[%c16_432, %c320_433], %447 {strides = array<i32>} : memref<32x576xbf16, #tpu.memory_space<vmem>>, vector<16x64xbf16>,
    %449 = vector.extract_strided_slice %436 {offsets = [96, 0], sizes = [16, 64], strides = [1, 1]} : vector<144x64xbf16> to vector<16x64xbf16>
    %c16_434 = arith.constant 16 : index
    %c384_435 = arith.constant 384 : index
    %450 = vector.load %arg52[%c16_434, %c384_435] : memref<32x576xbf16, #tpu.memory_space<vmem>>, vector<16x64xbf16>
    tpu.vector_store %arg52[%c16_434, %c384_435], %449 {strides = array<i32>} : memref<32x576xbf16, #tpu.memory_space<vmem>>, vector<16x64xbf16>,
    %451 = vector.extract_strided_slice %436 {offsets = [112, 0], sizes = [16, 64], strides = [1, 1]} : vector<144x64xbf16> to vector<16x64xbf16>
    %c16_436 = arith.constant 16 : index
    %c448_437 = arith.constant 448 : index
    %452 = vector.load %arg52[%c16_436, %c448_437] : memref<32x576xbf16, #tpu.memory_space<vmem>>, vector<16x64xbf16>
    tpu.vector_store %arg52[%c16_436, %c448_437], %451 {strides = array<i32>} : memref<32x576xbf16, #tpu.memory_space<vmem>>, vector<16x64xbf16>,
    %453 = vector.extract_strided_slice %436 {offsets = [128, 0], sizes = [16, 64], strides = [1, 1]} : vector<144x64xbf16> to vector<16x64xbf16>
    %c16_438 = arith.constant 16 : index
    %c512_439 = arith.constant 512 : index
    %454 = vector.load %arg52[%c16_438, %c512_439] : memref<32x576xbf16, #tpu.memory_space<vmem>>, vector<16x64xbf16>
    tpu.vector_store %arg52[%c16_438, %c512_439], %453 {strides = array<i32>} : memref<32x576xbf16, #tpu.memory_space<vmem>>, vector<16x64xbf16>,
    %c0_440 = arith.constant 0 : index
    %c0_441 = arith.constant 0 : index
    %455 = vector.load %arg52[%c0_440, %c0_441] : memref<32x576xbf16, #tpu.memory_space<vmem>>, vector<32x576xbf16>
    %c0_442 = arith.constant 0 : index
    %c0_443 = arith.constant 0 : index
    %456 = vector.load %arg28[%c0_442, %c0_443] : memref<576x32xbf16, #tpu.memory_space<vmem>>, vector<576x32xbf16>
    %cst_444 = arith.constant dense<0.000000e+00> : vector<32x32xf32>
    %457 = tpu.matmul %455, %456, %cst_444 {dimension_numbers = #tpu.dot_dimension_numbers<[1], [0], [0], [1], [0, 0, 1, 1], [], []>} : vector<32x576xbf16>, vector<576x32xbf16>, vector<32x32xf32> -> vector<32x32xf32>
    %c0_445 = arith.constant 0 : index
    %c0_446 = arith.constant 0 : index
    %458 = vector.load %arg29[%c0_445, %c0_446] : memref<1x32xf32, #tpu.memory_space<vmem>>, vector<1x32xf32>
    %459 = vector.broadcast %458 : vector<1x32xf32> to vector<32x32xf32>
    %460 = arith.addf %457, %459 : vector<32x32xf32>
    %461 = arith.truncf %460 : vector<32x32xf32> to vector<32x32xbf16>
    %c0_447 = arith.constant 0 : index
    %c0_448 = arith.constant 0 : index
    %462 = vector.load %arg30[%c0_447, %c0_448] : memref<32x32xbf16, #tpu.memory_space<vmem>>, vector<32x32xbf16>
    %cst_449 = arith.constant dense<0.000000e+00> : vector<32x32xf32>
    %463 = tpu.matmul %461, %462, %cst_449 {dimension_numbers = #tpu.dot_dimension_numbers<[1], [0], [0], [1], [0, 0, 1, 1], [], []>} : vector<32x32xbf16>, vector<32x32xbf16>, vector<32x32xf32> -> vector<32x32xf32>
    %c0_450 = arith.constant 0 : index
    %c0_451 = arith.constant 0 : index
    %464 = vector.load %arg31[%c0_450, %c0_451] : memref<1x32xf32, #tpu.memory_space<vmem>>, vector<1x32xf32>
    %465 = vector.broadcast %464 : vector<1x32xf32> to vector<32x32xf32>
    %466 = arith.addf %463, %465 : vector<32x32xf32>
    %cst_452 = arith.constant 0.000000e+00 : f32
    %467 = vector.broadcast %cst_452 : f32 to vector<32x32xf32>
    %468 = arith.maximumf %466, %467 : vector<32x32xf32>
    %469 = vector.extract_strided_slice %468 {offsets = [0, 0], sizes = [1, 32], strides = [1, 1]} : vector<32x32xf32> to vector<1x32xf32>
    %c0_453 = arith.constant 0 : index
    %c64_454 = arith.constant 64 : index
    %470 = vector.load %arg53[%c0_453, %c64_454] : memref<2x96xf32, #tpu.memory_space<vmem>>, vector<1x32xf32>
    tpu.vector_store %arg53[%c0_453, %c64_454], %469 {strides = array<i32>} : memref<2x96xf32, #tpu.memory_space<vmem>>, vector<1x32xf32>,
    %471 = vector.extract_strided_slice %468 {offsets = [16, 0], sizes = [1, 32], strides = [1, 1]} : vector<32x32xf32> to vector<1x32xf32>
    %c1_455 = arith.constant 1 : index
    %c64_456 = arith.constant 64 : index
    %472 = vector.load %arg53[%c1_455, %c64_456] : memref<2x96xf32, #tpu.memory_space<vmem>>, vector<1x32xf32>
    tpu.vector_store %arg53[%c1_455, %c64_456], %471 {strides = array<i32>} : memref<2x96xf32, #tpu.memory_space<vmem>>, vector<1x32xf32>,
    %c0_457 = arith.constant 0 : index
    %c0_458 = arith.constant 0 : index
    %473 = vector.load %arg32[%c0_457, %c0_458] : memref<2x32xf32, #tpu.memory_space<vmem>>, vector<2x32xf32>
    %c0_459 = arith.constant 0 : index
    %c0_460 = arith.constant 0 : index
    %474 = vector.load %arg33[%c0_459, %c0_460] : memref<2x1xf32, #tpu.memory_space<vmem>>, vector<2x1xf32>
    %475 = vector.broadcast %474 : vector<2x1xf32> to vector<2x32xf32>
    %476 = arith.mulf %473, %475 : vector<2x32xf32>
    %c0_461 = arith.constant 0 : index
    %c0_462 = arith.constant 0 : index
    %477 = vector.load %arg53[%c0_461, %c0_462] : memref<2x96xf32, #tpu.memory_space<vmem>>, vector<2x96xf32>
    %478 = arith.truncf %477 : vector<2x96xf32> to vector<2x96xbf16>
    %c0_463 = arith.constant 0 : index
    %c0_464 = arith.constant 0 : index
    %479 = vector.load %arg34[%c0_463, %c0_464] : memref<96x96xbf16, #tpu.memory_space<vmem>>, vector<96x96xbf16>
    %cst_465 = arith.constant dense<0.000000e+00> : vector<2x96xf32>
    %480 = tpu.matmul %478, %479, %cst_465 {dimension_numbers = #tpu.dot_dimension_numbers<[1], [0], [0], [1], [0, 0, 1, 1], [], []>} : vector<2x96xbf16>, vector<96x96xbf16>, vector<2x96xf32> -> vector<2x96xf32>
    %c0_466 = arith.constant 0 : index
    %c0_467 = arith.constant 0 : index
    %481 = vector.load %arg35[%c0_466, %c0_467] : memref<1x96xf32, #tpu.memory_space<vmem>>, vector<1x96xf32>
    %482 = vector.broadcast %481 : vector<1x96xf32> to vector<2x96xf32>
    %483 = arith.addf %480, %482 : vector<2x96xf32>
    %484 = arith.truncf %476 : vector<2x32xf32> to vector<2x32xbf16>
    %c0_468 = arith.constant 0 : index
    %c0_469 = arith.constant 0 : index
    %485 = vector.load %arg36[%c0_468, %c0_469] : memref<32x96xbf16, #tpu.memory_space<vmem>>, vector<32x96xbf16>
    %cst_470 = arith.constant dense<0.000000e+00> : vector<2x96xf32>
    %486 = tpu.matmul %484, %485, %cst_470 {dimension_numbers = #tpu.dot_dimension_numbers<[1], [0], [0], [1], [0, 0, 1, 1], [], []>} : vector<2x32xbf16>, vector<32x96xbf16>, vector<2x96xf32> -> vector<2x96xf32>
    %c0_471 = arith.constant 0 : index
    %c0_472 = arith.constant 0 : index
    %487 = vector.load %arg37[%c0_471, %c0_472] : memref<1x96xf32, #tpu.memory_space<vmem>>, vector<1x96xf32>
    %488 = vector.broadcast %487 : vector<1x96xf32> to vector<2x96xf32>
    %489 = arith.addf %486, %488 : vector<2x96xf32>
    %490 = vector.extract_strided_slice %483 {offsets = [0, 0], sizes = [2, 32], strides = [1, 1]} : vector<2x96xf32> to vector<2x32xf32>
    %491 = vector.extract_strided_slice %489 {offsets = [0, 0], sizes = [2, 32], strides = [1, 1]} : vector<2x96xf32> to vector<2x32xf32>
    %492 = arith.addf %490, %491 : vector<2x32xf32>
    %493 = arith.negf %492 : vector<2x32xf32>
    %494 = math.exp %493 : vector<2x32xf32>
    %cst_473 = arith.constant 1.000000e+00 : f32
    %495 = vector.broadcast %cst_473 : f32 to vector<2x32xf32>
    %496 = arith.addf %495, %494 : vector<2x32xf32>
    %497 = arith.divf %495, %496 : vector<2x32xf32>
    %498 = vector.extract_strided_slice %483 {offsets = [0, 32], sizes = [2, 32], strides = [1, 1]} : vector<2x96xf32> to vector<2x32xf32>
    %499 = vector.extract_strided_slice %489 {offsets = [0, 32], sizes = [2, 32], strides = [1, 1]} : vector<2x96xf32> to vector<2x32xf32>
    %500 = arith.addf %498, %499 : vector<2x32xf32>
    %501 = arith.negf %500 : vector<2x32xf32>
    %502 = math.exp %501 : vector<2x32xf32>
    %cst_474 = arith.constant 1.000000e+00 : f32
    %503 = vector.broadcast %cst_474 : f32 to vector<2x32xf32>
    %504 = arith.addf %503, %502 : vector<2x32xf32>
    %505 = arith.divf %503, %504 : vector<2x32xf32>
    %506 = vector.extract_strided_slice %483 {offsets = [0, 64], sizes = [2, 32], strides = [1, 1]} : vector<2x96xf32> to vector<2x32xf32>
    %507 = vector.extract_strided_slice %489 {offsets = [0, 64], sizes = [2, 32], strides = [1, 1]} : vector<2x96xf32> to vector<2x32xf32>
    %508 = arith.mulf %497, %507 : vector<2x32xf32>
    %509 = arith.addf %506, %508 : vector<2x32xf32>
    %510 = math.tanh %509 : vector<2x32xf32>
    %cst_475 = arith.constant 1.000000e+00 : f32
    %511 = vector.broadcast %cst_475 : f32 to vector<2x32xf32>
    %512 = arith.subf %511, %505 : vector<2x32xf32>
    %513 = arith.mulf %512, %510 : vector<2x32xf32>
    %514 = arith.mulf %505, %476 : vector<2x32xf32>
    %515 = arith.addf %513, %514 : vector<2x32xf32>
    %c0_476 = arith.constant 0 : index
    %c0_477 = arith.constant 0 : index
    %516 = vector.load %arg38[%c0_476, %c0_477] : memref<2x32xf32, #tpu.memory_space<vmem>>, vector<2x32xf32>
    tpu.vector_store %arg38[%c0_476, %c0_477], %515 {strides = array<i32>} : memref<2x32xf32, #tpu.memory_space<vmem>>, vector<2x32xf32>,
    return
  }
}

</mosaic_0001>

<llo_original>
// kernel: policy_forward.1
$region0: #{policy_forward.1}
  #allocation0 [shape = 'u32[]', space=smem, size = 0x4, offset = 0x4, fixed_abs, tag = 'smem constant byte address 0x4 - core index']
  #allocation1 [shape = 'u32[144,128]{1,0:T(1,128)}', space=vmem, size = 0x12000, scoped, tag = 'internal scratch']
  #allocation2 [shape = 'bf16[480,32]{1,0:T(16,128)(2,1)}', space=vmem, size = 0x1e000, scoped, tag = 'scratch operand']
  #allocation3 [shape = 'bf16[96,512]{1,0:T(16,128)(2,1)}', space=vmem, size = 0x18000, scoped, tag = 'scratch operand']
  #allocation4 [shape = 'bf16[96,64]{1,0:T(16,128)(2,1)}', space=vmem, size = 0x6000, scoped, tag = 'scratch operand']
  #allocation5 [shape = 'bf16[32,576]{1,0:T(16,128)(2,1)}', space=vmem, size = 0xa000, scoped, tag = 'scratch operand']
  #allocation6 [shape = 'bf16[32,32]{1,0:T(16,128)(2,1)}', space=vmem, size = 0x2000, scoped, tag = 'scratch operand']
  #allocation7 [shape = 'bf16[32,512]{1,0:T(16,128)(2,1)}', space=vmem, size = 0x8000, scoped, tag = 'scratch operand']
  #allocation8 [shape = 'bf16[128,32]{1,0:T(16,128)(2,1)}', space=vmem, size = 0x8000, scoped, tag = 'scratch operand']
  #allocation9 [shape = 'bf16[32,288]{1,0:T(16,128)(2,1)}', space=vmem, size = 0x6000, scoped, tag = 'scratch operand']
  #allocation10 [shape = 'bf16[32,64]{1,0:T(16,128)(2,1)}', space=vmem, size = 0x2000, scoped, tag = 'scratch operand']
  #allocation11 [shape = 'bf16[32,576]{1,0:T(16,128)(2,1)}', space=vmem, size = 0xa000, scoped, tag = 'scratch operand']
  #allocation12 [shape = 'bf16[128,32]{1,0:T(16,128)(2,1)}', space=vmem, size = 0x8000, scoped, tag = 'scratch operand']
  #allocation13 [shape = 'bf16[32,288]{1,0:T(16,128)(2,1)}', space=vmem, size = 0x6000, scoped, tag = 'scratch operand']
  #allocation14 [shape = 'bf16[32,64]{1,0:T(16,128)(2,1)}', space=vmem, size = 0x2000, scoped, tag = 'scratch operand']
  #allocation15 [shape = 'bf16[32,576]{1,0:T(16,128)(2,1)}', space=vmem, size = 0xa000, scoped, tag = 'scratch operand']
  #allocation16 [shape = 'f32[2,96]{1,0:T(2,128)}', space=vmem, size = 0x400, scoped, tag = 'scratch operand']
  %s0 = inlined_call_operand.smem [shape: u32[39], index: -1, kind: input, shape index: {}]
  %s1 = sld [smem:[%s0]]
  %s2 = scalar_lea.smem %s0, 1
  %s3 = sld [smem:[%s2]]
  %s4 = scalar_lea.smem %s0, 2
  %s5 = sld [smem:[%s4]]
  %s6 = scalar_lea.smem %s0, 3
  %s7 = sld [smem:[%s6]]
  %s8 = scalar_lea.smem %s0, 4
  %s9 = sld [smem:[%s8]]
  %s10 = scalar_lea.smem %s0, 5
  %s11 = sld [smem:[%s10]]
  %s12 = scalar_lea.smem %s0, 6
  %s13 = sld [smem:[%s12]]
  %s14 = scalar_lea.smem %s0, 7
  %s15 = sld [smem:[%s14]]
  %s16 = scalar_lea.smem %s0, 8
  %s17 = sld [smem:[%s16]]
  %s18 = scalar_lea.smem %s0, 9
  %s19 = sld [smem:[%s18]]
  %s20 = scalar_lea.smem %s0, 10
  %s21 = sld [smem:[%s20]]
  %s22 = scalar_lea.smem %s0, 11
  %s23 = sld [smem:[%s22]]
  %s24 = scalar_lea.smem %s0, 12
  %s25 = sld [smem:[%s24]]
  %s26 = scalar_lea.smem %s0, 13
  %s27 = sld [smem:[%s26]]
  %s28 = scalar_lea.smem %s0, 14
  %s29 = sld [smem:[%s28]]
  %s30 = scalar_lea.smem %s0, 15
  %s31 = sld [smem:[%s30]]
  %s32 = scalar_lea.smem %s0, 16
  %s33 = sld [smem:[%s32]]
  %s34 = scalar_lea.smem %s0, 17
  %s35 = sld [smem:[%s34]]
  %s36 = scalar_lea.smem %s0, 18
  %s37 = sld [smem:[%s36]]
  %s38 = scalar_lea.smem %s0, 19
  %s39 = sld [smem:[%s38]]
  %s40 = scalar_lea.smem %s0, 20
  %s41 = sld [smem:[%s40]]
  %s42 = scalar_lea.smem %s0, 21
  %s43 = sld [smem:[%s42]]
  %s44 = scalar_lea.smem %s0, 22
  %s45 = sld [smem:[%s44]]
  %s46 = scalar_lea.smem %s0, 23
  %s47 = sld [smem:[%s46]]
  %s48 = scalar_lea.smem %s0, 24
  %s49 = sld [smem:[%s48]]
  %s50 = scalar_lea.smem %s0, 25
  %s51 = sld [smem:[%s50]]
  %s52 = scalar_lea.smem %s0, 26
  %s53 = sld [smem:[%s52]]
  %s54 = scalar_lea.smem %s0, 27
  %s55 = sld [smem:[%s54]]
  %s56 = scalar_lea.smem %s0, 28
  %s57 = sld [smem:[%s56]]
  %s58 = scalar_lea.smem %s0, 29
  %s59 = sld [smem:[%s58]]
  %s60 = scalar_lea.smem %s0, 30
  %s61 = sld [smem:[%s60]]
  %s62 = scalar_lea.smem %s0, 31
  %s63 = sld [smem:[%s62]]
  %s64 = scalar_lea.smem %s0, 32
  %s65 = sld [smem:[%s64]]
  %s66 = scalar_lea.smem %s0, 33
  %s67 = sld [smem:[%s66]]
  %s68 = scalar_lea.smem %s0, 34
  %s69 = sld [smem:[%s68]]
  %s70 = scalar_lea.smem %s0, 35
  %s71 = sld [smem:[%s70]]
  %s72 = scalar_lea.smem %s0, 36
  %s73 = sld [smem:[%s72]]
  %s74 = scalar_lea.smem %s0, 37
  %s75 = sld [smem:[%s74]]
  %s76 = scalar_lea.smem %s0, 38
  %s77 = sld [smem:[%s76]]
  %s78 = sld [smem:[#allocation0]]
  $region162: #{policy_forward.1} parent=0
    _
  %s80 = ssub.s32 1, %s78
  %s81 = scalar_select 0, %s80, %s78
  // Predicated region
  $region2: #{policy_forward.1} parent=0 // pred_check
    _
  $region3: #{policy_forward.1} parent=0 // pred_check_branch
    %83 = sbr.rel (0) target = $region5
  $region4: #{policy_forward.1} parent=0 // pred_region
    _
  $region5: #{policy_forward.1} parent=0 // pred_fallthru
    _
  // Predicated region
  $region6: #{policy_forward.1} parent=0 // pred_check
    _
  $region7: #{policy_forward.1} parent=0 // pred_check_branch
    %85 = sbr.rel (0) target = $region9
  $region8: #{policy_forward.1} parent=0 // pred_region
    _
  $region9: #{policy_forward.1} parent=0 // pred_fallthru
    _
  // Predicated region
  $region10: #{policy_forward.1} parent=0 // pred_check
    _
  $region11: #{policy_forward.1} parent=0 // pred_check_branch
    %87 = sbr.rel (0) target = $region13
  $region12: #{policy_forward.1} parent=0 // pred_region
    _
  $region13: #{policy_forward.1} parent=0 // pred_fallthru
    _
  // Predicated region
  $region14: #{policy_forward.1} parent=0 // pred_check
    _
  $region15: #{policy_forward.1} parent=0 // pred_check_branch
    %89 = sbr.rel (0) target = $region17
  $region16: #{policy_forward.1} parent=0 // pred_region
    _
  $region17: #{policy_forward.1} parent=0 // pred_fallthru
    _
  // Predicated region
  $region18: #{policy_forward.1} parent=0 // pred_check
    _
  $region19: #{policy_forward.1} parent=0 // pred_check_branch
    %91 = sbr.rel (0) target = $region21
  $region20: #{policy_forward.1} parent=0 // pred_region
    _
  $region21: #{policy_forward.1} parent=0 // pred_fallthru
    _
  // Predicated region
  $region22: #{policy_forward.1} parent=0 // pred_check
    _
  $region23: #{policy_forward.1} parent=0 // pred_check_branch
    %93 = sbr.rel (0) target = $region25
  $region24: #{policy_forward.1} parent=0 // pred_region
    _
  $region25: #{policy_forward.1} parent=0 // pred_fallthru
    _
  // Predicated region
  $region26: #{policy_forward.1} parent=0 // pred_check
    _
  $region27: #{policy_forward.1} parent=0 // pred_check_branch
    %95 = sbr.rel (0) target = $region29
  $region28: #{policy_forward.1} parent=0 // pred_region
    _
  $region29: #{policy_forward.1} parent=0 // pred_fallthru
    _
  // Predicated region
  $region30: #{policy_forward.1} parent=0 // pred_check
    _
  $region31: #{policy_forward.1} parent=0 // pred_check_branch
    %97 = sbr.rel (0) target = $region33
  $region32: #{policy_forward.1} parent=0 // pred_region
    _
  $region33: #{policy_forward.1} parent=0 // pred_fallthru
    _
  // Predicated region
  $region34: #{policy_forward.1} parent=0 // pred_check
    _
  $region35: #{policy_forward.1} parent=0 // pred_check_branch
    %99 = sbr.rel (0) target = $region37
  $region36: #{policy_forward.1} parent=0 // pred_region
    _
  $region37: #{policy_forward.1} parent=0 // pred_fallthru
    _
  // Predicated region
  $region38: #{policy_forward.1} parent=0 // pred_check
    _
  $region39: #{policy_forward.1} parent=0 // pred_check_branch
    %101 = sbr.rel (0) target = $region41
  $region40: #{policy_forward.1} parent=0 // pred_region
    _
  $region41: #{policy_forward.1} parent=0 // pred_fallthru
    _
  // Predicated region
  $region42: #{policy_forward.1} parent=0 // pred_check
    _
  $region43: #{policy_forward.1} parent=0 // pred_check_branch
    %103 = sbr.rel (0) target = $region45
  $region44: #{policy_forward.1} parent=0 // pred_region
    _
  $region45: #{policy_forward.1} parent=0 // pred_fallthru
    _
  // Predicated region
  $region46: #{policy_forward.1} parent=0 // pred_check
    _
  $region47: #{policy_forward.1} parent=0 // pred_check_branch
    %105 = sbr.rel (0) target = $region49
  $region48: #{policy_forward.1} parent=0 // pred_region
    _
  $region49: #{policy_forward.1} parent=0 // pred_fallthru
    _
  // Predicated region
  $region50: #{policy_forward.1} parent=0 // pred_check
    _
  $region51: #{policy_forward.1} parent=0 // pred_check_branch
    %107 = sbr.rel (0) target = $region53
  $region52: #{policy_forward.1} parent=0 // pred_region
    _
  $region53: #{policy_forward.1} parent=0 // pred_fallthru
    _
  // Predicated region
  $region54: #{policy_forward.1} parent=0 // pred_check
    _
  $region55: #{policy_forward.1} parent=0 // pred_check_branch
    %109 = sbr.rel (0) target = $region57
  $region56: #{policy_forward.1} parent=0 // pred_region
    _
  $region57: #{policy_forward.1} parent=0 // pred_fallthru
    _
  // Predicated region
  $region58: #{policy_forward.1} parent=0 // pred_check
    _
  $region59: #{policy_forward.1} parent=0 // pred_check_branch
    %111 = sbr.rel (0) target = $region61
  $region60: #{policy_forward.1} parent=0 // pred_region
    _
  $region61: #{policy_forward.1} parent=0 // pred_fallthru
    _
  // Predicated region
  $region62: #{policy_forward.1} parent=0 // pred_check
    _
  $region63: #{policy_forward.1} parent=0 // pred_check_branch
    %113 = sbr.rel (0) target = $region65
  $region64: #{policy_forward.1} parent=0 // pred_region
    _
  $region65: #{policy_forward.1} parent=0 // pred_fallthru
    _
  // Predicated region
  $region66: #{policy_forward.1} parent=0 // pred_check
    _
  $region67: #{policy_forward.1} parent=0 // pred_check_branch
    %115 = sbr.rel (0) target = $region69
  $region68: #{policy_forward.1} parent=0 // pred_region
    _
  $region69: #{policy_forward.1} parent=0 // pred_fallthru
    _
  // Predicated region
  $region70: #{policy_forward.1} parent=0 // pred_check
    _
  $region71: #{policy_forward.1} parent=0 // pred_check_branch
    %117 = sbr.rel (0) target = $region73
  $region72: #{policy_forward.1} parent=0 // pred_region
    _
  $region73: #{policy_forward.1} parent=0 // pred_fallthru
    _
  // Predicated region
  $region74: #{policy_forward.1} parent=0 // pred_check
    _
  $region75: #{policy_forward.1} parent=0 // pred_check_branch
    %119 = sbr.rel (0) target = $region77
  $region76: #{policy_forward.1} parent=0 // pred_region
    _
  $region77: #{policy_forward.1} parent=0 // pred_fallthru
    _
  // Predicated region
  $region78: #{policy_forward.1} parent=0 // pred_check
    _
  $region79: #{policy_forward.1} parent=0 // pred_check_branch
    %121 = sbr.rel (0) target = $region81
  $region80: #{policy_forward.1} parent=0 // pred_region
    _
  $region81: #{policy_forward.1} parent=0 // pred_fallthru
    _
  // Predicated region
  $region82: #{policy_forward.1} parent=0 // pred_check
    _
  $region83: #{policy_forward.1} parent=0 // pred_check_branch
    %123 = sbr.rel (0) target = $region85
  $region84: #{policy_forward.1} parent=0 // pred_region
    _
  $region85: #{policy_forward.1} parent=0 // pred_fallthru
    _
  // Predicated region
  $region86: #{policy_forward.1} parent=0 // pred_check
    _
  $region87: #{policy_forward.1} parent=0 // pred_check_branch
    %125 = sbr.rel (0) target = $region89
  $region88: #{policy_forward.1} parent=0 // pred_region
    _
  $region89: #{policy_forward.1} parent=0 // pred_fallthru
    _
  // Predicated region
  $region90: #{policy_forward.1} parent=0 // pred_check
    _
  $region91: #{policy_forward.1} parent=0 // pred_check_branch
    %127 = sbr.rel (0) target = $region93
  $region92: #{policy_forward.1} parent=0 // pred_region
    _
  $region93: #{policy_forward.1} parent=0 // pred_fallthru
    _
  // Predicated region
  $region94: #{policy_forward.1} parent=0 // pred_check
    _
  $region95: #{policy_forward.1} parent=0 // pred_check_branch
    %129 = sbr.rel (0) target = $region97
  $region96: #{policy_forward.1} parent=0 // pred_region
    _
  $region97: #{policy_forward.1} parent=0 // pred_fallthru
    _
  // Predicated region
  $region98: #{policy_forward.1} parent=0 // pred_check
    _
  $region99: #{policy_forward.1} parent=0 // pred_check_branch
    %131 = sbr.rel (0) target = $region101
  $region100: #{policy_forward.1} parent=0 // pred_region
    _
  $region101: #{policy_forward.1} parent=0 // pred_fallthru
    _
  // Predicated region
  $region102: #{policy_forward.1} parent=0 // pred_check
    _
  $region103: #{policy_forward.1} parent=0 // pred_check_branch
    %133 = sbr.rel (0) target = $region105
  $region104: #{policy_forward.1} parent=0 // pred_region
    _
  $region105: #{policy_forward.1} parent=0 // pred_fallthru
    _
  // Predicated region
  $region106: #{policy_forward.1} parent=0 // pred_check
    _
  $region107: #{policy_forward.1} parent=0 // pred_check_branch
    %135 = sbr.rel (0) target = $region109
  $region108: #{policy_forward.1} parent=0 // pred_region
    _
  $region109: #{policy_forward.1} parent=0 // pred_fallthru
    _
  // Predicated region
  $region110: #{policy_forward.1} parent=0 // pred_check
    _
  $region111: #{policy_forward.1} parent=0 // pred_check_branch
    %137 = sbr.rel (0) target = $region113
  $region112: #{policy_forward.1} parent=0 // pred_region
    _
  $region113: #{policy_forward.1} parent=0 // pred_fallthru
    _
  // Predicated region
  $region114: #{policy_forward.1} parent=0 // pred_check
    _
  $region115: #{policy_forward.1} parent=0 // pred_check_branch
    %139 = sbr.rel (0) target = $region117
  $region116: #{policy_forward.1} parent=0 // pred_region
    _
  $region117: #{policy_forward.1} parent=0 // pred_fallthru
    _
  // Predicated region
  $region118: #{policy_forward.1} parent=0 // pred_check
    _
  $region119: #{policy_forward.1} parent=0 // pred_check_branch
    %141 = sbr.rel (0) target = $region121
  $region120: #{policy_forward.1} parent=0 // pred_region
    _
  $region121: #{policy_forward.1} parent=0 // pred_fallthru
    _
  // Predicated region
  $region122: #{policy_forward.1} parent=0 // pred_check
    _
  $region123: #{policy_forward.1} parent=0 // pred_check_branch
    %143 = sbr.rel (0) target = $region125
  $region124: #{policy_forward.1} parent=0 // pred_region
    _
  $region125: #{policy_forward.1} parent=0 // pred_fallthru
    _
  // Predicated region
  $region126: #{policy_forward.1} parent=0 // pred_check
    _
  $region127: #{policy_forward.1} parent=0 // pred_check_branch
    %145 = sbr.rel (0) target = $region129
  $region128: #{policy_forward.1} parent=0 // pred_region
    _
  $region129: #{policy_forward.1} parent=0 // pred_fallthru
    _
  // Predicated region
  $region130: #{policy_forward.1} parent=0 // pred_check
    _
  $region131: #{policy_forward.1} parent=0 // pred_check_branch
    %147 = sbr.rel (0) target = $region133
  $region132: #{policy_forward.1} parent=0 // pred_region
    _
  $region133: #{policy_forward.1} parent=0 // pred_fallthru
    _
  // Predicated region
  $region134: #{policy_forward.1} parent=0 // pred_check
    _
  $region135: #{policy_forward.1} parent=0 // pred_check_branch
    %149 = sbr.rel (0) target = $region137
  $region136: #{policy_forward.1} parent=0 // pred_region
    _
  $region137: #{policy_forward.1} parent=0 // pred_fallthru
    _
  // Predicated region
  $region138: #{policy_forward.1} parent=0 // pred_check
    _
  $region139: #{policy_forward.1} parent=0 // pred_check_branch
    %151 = sbr.rel (0) target = $region141
  $region140: #{policy_forward.1} parent=0 // pred_region
    _
  $region141: #{policy_forward.1} parent=0 // pred_fallthru
    _
  // Predicated region
  $region142: #{policy_forward.1} parent=0 // pred_check
    _
  $region143: #{policy_forward.1} parent=0 // pred_check_branch
    %153 = sbr.rel (0) target = $region145
  $region144: #{policy_forward.1} parent=0 // pred_region
    _
  $region145: #{policy_forward.1} parent=0 // pred_fallthru
    _
  // Predicated region
  $region146: #{policy_forward.1} parent=0 // pred_check
    _
  $region147: #{policy_forward.1} parent=0 // pred_check_branch
    %155 = sbr.rel (0) target = $region149
  $region148: #{policy_forward.1} parent=0 // pred_region
    _
  $region149: #{policy_forward.1} parent=0 // pred_fallthru
    _
  // Predicated region
  $region150: #{policy_forward.1} parent=0 // pred_check
    _
  $region151: #{policy_forward.1} parent=0 // pred_check_branch
    %157 = sbr.rel (0) target = $region153
  $region152: #{policy_forward.1} parent=0 // pred_region
    _
  $region153: #{policy_forward.1} parent=0 // pred_fallthru
    _
  %v159 = vld [vmem:[%s1] sm:$0xff]
  %v160 = vld [vmem:[%s1 + $0x8] sm:$0xff]
  %v161 = vld [vmem:[%s1 + $0x10] sm:$0xff]
  %v162 = vld [vmem:[%s1 + $0x18] sm:$0xff]
  %v163 = vld [vmem:[%s1 + $0x20] sm:$0xff]
  %v164 = vld [vmem:[%s1 + $0x28] sm:$0xff]
  %v165 = vld [vmem:[%s1 + $0x30] sm:$0xff]
  %v166 = vld [vmem:[%s1 + $0x38] sm:$0xff]
  %v167 = vld [vmem:[%s1 + $0x40] sm:$0xff]
  %v168 = vld [vmem:[%s1 + $0x48] sm:$0xff]
  %v169 = vld [vmem:[%s1 + $0x50] sm:$0xff]
  %v170 = vld [vmem:[%s1 + $0x58] sm:$0xff]
  %v171 = vld [vmem:[%s1 + $0x60] sm:$0xff]
  %v172 = vld [vmem:[%s1 + $0x68] sm:$0xff]
  %v173 = vld [vmem:[%s1 + $0x70] sm:$0xff]
  %v174 = vld [vmem:[%s1 + $0x78] sm:$0xff]
  %v175 = vld [vmem:[%s1 + $0x80] sm:$0xff]
  %v176 = vld [vmem:[%s1 + $0x88] sm:$0xff]
  %v177 = vld [vmem:[%s1 + $0x90] sm:$0xff]
  %v178 = vld [vmem:[%s1 + $0x98] sm:$0xff]
  %v179 = vld [vmem:[%s1 + $0xa0] sm:$0xff]
  %v180 = vld [vmem:[%s1 + $0xa8] sm:$0xff]
  %v181 = vld [vmem:[%s1 + $0xb0] sm:$0xff]
  %v182 = vld [vmem:[%s1 + $0xb8] sm:$0xff]
  %v183 = vld [vmem:[%s1 + $0xc0] sm:$0xff]
  %v184 = vld [vmem:[%s1 + $0xc8] sm:$0xff]
  %v185 = vld [vmem:[%s1 + $0xd0] sm:$0xff]
  %v186 = vld [vmem:[%s1 + $0xd8] sm:$0xff]
  %v187 = vld [vmem:[%s1 + $0xe0] sm:$0xff]
  %v188 = vld [vmem:[%s1 + $0xe8] sm:$0xff]
  %v189 = vld [vmem:[%s1 + $0xf0] sm:$0xff]
  %v190 = vld [vmem:[%s1 + $0xf8] sm:$0xff]
  %v191 = vld [vmem:[%s1 + $0x100] sm:$0xff]
  %v192 = vld [vmem:[%s1 + $0x108] sm:$0xff]
  %v193 = vld [vmem:[%s1 + $0x110] sm:$0xff]
  %v194 = vld [vmem:[%s1 + $0x118] sm:$0xff]
  %v195 = vld [vmem:[%s1 + $0x120] sm:$0xff]
  %v196 = vld [vmem:[%s1 + $0x128] sm:$0xff]
  %v197 = vld [vmem:[%s1 + $0x130] sm:$0xff]
  %v198 = vld [vmem:[%s1 + $0x138] sm:$0xff]
  %v199 = vld [vmem:[%s1 + $0x140] sm:$0xff]
  %v200 = vld [vmem:[%s1 + $0x148] sm:$0xff]
  %v201 = vld [vmem:[%s1 + $0x150] sm:$0xff]
  %v202 = vld [vmem:[%s1 + $0x158] sm:$0xff]
  %v203 = vld [vmem:[%s1 + $0x160] sm:$0xff]
  %v204 = vld [vmem:[%s1 + $0x168] sm:$0xff]
  %v205 = vld [vmem:[%s1 + $0x170] sm:$0xff]
  %v206 = vld [vmem:[%s1 + $0x178] sm:$0xff]
  %v207 = vld [vmem:[%s1 + $0x180] sm:$0xff]
  %v208 = vld [vmem:[%s1 + $0x188] sm:$0xff]
  %v209 = vld [vmem:[%s1 + $0x190] sm:$0xff]
  %v210 = vld [vmem:[%s1 + $0x198] sm:$0xff]
  %v211 = vld [vmem:[%s1 + $0x1a0] sm:$0xff]
  %v212 = vld [vmem:[%s1 + $0x1a8] sm:$0xff]
  %v213 = vld [vmem:[%s1 + $0x1b0] sm:$0xff]
  %v214 = vld [vmem:[%s1 + $0x1b8] sm:$0xff]
  %v215 = vld [vmem:[%s1 + $0x1c0] sm:$0xff]
  %v216 = vld [vmem:[%s1 + $0x1c8] sm:$0xff]
  %v217 = vld [vmem:[%s1 + $0x1d0] sm:$0xff]
  %v218 = vld [vmem:[%s1 + $0x1d8] sm:$0xff]
  %v219 = vld [vmem:[%s3] sm:$0xf]
  %v220 = vld [vmem:[%s3 + $0x4] sm:$0xf]
  %v221 = vld [vmem:[%s3 + $0x8] sm:$0xf]
  %v222 = vld [vmem:[%s3 + $0xc] sm:$0xf]
  %v223 = vld [vmem:[%s3 + $0x10] sm:$0xf]
  %v224 = vld [vmem:[%s3 + $0x14] sm:$0xf]
  %v225 = vld [vmem:[%s3 + $0x18] sm:$0xf]
  %v226 = vld [vmem:[%s3 + $0x1c] sm:$0xf]
  %v227 = vld [vmem:[%s3 + $0x20] sm:$0xf]
  %v228 = vld [vmem:[%s3 + $0x24] sm:$0xf]
  %v229 = vld [vmem:[%s3 + $0x28] sm:$0xf]
  %v230 = vld [vmem:[%s3 + $0x2c] sm:$0xf]
  %v231 = vld [vmem:[%s3 + $0x30] sm:$0xf]
  %v232 = vld [vmem:[%s3 + $0x34] sm:$0xf]
  %v233 = vld [vmem:[%s3 + $0x38] sm:$0xf]
  %v234 = vld [vmem:[%s3 + $0x3c] sm:$0xf]
  %v235 = vld [vmem:[%s3 + $0x40] sm:$0xf]
  %v236 = vld [vmem:[%s3 + $0x44] sm:$0xf]
  %v237 = vld [vmem:[%s3 + $0x48] sm:$0xf]
  %v238 = vld [vmem:[%s3 + $0x4c] sm:$0xf]
  %v239 = vld [vmem:[%s3 + $0x50] sm:$0xf]
  %v240 = vld [vmem:[%s3 + $0x54] sm:$0xf]
  %v241 = vld [vmem:[%s3 + $0x58] sm:$0xf]
  %v242 = vld [vmem:[%s3 + $0x5c] sm:$0xf]
  %v243 = vld [vmem:[%s3 + $0x60] sm:$0xf]
  %v244 = vld [vmem:[%s3 + $0x64] sm:$0xf]
  %v245 = vld [vmem:[%s3 + $0x68] sm:$0xf]
  %v246 = vld [vmem:[%s3 + $0x6c] sm:$0xf]
  %v247 = vld [vmem:[%s3 + $0x70] sm:$0xf]
  %v248 = vld [vmem:[%s3 + $0x74] sm:$0xf]
  %v249 = vld [vmem:[%s3 + $0x78] sm:$0xf]
  %v250 = vld [vmem:[%s3 + $0x7c] sm:$0xf]
  %v251 = vld [vmem:[%s5] sm:$0x1]
  %v253 = vlaneseq
  %v254 = vshrl.u32 %v253, 7
  %v255 = vsub.s32 0, %v254
  %v256 = vrot.slane %v251, %v255
  %v318 = vunpack.c.l.b16 %v159
  %v319 = vunpack.c.h.b16 %v159
  %v320 = vunpack.c.l.b16 %v160
  %v321 = vunpack.c.h.b16 %v160
  %v322 = vunpack.c.l.b16 %v161
  %v323 = vunpack.c.h.b16 %v161
  %v324 = vunpack.c.l.b16 %v162
  %v325 = vunpack.c.h.b16 %v162
  %v326 = vunpack.c.l.b16 %v163
  %v327 = vunpack.c.h.b16 %v163
  %v328 = vunpack.c.l.b16 %v164
  %v329 = vunpack.c.h.b16 %v164
  %v330 = vunpack.c.l.b16 %v165
  %v331 = vunpack.c.h.b16 %v165
  %v332 = vunpack.c.l.b16 %v166
  %v333 = vunpack.c.h.b16 %v166
  %v334 = vunpack.c.l.b16 %v167
  %v335 = vunpack.c.h.b16 %v167
  %v336 = vunpack.c.l.b16 %v168
  %v337 = vunpack.c.h.b16 %v168
  %v338 = vunpack.c.l.b16 %v169
  %v339 = vunpack.c.h.b16 %v169
  %v340 = vunpack.c.l.b16 %v170
  %v341 = vunpack.c.h.b16 %v170
  %v342 = vunpack.c.l.b16 %v171
  %v343 = vunpack.c.h.b16 %v171
  %v344 = vunpack.c.l.b16 %v172
  %v345 = vunpack.c.h.b16 %v172
  %v346 = vunpack.c.l.b16 %v173
  %v347 = vunpack.c.h.b16 %v173
  %v348 = vunpack.c.l.b16 %v174
  %v349 = vunpack.c.h.b16 %v174
  %v350 = vunpack.c.l.b16 %v175
  %v351 = vunpack.c.h.b16 %v175
  %v352 = vunpack.c.l.b16 %v176
  %v353 = vunpack.c.h.b16 %v176
  %v354 = vunpack.c.l.b16 %v177
  %v355 = vunpack.c.h.b16 %v177
  %v356 = vunpack.c.l.b16 %v178
  %v357 = vunpack.c.h.b16 %v178
  %v358 = vunpack.c.l.b16 %v179
  %v359 = vunpack.c.h.b16 %v179
  %v360 = vunpack.c.l.b16 %v180
  %v361 = vunpack.c.h.b16 %v180
  %v362 = vunpack.c.l.b16 %v181
  %v363 = vunpack.c.h.b16 %v181
  %v364 = vunpack.c.l.b16 %v182
  %v365 = vunpack.c.h.b16 %v182
  %v366 = vunpack.c.l.b16 %v183
  %v367 = vunpack.c.h.b16 %v183
  %v368 = vunpack.c.l.b16 %v184
  %v369 = vunpack.c.h.b16 %v184
  %v370 = vunpack.c.l.b16 %v185
  %v371 = vunpack.c.h.b16 %v185
  %v372 = vunpack.c.l.b16 %v186
  %v373 = vunpack.c.h.b16 %v186
  %v374 = vunpack.c.l.b16 %v187
  %v375 = vunpack.c.h.b16 %v187
  %v376 = vunpack.c.l.b16 %v188
  %v377 = vunpack.c.h.b16 %v188
  %v378 = vunpack.c.l.b16 %v189
  %v379 = vunpack.c.h.b16 %v189
  %v380 = vunpack.c.l.b16 %v190
  %v381 = vunpack.c.h.b16 %v190
  %v382 = vunpack.c.l.b16 %v191
  %v383 = vunpack.c.h.b16 %v191
  %v384 = vunpack.c.l.b16 %v192
  %v385 = vunpack.c.h.b16 %v192
  %v386 = vunpack.c.l.b16 %v193
  %v387 = vunpack.c.h.b16 %v193
  %v388 = vunpack.c.l.b16 %v194
  %v389 = vunpack.c.h.b16 %v194
  %v390 = vunpack.c.l.b16 %v195
  %v391 = vunpack.c.h.b16 %v195
  %v392 = vunpack.c.l.b16 %v196
  %v393 = vunpack.c.h.b16 %v196
  %v394 = vunpack.c.l.b16 %v197
  %v395 = vunpack.c.h.b16 %v197
  %v396 = vunpack.c.l.b16 %v198
  %v397 = vunpack.c.h.b16 %v198
  %v398 = vunpack.c.l.b16 %v199
  %v399 = vunpack.c.h.b16 %v199
  %v400 = vunpack.c.l.b16 %v200
  %v401 = vunpack.c.h.b16 %v200
  %v402 = vunpack.c.l.b16 %v201
  %v403 = vunpack.c.h.b16 %v201
  %v404 = vunpack.c.l.b16 %v202
  %v405 = vunpack.c.h.b16 %v202
  %v406 = vunpack.c.l.b16 %v203
  %v407 = vunpack.c.h.b16 %v203
  %v408 = vunpack.c.l.b16 %v204
  %v409 = vunpack.c.h.b16 %v204
  %v410 = vunpack.c.l.b16 %v205
  %v411 = vunpack.c.h.b16 %v205
  %v412 = vunpack.c.l.b16 %v206
  %v413 = vunpack.c.h.b16 %v206
  %v414 = vunpack.c.l.b16 %v207
  %v415 = vunpack.c.h.b16 %v207
  %v416 = vunpack.c.l.b16 %v208
  %v417 = vunpack.c.h.b16 %v208
  %v418 = vunpack.c.l.b16 %v209
  %v419 = vunpack.c.h.b16 %v209
  %v420 = vunpack.c.l.b16 %v210
  %v421 = vunpack.c.h.b16 %v210
  %v422 = vunpack.c.l.b16 %v211
  %v423 = vunpack.c.h.b16 %v211
  %v424 = vunpack.c.l.b16 %v212
  %v425 = vunpack.c.h.b16 %v212
  %v426 = vunpack.c.l.b16 %v213
  %v427 = vunpack.c.h.b16 %v213
  %v428 = vunpack.c.l.b16 %v214
  %v429 = vunpack.c.h.b16 %v214
  %v430 = vunpack.c.l.b16 %v215
  %v431 = vunpack.c.h.b16 %v215
  %v432 = vunpack.c.l.b16 %v216
  %v433 = vunpack.c.h.b16 %v216
  %v434 = vunpack.c.l.b16 %v217
  %v435 = vunpack.c.h.b16 %v217
  %v436 = vunpack.c.l.b16 %v218
  %v437 = vunpack.c.h.b16 %v218
  %v438 = vpack.c.b16 %v320, %v318
  %v439 = vpack.c.b16 %v321, %v319
  %v440 = vpack.c.b16 %v324, %v322
  %v441 = vpack.c.b16 %v325, %v323
  %v442 = vpack.c.b16 %v328, %v326
  %v443 = vpack.c.b16 %v329, %v327
  %v444 = vpack.c.b16 %v332, %v330
  %v445 = vpack.c.b16 %v333, %v331
  %v446 = vpack.c.b16 %v336, %v334
  %v447 = vpack.c.b16 %v337, %v335
  %v448 = vpack.c.b16 %v340, %v338
  %v449 = vpack.c.b16 %v341, %v339
  %v450 = vpack.c.b16 %v344, %v342
  %v451 = vpack.c.b16 %v345, %v343
  %v452 = vpack.c.b16 %v348, %v346
  %v453 = vpack.c.b16 %v349, %v347
  %v454 = vpack.c.b16 %v352, %v350
  %v455 = vpack.c.b16 %v353, %v351
  %v456 = vpack.c.b16 %v356, %v354
  %v457 = vpack.c.b16 %v357, %v355
  %v458 = vpack.c.b16 %v360, %v358
  %v459 = vpack.c.b16 %v361, %v359
  %v460 = vpack.c.b16 %v364, %v362
  %v461 = vpack.c.b16 %v365, %v363
  %v462 = vpack.c.b16 %v368, %v366
  %v463 = vpack.c.b16 %v369, %v367
  %v464 = vpack.c.b16 %v372, %v370
  %v465 = vpack.c.b16 %v373, %v371
  %v466 = vpack.c.b16 %v376, %v374
  %v467 = vpack.c.b16 %v377, %v375
  %v468 = vpack.c.b16 %v380, %v378
  %v469 = vpack.c.b16 %v381, %v379
  %v470 = vpack.c.b16 %v384, %v382
  %v471 = vpack.c.b16 %v385, %v383
  %v472 = vpack.c.b16 %v388, %v386
  %v473 = vpack.c.b16 %v389, %v387
  %v474 = vpack.c.b16 %v392, %v390
  %v475 = vpack.c.b16 %v393, %v391
  %v476 = vpack.c.b16 %v396, %v394
  %v477 = vpack.c.b16 %v397, %v395
  %v478 = vpack.c.b16 %v400, %v398
  %v479 = vpack.c.b16 %v401, %v399
  %v480 = vpack.c.b16 %v404, %v402
  %v481 = vpack.c.b16 %v405, %v403
  %v482 = vpack.c.b16 %v408, %v406
  %v483 = vpack.c.b16 %v409, %v407
  %v484 = vpack.c.b16 %v412, %v410
  %v485 = vpack.c.b16 %v413, %v411
  %v486 = vpack.c.b16 %v416, %v414
  %v487 = vpack.c.b16 %v417, %v415
  %v488 = vpack.c.b16 %v420, %v418
  %v489 = vpack.c.b16 %v421, %v419
  %v490 = vpack.c.b16 %v424, %v422
  %v491 = vpack.c.b16 %v425, %v423
  %v492 = vpack.c.b16 %v428, %v426
  %v493 = vpack.c.b16 %v429, %v427
  %v494 = vpack.c.b16 %v432, %v430
  %v495 = vpack.c.b16 %v433, %v431
  %v496 = vpack.c.b16 %v436, %v434
  %v497 = vpack.c.b16 %v437, %v435
  %v590 = vunpack.c.l.b16 %v219
  %v591 = vunpack.c.l.b16 %v220
  %v592 = vunpack.c.l.b16 %v221
  %v593 = vunpack.c.l.b16 %v222
  %v594 = vunpack.c.l.b16 %v223
  %v595 = vunpack.c.l.b16 %v224
  %v596 = vunpack.c.l.b16 %v225
  %v597 = vunpack.c.l.b16 %v226
  %v598 = vunpack.c.l.b16 %v227
  %v599 = vunpack.c.l.b16 %v228
  %v600 = vunpack.c.l.b16 %v229
  %v601 = vunpack.c.l.b16 %v230
  %v602 = vunpack.c.l.b16 %v231
  %v603 = vunpack.c.l.b16 %v232
  %v604 = vunpack.c.l.b16 %v233
  %v605 = vunpack.c.l.b16 %v234
  %v606 = vunpack.c.l.b16 %v235
  %v607 = vunpack.c.l.b16 %v236
  %v608 = vunpack.c.l.b16 %v237
  %v609 = vunpack.c.l.b16 %v238
  %v610 = vunpack.c.l.b16 %v239
  %v611 = vunpack.c.l.b16 %v240
  %v612 = vunpack.c.l.b16 %v241
  %v613 = vunpack.c.l.b16 %v242
  %v614 = vunpack.c.l.b16 %v243
  %v615 = vunpack.c.l.b16 %v244
  %v616 = vunpack.c.l.b16 %v245
  %v617 = vunpack.c.l.b16 %v246
  %v618 = vunpack.c.l.b16 %v247
  %v619 = vunpack.c.l.b16 %v248
  %v620 = vunpack.c.l.b16 %v249
  %v621 = vunpack.c.l.b16 %v250
  %v622 = vpack.c.b16 %v591, %v590
  %v623 = vpack.c.b16 %v593, %v592
  %v624 = vpack.c.b16 %v595, %v594
  %v625 = vpack.c.b16 %v597, %v596
  %v626 = vpack.c.b16 %v599, %v598
  %v627 = vpack.c.b16 %v601, %v600
  %v628 = vpack.c.b16 %v603, %v602
  %v629 = vpack.c.b16 %v605, %v604
  %v630 = vpack.c.b16 %v607, %v606
  %v631 = vpack.c.b16 %v609, %v608
  %v632 = vpack.c.b16 %v611, %v610
  %v633 = vpack.c.b16 %v613, %v612
  %v634 = vpack.c.b16 %v615, %v614
  %v635 = vpack.c.b16 %v617, %v616
  %v636 = vpack.c.b16 %v619, %v618
  %v637 = vpack.c.b16 %v621, %v620
  %654 = vmatprep.subr.bf16.mxu0 0
  %655 = vmatpush1.bf16.msra.mxu0 %v622
  %656 = vmatprep.subr.bf16.mxu0 0
  %657 = vmatpush1.bf16.msra.mxu0 %v623
  %658 = vmatprep.subr.bf16.mxu0 0
  %659 = vmatpush1.bf16.msra.mxu0 %v624
  %660 = vmatprep.subr.bf16.mxu0 0
  %661 = vmatpush1.bf16.msra.mxu0 %v625
  %662 = vmatprep.subr.bf16.mxu0 0
  %663 = vmatpush1.bf16.msra.mxu0 %v626
  %664 = vmatprep.subr.bf16.mxu0 0
  %665 = vmatpush1.bf16.msra.mxu0 %v627
  %666 = vmatprep.subr.bf16.mxu0 0
  %667 = vmatpush1.bf16.msra.mxu0 %v628
  %668 = vmatprep.subr.bf16.mxu0 0
  %669 = vmatpush1.bf16.msra.mxu0 %v629
  %670 = vmatprep.subr.bf16.mxu0 0
  %671 = vmatpush1.bf16.msra.mxu0 %v630
  %672 = vmatprep.subr.bf16.mxu0 0
  %673 = vmatpush1.bf16.msra.mxu0 %v631
  %674 = vmatprep.subr.bf16.mxu0 0
  %675 = vmatpush1.bf16.msra.mxu0 %v632
  %676 = vmatprep.subr.bf16.mxu0 0
  %677 = vmatpush1.bf16.msra.mxu0 %v633
  %678 = vmatprep.subr.bf16.mxu0 0
  %679 = vmatpush1.bf16.msra.mxu0 %v634
  %680 = vmatprep.subr.bf16.mxu0 0
  %681 = vmatpush1.bf16.msra.mxu0 %v635
  %682 = vmatprep.subr.bf16.mxu0 0
  %683 = vmatpush1.bf16.msra.mxu0 %v636
  %684 = vmatprep.subr.bf16.mxu0 0
  %685 = vmatpush1.bf16.msra.mxu0 %v637
  %686 = vmatprep.mubr.bf16.mxu0 %v439
  %687 = vmatmul.mubr.bf16.gmra.mrb[0].mxu0 %v438
  %v688 = vpop.f32.mrb[0].mxu0
  %v689 = vadd.f32 %v256, %v688
  %v690 = vpop.f32.mrb[0].mxu0
  %v691 = vpop.f32.mrb[0].mxu0
  %v692 = vadd.f32 %v256, %v691
  %v693 = vpop.f32.mrb[0].mxu0
  %694 = vmatprep.mubr.bf16.mxu0 %v441
  %695 = vmatmul.mubr.bf16.gmra.mrb[0].mxu0 %v440
  %v696 = vpop.f32.mrb[0].mxu0
  %v697 = vadd.f32 %v256, %v696
  %v698 = vpop.f32.mrb[0].mxu0
  %v699 = vpop.f32.mrb[0].mxu0
  %v700 = vadd.f32 %v256, %v699
  %v701 = vpop.f32.mrb[0].mxu0
  %702 = vmatprep.mubr.bf16.mxu0 %v443
  %703 = vmatmul.mubr.bf16.gmra.mrb[0].mxu0 %v442
  %v704 = vpop.f32.mrb[0].mxu0
  %v705 = vadd.f32 %v256, %v704
  %v706 = vpop.f32.mrb[0].mxu0
  %v707 = vpop.f32.mrb[0].mxu0
  %v708 = vadd.f32 %v256, %v707
  %v709 = vpop.f32.mrb[0].mxu0
  %710 = vmatprep.mubr.bf16.mxu0 %v445
  %711 = vmatmul.mubr.bf16.gmra.mrb[0].mxu0 %v444
  %v712 = vpop.f32.mrb[0].mxu0
  %v713 = vadd.f32 %v256, %v712
  %v714 = vpop.f32.mrb[0].mxu0
  %v715 = vpop.f32.mrb[0].mxu0
  %v716 = vadd.f32 %v256, %v715
  %v717 = vpop.f32.mrb[0].mxu0
  %718 = vmatprep.mubr.bf16.mxu0 %v447
  %719 = vmatmul.mubr.bf16.gmra.mrb[0].mxu0 %v446
  %v720 = vpop.f32.mrb[0].mxu0
  %v721 = vadd.f32 %v256, %v720
  %v722 = vpop.f32.mrb[0].mxu0
  %v723 = vpop.f32.mrb[0].mxu0
  %v724 = vadd.f32 %v256, %v723
  %v725 = vpop.f32.mrb[0].mxu0
  %726 = vmatprep.mubr.bf16.mxu0 %v449
  %727 = vmatmul.mubr.bf16.gmra.mrb[0].mxu0 %v448
  %v728 = vpop.f32.mrb[0].mxu0
  %v729 = vadd.f32 %v256, %v728
  %v730 = vpop.f32.mrb[0].mxu0
  %v731 = vpop.f32.mrb[0].mxu0
  %v732 = vadd.f32 %v256, %v731
  %v733 = vpop.f32.mrb[0].mxu0
  %734 = vmatprep.mubr.bf16.mxu0 %v451
  %735 = vmatmul.mubr.bf16.gmra.mrb[0].mxu0 %v450
  %v736 = vpop.f32.mrb[0].mxu0
  %v737 = vadd.f32 %v256, %v736
  %v738 = vpop.f32.mrb[0].mxu0
  %v739 = vpop.f32.mrb[0].mxu0
  %v740 = vadd.f32 %v256, %v739
  %v741 = vpop.f32.mrb[0].mxu0
  %742 = vmatprep.mubr.bf16.mxu0 %v453
  %743 = vmatmul.mubr.bf16.gmra.mrb[0].mxu0 %v452
  %v744 = vpop.f32.mrb[0].mxu0
  %v745 = vadd.f32 %v256, %v744
  %v746 = vpop.f32.mrb[0].mxu0
  %v747 = vpop.f32.mrb[0].mxu0
  %v748 = vadd.f32 %v256, %v747
  %v749 = vpop.f32.mrb[0].mxu0
  %750 = vmatprep.mubr.bf16.mxu0 %v455
  %751 = vmatmul.mubr.bf16.gmra.mrb[0].mxu0 %v454
  %v752 = vpop.f32.mrb[0].mxu0
  %v753 = vadd.f32 %v256, %v752
  %v754 = vpop.f32.mrb[0].mxu0
  %v755 = vpop.f32.mrb[0].mxu0
  %v756 = vadd.f32 %v256, %v755
  %v757 = vpop.f32.mrb[0].mxu0
  %758 = vmatprep.mubr.bf16.mxu0 %v457
  %759 = vmatmul.mubr.bf16.gmra.mrb[0].mxu0 %v456
  %v760 = vpop.f32.mrb[0].mxu0
  %v761 = vadd.f32 %v256, %v760
  %v762 = vpop.f32.mrb[0].mxu0
  %v763 = vpop.f32.mrb[0].mxu0
  %v764 = vadd.f32 %v256, %v763
  %v765 = vpop.f32.mrb[0].mxu0
  %766 = vmatprep.mubr.bf16.mxu0 %v459
  %767 = vmatmul.mubr.bf16.gmra.mrb[0].mxu0 %v458
  %v768 = vpop.f32.mrb[0].mxu0
  %v769 = vadd.f32 %v256, %v768
  %v770 = vpop.f32.mrb[0].mxu0
  %v771 = vpop.f32.mrb[0].mxu0
  %v772 = vadd.f32 %v256, %v771
  %v773 = vpop.f32.mrb[0].mxu0
  %774 = vmatprep.mubr.bf16.mxu0 %v461
  %775 = vmatmul.mubr.bf16.gmra.mrb[0].mxu0 %v460
  %v776 = vpop.f32.mrb[0].mxu0
  %v777 = vadd.f32 %v256, %v776
  %v778 = vpop.f32.mrb[0].mxu0
  %v779 = vpop.f32.mrb[0].mxu0
  %v780 = vadd.f32 %v256, %v779
  %v781 = vpop.f32.mrb[0].mxu0
  %782 = vmatprep.mubr.bf16.mxu0 %v463
  %783 = vmatmul.mubr.bf16.gmra.mrb[0].mxu0 %v462
  %v784 = vpop.f32.mrb[0].mxu0
  %v785 = vadd.f32 %v256, %v784
  %v786 = vpop.f32.mrb[0].mxu0
  %v787 = vpop.f32.mrb[0].mxu0
  %v788 = vadd.f32 %v256, %v787
  %v789 = vpop.f32.mrb[0].mxu0
  %790 = vmatprep.mubr.bf16.mxu0 %v465
  %791 = vmatmul.mubr.bf16.gmra.mrb[0].mxu0 %v464
  %v792 = vpop.f32.mrb[0].mxu0
  %v793 = vadd.f32 %v256, %v792
  %v794 = vpop.f32.mrb[0].mxu0
  %v795 = vpop.f32.mrb[0].mxu0
  %v796 = vadd.f32 %v256, %v795
  %v797 = vpop.f32.mrb[0].mxu0
  %798 = vmatprep.mubr.bf16.mxu0 %v467
  %799 = vmatmul.mubr.bf16.gmra.mrb[0].mxu0 %v466
  %v800 = vpop.f32.mrb[0].mxu0
  %v801 = vadd.f32 %v256, %v800
  %v802 = vpop.f32.mrb[0].mxu0
  %v803 = vpop.f32.mrb[0].mxu0
  %v804 = vadd.f32 %v256, %v803
  %v805 = vpop.f32.mrb[0].mxu0
  %806 = vmatprep.mubr.bf16.mxu0 %v469
  %807 = vmatmul.mubr.bf16.gmra.mrb[0].mxu0 %v468
  %v808 = vpop.f32.mrb[0].mxu0
  %v809 = vadd.f32 %v256, %v808
  %v810 = vpop.f32.mrb[0].mxu0
  %v811 = vpop.f32.mrb[0].mxu0
  %v812 = vadd.f32 %v256, %v811
  %v813 = vpop.f32.mrb[0].mxu0
  %814 = vmatprep.mubr.bf16.mxu0 %v471
  %815 = vmatmul.mubr.bf16.gmra.mrb[0].mxu0 %v470
  %v816 = vpop.f32.mrb[0].mxu0
  %v817 = vadd.f32 %v256, %v816
  %v818 = vpop.f32.mrb[0].mxu0
  %v819 = vpop.f32.mrb[0].mxu0
  %v820 = vadd.f32 %v256, %v819
  %v821 = vpop.f32.mrb[0].mxu0
  %822 = vmatprep.mubr.bf16.mxu0 %v473
  %823 = vmatmul.mubr.bf16.gmra.mrb[0].mxu0 %v472
  %v824 = vpop.f32.mrb[0].mxu0
  %v825 = vadd.f32 %v256, %v824
  %v826 = vpop.f32.mrb[0].mxu0
  %v827 = vpop.f32.mrb[0].mxu0
  %v828 = vadd.f32 %v256, %v827
  %v829 = vpop.f32.mrb[0].mxu0
  %830 = vmatprep.mubr.bf16.mxu0 %v475
  %831 = vmatmul.mubr.bf16.gmra.mrb[0].mxu0 %v474
  %v832 = vpop.f32.mrb[0].mxu0
  %v833 = vadd.f32 %v256, %v832
  %v834 = vpop.f32.mrb[0].mxu0
  %v835 = vpop.f32.mrb[0].mxu0
  %v836 = vadd.f32 %v256, %v835
  %v837 = vpop.f32.mrb[0].mxu0
  %838 = vmatprep.mubr.bf16.mxu0 %v477
  %839 = vmatmul.mubr.bf16.gmra.mrb[0].mxu0 %v476
  %v840 = vpop.f32.mrb[0].mxu0
  %v841 = vadd.f32 %v256, %v840
  %v842 = vpop.f32.mrb[0].mxu0
  %v843 = vpop.f32.mrb[0].mxu0
  %v844 = vadd.f32 %v256, %v843
  %v845 = vpop.f32.mrb[0].mxu0
  %846 = vmatprep.mubr.bf16.mxu0 %v479
  %847 = vmatmul.mubr.bf16.gmra.mrb[0].mxu0 %v478
  %v848 = vpop.f32.mrb[0].mxu0
  %v849 = vadd.f32 %v256, %v848
  %v850 = vpop.f32.mrb[0].mxu0
  %v851 = vpop.f32.mrb[0].mxu0
  %v852 = vadd.f32 %v256, %v851
  %v853 = vpop.f32.mrb[0].mxu0
  %854 = vmatprep.mubr.bf16.mxu0 %v481
  %855 = vmatmul.mubr.bf16.gmra.mrb[0].mxu0 %v480
  %v856 = vpop.f32.mrb[0].mxu0
  %v857 = vadd.f32 %v256, %v856
  %v858 = vpop.f32.mrb[0].mxu0
  %v859 = vpop.f32.mrb[0].mxu0
  %v860 = vadd.f32 %v256, %v859
  %v861 = vpop.f32.mrb[0].mxu0
  %862 = vmatprep.mubr.bf16.mxu0 %v483
  %863 = vmatmul.mubr.bf16.gmra.mrb[0].mxu0 %v482
  %v864 = vpop.f32.mrb[0].mxu0
  %v865 = vadd.f32 %v256, %v864
  %v866 = vpop.f32.mrb[0].mxu0
  %v867 = vpop.f32.mrb[0].mxu0
  %v868 = vadd.f32 %v256, %v867
  %v869 = vpop.f32.mrb[0].mxu0
  %870 = vmatprep.mubr.bf16.mxu0 %v485
  %871 = vmatmul.mubr.bf16.gmra.mrb[0].mxu0 %v484
  %v872 = vpop.f32.mrb[0].mxu0
  %v873 = vadd.f32 %v256, %v872
  %v874 = vpop.f32.mrb[0].mxu0
  %v875 = vpop.f32.mrb[0].mxu0
  %v876 = vadd.f32 %v256, %v875
  %v877 = vpop.f32.mrb[0].mxu0
  %878 = vmatprep.mubr.bf16.mxu0 %v487
  %879 = vmatmul.mubr.bf16.gmra.mrb[0].mxu0 %v486
  %v880 = vpop.f32.mrb[0].mxu0
  %v881 = vadd.f32 %v256, %v880
  %v882 = vpop.f32.mrb[0].mxu0
  %v883 = vpop.f32.mrb[0].mxu0
  %v884 = vadd.f32 %v256, %v883
  %v885 = vpop.f32.mrb[0].mxu0
  %886 = vmatprep.mubr.bf16.mxu0 %v489
  %887 = vmatmul.mubr.bf16.gmra.mrb[0].mxu0 %v488
  %v888 = vpop.f32.mrb[0].mxu0
  %v889 = vadd.f32 %v256, %v888
  %v890 = vpop.f32.mrb[0].mxu0
  %v891 = vpop.f32.mrb[0].mxu0
  %v892 = vadd.f32 %v256, %v891
  %v893 = vpop.f32.mrb[0].mxu0
  %894 = vmatprep.mubr.bf16.mxu0 %v491
  %895 = vmatmul.mubr.bf16.gmra.mrb[0].mxu0 %v490
  %v896 = vpop.f32.mrb[0].mxu0
  %v897 = vadd.f32 %v256, %v896
  %v898 = vpop.f32.mrb[0].mxu0
  %v899 = vpop.f32.mrb[0].mxu0
  %v900 = vadd.f32 %v256, %v899
  %v901 = vpop.f32.mrb[0].mxu0
  %902 = vmatprep.mubr.bf16.mxu0 %v493
  %903 = vmatmul.mubr.bf16.gmra.mrb[0].mxu0 %v492
  %v904 = vpop.f32.mrb[0].mxu0
  %v905 = vadd.f32 %v256, %v904
  %v906 = vpop.f32.mrb[0].mxu0
  %v907 = vpop.f32.mrb[0].mxu0
  %v908 = vadd.f32 %v256, %v907
  %v909 = vpop.f32.mrb[0].mxu0
  %910 = vmatprep.mubr.bf16.mxu0 %v495
  %911 = vmatmul.mubr.bf16.gmra.mrb[0].mxu0 %v494
  %v912 = vpop.f32.mrb[0].mxu0
  %v913 = vadd.f32 %v256, %v912
  %v914 = vpop.f32.mrb[0].mxu0
  %v915 = vpop.f32.mrb[0].mxu0
  %v916 = vadd.f32 %v256, %v915
  %v917 = vpop.f32.mrb[0].mxu0
  %918 = vmatprep.mubr.bf16.mxu0 %v497
  %919 = vmatmul.mubr.bf16.gmra.mrb[0].mxu0 %v496
  %v920 = vpop.f32.mrb[0].mxu0
  %v921 = vadd.f32 %v256, %v920
  %v922 = vpop.f32.mrb[0].mxu0
  %v923 = vpop.f32.mrb[0].mxu0
  %v924 = vadd.f32 %v256, %v923
  %v925 = vpop.f32.mrb[0].mxu0
  %926 = vdwg.mxu0
  %v927 = vmax.f32 %v689, 0.0
  %v928 = vmax.f32 %v692, 0.0
  %v929 = vmax.f32 %v697, 0.0
  %v930 = vmax.f32 %v700, 0.0
  %v931 = vmax.f32 %v705, 0.0
  %v932 = vmax.f32 %v708, 0.0
  %v933 = vmax.f32 %v713, 0.0
  %v934 = vmax.f32 %v716, 0.0
  %v935 = vmax.f32 %v721, 0.0
  %v936 = vmax.f32 %v724, 0.0
  %v937 = vmax.f32 %v729, 0.0
  %v938 = vmax.f32 %v732, 0.0
  %v939 = vmax.f32 %v737, 0.0
  %v940 = vmax.f32 %v740, 0.0
  %v941 = vmax.f32 %v745, 0.0
  %v942 = vmax.f32 %v748, 0.0
  %v943 = vmax.f32 %v753, 0.0
  %v944 = vmax.f32 %v756, 0.0
  %v945 = vmax.f32 %v761, 0.0
  %v946 = vmax.f32 %v764, 0.0
  %v947 = vmax.f32 %v769, 0.0
  %v948 = vmax.f32 %v772, 0.0
  %v949 = vmax.f32 %v777, 0.0
  %v950 = vmax.f32 %v780, 0.0
  %v951 = vmax.f32 %v785, 0.0
  %v952 = vmax.f32 %v788, 0.0
  %v953 = vmax.f32 %v793, 0.0
  %v954 = vmax.f32 %v796, 0.0
  %v955 = vmax.f32 %v801, 0.0
  %v956 = vmax.f32 %v804, 0.0
  %v957 = vmax.f32 %v809, 0.0
  %v958 = vmax.f32 %v812, 0.0
  %v959 = vmax.f32 %v817, 0.0
  %v960 = vmax.f32 %v820, 0.0
  %v961 = vmax.f32 %v825, 0.0
  %v962 = vmax.f32 %v828, 0.0
  %v963 = vmax.f32 %v833, 0.0
  %v964 = vmax.f32 %v836, 0.0
  %v965 = vmax.f32 %v841, 0.0
  %v966 = vmax.f32 %v844, 0.0
  %v967 = vmax.f32 %v849, 0.0
  %v968 = vmax.f32 %v852, 0.0
  %v969 = vmax.f32 %v857, 0.0
  %v970 = vmax.f32 %v860, 0.0
  %v971 = vmax.f32 %v865, 0.0
  %v972 = vmax.f32 %v868, 0.0
  %v973 = vmax.f32 %v873, 0.0
  %v974 = vmax.f32 %v876, 0.0
  %v975 = vmax.f32 %v881, 0.0
  %v976 = vmax.f32 %v884, 0.0
  %v977 = vmax.f32 %v889, 0.0
  %v978 = vmax.f32 %v892, 0.0
  %v979 = vmax.f32 %v897, 0.0
  %v980 = vmax.f32 %v900, 0.0
  %v981 = vmax.f32 %v905, 0.0
  %v982 = vmax.f32 %v908, 0.0
  %v983 = vmax.f32 %v913, 0.0
  %v984 = vmax.f32 %v916, 0.0
  %v985 = vmax.f32 %v921, 0.0
  %v986 = vmax.f32 %v924, 0.0
  %v987 = vpack.c.bf16 %v928, %v927
  %v988 = vpack.c.bf16 %v930, %v929
  %v989 = vpack.c.bf16 %v932, %v931
  %v990 = vpack.c.bf16 %v934, %v933
  %v991 = vpack.c.bf16 %v936, %v935
  %v992 = vpack.c.bf16 %v938, %v937
  %v993 = vpack.c.bf16 %v940, %v939
  %v994 = vpack.c.bf16 %v942, %v941
  %v995 = vpack.c.bf16 %v944, %v943
  %v996 = vpack.c.bf16 %v946, %v945
  %v997 = vpack.c.bf16 %v948, %v947
  %v998 = vpack.c.bf16 %v950, %v949
  %v999 = vpack.c.bf16 %v952, %v951
  %v1000 = vpack.c.bf16 %v954, %v953
  %v1001 = vpack.c.bf16 %v956, %v955
  %v1002 = vpack.c.bf16 %v958, %v957
  %v1003 = vpack.c.bf16 %v960, %v959
  %v1004 = vpack.c.bf16 %v962, %v961
  %v1005 = vpack.c.bf16 %v964, %v963
  %v1006 = vpack.c.bf16 %v966, %v965
  %v1007 = vpack.c.bf16 %v968, %v967
  %v1008 = vpack.c.bf16 %v970, %v969
  %v1009 = vpack.c.bf16 %v972, %v971
  %v1010 = vpack.c.bf16 %v974, %v973
  %v1011 = vpack.c.bf16 %v976, %v975
  %v1012 = vpack.c.bf16 %v978, %v977
  %v1013 = vpack.c.bf16 %v980, %v979
  %v1014 = vpack.c.bf16 %v982, %v981
  %v1015 = vpack.c.bf16 %v984, %v983
  %v1016 = vpack.c.bf16 %v986, %v985
  %vm1017 = vcmask 261120
  %1018 = vst.msk [vmem:[#allocation2] sm:$0xff] %vm1017, %v987
  %1019 = vst.msk [vmem:[#allocation2 + $0x8] sm:$0xff] %vm1017, %v988
  %1020 = vst.msk [vmem:[#allocation2 + $0x10] sm:$0xff] %vm1017, %v989
  %1021 = vst.msk [vmem:[#allocation2 + $0x18] sm:$0xff] %vm1017, %v990
  %1022 = vst.msk [vmem:[#allocation2 + $0x20] sm:$0xff] %vm1017, %v991
  %1023 = vst.msk [vmem:[#allocation2 + $0x28] sm:$0xff] %vm1017, %v992
  %1024 = vst.msk [vmem:[#allocation2 + $0x30] sm:$0xff] %vm1017, %v993
  %1025 = vst.msk [vmem:[#allocation2 + $0x38] sm:$0xff] %vm1017, %v994
  %1026 = vst.msk [vmem:[#allocation2 + $0x40] sm:$0xff] %vm1017, %v995
  %1027 = vst.msk [vmem:[#allocation2 + $0x48] sm:$0xff] %vm1017, %v996
  %1028 = vst.msk [vmem:[#allocation2 + $0x50] sm:$0xff] %vm1017, %v997
  %1029 = vst.msk [vmem:[#allocation2 + $0x58] sm:$0xff] %vm1017, %v998
  %1030 = vst.msk [vmem:[#allocation2 + $0x60] sm:$0xff] %vm1017, %v999
  %1031 = vst.msk [vmem:[#allocation2 + $0x68] sm:$0xff] %vm1017, %v1000
  %1032 = vst.msk [vmem:[#allocation2 + $0x70] sm:$0xff] %vm1017, %v1001
  %1033 = vst.msk [vmem:[#allocation2 + $0x78] sm:$0xff] %vm1017, %v1002
  %1034 = vst.msk [vmem:[#allocation2 + $0x80] sm:$0xff] %vm1017, %v1003
  %1035 = vst.msk [vmem:[#allocation2 + $0x88] sm:$0xff] %vm1017, %v1004
  %1036 = vst.msk [vmem:[#allocation2 + $0x90] sm:$0xff] %vm1017, %v1005
  %1037 = vst.msk [vmem:[#allocation2 + $0x98] sm:$0xff] %vm1017, %v1006
  %1038 = vst.msk [vmem:[#allocation2 + $0xa0] sm:$0xff] %vm1017, %v1007
  %1039 = vst.msk [vmem:[#allocation2 + $0xa8] sm:$0xff] %vm1017, %v1008
  %1040 = vst.msk [vmem:[#allocation2 + $0xb0] sm:$0xff] %vm1017, %v1009
  %1041 = vst.msk [vmem:[#allocation2 + $0xb8] sm:$0xff] %vm1017, %v1010
  %1042 = vst.msk [vmem:[#allocation2 + $0xc0] sm:$0xff] %vm1017, %v1011
  %1043 = vst.msk [vmem:[#allocation2 + $0xc8] sm:$0xff] %vm1017, %v1012
  %1044 = vst.msk [vmem:[#allocation2 + $0xd0] sm:$0xff] %vm1017, %v1013
  %1045 = vst.msk [vmem:[#allocation2 + $0xd8] sm:$0xff] %vm1017, %v1014
  %1046 = vst.msk [vmem:[#allocation2 + $0xe0] sm:$0xff] %vm1017, %v1015
  %1047 = vst.msk [vmem:[#allocation2 + $0xe8] sm:$0xff] %vm1017, %v1016
  %v1048 = vld [vmem:[%s7] sm:$0xff]
  %v1049 = vld [vmem:[%s7 + $0x8] sm:$0xff]
  %v1050 = vld [vmem:[%s7 + $0x10] sm:$0xff]
  %v1051 = vld [vmem:[%s7 + $0x18] sm:$0xff]
  %v1052 = vld [vmem:[%s7 + $0x20] sm:$0xff]
  %v1053 = vld [vmem:[%s7 + $0x28] sm:$0xff]
  %v1054 = vld [vmem:[%s7 + $0x30] sm:$0xff]
  %v1055 = vld [vmem:[%s7 + $0x38] sm:$0xff]
  %v1056 = vld [vmem:[%s7 + $0x40] sm:$0xff]
  %v1057 = vld [vmem:[%s7 + $0x48] sm:$0xff]
  %v1058 = vld [vmem:[%s7 + $0x50] sm:$0xff]
  %v1059 = vld [vmem:[%s7 + $0x58] sm:$0xff]
  %v1060 = vld [vmem:[%s7 + $0x60] sm:$0xff]
  %v1061 = vld [vmem:[%s7 + $0x68] sm:$0xff]
  %v1062 = vld [vmem:[%s7 + $0x70] sm:$0xff]
  %v1063 = vld [vmem:[%s7 + $0x78] sm:$0xff]
  %v1064 = vld [vmem:[%s7 + $0x80] sm:$0xff]
  %v1065 = vld [vmem:[%s7 + $0x88] sm:$0xff]
  %v1066 = vld [vmem:[%s7 + $0x90] sm:$0xff]
  %v1067 = vld [vmem:[%s7 + $0x98] sm:$0xff]
  %v1068 = vld [vmem:[%s7 + $0xa0] sm:$0xff]
  %v1069 = vld [vmem:[%s7 + $0xa8] sm:$0xff]
  %v1070 = vld [vmem:[%s7 + $0xb0] sm:$0xff]
  %v1071 = vld [vmem:[%s7 + $0xb8] sm:$0xff]
  %v1072 = vld [vmem:[%s7 + $0xc0] sm:$0xff]
  %v1073 = vld [vmem:[%s7 + $0xc8] sm:$0xff]
  %v1074 = vld [vmem:[%s7 + $0xd0] sm:$0xff]
  %v1075 = vld [vmem:[%s7 + $0xd8] sm:$0xff]
  %v1076 = vld [vmem:[%s7 + $0xe0] sm:$0xff]
  %v1077 = vld [vmem:[%s7 + $0xe8] sm:$0xff]
  %v1078 = vld [vmem:[%s7 + $0xf0] sm:$0xff]
  %v1079 = vld [vmem:[%s7 + $0xf8] sm:$0xff]
  %v1080 = vld [vmem:[%s7 + $0x100] sm:$0xff]
  %v1081 = vld [vmem:[%s7 + $0x108] sm:$0xff]
  %v1082 = vld [vmem:[%s7 + $0x110] sm:$0xff]
  %v1083 = vld [vmem:[%s7 + $0x118] sm:$0xff]
  %v1084 = vld [vmem:[%s7 + $0x120] sm:$0xff]
  %v1085 = vld [vmem:[%s7 + $0x128] sm:$0xff]
  %v1086 = vld [vmem:[%s7 + $0x130] sm:$0xff]
  %v1087 = vld [vmem:[%s7 + $0x138] sm:$0xff]
  %v1088 = vld [vmem:[%s7 + $0x140] sm:$0xff]
  %v1089 = vld [vmem:[%s7 + $0x148] sm:$0xff]
  %v1090 = vld [vmem:[%s7 + $0x150] sm:$0xff]
  %v1091 = vld [vmem:[%s7 + $0x158] sm:$0xff]
  %v1092 = vld [vmem:[%s7 + $0x160] sm:$0xff]
  %v1093 = vld [vmem:[%s7 + $0x168] sm:$0xff]
  %v1094 = vld [vmem:[%s7 + $0x170] sm:$0xff]
  %v1095 = vld [vmem:[%s7 + $0x178] sm:$0xff]
  %v1096 = vld [vmem:[%s7 + $0x180] sm:$0xff]
  %v1097 = vld [vmem:[%s7 + $0x188] sm:$0xff]
  %v1098 = vld [vmem:[%s7 + $0x190] sm:$0xff]
  %v1099 = vld [vmem:[%s7 + $0x198] sm:$0xff]
  %v1100 = vld [vmem:[%s7 + $0x1a0] sm:$0xff]
  %v1101 = vld [vmem:[%s7 + $0x1a8] sm:$0xff]
  %v1102 = vld [vmem:[%s7 + $0x1b0] sm:$0xff]
  %v1103 = vld [vmem:[%s7 + $0x1b8] sm:$0xff]
  %v1104 = vld [vmem:[%s7 + $0x1c0] sm:$0xff]
  %v1105 = vld [vmem:[%s7 + $0x1c8] sm:$0xff]
  %v1106 = vld [vmem:[%s7 + $0x1d0] sm:$0xff]
  %v1107 = vld [vmem:[%s7 + $0x1d8] sm:$0xff]
  %v1108 = vld [vmem:[%s7 + $0x1e0] sm:$0xff]
  %v1109 = vld [vmem:[%s7 + $0x1e8] sm:$0xff]
  %v1110 = vld [vmem:[%s7 + $0x1f0] sm:$0xff]
  %v1111 = vld [vmem:[%s7 + $0x1f8] sm:$0xff]
  %v1112 = vld [vmem:[%s7 + $0x200] sm:$0xff]
  %v1113 = vld [vmem:[%s7 + $0x208] sm:$0xff]
  %v1114 = vld [vmem:[%s7 + $0x210] sm:$0xff]
  %v1115 = vld [vmem:[%s7 + $0x218] sm:$0xff]
  %v1116 = vld [vmem:[%s7 + $0x220] sm:$0xff]
  %v1117 = vld [vmem:[%s7 + $0x228] sm:$0xff]
  %v1118 = vld [vmem:[%s7 + $0x230] sm:$0xff]
  %v1119 = vld [vmem:[%s7 + $0x238] sm:$0xff]
  %v1120 = vld [vmem:[%s7 + $0x240] sm:$0xff]
  %v1121 = vld [vmem:[%s7 + $0x248] sm:$0xff]
  %v1122 = vld [vmem:[%s7 + $0x250] sm:$0xff]
  %v1123 = vld [vmem:[%s7 + $0x258] sm:$0xff]
  %v1124 = vld [vmem:[%s7 + $0x260] sm:$0xff]
  %v1125 = vld [vmem:[%s7 + $0x268] sm:$0xff]
  %v1126 = vld [vmem:[%s7 + $0x270] sm:$0xff]
  %v1127 = vld [vmem:[%s7 + $0x278] sm:$0xff]
  %v1128 = vld [vmem:[%s7 + $0x280] sm:$0xff]
  %v1129 = vld [vmem:[%s7 + $0x288] sm:$0xff]
  %v1130 = vld [vmem:[%s7 + $0x290] sm:$0xff]
  %v1131 = vld [vmem:[%s7 + $0x298] sm:$0xff]
  %v1132 = vld [vmem:[%s7 + $0x2a0] sm:$0xff]
  %v1133 = vld [vmem:[%s7 + $0x2a8] sm:$0xff]
  %v1134 = vld [vmem:[%s7 + $0x2b0] sm:$0xff]
  %v1135 = vld [vmem:[%s7 + $0x2b8] sm:$0xff]
  %v1136 = vld [vmem:[%s7 + $0x2c0] sm:$0xff]
  %v1137 = vld [vmem:[%s7 + $0x2c8] sm:$0xff]
  %v1138 = vld [vmem:[%s7 + $0x2d0] sm:$0xff]
  %v1139 = vld [vmem:[%s7 + $0x2d8] sm:$0xff]
  %v1140 = vld [vmem:[%s7 + $0x2e0] sm:$0xff]
  %v1141 = vld [vmem:[%s7 + $0x2e8] sm:$0xff]
  %v1142 = vld [vmem:[%s7 + $0x2f0] sm:$0xff]
  %v1143 = vld [vmem:[%s7 + $0x2f8] sm:$0xff]
  %v1144 = vld [vmem:[#allocation2] sm:$0xff]
  %v1145 = vld [vmem:[#allocation2 + $0x8] sm:$0xff]
  %v1146 = vld [vmem:[#allocation2 + $0x10] sm:$0xff]
  %v1147 = vld [vmem:[#allocation2 + $0x18] sm:$0xff]
  %v1148 = vld [vmem:[#allocation2 + $0x20] sm:$0xff]
  %v1149 = vld [vmem:[#allocation2 + $0x28] sm:$0xff]
  %v1150 = vld [vmem:[#allocation2 + $0x30] sm:$0xff]
  %v1151 = vld [vmem:[#allocation2 + $0x38] sm:$0xff]
  %v1152 = vld [vmem:[#allocation2 + $0x40] sm:$0xff]
  %v1153 = vld [vmem:[#allocation2 + $0x48] sm:$0xff]
  %v1154 = vld [vmem:[#allocation2 + $0x50] sm:$0xff]
  %v1155 = vld [vmem:[#allocation2 + $0x58] sm:$0xff]
  %v1156 = vld [vmem:[#allocation2 + $0x60] sm:$0xff]
  %v1157 = vld [vmem:[#allocation2 + $0x68] sm:$0xff]
  %v1158 = vld [vmem:[#allocation2 + $0x70] sm:$0xff]
  %v1255 = vunpack.c.l.b16 %v1048
  %v1256 = vunpack.c.h.b16 %v1048
  %v1257 = vunpack.c.l.b16 %v1049
  %v1258 = vunpack.c.h.b16 %v1049
  %v1259 = vunpack.c.l.b16 %v1050
  %v1260 = vunpack.c.h.b16 %v1050
  %v1261 = vunpack.c.l.b16 %v1051
  %v1262 = vunpack.c.h.b16 %v1051
  %v1263 = vunpack.c.l.b16 %v1052
  %v1264 = vunpack.c.h.b16 %v1052
  %v1265 = vunpack.c.l.b16 %v1053
  %v1266 = vunpack.c.h.b16 %v1053
  %v1267 = vunpack.c.l.b16 %v1054
  %v1268 = vunpack.c.h.b16 %v1054
  %v1269 = vunpack.c.l.b16 %v1055
  %v1270 = vunpack.c.h.b16 %v1055
  %v1271 = vunpack.c.l.b16 %v1056
  %v1272 = vunpack.c.h.b16 %v1056
  %v1273 = vunpack.c.l.b16 %v1057
  %v1274 = vunpack.c.h.b16 %v1057
  %v1275 = vunpack.c.l.b16 %v1058
  %v1276 = vunpack.c.h.b16 %v1058
  %v1277 = vunpack.c.l.b16 %v1059
  %v1278 = vunpack.c.h.b16 %v1059
  %v1279 = vunpack.c.l.b16 %v1060
  %v1280 = vunpack.c.h.b16 %v1060
  %v1281 = vunpack.c.l.b16 %v1061
  %v1282 = vunpack.c.h.b16 %v1061
  %v1283 = vunpack.c.l.b16 %v1062
  %v1284 = vunpack.c.h.b16 %v1062
  %v1285 = vunpack.c.l.b16 %v1063
  %v1286 = vunpack.c.h.b16 %v1063
  %v1287 = vunpack.c.l.b16 %v1064
  %v1288 = vunpack.c.h.b16 %v1064
  %v1289 = vunpack.c.l.b16 %v1065
  %v1290 = vunpack.c.h.b16 %v1065
  %v1291 = vunpack.c.l.b16 %v1066
  %v1292 = vunpack.c.h.b16 %v1066
  %v1293 = vunpack.c.l.b16 %v1067
  %v1294 = vunpack.c.h.b16 %v1067
  %v1295 = vunpack.c.l.b16 %v1068
  %v1296 = vunpack.c.h.b16 %v1068
  %v1297 = vunpack.c.l.b16 %v1069
  %v1298 = vunpack.c.h.b16 %v1069
  %v1299 = vunpack.c.l.b16 %v1070
  %v1300 = vunpack.c.h.b16 %v1070
  %v1301 = vunpack.c.l.b16 %v1071
  %v1302 = vunpack.c.h.b16 %v1071
  %v1303 = vunpack.c.l.b16 %v1072
  %v1304 = vunpack.c.h.b16 %v1072
  %v1305 = vunpack.c.l.b16 %v1073
  %v1306 = vunpack.c.h.b16 %v1073
  %v1307 = vunpack.c.l.b16 %v1074
  %v1308 = vunpack.c.h.b16 %v1074
  %v1309 = vunpack.c.l.b16 %v1075
  %v1310 = vunpack.c.h.b16 %v1075
  %v1311 = vunpack.c.l.b16 %v1076
  %v1312 = vunpack.c.h.b16 %v1076
  %v1313 = vunpack.c.l.b16 %v1077
  %v1314 = vunpack.c.h.b16 %v1077
  %v1315 = vunpack.c.l.b16 %v1078
  %v1316 = vunpack.c.h.b16 %v1078
  %v1317 = vunpack.c.l.b16 %v1079
  %v1318 = vunpack.c.h.b16 %v1079
  %v1319 = vunpack.c.l.b16 %v1080
  %v1320 = vunpack.c.h.b16 %v1080
  %v1321 = vunpack.c.l.b16 %v1081
  %v1322 = vunpack.c.h.b16 %v1081
  %v1323 = vunpack.c.l.b16 %v1082
  %v1324 = vunpack.c.h.b16 %v1082
  %v1325 = vunpack.c.l.b16 %v1083
  %v1326 = vunpack.c.h.b16 %v1083
  %v1327 = vunpack.c.l.b16 %v1084
  %v1328 = vunpack.c.h.b16 %v1084
  %v1329 = vunpack.c.l.b16 %v1085
  %v1330 = vunpack.c.h.b16 %v1085
  %v1331 = vunpack.c.l.b16 %v1086
  %v1332 = vunpack.c.h.b16 %v1086
  %v1333 = vunpack.c.l.b16 %v1087
  %v1334 = vunpack.c.h.b16 %v1087
  %v1335 = vunpack.c.l.b16 %v1088
  %v1336 = vunpack.c.h.b16 %v1088
  %v1337 = vunpack.c.l.b16 %v1089
  %v1338 = vunpack.c.h.b16 %v1089
  %v1339 = vunpack.c.l.b16 %v1090
  %v1340 = vunpack.c.h.b16 %v1090
  %v1341 = vunpack.c.l.b16 %v1091
  %v1342 = vunpack.c.h.b16 %v1091
  %v1343 = vunpack.c.l.b16 %v1092
  %v1344 = vunpack.c.h.b16 %v1092
  %v1345 = vunpack.c.l.b16 %v1093
  %v1346 = vunpack.c.h.b16 %v1093
  %v1347 = vunpack.c.l.b16 %v1094
  %v1348 = vunpack.c.h.b16 %v1094
  %v1349 = vunpack.c.l.b16 %v1095
  %v1350 = vunpack.c.h.b16 %v1095
  %v1351 = vunpack.c.l.b16 %v1096
  %v1352 = vunpack.c.h.b16 %v1096
  %v1353 = vunpack.c.l.b16 %v1097
  %v1354 = vunpack.c.h.b16 %v1097
  %v1355 = vunpack.c.l.b16 %v1098
  %v1356 = vunpack.c.h.b16 %v1098
  %v1357 = vunpack.c.l.b16 %v1099
  %v1358 = vunpack.c.h.b16 %v1099
  %v1359 = vunpack.c.l.b16 %v1100
  %v1360 = vunpack.c.h.b16 %v1100
  %v1361 = vunpack.c.l.b16 %v1101
  %v1362 = vunpack.c.h.b16 %v1101
  %v1363 = vunpack.c.l.b16 %v1102
  %v1364 = vunpack.c.h.b16 %v1102
  %v1365 = vunpack.c.l.b16 %v1103
  %v1366 = vunpack.c.h.b16 %v1103
  %v1367 = vunpack.c.l.b16 %v1104
  %v1368 = vunpack.c.h.b16 %v1104
  %v1369 = vunpack.c.l.b16 %v1105
  %v1370 = vunpack.c.h.b16 %v1105
  %v1371 = vunpack.c.l.b16 %v1106
  %v1372 = vunpack.c.h.b16 %v1106
  %v1373 = vunpack.c.l.b16 %v1107
  %v1374 = vunpack.c.h.b16 %v1107
  %v1375 = vunpack.c.l.b16 %v1108
  %v1376 = vunpack.c.h.b16 %v1108
  %v1377 = vunpack.c.l.b16 %v1109
  %v1378 = vunpack.c.h.b16 %v1109
  %v1379 = vunpack.c.l.b16 %v1110
  %v1380 = vunpack.c.h.b16 %v1110
  %v1381 = vunpack.c.l.b16 %v1111
  %v1382 = vunpack.c.h.b16 %v1111
  %v1383 = vunpack.c.l.b16 %v1112
  %v1384 = vunpack.c.h.b16 %v1112
  %v1385 = vunpack.c.l.b16 %v1113
  %v1386 = vunpack.c.h.b16 %v1113
  %v1387 = vunpack.c.l.b16 %v1114
  %v1388 = vunpack.c.h.b16 %v1114
  %v1389 = vunpack.c.l.b16 %v1115
  %v1390 = vunpack.c.h.b16 %v1115
  %v1391 = vunpack.c.l.b16 %v1116
  %v1392 = vunpack.c.h.b16 %v1116
  %v1393 = vunpack.c.l.b16 %v1117
  %v1394 = vunpack.c.h.b16 %v1117
  %v1395 = vunpack.c.l.b16 %v1118
  %v1396 = vunpack.c.h.b16 %v1118
  %v1397 = vunpack.c.l.b16 %v1119
  %v1398 = vunpack.c.h.b16 %v1119
  %v1399 = vunpack.c.l.b16 %v1120
  %v1400 = vunpack.c.h.b16 %v1120
  %v1401 = vunpack.c.l.b16 %v1121
  %v1402 = vunpack.c.h.b16 %v1121
  %v1403 = vunpack.c.l.b16 %v1122
  %v1404 = vunpack.c.h.b16 %v1122
  %v1405 = vunpack.c.l.b16 %v1123
  %v1406 = vunpack.c.h.b16 %v1123
  %v1407 = vunpack.c.l.b16 %v1124
  %v1408 = vunpack.c.h.b16 %v1124
  %v1409 = vunpack.c.l.b16 %v1125
  %v1410 = vunpack.c.h.b16 %v1125
  %v1411 = vunpack.c.l.b16 %v1126
  %v1412 = vunpack.c.h.b16 %v1126
  %v1413 = vunpack.c.l.b16 %v1127
  %v1414 = vunpack.c.h.b16 %v1127
  %v1415 = vunpack.c.l.b16 %v1128
  %v1416 = vunpack.c.h.b16 %v1128
  %v1417 = vunpack.c.l.b16 %v1129
  %v1418 = vunpack.c.h.b16 %v1129
  %v1419 = vunpack.c.l.b16 %v1130
  %v1420 = vunpack.c.h.b16 %v1130
  %v1421 = vunpack.c.l.b16 %v1131
  %v1422 = vunpack.c.h.b16 %v1131
  %v1423 = vunpack.c.l.b16 %v1132
  %v1424 = vunpack.c.h.b16 %v1132
  %v1425 = vunpack.c.l.b16 %v1133
  %v1426 = vunpack.c.h.b16 %v1133
  %v1427 = vunpack.c.l.b16 %v1134
  %v1428 = vunpack.c.h.b16 %v1134
  %v1429 = vunpack.c.l.b16 %v1135
  %v1430 = vunpack.c.h.b16 %v1135
  %v1431 = vunpack.c.l.b16 %v1136
  %v1432 = vunpack.c.h.b16 %v1136
  %v1433 = vunpack.c.l.b16 %v1137
  %v1434 = vunpack.c.h.b16 %v1137
  %v1435 = vunpack.c.l.b16 %v1138
  %v1436 = vunpack.c.h.b16 %v1138
  %v1437 = vunpack.c.l.b16 %v1139
  %v1438 = vunpack.c.h.b16 %v1139
  %v1439 = vunpack.c.l.b16 %v1140
  %v1440 = vunpack.c.h.b16 %v1140
  %v1441 = vunpack.c.l.b16 %v1141
  %v1442 = vunpack.c.h.b16 %v1141
  %v1443 = vunpack.c.l.b16 %v1142
  %v1444 = vunpack.c.h.b16 %v1142
  %v1445 = vunpack.c.l.b16 %v1143
  %v1446 = vunpack.c.h.b16 %v1143
  %v1447 = vpack.c.b16 %v1257, %v1255
  %v1448 = vpack.c.b16 %v1258, %v1256
  %v1449 = vpack.c.b16 %v1261, %v1259
  %v1450 = vpack.c.b16 %v1262, %v1260
  %v1451 = vpack.c.b16 %v1265, %v1263
  %v1452 = vpack.c.b16 %v1266, %v1264
  %v1453 = vpack.c.b16 %v1269, %v1267
  %v1454 = vpack.c.b16 %v1270, %v1268
  %v1455 = vpack.c.b16 %v1273, %v1271
  %v1456 = vpack.c.b16 %v1274, %v1272
  %v1457 = vpack.c.b16 %v1277, %v1275
  %v1458 = vpack.c.b16 %v1278, %v1276
  %v1459 = vpack.c.b16 %v1281, %v1279
  %v1460 = vpack.c.b16 %v1282, %v1280
  %v1461 = vpack.c.b16 %v1285, %v1283
  %v1462 = vpack.c.b16 %v1286, %v1284
  %v1463 = vpack.c.b16 %v1289, %v1287
  %v1464 = vpack.c.b16 %v1290, %v1288
  %v1465 = vpack.c.b16 %v1293, %v1291
  %v1466 = vpack.c.b16 %v1294, %v1292
  %v1467 = vpack.c.b16 %v1297, %v1295
  %v1468 = vpack.c.b16 %v1298, %v1296
  %v1469 = vpack.c.b16 %v1301, %v1299
  %v1470 = vpack.c.b16 %v1302, %v1300
  %v1471 = vpack.c.b16 %v1305, %v1303
  %v1472 = vpack.c.b16 %v1306, %v1304
  %v1473 = vpack.c.b16 %v1309, %v1307
  %v1474 = vpack.c.b16 %v1310, %v1308
  %v1475 = vpack.c.b16 %v1313, %v1311
  %v1476 = vpack.c.b16 %v1314, %v1312
  %v1477 = vpack.c.b16 %v1317, %v1315
  %v1478 = vpack.c.b16 %v1318, %v1316
  %v1479 = vpack.c.b16 %v1321, %v1319
  %v1480 = vpack.c.b16 %v1322, %v1320
  %v1481 = vpack.c.b16 %v1325, %v1323
  %v1482 = vpack.c.b16 %v1326, %v1324
  %v1483 = vpack.c.b16 %v1329, %v1327
  %v1484 = vpack.c.b16 %v1330, %v1328
  %v1485 = vpack.c.b16 %v1333, %v1331
  %v1486 = vpack.c.b16 %v1334, %v1332
  %v1487 = vpack.c.b16 %v1337, %v1335
  %v1488 = vpack.c.b16 %v1338, %v1336
  %v1489 = vpack.c.b16 %v1341, %v1339
  %v1490 = vpack.c.b16 %v1342, %v1340
  %v1491 = vpack.c.b16 %v1345, %v1343
  %v1492 = vpack.c.b16 %v1346, %v1344
  %v1493 = vpack.c.b16 %v1349, %v1347
  %v1494 = vpack.c.b16 %v1350, %v1348
  %v1495 = vpack.c.b16 %v1353, %v1351
  %v1496 = vpack.c.b16 %v1354, %v1352
  %v1497 = vpack.c.b16 %v1357, %v1355
  %v1498 = vpack.c.b16 %v1358, %v1356
  %v1499 = vpack.c.b16 %v1361, %v1359
  %v1500 = vpack.c.b16 %v1362, %v1360
  %v1501 = vpack.c.b16 %v1365, %v1363
  %v1502 = vpack.c.b16 %v1366, %v1364
  %v1503 = vpack.c.b16 %v1369, %v1367
  %v1504 = vpack.c.b16 %v1370, %v1368
  %v1505 = vpack.c.b16 %v1373, %v1371
  %v1506 = vpack.c.b16 %v1374, %v1372
  %v1507 = vpack.c.b16 %v1377, %v1375
  %v1508 = vpack.c.b16 %v1378, %v1376
  %v1509 = vpack.c.b16 %v1381, %v1379
  %v1510 = vpack.c.b16 %v1382, %v1380
  %v1511 = vpack.c.b16 %v1385, %v1383
  %v1512 = vpack.c.b16 %v1386, %v1384
  %v1513 = vpack.c.b16 %v1389, %v1387
  %v1514 = vpack.c.b16 %v1390, %v1388
  %v1515 = vpack.c.b16 %v1393, %v1391
  %v1516 = vpack.c.b16 %v1394, %v1392
  %v1517 = vpack.c.b16 %v1397, %v1395
  %v1518 = vpack.c.b16 %v1398, %v1396
  %v1519 = vpack.c.b16 %v1401, %v1399
  %v1520 = vpack.c.b16 %v1402, %v1400
  %v1521 = vpack.c.b16 %v1405, %v1403
  %v1522 = vpack.c.b16 %v1406, %v1404
  %v1523 = vpack.c.b16 %v1409, %v1407
  %v1524 = vpack.c.b16 %v1410, %v1408
  %v1525 = vpack.c.b16 %v1413, %v1411
  %v1526 = vpack.c.b16 %v1414, %v1412
  %v1527 = vpack.c.b16 %v1417, %v1415
  %v1528 = vpack.c.b16 %v1418, %v1416
  %v1529 = vpack.c.b16 %v1421, %v1419
  %v1530 = vpack.c.b16 %v1422, %v1420
  %v1531 = vpack.c.b16 %v1425, %v1423
  %v1532 = vpack.c.b16 %v1426, %v1424
  %v1533 = vpack.c.b16 %v1429, %v1427
  %v1534 = vpack.c.b16 %v1430, %v1428
  %v1535 = vpack.c.b16 %v1433, %v1431
  %v1536 = vpack.c.b16 %v1434, %v1432
  %v1537 = vpack.c.b16 %v1437, %v1435
  %v1538 = vpack.c.b16 %v1438, %v1436
  %v1539 = vpack.c.b16 %v1441, %v1439
  %v1540 = vpack.c.b16 %v1442, %v1440
  %v1541 = vpack.c.b16 %v1445, %v1443
  %v1542 = vpack.c.b16 %v1446, %v1444
  %vm1591 = vcmask 916480
  %v1593 = vsel %vm1591, %v1448, 0
  %v1596 = vsel %vm1591, %v1450, 0
  %v1599 = vsel %vm1591, %v1452, 0
  %v1602 = vsel %vm1591, %v1454, 0
  %v1605 = vsel %vm1591, %v1456, 0
  %v1608 = vsel %vm1591, %v1458, 0
  %v1611 = vsel %vm1591, %v1460, 0
  %v1614 = vsel %vm1591, %v1462, 0
  %v1617 = vsel %vm1591, %v1464, 0
  %v1620 = vsel %vm1591, %v1466, 0
  %v1623 = vsel %vm1591, %v1468, 0
  %v1626 = vsel %vm1591, %v1470, 0
  %v1629 = vsel %vm1591, %v1472, 0
  %v1632 = vsel %vm1591, %v1474, 0
  %v1635 = vsel %vm1591, %v1476, 0
  %v1638 = vsel %vm1591, %v1478, 0
  %v1641 = vsel %vm1591, %v1480, 0
  %v1644 = vsel %vm1591, %v1482, 0
  %v1647 = vsel %vm1591, %v1484, 0
  %v1650 = vsel %vm1591, %v1486, 0
  %v1653 = vsel %vm1591, %v1488, 0
  %v1656 = vsel %vm1591, %v1490, 0
  %v1659 = vsel %vm1591, %v1492, 0
  %v1662 = vsel %vm1591, %v1494, 0
  %v1665 = vsel %vm1591, %v1496, 0
  %v1668 = vsel %vm1591, %v1498, 0
  %v1671 = vsel %vm1591, %v1500, 0
  %v1674 = vsel %vm1591, %v1502, 0
  %v1677 = vsel %vm1591, %v1504, 0
  %v1680 = vsel %vm1591, %v1506, 0
  %v1683 = vsel %vm1591, %v1508, 0
  %v1686 = vsel %vm1591, %v1510, 0
  %v1689 = vsel %vm1591, %v1512, 0
  %v1692 = vsel %vm1591, %v1514, 0
  %v1695 = vsel %vm1591, %v1516, 0
  %v1698 = vsel %vm1591, %v1518, 0
  %v1701 = vsel %vm1591, %v1520, 0
  %v1704 = vsel %vm1591, %v1522, 0
  %v1707 = vsel %vm1591, %v1524, 0
  %v1710 = vsel %vm1591, %v1526, 0
  %v1713 = vsel %vm1591, %v1528, 0
  %v1716 = vsel %vm1591, %v1530, 0
  %v1719 = vsel %vm1591, %v1532, 0
  %v1722 = vsel %vm1591, %v1534, 0
  %v1725 = vsel %vm1591, %v1536, 0
  %v1728 = vsel %vm1591, %v1538, 0
  %v1731 = vsel %vm1591, %v1540, 0
  %v1734 = vsel %vm1591, %v1542, 0
  %1736 = vmatprep.subr.bf16.mxu0 0
  %1737 = vmatpush1.bf16.msra.mxu0 %v1144
  %1738 = vmatprep.subr.bf16.mxu0 0
  %1739 = vmatpush1.bf16.msra.mxu0 %v1145
  %1740 = vmatprep.subr.bf16.mxu0 0
  %1741 = vmatpush1.bf16.msra.mxu0 %v1146
  %1742 = vmatprep.subr.bf16.mxu0 0
  %1743 = vmatpush1.bf16.msra.mxu0 %v1147
  %1744 = vmatprep.subr.bf16.mxu0 0
  %1745 = vmatpush1.bf16.msra.mxu0 %v1148
  %1746 = vmatprep.subr.bf16.mxu0 0
  %1747 = vmatpush1.bf16.msra.mxu0 %v1149
  %1748 = vmatprep.subr.bf16.mxu0 0
  %1749 = vmatpush1.bf16.msra.mxu0 %v1150
  %1750 = vmatprep.subr.bf16.mxu0 0
  %1751 = vmatpush1.bf16.msra.mxu0 %v1151
  %1752 = vmatprep.subr.bf16.mxu0 0
  %1753 = vmatpush1.bf16.msra.mxu0 %v1152
  %1754 = vmatprep.subr.bf16.mxu0 0
  %1755 = vmatpush1.bf16.msra.mxu0 %v1153
  %1756 = vmatprep.subr.bf16.mxu0 0
  %1757 = vmatpush1.bf16.msra.mxu0 %v1154
  %1758 = vmatprep.subr.bf16.mxu0 0
  %1759 = vmatpush1.bf16.msra.mxu0 %v1155
  %1760 = vmatprep.subr.bf16.mxu0 0
  %1761 = vmatpush1.bf16.msra.mxu0 %v1156
  %1762 = vmatprep.subr.bf16.mxu0 0
  %1763 = vmatpush1.bf16.msra.mxu0 %v1157
  %1764 = vmatprep.subr.bf16.mxu0 0
  %1765 = vmatpush1.bf16.msra.mxu0 %v1158
  %1766 = vmatprep.subr.bf16.mxu0 0
  %1767 = vmatpush1.bf16.msra.mxu0 0
  %1768 = vmatprep.mubr.bf16.mxu0 %v1593
  %1769 = vmatmul.mubr.bf16.gmra.mrb[0].mxu0 %v1447
  %v1770 = vpop.f32.mrb[0].mxu0
  %v1771 = vadd.f32 0.0, %v1770
  %v1772 = vpop.f32.mrb[0].mxu0
  %v1773 = vpop.f32.mrb[0].mxu0
  %v1774 = vadd.f32 0.0, %v1773
  %v1775 = vpop.f32.mrb[0].mxu0
  %1776 = vmatprep.mubr.bf16.mxu0 %v1596
  %1777 = vmatmul.mubr.bf16.gmra.mrb[0].mxu0 %v1449
  %v1778 = vpop.f32.mrb[0].mxu0
  %v1779 = vadd.f32 0.0, %v1778
  %v1780 = vpop.f32.mrb[0].mxu0
  %v1781 = vpop.f32.mrb[0].mxu0
  %v1782 = vadd.f32 0.0, %v1781
  %v1783 = vpop.f32.mrb[0].mxu0
  %1784 = vmatprep.mubr.bf16.mxu0 %v1599
  %1785 = vmatmul.mubr.bf16.gmra.mrb[0].mxu0 %v1451
  %v1786 = vpop.f32.mrb[0].mxu0
  %v1787 = vadd.f32 0.0, %v1786
  %v1788 = vpop.f32.mrb[0].mxu0
  %v1789 = vpop.f32.mrb[0].mxu0
  %v1790 = vadd.f32 0.0, %v1789
  %v1791 = vpop.f32.mrb[0].mxu0
  %1792 = vmatprep.mubr.bf16.mxu0 %v1602
  %1793 = vmatmul.mubr.bf16.gmra.mrb[0].mxu0 %v1453
  %v1794 = vpop.f32.mrb[0].mxu0
  %v1795 = vadd.f32 0.0, %v1794
  %v1796 = vpop.f32.mrb[0].mxu0
  %v1797 = vpop.f32.mrb[0].mxu0
  %v1798 = vadd.f32 0.0, %v1797
  %v1799 = vpop.f32.mrb[0].mxu0
  %1800 = vmatprep.mubr.bf16.mxu0 %v1605
  %1801 = vmatmul.mubr.bf16.gmra.mrb[0].mxu0 %v1455
  %v1802 = vpop.f32.mrb[0].mxu0
  %v1803 = vadd.f32 0.0, %v1802
  %v1804 = vpop.f32.mrb[0].mxu0
  %v1805 = vpop.f32.mrb[0].mxu0
  %v1806 = vadd.f32 0.0, %v1805
  %v1807 = vpop.f32.mrb[0].mxu0
  %1808 = vmatprep.mubr.bf16.mxu0 %v1608
  %1809 = vmatmul.mubr.bf16.gmra.mrb[0].mxu0 %v1457
  %v1810 = vpop.f32.mrb[0].mxu0
  %v1811 = vadd.f32 0.0, %v1810
  %v1812 = vpop.f32.mrb[0].mxu0
  %v1813 = vpop.f32.mrb[0].mxu0
  %v1814 = vadd.f32 0.0, %v1813
  %v1815 = vpop.f32.mrb[0].mxu0
  %1816 = vmatprep.mubr.bf16.mxu0 %v1611
  %1817 = vmatmul.mubr.bf16.gmra.mrb[0].mxu0 %v1459
  %v1818 = vpop.f32.mrb[0].mxu0
  %v1819 = vadd.f32 0.0, %v1818
  %v1820 = vpop.f32.mrb[0].mxu0
  %v1821 = vpop.f32.mrb[0].mxu0
  %v1822 = vadd.f32 0.0, %v1821
  %v1823 = vpop.f32.mrb[0].mxu0
  %1824 = vmatprep.mubr.bf16.mxu0 %v1614
  %1825 = vmatmul.mubr.bf16.gmra.mrb[0].mxu0 %v1461
  %v1826 = vpop.f32.mrb[0].mxu0
  %v1827 = vadd.f32 0.0, %v1826
  %v1828 = vpop.f32.mrb[0].mxu0
  %v1829 = vpop.f32.mrb[0].mxu0
  %v1830 = vadd.f32 0.0, %v1829
  %v1831 = vpop.f32.mrb[0].mxu0
  %1832 = vmatprep.mubr.bf16.mxu0 %v1617
  %1833 = vmatmul.mubr.bf16.gmra.mrb[0].mxu0 %v1463
  %v1834 = vpop.f32.mrb[0].mxu0
  %v1835 = vadd.f32 0.0, %v1834
  %v1836 = vpop.f32.mrb[0].mxu0
  %v1837 = vpop.f32.mrb[0].mxu0
  %v1838 = vadd.f32 0.0, %v1837
  %v1839 = vpop.f32.mrb[0].mxu0
  %1840 = vmatprep.mubr.bf16.mxu0 %v1620
  %1841 = vmatmul.mubr.bf16.gmra.mrb[0].mxu0 %v1465
  %v1842 = vpop.f32.mrb[0].mxu0
  %v1843 = vadd.f32 0.0, %v1842
  %v1844 = vpop.f32.mrb[0].mxu0
  %v1845 = vpop.f32.mrb[0].mxu0
  %v1846 = vadd.f32 0.0, %v1845
  %v1847 = vpop.f32.mrb[0].mxu0
  %1848 = vmatprep.mubr.bf16.mxu0 %v1623
  %1849 = vmatmul.mubr.bf16.gmra.mrb[0].mxu0 %v1467
  %v1850 = vpop.f32.mrb[0].mxu0
  %v1851 = vadd.f32 0.0, %v1850
  %v1852 = vpop.f32.mrb[0].mxu0
  %v1853 = vpop.f32.mrb[0].mxu0
  %v1854 = vadd.f32 0.0, %v1853
  %v1855 = vpop.f32.mrb[0].mxu0
  %1856 = vmatprep.mubr.bf16.mxu0 %v1626
  %1857 = vmatmul.mubr.bf16.gmra.mrb[0].mxu0 %v1469
  %v1858 = vpop.f32.mrb[0].mxu0
  %v1859 = vadd.f32 0.0, %v1858
  %v1860 = vpop.f32.mrb[0].mxu0
  %v1861 = vpop.f32.mrb[0].mxu0
  %v1862 = vadd.f32 0.0, %v1861
  %v1863 = vpop.f32.mrb[0].mxu0
  %1864 = vmatprep.mubr.bf16.mxu0 %v1629
  %1865 = vmatmul.mubr.bf16.gmra.mrb[0].mxu0 %v1471
  %v1866 = vpop.f32.mrb[0].mxu0
  %v1867 = vadd.f32 0.0, %v1866
  %v1868 = vpop.f32.mrb[0].mxu0
  %v1869 = vpop.f32.mrb[0].mxu0
  %v1870 = vadd.f32 0.0, %v1869
  %v1871 = vpop.f32.mrb[0].mxu0
  %1872 = vmatprep.mubr.bf16.mxu0 %v1632
  %1873 = vmatmul.mubr.bf16.gmra.mrb[0].mxu0 %v1473
  %v1874 = vpop.f32.mrb[0].mxu0
  %v1875 = vadd.f32 0.0, %v1874
  %v1876 = vpop.f32.mrb[0].mxu0
  %v1877 = vpop.f32.mrb[0].mxu0
  %v1878 = vadd.f32 0.0, %v1877
  %v1879 = vpop.f32.mrb[0].mxu0
  %1880 = vmatprep.mubr.bf16.mxu0 %v1635
  %1881 = vmatmul.mubr.bf16.gmra.mrb[0].mxu0 %v1475
  %v1882 = vpop.f32.mrb[0].mxu0
  %v1883 = vadd.f32 0.0, %v1882
  %v1884 = vpop.f32.mrb[0].mxu0
  %v1885 = vpop.f32.mrb[0].mxu0
  %v1886 = vadd.f32 0.0, %v1885
  %v1887 = vpop.f32.mrb[0].mxu0
  %1888 = vmatprep.mubr.bf16.mxu0 %v1638
  %1889 = vmatmul.mubr.bf16.gmra.mrb[0].mxu0 %v1477
  %v1890 = vpop.f32.mrb[0].mxu0
  %v1891 = vadd.f32 0.0, %v1890
  %v1892 = vpop.f32.mrb[0].mxu0
  %v1893 = vpop.f32.mrb[0].mxu0
  %v1894 = vadd.f32 0.0, %v1893
  %v1895 = vpop.f32.mrb[0].mxu0
  %1896 = vmatprep.mubr.bf16.mxu0 %v1641
  %1897 = vmatmul.mubr.bf16.gmra.mrb[0].mxu0 %v1479
  %v1898 = vpop.f32.mrb[0].mxu0
  %v1899 = vadd.f32 0.0, %v1898
  %v1900 = vpop.f32.mrb[0].mxu0
  %v1901 = vpop.f32.mrb[0].mxu0
  %v1902 = vadd.f32 0.0, %v1901
  %v1903 = vpop.f32.mrb[0].mxu0
  %1904 = vmatprep.mubr.bf16.mxu0 %v1644
  %1905 = vmatmul.mubr.bf16.gmra.mrb[0].mxu0 %v1481
  %v1906 = vpop.f32.mrb[0].mxu0
  %v1907 = vadd.f32 0.0, %v1906
  %v1908 = vpop.f32.mrb[0].mxu0
  %v1909 = vpop.f32.mrb[0].mxu0
  %v1910 = vadd.f32 0.0, %v1909
  %v1911 = vpop.f32.mrb[0].mxu0
  %1912 = vmatprep.mubr.bf16.mxu0 %v1647
  %1913 = vmatmul.mubr.bf16.gmra.mrb[0].mxu0 %v1483
  %v1914 = vpop.f32.mrb[0].mxu0
  %v1915 = vadd.f32 0.0, %v1914
  %v1916 = vpop.f32.mrb[0].mxu0
  %v1917 = vpop.f32.mrb[0].mxu0
  %v1918 = vadd.f32 0.0, %v1917
  %v1919 = vpop.f32.mrb[0].mxu0
  %1920 = vmatprep.mubr.bf16.mxu0 %v1650
  %1921 = vmatmul.mubr.bf16.gmra.mrb[0].mxu0 %v1485
  %v1922 = vpop.f32.mrb[0].mxu0
  %v1923 = vadd.f32 0.0, %v1922
  %v1924 = vpop.f32.mrb[0].mxu0
  %v1925 = vpop.f32.mrb[0].mxu0
  %v1926 = vadd.f32 0.0, %v1925
  %v1927 = vpop.f32.mrb[0].mxu0
  %1928 = vmatprep.mubr.bf16.mxu0 %v1653
  %1929 = vmatmul.mubr.bf16.gmra.mrb[0].mxu0 %v1487
  %v1930 = vpop.f32.mrb[0].mxu0
  %v1931 = vadd.f32 0.0, %v1930
  %v1932 = vpop.f32.mrb[0].mxu0
  %v1933 = vpop.f32.mrb[0].mxu0
  %v1934 = vadd.f32 0.0, %v1933
  %v1935 = vpop.f32.mrb[0].mxu0
  %1936 = vmatprep.mubr.bf16.mxu0 %v1656
  %1937 = vmatmul.mubr.bf16.gmra.mrb[0].mxu0 %v1489
  %v1938 = vpop.f32.mrb[0].mxu0
  %v1939 = vadd.f32 0.0, %v1938
  %v1940 = vpop.f32.mrb[0].mxu0
  %v1941 = vpop.f32.mrb[0].mxu0
  %v1942 = vadd.f32 0.0, %v1941
  %v1943 = vpop.f32.mrb[0].mxu0
  %1944 = vmatprep.mubr.bf16.mxu0 %v1659
  %1945 = vmatmul.mubr.bf16.gmra.mrb[0].mxu0 %v1491
  %v1946 = vpop.f32.mrb[0].mxu0
  %v1947 = vadd.f32 0.0, %v1946
  %v1948 = vpop.f32.mrb[0].mxu0
  %v1949 = vpop.f32.mrb[0].mxu0
  %v1950 = vadd.f32 0.0, %v1949
  %v1951 = vpop.f32.mrb[0].mxu0
  %1952 = vmatprep.mubr.bf16.mxu0 %v1662
  %1953 = vmatmul.mubr.bf16.gmra.mrb[0].mxu0 %v1493
  %v1954 = vpop.f32.mrb[0].mxu0
  %v1955 = vadd.f32 0.0, %v1954
  %v1956 = vpop.f32.mrb[0].mxu0
  %v1957 = vpop.f32.mrb[0].mxu0
  %v1958 = vadd.f32 0.0, %v1957
  %v1959 = vpop.f32.mrb[0].mxu0
  %1960 = vmatprep.mubr.bf16.mxu0 %v1665
  %1961 = vmatmul.mubr.bf16.gmra.mrb[0].mxu0 %v1495
  %v1962 = vpop.f32.mrb[0].mxu0
  %v1963 = vadd.f32 0.0, %v1962
  %v1964 = vpop.f32.mrb[0].mxu0
  %v1965 = vpop.f32.mrb[0].mxu0
  %v1966 = vadd.f32 0.0, %v1965
  %v1967 = vpop.f32.mrb[0].mxu0
  %1968 = vmatprep.mubr.bf16.mxu0 %v1668
  %1969 = vmatmul.mubr.bf16.gmra.mrb[0].mxu0 %v1497
  %v1970 = vpop.f32.mrb[0].mxu0
  %v1971 = vadd.f32 0.0, %v1970
  %v1972 = vpop.f32.mrb[0].mxu0
  %v1973 = vpop.f32.mrb[0].mxu0
  %v1974 = vadd.f32 0.0, %v1973
  %v1975 = vpop.f32.mrb[0].mxu0
  %1976 = vmatprep.mubr.bf16.mxu0 %v1671
  %1977 = vmatmul.mubr.bf16.gmra.mrb[0].mxu0 %v1499
  %v1978 = vpop.f32.mrb[0].mxu0
  %v1979 = vadd.f32 0.0, %v1978
  %v1980 = vpop.f32.mrb[0].mxu0
  %v1981 = vpop.f32.mrb[0].mxu0
  %v1982 = vadd.f32 0.0, %v1981
  %v1983 = vpop.f32.mrb[0].mxu0
  %1984 = vmatprep.mubr.bf16.mxu0 %v1674
  %1985 = vmatmul.mubr.bf16.gmra.mrb[0].mxu0 %v1501
  %v1986 = vpop.f32.mrb[0].mxu0
  %v1987 = vadd.f32 0.0, %v1986
  %v1988 = vpop.f32.mrb[0].mxu0
  %v1989 = vpop.f32.mrb[0].mxu0
  %v1990 = vadd.f32 0.0, %v1989
  %v1991 = vpop.f32.mrb[0].mxu0
  %1992 = vmatprep.mubr.bf16.mxu0 %v1677
  %1993 = vmatmul.mubr.bf16.gmra.mrb[0].mxu0 %v1503
  %v1994 = vpop.f32.mrb[0].mxu0
  %v1995 = vadd.f32 0.0, %v1994
  %v1996 = vpop.f32.mrb[0].mxu0
  %v1997 = vpop.f32.mrb[0].mxu0
  %v1998 = vadd.f32 0.0, %v1997
  %v1999 = vpop.f32.mrb[0].mxu0
  %2000 = vmatprep.mubr.bf16.mxu0 %v1680
  %2001 = vmatmul.mubr.bf16.gmra.mrb[0].mxu0 %v1505
  %v2002 = vpop.f32.mrb[0].mxu0
  %v2003 = vadd.f32 0.0, %v2002
  %v2004 = vpop.f32.mrb[0].mxu0
  %v2005 = vpop.f32.mrb[0].mxu0
  %v2006 = vadd.f32 0.0, %v2005
  %v2007 = vpop.f32.mrb[0].mxu0
  %2008 = vmatprep.mubr.bf16.mxu0 %v1683
  %2009 = vmatmul.mubr.bf16.gmra.mrb[0].mxu0 %v1507
  %v2010 = vpop.f32.mrb[0].mxu0
  %v2011 = vadd.f32 0.0, %v2010
  %v2012 = vpop.f32.mrb[0].mxu0
  %v2013 = vpop.f32.mrb[0].mxu0
  %v2014 = vadd.f32 0.0, %v2013
  %v2015 = vpop.f32.mrb[0].mxu0
  %2016 = vmatprep.mubr.bf16.mxu0 %v1686
  %2017 = vmatmul.mubr.bf16.gmra.mrb[0].mxu0 %v1509
  %v2018 = vpop.f32.mrb[0].mxu0
  %v2019 = vadd.f32 0.0, %v2018
  %v2020 = vpop.f32.mrb[0].mxu0
  %v2021 = vpop.f32.mrb[0].mxu0
  %v2022 = vadd.f32 0.0, %v2021
  %v2023 = vpop.f32.mrb[0].mxu0
  %2024 = vmatprep.mubr.bf16.mxu0 %v1689
  %2025 = vmatmul.mubr.bf16.gmra.mrb[0].mxu0 %v1511
  %v2026 = vpop.f32.mrb[0].mxu0
  %v2027 = vadd.f32 0.0, %v2026
  %v2028 = vpop.f32.mrb[0].mxu0
  %v2029 = vpop.f32.mrb[0].mxu0
  %v2030 = vadd.f32 0.0, %v2029
  %v2031 = vpop.f32.mrb[0].mxu0
  %2032 = vmatprep.mubr.bf16.mxu0 %v1692
  %2033 = vmatmul.mubr.bf16.gmra.mrb[0].mxu0 %v1513
  %v2034 = vpop.f32.mrb[0].mxu0
  %v2035 = vadd.f32 0.0, %v2034
  %v2036 = vpop.f32.mrb[0].mxu0
  %v2037 = vpop.f32.mrb[0].mxu0
  %v2038 = vadd.f32 0.0, %v2037
  %v2039 = vpop.f32.mrb[0].mxu0
  %2040 = vmatprep.mubr.bf16.mxu0 %v1695
  %2041 = vmatmul.mubr.bf16.gmra.mrb[0].mxu0 %v1515
  %v2042 = vpop.f32.mrb[0].mxu0
  %v2043 = vadd.f32 0.0, %v2042
  %v2044 = vpop.f32.mrb[0].mxu0
  %v2045 = vpop.f32.mrb[0].mxu0
  %v2046 = vadd.f32 0.0, %v2045
  %v2047 = vpop.f32.mrb[0].mxu0
  %2048 = vmatprep.mubr.bf16.mxu0 %v1698
  %2049 = vmatmul.mubr.bf16.gmra.mrb[0].mxu0 %v1517
  %v2050 = vpop.f32.mrb[0].mxu0
  %v2051 = vadd.f32 0.0, %v2050
  %v2052 = vpop.f32.mrb[0].mxu0
  %v2053 = vpop.f32.mrb[0].mxu0
  %v2054 = vadd.f32 0.0, %v2053
  %v2055 = vpop.f32.mrb[0].mxu0
  %2056 = vmatprep.mubr.bf16.mxu0 %v1701
  %2057 = vmatmul.mubr.bf16.gmra.mrb[0].mxu0 %v1519
  %v2058 = vpop.f32.mrb[0].mxu0
  %v2059 = vadd.f32 0.0, %v2058
  %v2060 = vpop.f32.mrb[0].mxu0
  %v2061 = vpop.f32.mrb[0].mxu0
  %v2062 = vadd.f32 0.0, %v2061
  %v2063 = vpop.f32.mrb[0].mxu0
  %2064 = vmatprep.mubr.bf16.mxu0 %v1704
  %2065 = vmatmul.mubr.bf16.gmra.mrb[0].mxu0 %v1521
  %v2066 = vpop.f32.mrb[0].mxu0
  %v2067 = vadd.f32 0.0, %v2066
  %v2068 = vpop.f32.mrb[0].mxu0
  %v2069 = vpop.f32.mrb[0].mxu0
  %v2070 = vadd.f32 0.0, %v2069
  %v2071 = vpop.f32.mrb[0].mxu0
  %2072 = vmatprep.mubr.bf16.mxu0 %v1707
  %2073 = vmatmul.mubr.bf16.gmra.mrb[0].mxu0 %v1523
  %v2074 = vpop.f32.mrb[0].mxu0
  %v2075 = vadd.f32 0.0, %v2074
  %v2076 = vpop.f32.mrb[0].mxu0
  %v2077 = vpop.f32.mrb[0].mxu0
  %v2078 = vadd.f32 0.0, %v2077
  %v2079 = vpop.f32.mrb[0].mxu0
  %2080 = vmatprep.mubr.bf16.mxu0 %v1710
  %2081 = vmatmul.mubr.bf16.gmra.mrb[0].mxu0 %v1525
  %v2082 = vpop.f32.mrb[0].mxu0
  %v2083 = vadd.f32 0.0, %v2082
  %v2084 = vpop.f32.mrb[0].mxu0
  %v2085 = vpop.f32.mrb[0].mxu0
  %v2086 = vadd.f32 0.0, %v2085
  %v2087 = vpop.f32.mrb[0].mxu0
  %2088 = vmatprep.mubr.bf16.mxu0 %v1713
  %2089 = vmatmul.mubr.bf16.gmra.mrb[0].mxu0 %v1527
  %v2090 = vpop.f32.mrb[0].mxu0
  %v2091 = vadd.f32 0.0, %v2090
  %v2092 = vpop.f32.mrb[0].mxu0
  %v2093 = vpop.f32.mrb[0].mxu0
  %v2094 = vadd.f32 0.0, %v2093
  %v2095 = vpop.f32.mrb[0].mxu0
  %2096 = vmatprep.mubr.bf16.mxu0 %v1716
  %2097 = vmatmul.mubr.bf16.gmra.mrb[0].mxu0 %v1529
  %v2098 = vpop.f32.mrb[0].mxu0
  %v2099 = vadd.f32 0.0, %v2098
  %v2100 = vpop.f32.mrb[0].mxu0
  %v2101 = vpop.f32.mrb[0].mxu0
  %v2102 = vadd.f32 0.0, %v2101
  %v2103 = vpop.f32.mrb[0].mxu0
  %2104 = vmatprep.mubr.bf16.mxu0 %v1719
  %2105 = vmatmul.mubr.bf16.gmra.mrb[0].mxu0 %v1531
  %v2106 = vpop.f32.mrb[0].mxu0
  %v2107 = vadd.f32 0.0, %v2106
  %v2108 = vpop.f32.mrb[0].mxu0
  %v2109 = vpop.f32.mrb[0].mxu0
  %v2110 = vadd.f32 0.0, %v2109
  %v2111 = vpop.f32.mrb[0].mxu0
  %2112 = vmatprep.mubr.bf16.mxu0 %v1722
  %2113 = vmatmul.mubr.bf16.gmra.mrb[0].mxu0 %v1533
  %v2114 = vpop.f32.mrb[0].mxu0
  %v2115 = vadd.f32 0.0, %v2114
  %v2116 = vpop.f32.mrb[0].mxu0
  %v2117 = vpop.f32.mrb[0].mxu0
  %v2118 = vadd.f32 0.0, %v2117
  %v2119 = vpop.f32.mrb[0].mxu0
  %2120 = vmatprep.mubr.bf16.mxu0 %v1725
  %2121 = vmatmul.mubr.bf16.gmra.mrb[0].mxu0 %v1535
  %v2122 = vpop.f32.mrb[0].mxu0
  %v2123 = vadd.f32 0.0, %v2122
  %v2124 = vpop.f32.mrb[0].mxu0
  %v2125 = vpop.f32.mrb[0].mxu0
  %v2126 = vadd.f32 0.0, %v2125
  %v2127 = vpop.f32.mrb[0].mxu0
  %2128 = vmatprep.mubr.bf16.mxu0 %v1728
  %2129 = vmatmul.mubr.bf16.gmra.mrb[0].mxu0 %v1537
  %v2130 = vpop.f32.mrb[0].mxu0
  %v2131 = vadd.f32 0.0, %v2130
  %v2132 = vpop.f32.mrb[0].mxu0
  %v2133 = vpop.f32.mrb[0].mxu0
  %v2134 = vadd.f32 0.0, %v2133
  %v2135 = vpop.f32.mrb[0].mxu0
  %2136 = vmatprep.mubr.bf16.mxu0 %v1731
  %2137 = vmatmul.mubr.bf16.gmra.mrb[0].mxu0 %v1539
  %v2138 = vpop.f32.mrb[0].mxu0
  %v2139 = vadd.f32 0.0, %v2138
  %v2140 = vpop.f32.mrb[0].mxu0
  %v2141 = vpop.f32.mrb[0].mxu0
  %v2142 = vadd.f32 0.0, %v2141
  %v2143 = vpop.f32.mrb[0].mxu0
  %2144 = vmatprep.mubr.bf16.mxu0 %v1734
  %2145 = vmatmul.mubr.bf16.gmra.mrb[0].mxu0 %v1541
  %v2146 = vpop.f32.mrb[0].mxu0
  %v2147 = vadd.f32 0.0, %v2146
  %v2148 = vpop.f32.mrb[0].mxu0
  %v2149 = vpop.f32.mrb[0].mxu0
  %v2150 = vadd.f32 0.0, %v2149
  %v2151 = vpop.f32.mrb[0].mxu0
  %2152 = vdwg.mxu0
  %v2153 = vpack.c.bf16 %v1774, %v1771
  %v2154 = vpack.c.bf16 %v1782, %v1779
  %v2155 = vpack.c.bf16 %v1790, %v1787
  %v2156 = vpack.c.bf16 %v1798, %v1795
  %v2157 = vpack.c.bf16 %v1806, %v1803
  %v2158 = vpack.c.bf16 %v1814, %v1811
  %v2159 = vpack.c.bf16 %v1822, %v1819
  %v2160 = vpack.c.bf16 %v1830, %v1827
  %v2161 = vpack.c.bf16 %v1838, %v1835
  %v2162 = vpack.c.bf16 %v1846, %v1843
  %v2163 = vpack.c.bf16 %v1854, %v1851
  %v2164 = vpack.c.bf16 %v1862, %v1859
  %v2165 = vpack.c.bf16 %v1870, %v1867
  %v2166 = vpack.c.bf16 %v1878, %v1875
  %v2167 = vpack.c.bf16 %v1886, %v1883
  %v2168 = vpack.c.bf16 %v1894, %v1891
  %v2169 = vpack.c.bf16 %v1902, %v1899
  %v2170 = vpack.c.bf16 %v1910, %v1907
  %v2171 = vpack.c.bf16 %v1918, %v1915
  %v2172 = vpack.c.bf16 %v1926, %v1923
  %v2173 = vpack.c.bf16 %v1934, %v1931
  %v2174 = vpack.c.bf16 %v1942, %v1939
  %v2175 = vpack.c.bf16 %v1950, %v1947
  %v2176 = vpack.c.bf16 %v1958, %v1955
  %v2177 = vpack.c.bf16 %v1966, %v1963
  %v2178 = vpack.c.bf16 %v1974, %v1971
  %v2179 = vpack.c.bf16 %v1982, %v1979
  %v2180 = vpack.c.bf16 %v1990, %v1987
  %v2181 = vpack.c.bf16 %v1998, %v1995
  %v2182 = vpack.c.bf16 %v2006, %v2003
  %v2183 = vpack.c.bf16 %v2014, %v2011
  %v2184 = vpack.c.bf16 %v2022, %v2019
  %v2185 = vpack.c.bf16 %v2030, %v2027
  %v2186 = vpack.c.bf16 %v2038, %v2035
  %v2187 = vpack.c.bf16 %v2046, %v2043
  %v2188 = vpack.c.bf16 %v2054, %v2051
  %v2189 = vpack.c.bf16 %v2062, %v2059
  %v2190 = vpack.c.bf16 %v2070, %v2067
  %v2191 = vpack.c.bf16 %v2078, %v2075
  %v2192 = vpack.c.bf16 %v2086, %v2083
  %v2193 = vpack.c.bf16 %v2094, %v2091
  %v2194 = vpack.c.bf16 %v2102, %v2099
  %v2195 = vpack.c.bf16 %v2110, %v2107
  %v2196 = vpack.c.bf16 %v2118, %v2115
  %v2197 = vpack.c.bf16 %v2126, %v2123
  %v2198 = vpack.c.bf16 %v2134, %v2131
  %v2199 = vpack.c.bf16 %v2142, %v2139
  %v2200 = vpack.c.bf16 %v2150, %v2147
  %2201 = vst.msk [vmem:[#allocation3] sm:$0xff] %vm1017, %v2153
  %2202 = vst.msk [vmem:[#allocation3 + $0x20] sm:$0xff] %vm1017, %v2154
  %2203 = vst.msk [vmem:[#allocation3 + $0x40] sm:$0xff] %vm1017, %v2155
  %2207 = vrot.lane.b32.xlu0 %v2156, 32
  %v2208 = vpop.permute.xlu0 %2207
  %2209 = vrot.lane.b32.xlu0 %v2157, 32
  %v2210 = vpop.permute.xlu0 %2209
  %2211 = vrot.lane.b32.xlu0 %v2158, 32
  %v2212 = vpop.permute.xlu0 %2211
  %vm2216 = vcmask 523520
  %2217 = vst.msk [vmem:[#allocation3] sm:$0xff] %vm2216, %v2208
  %2218 = vst.msk [vmem:[#allocation3 + $0x20] sm:$0xff] %vm2216, %v2210
  %2219 = vst.msk [vmem:[#allocation3 + $0x40] sm:$0xff] %vm2216, %v2212
  %2223 = vrot.lane.b32.xlu0 %v2159, 64
  %v2224 = vpop.permute.xlu0 %2223
  %2225 = vrot.lane.b32.xlu0 %v2160, 64
  %v2226 = vpop.permute.xlu0 %2225
  %2227 = vrot.lane.b32.xlu0 %v2161, 64
  %v2228 = vpop.permute.xlu0 %2227
  %vm2232 = vcmask 785920
  %2233 = vst.msk [vmem:[#allocation3] sm:$0xff] %vm2232, %v2224
  %2234 = vst.msk [vmem:[#allocation3 + $0x20] sm:$0xff] %vm2232, %v2226
  %2235 = vst.msk [vmem:[#allocation3 + $0x40] sm:$0xff] %vm2232, %v2228
  %2239 = vrot.lane.b32.xlu0 %v2162, 96
  %v2240 = vpop.permute.xlu0 %2239
  %2241 = vrot.lane.b32.xlu0 %v2163, 96
  %v2242 = vpop.permute.xlu0 %2241
  %2243 = vrot.lane.b32.xlu0 %v2164, 96
  %v2244 = vpop.permute.xlu0 %2243
  %vm2248 = vcmask 1048320
  %2249 = vst.msk [vmem:[#allocation3] sm:$0xff] %vm2248, %v2240
  %2250 = vst.msk [vmem:[#allocation3 + $0x20] sm:$0xff] %vm2248, %v2242
  %2251 = vst.msk [vmem:[#allocation3 + $0x40] sm:$0xff] %vm2248, %v2244
  %2252 = vst.msk [vmem:[#allocation3 + $0x8] sm:$0xff] %vm1017, %v2165
  %2253 = vst.msk [vmem:[#allocation3 + $0x28] sm:$0xff] %vm1017, %v2166
  %2254 = vst.msk [vmem:[#allocation3 + $0x48] sm:$0xff] %vm1017, %v2167
  %2258 = vrot.lane.b32.xlu0 %v2168, 32
  %v2259 = vpop.permute.xlu0 %2258
  %2260 = vrot.lane.b32.xlu0 %v2169, 32
  %v2261 = vpop.permute.xlu0 %2260
  %2262 = vrot.lane.b32.xlu0 %v2170, 32
  %v2263 = vpop.permute.xlu0 %2262
  %2267 = vst.msk [vmem:[#allocation3 + $0x8] sm:$0xff] %vm2216, %v2259
  %2268 = vst.msk [vmem:[#allocation3 + $0x28] sm:$0xff] %vm2216, %v2261
  %2269 = vst.msk [vmem:[#allocation3 + $0x48] sm:$0xff] %vm2216, %v2263
  %2273 = vrot.lane.b32.xlu0 %v2171, 64
  %v2274 = vpop.permute.xlu0 %2273
  %2275 = vrot.lane.b32.xlu0 %v2172, 64
  %v2276 = vpop.permute.xlu0 %2275
  %2277 = vrot.lane.b32.xlu0 %v2173, 64
  %v2278 = vpop.permute.xlu0 %2277
  %2282 = vst.msk [vmem:[#allocation3 + $0x8] sm:$0xff] %vm2232, %v2274
  %2283 = vst.msk [vmem:[#allocation3 + $0x28] sm:$0xff] %vm2232, %v2276
  %2284 = vst.msk [vmem:[#allocation3 + $0x48] sm:$0xff] %vm2232, %v2278
  %2288 = vrot.lane.b32.xlu0 %v2174, 96
  %v2289 = vpop.permute.xlu0 %2288
  %2290 = vrot.lane.b32.xlu0 %v2175, 96
  %v2291 = vpop.permute.xlu0 %2290
  %2292 = vrot.lane.b32.xlu0 %v2176, 96
  %v2293 = vpop.permute.xlu0 %2292
  %2297 = vst.msk [vmem:[#allocation3 + $0x8] sm:$0xff] %vm2248, %v2289
  %2298 = vst.msk [vmem:[#allocation3 + $0x28] sm:$0xff] %vm2248, %v2291
  %2299 = vst.msk [vmem:[#allocation3 + $0x48] sm:$0xff] %vm2248, %v2293
  %2300 = vst.msk [vmem:[#allocation3 + $0x10] sm:$0xff] %vm1017, %v2177
  %2301 = vst.msk [vmem:[#allocation3 + $0x30] sm:$0xff] %vm1017, %v2178
  %2302 = vst.msk [vmem:[#allocation3 + $0x50] sm:$0xff] %vm1017, %v2179
  %2306 = vrot.lane.b32.xlu0 %v2180, 32
  %v2307 = vpop.permute.xlu0 %2306
  %2308 = vrot.lane.b32.xlu0 %v2181, 32
  %v2309 = vpop.permute.xlu0 %2308
  %2310 = vrot.lane.b32.xlu0 %v2182, 32
  %v2311 = vpop.permute.xlu0 %2310
  %2315 = vst.msk [vmem:[#allocation3 + $0x10] sm:$0xff] %vm2216, %v2307
  %2316 = vst.msk [vmem:[#allocation3 + $0x30] sm:$0xff] %vm2216, %v2309
  %2317 = vst.msk [vmem:[#allocation3 + $0x50] sm:$0xff] %vm2216, %v2311
  %2321 = vrot.lane.b32.xlu0 %v2183, 64
  %v2322 = vpop.permute.xlu0 %2321
  %2323 = vrot.lane.b32.xlu0 %v2184, 64
  %v2324 = vpop.permute.xlu0 %2323
  %2325 = vrot.lane.b32.xlu0 %v2185, 64
  %v2326 = vpop.permute.xlu0 %2325
  %2330 = vst.msk [vmem:[#allocation3 + $0x10] sm:$0xff] %vm2232, %v2322
  %2331 = vst.msk [vmem:[#allocation3 + $0x30] sm:$0xff] %vm2232, %v2324
  %2332 = vst.msk [vmem:[#allocation3 + $0x50] sm:$0xff] %vm2232, %v2326
  %2336 = vrot.lane.b32.xlu0 %v2186, 96
  %v2337 = vpop.permute.xlu0 %2336
  %2338 = vrot.lane.b32.xlu0 %v2187, 96
  %v2339 = vpop.permute.xlu0 %2338
  %2340 = vrot.lane.b32.xlu0 %v2188, 96
  %v2341 = vpop.permute.xlu0 %2340
  %2345 = vst.msk [vmem:[#allocation3 + $0x10] sm:$0xff] %vm2248, %v2337
  %2346 = vst.msk [vmem:[#allocation3 + $0x30] sm:$0xff] %vm2248, %v2339
  %2347 = vst.msk [vmem:[#allocation3 + $0x50] sm:$0xff] %vm2248, %v2341
  %2348 = vst.msk [vmem:[#allocation3 + $0x18] sm:$0xff] %vm1017, %v2189
  %2349 = vst.msk [vmem:[#allocation3 + $0x38] sm:$0xff] %vm1017, %v2190
  %2350 = vst.msk [vmem:[#allocation3 + $0x58] sm:$0xff] %vm1017, %v2191
  %2354 = vrot.lane.b32.xlu0 %v2192, 32
  %v2355 = vpop.permute.xlu0 %2354
  %2356 = vrot.lane.b32.xlu0 %v2193, 32
  %v2357 = vpop.permute.xlu0 %2356
  %2358 = vrot.lane.b32.xlu0 %v2194, 32
  %v2359 = vpop.permute.xlu0 %2358
  %2363 = vst.msk [vmem:[#allocation3 + $0x18] sm:$0xff] %vm2216, %v2355
  %2364 = vst.msk [vmem:[#allocation3 + $0x38] sm:$0xff] %vm2216, %v2357
  %2365 = vst.msk [vmem:[#allocation3 + $0x58] sm:$0xff] %vm2216, %v2359
  %2369 = vrot.lane.b32.xlu0 %v2195, 64
  %v2370 = vpop.permute.xlu0 %2369
  %2371 = vrot.lane.b32.xlu0 %v2196, 64
  %v2372 = vpop.permute.xlu0 %2371
  %2373 = vrot.lane.b32.xlu0 %v2197, 64
  %v2374 = vpop.permute.xlu0 %2373
  %2378 = vst.msk [vmem:[#allocation3 + $0x18] sm:$0xff] %vm2232, %v2370
  %2379 = vst.msk [vmem:[#allocation3 + $0x38] sm:$0xff] %vm2232, %v2372
  %2380 = vst.msk [vmem:[#allocation3 + $0x58] sm:$0xff] %vm2232, %v2374
  %2384 = vrot.lane.b32.xlu0 %v2198, 96
  %v2385 = vpop.permute.xlu0 %2384
  %2386 = vrot.lane.b32.xlu0 %v2199, 96
  %v2387 = vpop.permute.xlu0 %2386
  %2388 = vrot.lane.b32.xlu0 %v2200, 96
  %v2389 = vpop.permute.xlu0 %2388
  %2393 = vst.msk [vmem:[#allocation3 + $0x18] sm:$0xff] %vm2248, %v2385
  %2394 = vst.msk [vmem:[#allocation3 + $0x38] sm:$0xff] %vm2248, %v2387
  %2395 = vst.msk [vmem:[#allocation3 + $0x58] sm:$0xff] %vm2248, %v2389
  %v2396 = vld [vmem:[#allocation2 + $0x78] sm:$0xff]
  %v2397 = vld [vmem:[#allocation2 + $0x80] sm:$0xff]
  %v2398 = vld [vmem:[#allocation2 + $0x88] sm:$0xff]
  %v2399 = vld [vmem:[#allocation2 + $0x90] sm:$0xff]
  %v2400 = vld [vmem:[#allocation2 + $0x98] sm:$0xff]
  %v2401 = vld [vmem:[#allocation2 + $0xa0] sm:$0xff]
  %v2402 = vld [vmem:[#allocation2 + $0xa8] sm:$0xff]
  %v2403 = vld [vmem:[#allocation2 + $0xb0] sm:$0xff]
  %v2404 = vld [vmem:[#allocation2 + $0xb8] sm:$0xff]
  %v2405 = vld [vmem:[#allocation2 + $0xc0] sm:$0xff]
  %v2406 = vld [vmem:[#allocation2 + $0xc8] sm:$0xff]
  %v2407 = vld [vmem:[#allocation2 + $0xd0] sm:$0xff]
  %v2408 = vld [vmem:[#allocation2 + $0xd8] sm:$0xff]
  %v2409 = vld [vmem:[#allocation2 + $0xe0] sm:$0xff]
  %v2410 = vld [vmem:[#allocation2 + $0xe8] sm:$0xff]
  %2411 = vmatprep.subr.bf16.mxu0 0
  %2412 = vmatpush1.bf16.msra.mxu0 %v2396
  %2413 = vmatprep.subr.bf16.mxu0 0
  %2414 = vmatpush1.bf16.msra.mxu0 %v2397
  %2415 = vmatprep.subr.bf16.mxu0 0
  %2416 = vmatpush1.bf16.msra.mxu0 %v2398
  %2417 = vmatprep.subr.bf16.mxu0 0
  %2418 = vmatpush1.bf16.msra.mxu0 %v2399
  %2419 = vmatprep.subr.bf16.mxu0 0
  %2420 = vmatpush1.bf16.msra.mxu0 %v2400
  %2421 = vmatprep.subr.bf16.mxu0 0
  %2422 = vmatpush1.bf16.msra.mxu0 %v2401
  %2423 = vmatprep.subr.bf16.mxu0 0
  %2424 = vmatpush1.bf16.msra.mxu0 %v2402
  %2425 = vmatprep.subr.bf16.mxu0 0
  %2426 = vmatpush1.bf16.msra.mxu0 %v2403
  %2427 = vmatprep.subr.bf16.mxu0 0
  %2428 = vmatpush1.bf16.msra.mxu0 %v2404
  %2429 = vmatprep.subr.bf16.mxu0 0
  %2430 = vmatpush1.bf16.msra.mxu0 %v2405
  %2431 = vmatprep.subr.bf16.mxu0 0
  %2432 = vmatpush1.bf16.msra.mxu0 %v2406
  %2433 = vmatprep.subr.bf16.mxu0 0
  %2434 = vmatpush1.bf16.msra.mxu0 %v2407
  %2435 = vmatprep.subr.bf16.mxu0 0
  %2436 = vmatpush1.bf16.msra.mxu0 %v2408
  %2437 = vmatprep.subr.bf16.mxu0 0
  %2438 = vmatpush1.bf16.msra.mxu0 %v2409
  %2439 = vmatprep.subr.bf16.mxu0 0
  %2440 = vmatpush1.bf16.msra.mxu0 %v2410
  %2441 = vmatprep.subr.bf16.mxu0 0
  %2442 = vmatpush1.bf16.msra.mxu0 0
  %2443 = vmatprep.mubr.bf16.mxu0 %v1593
  %2444 = vmatmul.mubr.bf16.gmra.mrb[0].mxu0 %v1447
  %v2445 = vpop.f32.mrb[0].mxu0
  %v2446 = vadd.f32 0.0, %v2445
  %v2447 = vpop.f32.mrb[0].mxu0
  %v2448 = vpop.f32.mrb[0].mxu0
  %v2449 = vadd.f32 0.0, %v2448
  %v2450 = vpop.f32.mrb[0].mxu0
  %2451 = vmatprep.mubr.bf16.mxu0 %v1596
  %2452 = vmatmul.mubr.bf16.gmra.mrb[0].mxu0 %v1449
  %v2453 = vpop.f32.mrb[0].mxu0
  %v2454 = vadd.f32 0.0, %v2453
  %v2455 = vpop.f32.mrb[0].mxu0
  %v2456 = vpop.f32.mrb[0].mxu0
  %v2457 = vadd.f32 0.0, %v2456
  %v2458 = vpop.f32.mrb[0].mxu0
  %2459 = vmatprep.mubr.bf16.mxu0 %v1599
  %2460 = vmatmul.mubr.bf16.gmra.mrb[0].mxu0 %v1451
  %v2461 = vpop.f32.mrb[0].mxu0
  %v2462 = vadd.f32 0.0, %v2461
  %v2463 = vpop.f32.mrb[0].mxu0
  %v2464 = vpop.f32.mrb[0].mxu0
  %v2465 = vadd.f32 0.0, %v2464
  %v2466 = vpop.f32.mrb[0].mxu0
  %2467 = vmatprep.mubr.bf16.mxu0 %v1602
  %2468 = vmatmul.mubr.bf16.gmra.mrb[0].mxu0 %v1453
  %v2469 = vpop.f32.mrb[0].mxu0
  %v2470 = vadd.f32 0.0, %v2469
  %v2471 = vpop.f32.mrb[0].mxu0
  %v2472 = vpop.f32.mrb[0].mxu0
  %v2473 = vadd.f32 0.0, %v2472
  %v2474 = vpop.f32.mrb[0].mxu0
  %2475 = vmatprep.mubr.bf16.mxu0 %v1605
  %2476 = vmatmul.mubr.bf16.gmra.mrb[0].mxu0 %v1455
  %v2477 = vpop.f32.mrb[0].mxu0
  %v2478 = vadd.f32 0.0, %v2477
  %v2479 = vpop.f32.mrb[0].mxu0
  %v2480 = vpop.f32.mrb[0].mxu0
  %v2481 = vadd.f32 0.0, %v2480
  %v2482 = vpop.f32.mrb[0].mxu0
  %2483 = vmatprep.mubr.bf16.mxu0 %v1608
  %2484 = vmatmul.mubr.bf16.gmra.mrb[0].mxu0 %v1457
  %v2485 = vpop.f32.mrb[0].mxu0
  %v2486 = vadd.f32 0.0, %v2485
  %v2487 = vpop.f32.mrb[0].mxu0
  %v2488 = vpop.f32.mrb[0].mxu0
  %v2489 = vadd.f32 0.0, %v2488
  %v2490 = vpop.f32.mrb[0].mxu0
  %2491 = vmatprep.mubr.bf16.mxu0 %v1611
  %2492 = vmatmul.mubr.bf16.gmra.mrb[0].mxu0 %v1459
  %v2493 = vpop.f32.mrb[0].mxu0
  %v2494 = vadd.f32 0.0, %v2493
  %v2495 = vpop.f32.mrb[0].mxu0
  %v2496 = vpop.f32.mrb[0].mxu0
  %v2497 = vadd.f32 0.0, %v2496
  %v2498 = vpop.f32.mrb[0].mxu0
  %2499 = vmatprep.mubr.bf16.mxu0 %v1614
  %2500 = vmatmul.mubr.bf16.gmra.mrb[0].mxu0 %v1461
  %v2501 = vpop.f32.mrb[0].mxu0
  %v2502 = vadd.f32 0.0, %v2501
  %v2503 = vpop.f32.mrb[0].mxu0
  %v2504 = vpop.f32.mrb[0].mxu0
  %v2505 = vadd.f32 0.0, %v2504
  %v2506 = vpop.f32.mrb[0].mxu0
  %2507 = vmatprep.mubr.bf16.mxu0 %v1617
  %2508 = vmatmul.mubr.bf16.gmra.mrb[0].mxu0 %v1463
  %v2509 = vpop.f32.mrb[0].mxu0
  %v2510 = vadd.f32 0.0, %v2509
  %v2511 = vpop.f32.mrb[0].mxu0
  %v2512 = vpop.f32.mrb[0].mxu0
  %v2513 = vadd.f32 0.0, %v2512
  %v2514 = vpop.f32.mrb[0].mxu0
  %2515 = vmatprep.mubr.bf16.mxu0 %v1620
  %2516 = vmatmul.mubr.bf16.gmra.mrb[0].mxu0 %v1465
  %v2517 = vpop.f32.mrb[0].mxu0
  %v2518 = vadd.f32 0.0, %v2517
  %v2519 = vpop.f32.mrb[0].mxu0
  %v2520 = vpop.f32.mrb[0].mxu0
  %v2521 = vadd.f32 0.0, %v2520
  %v2522 = vpop.f32.mrb[0].mxu0
  %2523 = vmatprep.mubr.bf16.mxu0 %v1623
  %2524 = vmatmul.mubr.bf16.gmra.mrb[0].mxu0 %v1467
  %v2525 = vpop.f32.mrb[0].mxu0
  %v2526 = vadd.f32 0.0, %v2525
  %v2527 = vpop.f32.mrb[0].mxu0
  %v2528 = vpop.f32.mrb[0].mxu0
  %v2529 = vadd.f32 0.0, %v2528
  %v2530 = vpop.f32.mrb[0].mxu0
  %2531 = vmatprep.mubr.bf16.mxu0 %v1626
  %2532 = vmatmul.mubr.bf16.gmra.mrb[0].mxu0 %v1469
  %v2533 = vpop.f32.mrb[0].mxu0
  %v2534 = vadd.f32 0.0, %v2533
  %v2535 = vpop.f32.mrb[0].mxu0
  %v2536 = vpop.f32.mrb[0].mxu0
  %v2537 = vadd.f32 0.0, %v2536
  %v2538 = vpop.f32.mrb[0].mxu0
  %2539 = vmatprep.mubr.bf16.mxu0 %v1629
  %2540 = vmatmul.mubr.bf16.gmra.mrb[0].mxu0 %v1471
  %v2541 = vpop.f32.mrb[0].mxu0
  %v2542 = vadd.f32 0.0, %v2541
  %v2543 = vpop.f32.mrb[0].mxu0
  %v2544 = vpop.f32.mrb[0].mxu0
  %v2545 = vadd.f32 0.0, %v2544
  %v2546 = vpop.f32.mrb[0].mxu0
  %2547 = vmatprep.mubr.bf16.mxu0 %v1632
  %2548 = vmatmul.mubr.bf16.gmra.mrb[0].mxu0 %v1473
  %v2549 = vpop.f32.mrb[0].mxu0
  %v2550 = vadd.f32 0.0, %v2549
  %v2551 = vpop.f32.mrb[0].mxu0
  %v2552 = vpop.f32.mrb[0].mxu0
  %v2553 = vadd.f32 0.0, %v2552
  %v2554 = vpop.f32.mrb[0].mxu0
  %2555 = vmatprep.mubr.bf16.mxu0 %v1635
  %2556 = vmatmul.mubr.bf16.gmra.mrb[0].mxu0 %v1475
  %v2557 = vpop.f32.mrb[0].mxu0
  %v2558 = vadd.f32 0.0, %v2557
  %v2559 = vpop.f32.mrb[0].mxu0
  %v2560 = vpop.f32.mrb[0].mxu0
  %v2561 = vadd.f32 0.0, %v2560
  %v2562 = vpop.f32.mrb[0].mxu0
  %2563 = vmatprep.mubr.bf16.mxu0 %v1638
  %2564 = vmatmul.mubr.bf16.gmra.mrb[0].mxu0 %v1477
  %v2565 = vpop.f32.mrb[0].mxu0
  %v2566 = vadd.f32 0.0, %v2565
  %v2567 = vpop.f32.mrb[0].mxu0
  %v2568 = vpop.f32.mrb[0].mxu0
  %v2569 = vadd.f32 0.0, %v2568
  %v2570 = vpop.f32.mrb[0].mxu0
  %2571 = vmatprep.mubr.bf16.mxu0 %v1641
  %2572 = vmatmul.mubr.bf16.gmra.mrb[0].mxu0 %v1479
  %v2573 = vpop.f32.mrb[0].mxu0
  %v2574 = vadd.f32 0.0, %v2573
  %v2575 = vpop.f32.mrb[0].mxu0
  %v2576 = vpop.f32.mrb[0].mxu0
  %v2577 = vadd.f32 0.0, %v2576
  %v2578 = vpop.f32.mrb[0].mxu0
  %2579 = vmatprep.mubr.bf16.mxu0 %v1644
  %2580 = vmatmul.mubr.bf16.gmra.mrb[0].mxu0 %v1481
  %v2581 = vpop.f32.mrb[0].mxu0
  %v2582 = vadd.f32 0.0, %v2581
  %v2583 = vpop.f32.mrb[0].mxu0
  %v2584 = vpop.f32.mrb[0].mxu0
  %v2585 = vadd.f32 0.0, %v2584
  %v2586 = vpop.f32.mrb[0].mxu0
  %2587 = vmatprep.mubr.bf16.mxu0 %v1647
  %2588 = vmatmul.mubr.bf16.gmra.mrb[0].mxu0 %v1483
  %v2589 = vpop.f32.mrb[0].mxu0
  %v2590 = vadd.f32 0.0, %v2589
  %v2591 = vpop.f32.mrb[0].mxu0
  %v2592 = vpop.f32.mrb[0].mxu0
  %v2593 = vadd.f32 0.0, %v2592
  %v2594 = vpop.f32.mrb[0].mxu0
  %2595 = vmatprep.mubr.bf16.mxu0 %v1650
  %2596 = vmatmul.mubr.bf16.gmra.mrb[0].mxu0 %v1485
  %v2597 = vpop.f32.mrb[0].mxu0
  %v2598 = vadd.f32 0.0, %v2597
  %v2599 = vpop.f32.mrb[0].mxu0
  %v2600 = vpop.f32.mrb[0].mxu0
  %v2601 = vadd.f32 0.0, %v2600
  %v2602 = vpop.f32.mrb[0].mxu0
  %2603 = vmatprep.mubr.bf16.mxu0 %v1653
  %2604 = vmatmul.mubr.bf16.gmra.mrb[0].mxu0 %v1487
  %v2605 = vpop.f32.mrb[0].mxu0
  %v2606 = vadd.f32 0.0, %v2605
  %v2607 = vpop.f32.mrb[0].mxu0
  %v2608 = vpop.f32.mrb[0].mxu0
  %v2609 = vadd.f32 0.0, %v2608
  %v2610 = vpop.f32.mrb[0].mxu0
  %2611 = vmatprep.mubr.bf16.mxu0 %v1656
  %2612 = vmatmul.mubr.bf16.gmra.mrb[0].mxu0 %v1489
  %v2613 = vpop.f32.mrb[0].mxu0
  %v2614 = vadd.f32 0.0, %v2613
  %v2615 = vpop.f32.mrb[0].mxu0
  %v2616 = vpop.f32.mrb[0].mxu0
  %v2617 = vadd.f32 0.0, %v2616
  %v2618 = vpop.f32.mrb[0].mxu0
  %2619 = vmatprep.mubr.bf16.mxu0 %v1659
  %2620 = vmatmul.mubr.bf16.gmra.mrb[0].mxu0 %v1491
  %v2621 = vpop.f32.mrb[0].mxu0
  %v2622 = vadd.f32 0.0, %v2621
  %v2623 = vpop.f32.mrb[0].mxu0
  %v2624 = vpop.f32.mrb[0].mxu0
  %v2625 = vadd.f32 0.0, %v2624
  %v2626 = vpop.f32.mrb[0].mxu0
  %2627 = vmatprep.mubr.bf16.mxu0 %v1662
  %2628 = vmatmul.mubr.bf16.gmra.mrb[0].mxu0 %v1493
  %v2629 = vpop.f32.mrb[0].mxu0
  %v2630 = vadd.f32 0.0, %v2629
  %v2631 = vpop.f32.mrb[0].mxu0
  %v2632 = vpop.f32.mrb[0].mxu0
  %v2633 = vadd.f32 0.0, %v2632
  %v2634 = vpop.f32.mrb[0].mxu0
  %2635 = vmatprep.mubr.bf16.mxu0 %v1665
  %2636 = vmatmul.mubr.bf16.gmra.mrb[0].mxu0 %v1495
  %v2637 = vpop.f32.mrb[0].mxu0
  %v2638 = vadd.f32 0.0, %v2637
  %v2639 = vpop.f32.mrb[0].mxu0
  %v2640 = vpop.f32.mrb[0].mxu0
  %v2641 = vadd.f32 0.0, %v2640
  %v2642 = vpop.f32.mrb[0].mxu0
  %2643 = vmatprep.mubr.bf16.mxu0 %v1668
  %2644 = vmatmul.mubr.bf16.gmra.mrb[0].mxu0 %v1497
  %v2645 = vpop.f32.mrb[0].mxu0
  %v2646 = vadd.f32 0.0, %v2645
  %v2647 = vpop.f32.mrb[0].mxu0
  %v2648 = vpop.f32.mrb[0].mxu0
  %v2649 = vadd.f32 0.0, %v2648
  %v2650 = vpop.f32.mrb[0].mxu0
  %2651 = vmatprep.mubr.bf16.mxu0 %v1671
  %2652 = vmatmul.mubr.bf16.gmra.mrb[0].mxu0 %v1499
  %v2653 = vpop.f32.mrb[0].mxu0
  %v2654 = vadd.f32 0.0, %v2653
  %v2655 = vpop.f32.mrb[0].mxu0
  %v2656 = vpop.f32.mrb[0].mxu0
  %v2657 = vadd.f32 0.0, %v2656
  %v2658 = vpop.f32.mrb[0].mxu0
  %2659 = vmatprep.mubr.bf16.mxu0 %v1674
  %2660 = vmatmul.mubr.bf16.gmra.mrb[0].mxu0 %v1501
  %v2661 = vpop.f32.mrb[0].mxu0
  %v2662 = vadd.f32 0.0, %v2661
  %v2663 = vpop.f32.mrb[0].mxu0
  %v2664 = vpop.f32.mrb[0].mxu0
  %v2665 = vadd.f32 0.0, %v2664
  %v2666 = vpop.f32.mrb[0].mxu0
  %2667 = vmatprep.mubr.bf16.mxu0 %v1677
  %2668 = vmatmul.mubr.bf16.gmra.mrb[0].mxu0 %v1503
  %v2669 = vpop.f32.mrb[0].mxu0
  %v2670 = vadd.f32 0.0, %v2669
  %v2671 = vpop.f32.mrb[0].mxu0
  %v2672 = vpop.f32.mrb[0].mxu0
  %v2673 = vadd.f32 0.0, %v2672
  %v2674 = vpop.f32.mrb[0].mxu0
  %2675 = vmatprep.mubr.bf16.mxu0 %v1680
  %2676 = vmatmul.mubr.bf16.gmra.mrb[0].mxu0 %v1505
  %v2677 = vpop.f32.mrb[0].mxu0
  %v2678 = vadd.f32 0.0, %v2677
  %v2679 = vpop.f32.mrb[0].mxu0
  %v2680 = vpop.f32.mrb[0].mxu0
  %v2681 = vadd.f32 0.0, %v2680
  %v2682 = vpop.f32.mrb[0].mxu0
  %2683 = vmatprep.mubr.bf16.mxu0 %v1683
  %2684 = vmatmul.mubr.bf16.gmra.mrb[0].mxu0 %v1507
  %v2685 = vpop.f32.mrb[0].mxu0
  %v2686 = vadd.f32 0.0, %v2685
  %v2687 = vpop.f32.mrb[0].mxu0
  %v2688 = vpop.f32.mrb[0].mxu0
  %v2689 = vadd.f32 0.0, %v2688
  %v2690 = vpop.f32.mrb[0].mxu0
  %2691 = vmatprep.mubr.bf16.mxu0 %v1686
  %2692 = vmatmul.mubr.bf16.gmra.mrb[0].mxu0 %v1509
  %v2693 = vpop.f32.mrb[0].mxu0
  %v2694 = vadd.f32 0.0, %v2693
  %v2695 = vpop.f32.mrb[0].mxu0
  %v2696 = vpop.f32.mrb[0].mxu0
  %v2697 = vadd.f32 0.0, %v2696
  %v2698 = vpop.f32.mrb[0].mxu0
  %2699 = vmatprep.mubr.bf16.mxu0 %v1689
  %2700 = vmatmul.mubr.bf16.gmra.mrb[0].mxu0 %v1511
  %v2701 = vpop.f32.mrb[0].mxu0
  %v2702 = vadd.f32 0.0, %v2701
  %v2703 = vpop.f32.mrb[0].mxu0
  %v2704 = vpop.f32.mrb[0].mxu0
  %v2705 = vadd.f32 0.0, %v2704
  %v2706 = vpop.f32.mrb[0].mxu0
  %2707 = vmatprep.mubr.bf16.mxu0 %v1692
  %2708 = vmatmul.mubr.bf16.gmra.mrb[0].mxu0 %v1513
  %v2709 = vpop.f32.mrb[0].mxu0
  %v2710 = vadd.f32 0.0, %v2709
  %v2711 = vpop.f32.mrb[0].mxu0
  %v2712 = vpop.f32.mrb[0].mxu0
  %v2713 = vadd.f32 0.0, %v2712
  %v2714 = vpop.f32.mrb[0].mxu0
  %2715 = vmatprep.mubr.bf16.mxu0 %v1695
  %2716 = vmatmul.mubr.bf16.gmra.mrb[0].mxu0 %v1515
  %v2717 = vpop.f32.mrb[0].mxu0
  %v2718 = vadd.f32 0.0, %v2717
  %v2719 = vpop.f32.mrb[0].mxu0
  %v2720 = vpop.f32.mrb[0].mxu0
  %v2721 = vadd.f32 0.0, %v2720
  %v2722 = vpop.f32.mrb[0].mxu0
  %2723 = vmatprep.mubr.bf16.mxu0 %v1698
  %2724 = vmatmul.mubr.bf16.gmra.mrb[0].mxu0 %v1517
  %v2725 = vpop.f32.mrb[0].mxu0
  %v2726 = vadd.f32 0.0, %v2725
  %v2727 = vpop.f32.mrb[0].mxu0
  %v2728 = vpop.f32.mrb[0].mxu0
  %v2729 = vadd.f32 0.0, %v2728
  %v2730 = vpop.f32.mrb[0].mxu0
  %2731 = vmatprep.mubr.bf16.mxu0 %v1701
  %2732 = vmatmul.mubr.bf16.gmra.mrb[0].mxu0 %v1519
  %v2733 = vpop.f32.mrb[0].mxu0
  %v2734 = vadd.f32 0.0, %v2733
  %v2735 = vpop.f32.mrb[0].mxu0
  %v2736 = vpop.f32.mrb[0].mxu0
  %v2737 = vadd.f32 0.0, %v2736
  %v2738 = vpop.f32.mrb[0].mxu0
  %2739 = vmatprep.mubr.bf16.mxu0 %v1704
  %2740 = vmatmul.mubr.bf16.gmra.mrb[0].mxu0 %v1521
  %v2741 = vpop.f32.mrb[0].mxu0
  %v2742 = vadd.f32 0.0, %v2741
  %v2743 = vpop.f32.mrb[0].mxu0
  %v2744 = vpop.f32.mrb[0].mxu0
  %v2745 = vadd.f32 0.0, %v2744
  %v2746 = vpop.f32.mrb[0].mxu0
  %2747 = vmatprep.mubr.bf16.mxu0 %v1707
  %2748 = vmatmul.mubr.bf16.gmra.mrb[0].mxu0 %v1523
  %v2749 = vpop.f32.mrb[0].mxu0
  %v2750 = vadd.f32 0.0, %v2749
  %v2751 = vpop.f32.mrb[0].mxu0
  %v2752 = vpop.f32.mrb[0].mxu0
  %v2753 = vadd.f32 0.0, %v2752
  %v2754 = vpop.f32.mrb[0].mxu0
  %2755 = vmatprep.mubr.bf16.mxu0 %v1710
  %2756 = vmatmul.mubr.bf16.gmra.mrb[0].mxu0 %v1525
  %v2757 = vpop.f32.mrb[0].mxu0
  %v2758 = vadd.f32 0.0, %v2757
  %v2759 = vpop.f32.mrb[0].mxu0
  %v2760 = vpop.f32.mrb[0].mxu0
  %v2761 = vadd.f32 0.0, %v2760
  %v2762 = vpop.f32.mrb[0].mxu0
  %2763 = vmatprep.mubr.bf16.mxu0 %v1713
  %2764 = vmatmul.mubr.bf16.gmra.mrb[0].mxu0 %v1527
  %v2765 = vpop.f32.mrb[0].mxu0
  %v2766 = vadd.f32 0.0, %v2765
  %v2767 = vpop.f32.mrb[0].mxu0
  %v2768 = vpop.f32.mrb[0].mxu0
  %v2769 = vadd.f32 0.0, %v2768
  %v2770 = vpop.f32.mrb[0].mxu0
  %2771 = vmatprep.mubr.bf16.mxu0 %v1716
  %2772 = vmatmul.mubr.bf16.gmra.mrb[0].mxu0 %v1529
  %v2773 = vpop.f32.mrb[0].mxu0
  %v2774 = vadd.f32 0.0, %v2773
  %v2775 = vpop.f32.mrb[0].mxu0
  %v2776 = vpop.f32.mrb[0].mxu0
  %v2777 = vadd.f32 0.0, %v2776
  %v2778 = vpop.f32.mrb[0].mxu0
  %2779 = vmatprep.mubr.bf16.mxu0 %v1719
  %2780 = vmatmul.mubr.bf16.gmra.mrb[0].mxu0 %v1531
  %v2781 = vpop.f32.mrb[0].mxu0
  %v2782 = vadd.f32 0.0, %v2781
  %v2783 = vpop.f32.mrb[0].mxu0
  %v2784 = vpop.f32.mrb[0].mxu0
  %v2785 = vadd.f32 0.0, %v2784
  %v2786 = vpop.f32.mrb[0].mxu0
  %2787 = vmatprep.mubr.bf16.mxu0 %v1722
  %2788 = vmatmul.mubr.bf16.gmra.mrb[0].mxu0 %v1533
  %v2789 = vpop.f32.mrb[0].mxu0
  %v2790 = vadd.f32 0.0, %v2789
  %v2791 = vpop.f32.mrb[0].mxu0
  %v2792 = vpop.f32.mrb[0].mxu0
  %v2793 = vadd.f32 0.0, %v2792
  %v2794 = vpop.f32.mrb[0].mxu0
  %2795 = vmatprep.mubr.bf16.mxu0 %v1725
  %2796 = vmatmul.mubr.bf16.gmra.mrb[0].mxu0 %v1535
  %v2797 = vpop.f32.mrb[0].mxu0
  %v2798 = vadd.f32 0.0, %v2797
  %v2799 = vpop.f32.mrb[0].mxu0
  %v2800 = vpop.f32.mrb[0].mxu0
  %v2801 = vadd.f32 0.0, %v2800
  %v2802 = vpop.f32.mrb[0].mxu0
  %2803 = vmatprep.mubr.bf16.mxu0 %v1728
  %2804 = vmatmul.mubr.bf16.gmra.mrb[0].mxu0 %v1537
  %v2805 = vpop.f32.mrb[0].mxu0
  %v2806 = vadd.f32 0.0, %v2805
  %v2807 = vpop.f32.mrb[0].mxu0
  %v2808 = vpop.f32.mrb[0].mxu0
  %v2809 = vadd.f32 0.0, %v2808
  %v2810 = vpop.f32.mrb[0].mxu0
  %2811 = vmatprep.mubr.bf16.mxu0 %v1731
  %2812 = vmatmul.mubr.bf16.gmra.mrb[0].mxu0 %v1539
  %v2813 = vpop.f32.mrb[0].mxu0
  %v2814 = vadd.f32 0.0, %v2813
  %v2815 = vpop.f32.mrb[0].mxu0
  %v2816 = vpop.f32.mrb[0].mxu0
  %v2817 = vadd.f32 0.0, %v2816
  %v2818 = vpop.f32.mrb[0].mxu0
  %2819 = vmatprep.mubr.bf16.mxu0 %v1734
  %2820 = vmatmul.mubr.bf16.gmra.mrb[0].mxu0 %v1541
  %v2821 = vpop.f32.mrb[0].mxu0
  %v2822 = vadd.f32 0.0, %v2821
  %v2823 = vpop.f32.mrb[0].mxu0
  %v2824 = vpop.f32.mrb[0].mxu0
  %v2825 = vadd.f32 0.0, %v2824
  %v2826 = vpop.f32.mrb[0].mxu0
  %2827 = vdwg.mxu0
  %v2828 = vpack.c.bf16 %v2449, %v2446
  %v2829 = vpack.c.bf16 %v2457, %v2454
  %v2830 = vpack.c.bf16 %v2465, %v2462
  %v2831 = vpack.c.bf16 %v2473, %v2470
  %v2832 = vpack.c.bf16 %v2481, %v2478
  %v2833 = vpack.c.bf16 %v2489, %v2486
  %v2834 = vpack.c.bf16 %v2497, %v2494
  %v2835 = vpack.c.bf16 %v2505, %v2502
  %v2836 = vpack.c.bf16 %v2513, %v2510
  %v2837 = vpack.c.bf16 %v2521, %v2518
  %v2838 = vpack.c.bf16 %v2529, %v2526
  %v2839 = vpack.c.bf16 %v2537, %v2534
  %v2840 = vpack.c.bf16 %v2545, %v2542
  %v2841 = vpack.c.bf16 %v2553, %v2550
  %v2842 = vpack.c.bf16 %v2561, %v2558
  %v2843 = vpack.c.bf16 %v2569, %v2566
  %v2844 = vpack.c.bf16 %v2577, %v2574
  %v2845 = vpack.c.bf16 %v2585, %v2582
  %v2846 = vpack.c.bf16 %v2593, %v2590
  %v2847 = vpack.c.bf16 %v2601, %v2598
  %v2848 = vpack.c.bf16 %v2609, %v2606
  %v2849 = vpack.c.bf16 %v2617, %v2614
  %v2850 = vpack.c.bf16 %v2625, %v2622
  %v2851 = vpack.c.bf16 %v2633, %v2630
  %v2852 = vpack.c.bf16 %v2641, %v2638
  %v2853 = vpack.c.bf16 %v2649, %v2646
  %v2854 = vpack.c.bf16 %v2657, %v2654
  %v2855 = vpack.c.bf16 %v2665, %v2662
  %v2856 = vpack.c.bf16 %v2673, %v2670
  %v2857 = vpack.c.bf16 %v2681, %v2678
  %v2858 = vpack.c.bf16 %v2689, %v2686
  %v2859 = vpack.c.bf16 %v2697, %v2694
  %v2860 = vpack.c.bf16 %v2705, %v2702
  %v2861 = vpack.c.bf16 %v2713, %v2710
  %v2862 = vpack.c.bf16 %v2721, %v2718
  %v2863 = vpack.c.bf16 %v2729, %v2726
  %v2864 = vpack.c.bf16 %v2737, %v2734
  %v2865 = vpack.c.bf16 %v2745, %v2742
  %v2866 = vpack.c.bf16 %v2753, %v2750
  %v2867 = vpack.c.bf16 %v2761, %v2758
  %v2868 = vpack.c.bf16 %v2769, %v2766
  %v2869 = vpack.c.bf16 %v2777, %v2774
  %v2870 = vpack.c.bf16 %v2785, %v2782
  %v2871 = vpack.c.bf16 %v2793, %v2790
  %v2872 = vpack.c.bf16 %v2801, %v2798
  %v2873 = vpack.c.bf16 %v2809, %v2806
  %v2874 = vpack.c.bf16 %v2817, %v2814
  %v2875 = vpack.c.bf16 %v2825, %v2822
  %2876 = vst.msk [vmem:[#allocation3 + $0x60] sm:$0xff] %vm1017, %v2828
  %2877 = vst.msk [vmem:[#allocation3 + $0x80] sm:$0xff] %vm1017, %v2829
  %2878 = vst.msk [vmem:[#allocation3 + $0xa0] sm:$0xff] %vm1017, %v2830
  %2882 = vrot.lane.b32.xlu0 %v2831, 32
  %v2883 = vpop.permute.xlu0 %2882
  %2884 = vrot.lane.b32.xlu0 %v2832, 32
  %v2885 = vpop.permute.xlu0 %2884
  %2886 = vrot.lane.b32.xlu0 %v2833, 32
  %v2887 = vpop.permute.xlu0 %2886
  %2891 = vst.msk [vmem:[#allocation3 + $0x60] sm:$0xff] %vm2216, %v2883
  %2892 = vst.msk [vmem:[#allocation3 + $0x80] sm:$0xff] %vm2216, %v2885
  %2893 = vst.msk [vmem:[#allocation3 + $0xa0] sm:$0xff] %vm2216, %v2887
  %2897 = vrot.lane.b32.xlu0 %v2834, 64
  %v2898 = vpop.permute.xlu0 %2897
  %2899 = vrot.lane.b32.xlu0 %v2835, 64
  %v2900 = vpop.permute.xlu0 %2899
  %2901 = vrot.lane.b32.xlu0 %v2836, 64
  %v2902 = vpop.permute.xlu0 %2901
  %2906 = vst.msk [vmem:[#allocation3 + $0x60] sm:$0xff] %vm2232, %v2898
  %2907 = vst.msk [vmem:[#allocation3 + $0x80] sm:$0xff] %vm2232, %v2900
  %2908 = vst.msk [vmem:[#allocation3 + $0xa0] sm:$0xff] %vm2232, %v2902
  %2912 = vrot.lane.b32.xlu0 %v2837, 96
  %v2913 = vpop.permute.xlu0 %2912
  %2914 = vrot.lane.b32.xlu0 %v2838, 96
  %v2915 = vpop.permute.xlu0 %2914
  %2916 = vrot.lane.b32.xlu0 %v2839, 96
  %v2917 = vpop.permute.xlu0 %2916
  %2921 = vst.msk [vmem:[#allocation3 + $0x60] sm:$0xff] %vm2248, %v2913
  %2922 = vst.msk [vmem:[#allocation3 + $0x80] sm:$0xff] %vm2248, %v2915
  %2923 = vst.msk [vmem:[#allocation3 + $0xa0] sm:$0xff] %vm2248, %v2917
  %2924 = vst.msk [vmem:[#allocation3 + $0x68] sm:$0xff] %vm1017, %v2840
  %2925 = vst.msk [vmem:[#allocation3 + $0x88] sm:$0xff] %vm1017, %v2841
  %2926 = vst.msk [vmem:[#allocation3 + $0xa8] sm:$0xff] %vm1017, %v2842
  %2930 = vrot.lane.b32.xlu0 %v2843, 32
  %v2931 = vpop.permute.xlu0 %2930
  %2932 = vrot.lane.b32.xlu0 %v2844, 32
  %v2933 = vpop.permute.xlu0 %2932
  %2934 = vrot.lane.b32.xlu0 %v2845, 32
  %v2935 = vpop.permute.xlu0 %2934
  %2939 = vst.msk [vmem:[#allocation3 + $0x68] sm:$0xff] %vm2216, %v2931
  %2940 = vst.msk [vmem:[#allocation3 + $0x88] sm:$0xff] %vm2216, %v2933
  %2941 = vst.msk [vmem:[#allocation3 + $0xa8] sm:$0xff] %vm2216, %v2935
  %2945 = vrot.lane.b32.xlu0 %v2846, 64
  %v2946 = vpop.permute.xlu0 %2945
  %2947 = vrot.lane.b32.xlu0 %v2847, 64
  %v2948 = vpop.permute.xlu0 %2947
  %2949 = vrot.lane.b32.xlu0 %v2848, 64
  %v2950 = vpop.permute.xlu0 %2949
  %2954 = vst.msk [vmem:[#allocation3 + $0x68] sm:$0xff] %vm2232, %v2946
  %2955 = vst.msk [vmem:[#allocation3 + $0x88] sm:$0xff] %vm2232, %v2948
  %2956 = vst.msk [vmem:[#allocation3 + $0xa8] sm:$0xff] %vm2232, %v2950
  %2960 = vrot.lane.b32.xlu0 %v2849, 96
  %v2961 = vpop.permute.xlu0 %2960
  %2962 = vrot.lane.b32.xlu0 %v2850, 96
  %v2963 = vpop.permute.xlu0 %2962
  %2964 = vrot.lane.b32.xlu0 %v2851, 96
  %v2965 = vpop.permute.xlu0 %2964
  %2969 = vst.msk [vmem:[#allocation3 + $0x68] sm:$0xff] %vm2248, %v2961
  %2970 = vst.msk [vmem:[#allocation3 + $0x88] sm:$0xff] %vm2248, %v2963
  %2971 = vst.msk [vmem:[#allocation3 + $0xa8] sm:$0xff] %vm2248, %v2965
  %2972 = vst.msk [vmem:[#allocation3 + $0x70] sm:$0xff] %vm1017, %v2852
  %2973 = vst.msk [vmem:[#allocation3 + $0x90] sm:$0xff] %vm1017, %v2853
  %2974 = vst.msk [vmem:[#allocation3 + $0xb0] sm:$0xff] %vm1017, %v2854
  %2978 = vrot.lane.b32.xlu0 %v2855, 32
  %v2979 = vpop.permute.xlu0 %2978
  %2980 = vrot.lane.b32.xlu0 %v2856, 32
  %v2981 = vpop.permute.xlu0 %2980
  %2982 = vrot.lane.b32.xlu0 %v2857, 32
  %v2983 = vpop.permute.xlu0 %2982
  %2987 = vst.msk [vmem:[#allocation3 + $0x70] sm:$0xff] %vm2216, %v2979
  %2988 = vst.msk [vmem:[#allocation3 + $0x90] sm:$0xff] %vm2216, %v2981
  %2989 = vst.msk [vmem:[#allocation3 + $0xb0] sm:$0xff] %vm2216, %v2983
  %2993 = vrot.lane.b32.xlu0 %v2858, 64
  %v2994 = vpop.permute.xlu0 %2993
  %2995 = vrot.lane.b32.xlu0 %v2859, 64
  %v2996 = vpop.permute.xlu0 %2995
  %2997 = vrot.lane.b32.xlu0 %v2860, 64
  %v2998 = vpop.permute.xlu0 %2997
  %3002 = vst.msk [vmem:[#allocation3 + $0x70] sm:$0xff] %vm2232, %v2994
  %3003 = vst.msk [vmem:[#allocation3 + $0x90] sm:$0xff] %vm2232, %v2996
  %3004 = vst.msk [vmem:[#allocation3 + $0xb0] sm:$0xff] %vm2232, %v2998
  %3008 = vrot.lane.b32.xlu0 %v2861, 96
  %v3009 = vpop.permute.xlu0 %3008
  %3010 = vrot.lane.b32.xlu0 %v2862, 96
  %v3011 = vpop.permute.xlu0 %3010
  %3012 = vrot.lane.b32.xlu0 %v2863, 96
  %v3013 = vpop.permute.xlu0 %3012
  %3017 = vst.msk [vmem:[#allocation3 + $0x70] sm:$0xff] %vm2248, %v3009
  %3018 = vst.msk [vmem:[#allocation3 + $0x90] sm:$0xff] %vm2248, %v3011
  %3019 = vst.msk [vmem:[#allocation3 + $0xb0] sm:$0xff] %vm2248, %v3013
  %3020 = vst.msk [vmem:[#allocation3 + $0x78] sm:$0xff] %vm1017, %v2864
  %3021 = vst.msk [vmem:[#allocation3 + $0x98] sm:$0xff] %vm1017, %v2865
  %3022 = vst.msk [vmem:[#allocation3 + $0xb8] sm:$0xff] %vm1017, %v2866
  %3026 = vrot.lane.b32.xlu0 %v2867, 32
  %v3027 = vpop.permute.xlu0 %3026
  %3028 = vrot.lane.b32.xlu0 %v2868, 32
  %v3029 = vpop.permute.xlu0 %3028
  %3030 = vrot.lane.b32.xlu0 %v2869, 32
  %v3031 = vpop.permute.xlu0 %3030
  %3035 = vst.msk [vmem:[#allocation3 + $0x78] sm:$0xff] %vm2216, %v3027
  %3036 = vst.msk [vmem:[#allocation3 + $0x98] sm:$0xff] %vm2216, %v3029
  %3037 = vst.msk [vmem:[#allocation3 + $0xb8] sm:$0xff] %vm2216, %v3031
  %3041 = vrot.lane.b32.xlu0 %v2870, 64
  %v3042 = vpop.permute.xlu0 %3041
  %3043 = vrot.lane.b32.xlu0 %v2871, 64
  %v3044 = vpop.permute.xlu0 %3043
  %3045 = vrot.lane.b32.xlu0 %v2872, 64
  %v3046 = vpop.permute.xlu0 %3045
  %3050 = vst.msk [vmem:[#allocation3 + $0x78] sm:$0xff] %vm2232, %v3042
  %3051 = vst.msk [vmem:[#allocation3 + $0x98] sm:$0xff] %vm2232, %v3044
  %3052 = vst.msk [vmem:[#allocation3 + $0xb8] sm:$0xff] %vm2232, %v3046
  %3056 = vrot.lane.b32.xlu0 %v2873, 96
  %v3057 = vpop.permute.xlu0 %3056
  %3058 = vrot.lane.b32.xlu0 %v2874, 96
  %v3059 = vpop.permute.xlu0 %3058
  %3060 = vrot.lane.b32.xlu0 %v2875, 96
  %v3061 = vpop.permute.xlu0 %3060
  %3065 = vst.msk [vmem:[#allocation3 + $0x78] sm:$0xff] %vm2248, %v3057
  %3066 = vst.msk [vmem:[#allocation3 + $0x98] sm:$0xff] %vm2248, %v3059
  %3067 = vst.msk [vmem:[#allocation3 + $0xb8] sm:$0xff] %vm2248, %v3061
  %v3068 = vld [vmem:[#allocation3] sm:$0xff]
  %v3069 = vld [vmem:[#allocation3 + $0x8] sm:$0xff]
  %v3070 = vld [vmem:[#allocation3 + $0x10] sm:$0xff]
  %v3071 = vld [vmem:[#allocation3 + $0x18] sm:$0xff]
  %v3072 = vld [vmem:[#allocation3 + $0x20] sm:$0xff]
  %v3073 = vld [vmem:[#allocation3 + $0x28] sm:$0xff]
  %v3074 = vld [vmem:[#allocation3 + $0x30] sm:$0xff]
  %v3075 = vld [vmem:[#allocation3 + $0x38] sm:$0xff]
  %v3076 = vld [vmem:[#allocation3 + $0x40] sm:$0xff]
  %v3077 = vld [vmem:[#allocation3 + $0x48] sm:$0xff]
  %v3078 = vld [vmem:[#allocation3 + $0x50] sm:$0xff]
  %v3079 = vld [vmem:[#allocation3 + $0x58] sm:$0xff]
  %v3080 = vld [vmem:[#allocation3 + $0x60] sm:$0xff]
  %v3081 = vld [vmem:[#allocation3 + $0x68] sm:$0xff]
  %v3082 = vld [vmem:[#allocation3 + $0x70] sm:$0xff]
  %v3083 = vld [vmem:[#allocation3 + $0x78] sm:$0xff]
  %v3084 = vld [vmem:[#allocation3 + $0x80] sm:$0xff]
  %v3085 = vld [vmem:[#allocation3 + $0x88] sm:$0xff]
  %v3086 = vld [vmem:[#allocation3 + $0x90] sm:$0xff]
  %v3087 = vld [vmem:[#allocation3 + $0x98] sm:$0xff]
  %v3088 = vld [vmem:[#allocation3 + $0xa0] sm:$0xff]
  %v3089 = vld [vmem:[#allocation3 + $0xa8] sm:$0xff]
  %v3090 = vld [vmem:[#allocation3 + $0xb0] sm:$0xff]
  %v3091 = vld [vmem:[#allocation3 + $0xb8] sm:$0xff]
  %v3092 = vld [vmem:[%s9] sm:$0xf]
  %v3093 = vld [vmem:[%s9 + $0x4] sm:$0xf]
  %v3094 = vld [vmem:[%s9 + $0x8] sm:$0xf]
  %v3095 = vld [vmem:[%s9 + $0xc] sm:$0xf]
  %v3096 = vld [vmem:[%s9 + $0x10] sm:$0xf]
  %v3097 = vld [vmem:[%s9 + $0x14] sm:$0xf]
  %v3098 = vld [vmem:[%s9 + $0x18] sm:$0xf]
  %v3099 = vld [vmem:[%s9 + $0x1c] sm:$0xf]
  %v3100 = vld [vmem:[%s9 + $0x20] sm:$0xf]
  %v3101 = vld [vmem:[%s9 + $0x24] sm:$0xf]
  %v3102 = vld [vmem:[%s9 + $0x28] sm:$0xf]
  %v3103 = vld [vmem:[%s9 + $0x2c] sm:$0xf]
  %v3104 = vld [vmem:[%s9 + $0x30] sm:$0xf]
  %v3105 = vld [vmem:[%s9 + $0x34] sm:$0xf]
  %v3106 = vld [vmem:[%s9 + $0x38] sm:$0xf]
  %v3107 = vld [vmem:[%s9 + $0x3c] sm:$0xf]
  %v3108 = vld [vmem:[%s9 + $0x40] sm:$0xf]
  %v3109 = vld [vmem:[%s9 + $0x44] sm:$0xf]
  %v3110 = vld [vmem:[%s9 + $0x48] sm:$0xf]
  %v3111 = vld [vmem:[%s9 + $0x4c] sm:$0xf]
  %v3112 = vld [vmem:[%s9 + $0x50] sm:$0xf]
  %v3113 = vld [vmem:[%s9 + $0x54] sm:$0xf]
  %v3114 = vld [vmem:[%s9 + $0x58] sm:$0xf]
  %v3115 = vld [vmem:[%s9 + $0x5c] sm:$0xf]
  %v3116 = vld [vmem:[%s9 + $0x60] sm:$0xf]
  %v3117 = vld [vmem:[%s9 + $0x64] sm:$0xf]
  %v3118 = vld [vmem:[%s9 + $0x68] sm:$0xf]
  %v3119 = vld [vmem:[%s9 + $0x6c] sm:$0xf]
  %v3120 = vld [vmem:[%s9 + $0x70] sm:$0xf]
  %v3121 = vld [vmem:[%s9 + $0x74] sm:$0xf]
  %v3122 = vld [vmem:[%s9 + $0x78] sm:$0xf]
  %v3123 = vld [vmem:[%s9 + $0x7c] sm:$0xf]
  %v3124 = vld [vmem:[%s9 + $0x80] sm:$0xf]
  %v3125 = vld [vmem:[%s9 + $0x84] sm:$0xf]
  %v3126 = vld [vmem:[%s9 + $0x88] sm:$0xf]
  %v3127 = vld [vmem:[%s9 + $0x8c] sm:$0xf]
  %v3128 = vld [vmem:[%s9 + $0x90] sm:$0xf]
  %v3129 = vld [vmem:[%s9 + $0x94] sm:$0xf]
  %v3130 = vld [vmem:[%s9 + $0x98] sm:$0xf]
  %v3131 = vld [vmem:[%s9 + $0x9c] sm:$0xf]
  %v3132 = vld [vmem:[%s9 + $0xa0] sm:$0xf]
  %v3133 = vld [vmem:[%s9 + $0xa4] sm:$0xf]
  %v3134 = vld [vmem:[%s9 + $0xa8] sm:$0xf]
  %v3135 = vld [vmem:[%s9 + $0xac] sm:$0xf]
  %v3136 = vld [vmem:[%s9 + $0xb0] sm:$0xf]
  %v3137 = vld [vmem:[%s9 + $0xb4] sm:$0xf]
  %v3138 = vld [vmem:[%s9 + $0xb8] sm:$0xf]
  %v3139 = vld [vmem:[%s9 + $0xbc] sm:$0xf]
  %v3140 = vld [vmem:[%s9 + $0xc0] sm:$0xf]
  %v3141 = vld [vmem:[%s9 + $0xc4] sm:$0xf]
  %v3142 = vld [vmem:[%s9 + $0xc8] sm:$0xf]
  %v3143 = vld [vmem:[%s9 + $0xcc] sm:$0xf]
  %v3144 = vld [vmem:[%s9 + $0xd0] sm:$0xf]
  %v3145 = vld [vmem:[%s9 + $0xd4] sm:$0xf]
  %v3146 = vld [vmem:[%s9 + $0xd8] sm:$0xf]
  %v3147 = vld [vmem:[%s9 + $0xdc] sm:$0xf]
  %v3148 = vld [vmem:[%s9 + $0xe0] sm:$0xf]
  %v3149 = vld [vmem:[%s9 + $0xe4] sm:$0xf]
  %v3150 = vld [vmem:[%s9 + $0xe8] sm:$0xf]
  %v3151 = vld [vmem:[%s9 + $0xec] sm:$0xf]
  %v3152 = vld [vmem:[%s9 + $0xf0] sm:$0xf]
  %v3153 = vld [vmem:[%s9 + $0xf4] sm:$0xf]
  %v3154 = vld [vmem:[%s9 + $0xf8] sm:$0xf]
  %v3155 = vld [vmem:[%s9 + $0xfc] sm:$0xf]
  %v3156 = vld [vmem:[%s11] sm:$0x1]
  %v3158 = vlaneseq
  %v3159 = vshrl.u32 %v3158, 7
  %v3160 = vsub.s32 0, %v3159
  %v3161 = vrot.slane %v3156, %v3160
  %v3227 = vunpack.c.l.b16 %v3092
  %v3228 = vunpack.c.l.b16 %v3093
  %v3229 = vunpack.c.l.b16 %v3094
  %v3230 = vunpack.c.l.b16 %v3095
  %v3231 = vunpack.c.l.b16 %v3096
  %v3232 = vunpack.c.l.b16 %v3097
  %v3233 = vunpack.c.l.b16 %v3098
  %v3234 = vunpack.c.l.b16 %v3099
  %v3235 = vunpack.c.l.b16 %v3100
  %v3236 = vunpack.c.l.b16 %v3101
  %v3237 = vunpack.c.l.b16 %v3102
  %v3238 = vunpack.c.l.b16 %v3103
  %v3239 = vunpack.c.l.b16 %v3104
  %v3240 = vunpack.c.l.b16 %v3105
  %v3241 = vunpack.c.l.b16 %v3106
  %v3242 = vunpack.c.l.b16 %v3107
  %v3243 = vunpack.c.l.b16 %v3108
  %v3244 = vunpack.c.l.b16 %v3109
  %v3245 = vunpack.c.l.b16 %v3110
  %v3246 = vunpack.c.l.b16 %v3111
  %v3247 = vunpack.c.l.b16 %v3112
  %v3248 = vunpack.c.l.b16 %v3113
  %v3249 = vunpack.c.l.b16 %v3114
  %v3250 = vunpack.c.l.b16 %v3115
  %v3251 = vunpack.c.l.b16 %v3116
  %v3252 = vunpack.c.l.b16 %v3117
  %v3253 = vunpack.c.l.b16 %v3118
  %v3254 = vunpack.c.l.b16 %v3119
  %v3255 = vunpack.c.l.b16 %v3120
  %v3256 = vunpack.c.l.b16 %v3121
  %v3257 = vunpack.c.l.b16 %v3122
  %v3258 = vunpack.c.l.b16 %v3123
  %v3259 = vunpack.c.l.b16 %v3124
  %v3260 = vunpack.c.l.b16 %v3125
  %v3261 = vunpack.c.l.b16 %v3126
  %v3262 = vunpack.c.l.b16 %v3127
  %v3263 = vunpack.c.l.b16 %v3128
  %v3264 = vunpack.c.l.b16 %v3129
  %v3265 = vunpack.c.l.b16 %v3130
  %v3266 = vunpack.c.l.b16 %v3131
  %v3267 = vunpack.c.l.b16 %v3132
  %v3268 = vunpack.c.l.b16 %v3133
  %v3269 = vunpack.c.l.b16 %v3134
  %v3270 = vunpack.c.l.b16 %v3135
  %v3271 = vunpack.c.l.b16 %v3136
  %v3272 = vunpack.c.l.b16 %v3137
  %v3273 = vunpack.c.l.b16 %v3138
  %v3274 = vunpack.c.l.b16 %v3139
  %v3275 = vunpack.c.l.b16 %v3140
  %v3276 = vunpack.c.l.b16 %v3141
  %v3277 = vunpack.c.l.b16 %v3142
  %v3278 = vunpack.c.l.b16 %v3143
  %v3279 = vunpack.c.l.b16 %v3144
  %v3280 = vunpack.c.l.b16 %v3145
  %v3281 = vunpack.c.l.b16 %v3146
  %v3282 = vunpack.c.l.b16 %v3147
  %v3283 = vunpack.c.l.b16 %v3148
  %v3284 = vunpack.c.l.b16 %v3149
  %v3285 = vunpack.c.l.b16 %v3150
  %v3286 = vunpack.c.l.b16 %v3151
  %v3287 = vunpack.c.l.b16 %v3152
  %v3288 = vunpack.c.l.b16 %v3153
  %v3289 = vunpack.c.l.b16 %v3154
  %v3290 = vunpack.c.l.b16 %v3155
  %v3291 = vpack.c.b16 %v3228, %v3227
  %v3292 = vpack.c.b16 %v3230, %v3229
  %v3293 = vpack.c.b16 %v3232, %v3231
  %v3294 = vpack.c.b16 %v3234, %v3233
  %v3295 = vpack.c.b16 %v3236, %v3235
  %v3296 = vpack.c.b16 %v3238, %v3237
  %v3297 = vpack.c.b16 %v3240, %v3239
  %v3298 = vpack.c.b16 %v3242, %v3241
  %v3299 = vpack.c.b16 %v3244, %v3243
  %v3300 = vpack.c.b16 %v3246, %v3245
  %v3301 = vpack.c.b16 %v3248, %v3247
  %v3302 = vpack.c.b16 %v3250, %v3249
  %v3303 = vpack.c.b16 %v3252, %v3251
  %v3304 = vpack.c.b16 %v3254, %v3253
  %v3305 = vpack.c.b16 %v3256, %v3255
  %v3306 = vpack.c.b16 %v3258, %v3257
  %v3307 = vpack.c.b16 %v3260, %v3259
  %v3308 = vpack.c.b16 %v3262, %v3261
  %v3309 = vpack.c.b16 %v3264, %v3263
  %v3310 = vpack.c.b16 %v3266, %v3265
  %v3311 = vpack.c.b16 %v3268, %v3267
  %v3312 = vpack.c.b16 %v3270, %v3269
  %v3313 = vpack.c.b16 %v3272, %v3271
  %v3314 = vpack.c.b16 %v3274, %v3273
  %v3315 = vpack.c.b16 %v3276, %v3275
  %v3316 = vpack.c.b16 %v3278, %v3277
  %v3317 = vpack.c.b16 %v3280, %v3279
  %v3318 = vpack.c.b16 %v3282, %v3281
  %v3319 = vpack.c.b16 %v3284, %v3283
  %v3320 = vpack.c.b16 %v3286, %v3285
  %v3321 = vpack.c.b16 %v3288, %v3287
  %v3322 = vpack.c.b16 %v3290, %v3289
  %3355 = vmatprep.subr.bf16.mxu0 0
  %3356 = vmatpush1.bf16.msra.mxu0 %v3291
  %3357 = vmatprep.subr.bf16.mxu0 0
  %3358 = vmatpush1.bf16.msra.mxu0 %v3292
  %3359 = vmatprep.subr.bf16.mxu0 0
  %3360 = vmatpush1.bf16.msra.mxu0 %v3293
  %3361 = vmatprep.subr.bf16.mxu0 0
  %3362 = vmatpush1.bf16.msra.mxu0 %v3294
  %3363 = vmatprep.subr.bf16.mxu0 0
  %3364 = vmatpush1.bf16.msra.mxu0 %v3295
  %3365 = vmatprep.subr.bf16.mxu0 0
  %3366 = vmatpush1.bf16.msra.mxu0 %v3296
  %3367 = vmatprep.subr.bf16.mxu0 0
  %3368 = vmatpush1.bf16.msra.mxu0 %v3297
  %3369 = vmatprep.subr.bf16.mxu0 0
  %3370 = vmatpush1.bf16.msra.mxu0 %v3298
  %3371 = vmatprep.subr.bf16.mxu0 0
  %3372 = vmatpush1.bf16.msra.mxu0 %v3299
  %3373 = vmatprep.subr.bf16.mxu0 0
  %3374 = vmatpush1.bf16.msra.mxu0 %v3300
  %3375 = vmatprep.subr.bf16.mxu0 0
  %3376 = vmatpush1.bf16.msra.mxu0 %v3301
  %3377 = vmatprep.subr.bf16.mxu0 0
  %3378 = vmatpush1.bf16.msra.mxu0 %v3302
  %3379 = vmatprep.subr.bf16.mxu0 0
  %3380 = vmatpush1.bf16.msra.mxu0 %v3303
  %3381 = vmatprep.subr.bf16.mxu0 0
  %3382 = vmatpush1.bf16.msra.mxu0 %v3304
  %3383 = vmatprep.subr.bf16.mxu0 0
  %3384 = vmatpush1.bf16.msra.mxu0 %v3305
  %3385 = vmatprep.subr.bf16.mxu0 0
  %3386 = vmatpush1.bf16.msra.mxu0 %v3306
  %3387 = vmatprep.mubr.bf16.mxu0 %v3069
  %3388 = vmatmul.mubr.bf16.gmra.mrb[0].mxu0 %v3068
  %v3389 = vpop.f32.mrb[0].mxu0
  %v3390 = vadd.f32 %v3161, %v3389
  %v3391 = vpop.f32.mrb[0].mxu0
  %v3392 = vpop.f32.mrb[0].mxu0
  %v3393 = vadd.f32 %v3161, %v3392
  %v3394 = vpop.f32.mrb[0].mxu0
  %3395 = vmatprep.mubr.bf16.mxu0 %v3073
  %3396 = vmatmul.mubr.bf16.gmra.mrb[0].mxu0 %v3072
  %v3397 = vpop.f32.mrb[0].mxu0
  %v3398 = vadd.f32 %v3161, %v3397
  %v3399 = vpop.f32.mrb[0].mxu0
  %v3400 = vpop.f32.mrb[0].mxu0
  %v3401 = vadd.f32 %v3161, %v3400
  %v3402 = vpop.f32.mrb[0].mxu0
  %3403 = vmatprep.mubr.bf16.mxu0 %v3077
  %3404 = vmatmul.mubr.bf16.gmra.mrb[0].mxu0 %v3076
  %v3405 = vpop.f32.mrb[0].mxu0
  %v3406 = vadd.f32 %v3161, %v3405
  %v3407 = vpop.f32.mrb[0].mxu0
  %v3408 = vpop.f32.mrb[0].mxu0
  %v3409 = vadd.f32 %v3161, %v3408
  %v3410 = vpop.f32.mrb[0].mxu0
  %3411 = vmatprep.mubr.bf16.mxu0 %v3081
  %3412 = vmatmul.mubr.bf16.gmra.mrb[0].mxu0 %v3080
  %v3413 = vpop.f32.mrb[0].mxu0
  %v3414 = vadd.f32 %v3161, %v3413
  %v3415 = vpop.f32.mrb[0].mxu0
  %v3416 = vpop.f32.mrb[0].mxu0
  %v3417 = vadd.f32 %v3161, %v3416
  %v3418 = vpop.f32.mrb[0].mxu0
  %3419 = vmatprep.mubr.bf16.mxu0 %v3085
  %3420 = vmatmul.mubr.bf16.gmra.mrb[0].mxu0 %v3084
  %v3421 = vpop.f32.mrb[0].mxu0
  %v3422 = vadd.f32 %v3161, %v3421
  %v3423 = vpop.f32.mrb[0].mxu0
  %v3424 = vpop.f32.mrb[0].mxu0
  %v3425 = vadd.f32 %v3161, %v3424
  %v3426 = vpop.f32.mrb[0].mxu0
  %3427 = vmatprep.mubr.bf16.mxu0 %v3089
  %3428 = vmatmul.mubr.bf16.gmra.mrb[0].mxu0 %v3088
  %v3429 = vpop.f32.mrb[0].mxu0
  %v3430 = vadd.f32 %v3161, %v3429
  %v3431 = vpop.f32.mrb[0].mxu0
  %v3432 = vpop.f32.mrb[0].mxu0
  %v3433 = vadd.f32 %v3161, %v3432
  %v3434 = vpop.f32.mrb[0].mxu0
  %3435 = vdwg.mxu0
  %3436 = vmatprep.subr.bf16.mxu0 0
  %3437 = vmatpush1.bf16.msra.mxu0 %v3307
  %3438 = vmatprep.subr.bf16.mxu0 0
  %3439 = vmatpush1.bf16.msra.mxu0 %v3308
  %3440 = vmatprep.subr.bf16.mxu0 0
  %3441 = vmatpush1.bf16.msra.mxu0 %v3309
  %3442 = vmatprep.subr.bf16.mxu0 0
  %3443 = vmatpush1.bf16.msra.mxu0 %v3310
  %3444 = vmatprep.subr.bf16.mxu0 0
  %3445 = vmatpush1.bf16.msra.mxu0 %v3311
  %3446 = vmatprep.subr.bf16.mxu0 0
  %3447 = vmatpush1.bf16.msra.mxu0 %v3312
  %3448 = vmatprep.subr.bf16.mxu0 0
  %3449 = vmatpush1.bf16.msra.mxu0 %v3313
  %3450 = vmatprep.subr.bf16.mxu0 0
  %3451 = vmatpush1.bf16.msra.mxu0 %v3314
  %3452 = vmatprep.subr.bf16.mxu0 0
  %3453 = vmatpush1.bf16.msra.mxu0 %v3315
  %3454 = vmatprep.subr.bf16.mxu0 0
  %3455 = vmatpush1.bf16.msra.mxu0 %v3316
  %3456 = vmatprep.subr.bf16.mxu0 0
  %3457 = vmatpush1.bf16.msra.mxu0 %v3317
  %3458 = vmatprep.subr.bf16.mxu0 0
  %3459 = vmatpush1.bf16.msra.mxu0 %v3318
  %3460 = vmatprep.subr.bf16.mxu0 0
  %3461 = vmatpush1.bf16.msra.mxu0 %v3319
  %3462 = vmatprep.subr.bf16.mxu0 0
  %3463 = vmatpush1.bf16.msra.mxu0 %v3320
  %3464 = vmatprep.subr.bf16.mxu0 0
  %3465 = vmatpush1.bf16.msra.mxu0 %v3321
  %3466 = vmatprep.subr.bf16.mxu0 0
  %3467 = vmatpush1.bf16.msra.mxu0 %v3322
  %3468 = vmatprep.mubr.bf16.mxu0 %v3071
  %3469 = vmatmul.mubr.bf16.gmra.mrb[0].mxu0 %v3070
  %v3470 = vpop.f32.mrb[0].mxu0
  %v3471 = vadd.f32 %v3390, %v3470
  %v3472 = vpop.f32.mrb[0].mxu0
  %v3473 = vpop.f32.mrb[0].mxu0
  %v3474 = vadd.f32 %v3393, %v3473
  %v3475 = vpop.f32.mrb[0].mxu0
  %3476 = vmatprep.mubr.bf16.mxu0 %v3075
  %3477 = vmatmul.mubr.bf16.gmra.mrb[0].mxu0 %v3074
  %v3478 = vpop.f32.mrb[0].mxu0
  %v3479 = vadd.f32 %v3398, %v3478
  %v3480 = vpop.f32.mrb[0].mxu0
  %v3481 = vpop.f32.mrb[0].mxu0
  %v3482 = vadd.f32 %v3401, %v3481
  %v3483 = vpop.f32.mrb[0].mxu0
  %3484 = vmatprep.mubr.bf16.mxu0 %v3079
  %3485 = vmatmul.mubr.bf16.gmra.mrb[0].mxu0 %v3078
  %v3486 = vpop.f32.mrb[0].mxu0
  %v3487 = vadd.f32 %v3406, %v3486
  %v3488 = vpop.f32.mrb[0].mxu0
  %v3489 = vpop.f32.mrb[0].mxu0
  %v3490 = vadd.f32 %v3409, %v3489
  %v3491 = vpop.f32.mrb[0].mxu0
  %3492 = vmatprep.mubr.bf16.mxu0 %v3083
  %3493 = vmatmul.mubr.bf16.gmra.mrb[0].mxu0 %v3082
  %v3494 = vpop.f32.mrb[0].mxu0
  %v3495 = vadd.f32 %v3414, %v3494
  %v3496 = vpop.f32.mrb[0].mxu0
  %v3497 = vpop.f32.mrb[0].mxu0
  %v3498 = vadd.f32 %v3417, %v3497
  %v3499 = vpop.f32.mrb[0].mxu0
  %3500 = vmatprep.mubr.bf16.mxu0 %v3087
  %3501 = vmatmul.mubr.bf16.gmra.mrb[0].mxu0 %v3086
  %v3502 = vpop.f32.mrb[0].mxu0
  %v3503 = vadd.f32 %v3422, %v3502
  %v3504 = vpop.f32.mrb[0].mxu0
  %v3505 = vpop.f32.mrb[0].mxu0
  %v3506 = vadd.f32 %v3425, %v3505
  %v3507 = vpop.f32.mrb[0].mxu0
  %3508 = vmatprep.mubr.bf16.mxu0 %v3091
  %3509 = vmatmul.mubr.bf16.gmra.mrb[0].mxu0 %v3090
  %v3510 = vpop.f32.mrb[0].mxu0
  %v3511 = vadd.f32 %v3430, %v3510
  %v3512 = vpop.f32.mrb[0].mxu0
  %v3513 = vpop.f32.mrb[0].mxu0
  %v3514 = vadd.f32 %v3433, %v3513
  %v3515 = vpop.f32.mrb[0].mxu0
  %3516 = vdwg.mxu0
  %v3517 = vmax.f32 %v3471, 0.0
  %v3518 = vmax.f32 %v3474, 0.0
  %v3519 = vmax.f32 %v3479, 0.0
  %v3520 = vmax.f32 %v3482, 0.0
  %v3521 = vmax.f32 %v3487, 0.0
  %v3522 = vmax.f32 %v3490, 0.0
  %v3523 = vmax.f32 %v3495, 0.0
  %v3524 = vmax.f32 %v3498, 0.0
  %v3525 = vmax.f32 %v3503, 0.0
  %v3526 = vmax.f32 %v3506, 0.0
  %v3527 = vmax.f32 %v3511, 0.0
  %v3528 = vmax.f32 %v3514, 0.0
  %v3529 = vpack.c.bf16 %v3518, %v3517
  %v3530 = vpack.c.bf16 %v3520, %v3519
  %v3531 = vpack.c.bf16 %v3522, %v3521
  %v3532 = vpack.c.bf16 %v3524, %v3523
  %v3533 = vpack.c.bf16 %v3526, %v3525
  %v3534 = vpack.c.bf16 %v3528, %v3527
  %vm3535 = vcmask 523264
  %3536 = vst.msk [vmem:[#allocation4] sm:$0xff] %vm3535, %v3529
  %3537 = vst.msk [vmem:[#allocation4 + $0x8] sm:$0xff] %vm3535, %v3530
  %3538 = vst.msk [vmem:[#allocation4 + $0x10] sm:$0xff] %vm3535, %v3531
  %3539 = vst.msk [vmem:[#allocation4 + $0x18] sm:$0xff] %vm3535, %v3532
  %3540 = vst.msk [vmem:[#allocation4 + $0x20] sm:$0xff] %vm3535, %v3533
  %3541 = vst.msk [vmem:[#allocation4 + $0x28] sm:$0xff] %vm3535, %v3534
  %v3542 = vld [vmem:[%s13] sm:$0xf]
  %v3543 = vld [vmem:[%s13 + $0x4] sm:$0xf]
  %v3544 = vld [vmem:[%s13 + $0x8] sm:$0xf]
  %v3545 = vld [vmem:[%s13 + $0xc] sm:$0xf]
  %v3546 = vld [vmem:[%s13 + $0x10] sm:$0xf]
  %v3547 = vld [vmem:[%s13 + $0x14] sm:$0xf]
  %v3548 = vld [vmem:[%s13 + $0x18] sm:$0xf]
  %v3549 = vld [vmem:[%s13 + $0x1c] sm:$0xf]
  %v3550 = vld [vmem:[%s13 + $0x20] sm:$0xf]
  %v3551 = vld [vmem:[%s13 + $0x24] sm:$0xf]
  %v3552 = vld [vmem:[%s13 + $0x28] sm:$0xf]
  %v3553 = vld [vmem:[%s13 + $0x2c] sm:$0xf]
  %v3554 = vld [vmem:[%s13 + $0x30] sm:$0xf]
  %v3555 = vld [vmem:[%s13 + $0x34] sm:$0xf]
  %v3556 = vld [vmem:[%s13 + $0x38] sm:$0xf]
  %v3557 = vld [vmem:[%s13 + $0x3c] sm:$0xf]
  %v3558 = vld [vmem:[%s13 + $0x40] sm:$0xf]
  %v3559 = vld [vmem:[%s13 + $0x44] sm:$0xf]
  %v3560 = vld [vmem:[#allocation4] sm:$0xff]
  %v3561 = vld [vmem:[#allocation4 + $0x8] sm:$0xff]
  %v3562 = vld [vmem:[#allocation4 + $0x10] sm:$0xff]
  %v3581 = vunpack.c.l.b16 %v3542
  %v3582 = vunpack.c.l.b16 %v3543
  %v3583 = vunpack.c.l.b16 %v3544
  %v3584 = vunpack.c.l.b16 %v3545
  %v3585 = vunpack.c.l.b16 %v3546
  %v3586 = vunpack.c.l.b16 %v3547
  %v3587 = vunpack.c.l.b16 %v3548
  %v3588 = vunpack.c.l.b16 %v3549
  %v3589 = vunpack.c.l.b16 %v3550
  %v3590 = vunpack.c.l.b16 %v3551
  %v3591 = vunpack.c.l.b16 %v3552
  %v3592 = vunpack.c.l.b16 %v3553
  %v3593 = vunpack.c.l.b16 %v3554
  %v3594 = vunpack.c.l.b16 %v3555
  %v3595 = vunpack.c.l.b16 %v3556
  %v3596 = vunpack.c.l.b16 %v3557
  %v3597 = vunpack.c.l.b16 %v3558
  %v3598 = vunpack.c.l.b16 %v3559
  %v3599 = vpack.c.b16 %v3582, %v3581
  %v3600 = vpack.c.b16 %v3584, %v3583
  %v3601 = vpack.c.b16 %v3586, %v3585
  %v3602 = vpack.c.b16 %v3588, %v3587
  %v3603 = vpack.c.b16 %v3590, %v3589
  %v3604 = vpack.c.b16 %v3592, %v3591
  %v3605 = vpack.c.b16 %v3594, %v3593
  %v3606 = vpack.c.b16 %v3596, %v3595
  %v3607 = vpack.c.b16 %v3598, %v3597
  %vm3608 = vcmask 392192
  %v3610 = vsel %vm3608, %v3599, 0
  %v3613 = vsel %vm3608, %v3600, 0
  %v3616 = vsel %vm3608, %v3601, 0
  %v3619 = vsel %vm3608, %v3602, 0
  %v3622 = vsel %vm3608, %v3603, 0
  %v3625 = vsel %vm3608, %v3604, 0
  %v3628 = vsel %vm3608, %v3605, 0
  %v3631 = vsel %vm3608, %v3606, 0
  %v3634 = vsel %vm3608, %v3607, 0
  %3636 = vmatprep.subr.bf16.mxu0 0
  %3637 = vmatpush1.bf16.msra.mxu0 %v3560
  %3638 = vmatprep.subr.bf16.mxu0 0
  %3639 = vmatpush1.bf16.msra.mxu0 %v3561
  %3640 = vmatprep.subr.bf16.mxu0 0
  %3641 = vmatpush1.bf16.msra.mxu0 %v3562
  %3642 = vmatprep.subr.bf16.mxu0 0
  %3643 = vmatpush1.bf16.msra.mxu0 0
  %3644 = vmatprep.subr.bf16.mxu0 0
  %3645 = vmatpush1.bf16.msra.mxu0 0
  %3646 = vmatprep.subr.bf16.mxu0 0
  %3647 = vmatpush1.bf16.msra.mxu0 0
  %3648 = vmatprep.subr.bf16.mxu0 0
  %3649 = vmatpush1.bf16.msra.mxu0 0
  %3650 = vmatprep.subr.bf16.mxu0 0
  %3651 = vmatpush1.bf16.msra.mxu0 0
  %3652 = vmatprep.subr.bf16.mxu0 0
  %3653 = vmatpush1.bf16.msra.mxu0 0
  %3654 = vmatprep.subr.bf16.mxu0 0
  %3655 = vmatpush1.bf16.msra.mxu0 0
  %3656 = vmatprep.subr.bf16.mxu0 0
  %3657 = vmatpush1.bf16.msra.mxu0 0
  %3658 = vmatprep.subr.bf16.mxu0 0
  %3659 = vmatpush1.bf16.msra.mxu0 0
  %3660 = vmatprep.subr.bf16.mxu0 0
  %3661 = vmatpush1.bf16.msra.mxu0 0
  %3662 = vmatprep.subr.bf16.mxu0 0
  %3663 = vmatpush1.bf16.msra.mxu0 0
  %3664 = vmatprep.subr.bf16.mxu0 0
  %3665 = vmatpush1.bf16.msra.mxu0 0
  %3666 = vmatprep.subr.bf16.mxu0 0
  %3667 = vmatpush1.bf16.msra.mxu0 0
  %3668 = vmatprep.mubr.bf16.mxu0 0
  %3669 = vmatmul.mubr.bf16.gmra.mrb[0].mxu0 %v3610
  %v3670 = vpop.f32.mrb[0].mxu0
  %v3671 = vadd.f32 0.0, %v3670
  %v3672 = vpop.f32.mrb[0].mxu0
  %v3673 = vpop.f32.mrb[0].mxu0
  %v3674 = vadd.f32 0.0, %v3673
  %v3675 = vpop.f32.mrb[0].mxu0
  %3676 = vmatprep.mubr.bf16.mxu0 0
  %3677 = vmatmul.mubr.bf16.gmra.mrb[0].mxu0 %v3613
  %v3678 = vpop.f32.mrb[0].mxu0
  %v3679 = vadd.f32 0.0, %v3678
  %v3680 = vpop.f32.mrb[0].mxu0
  %v3681 = vpop.f32.mrb[0].mxu0
  %v3682 = vadd.f32 0.0, %v3681
  %v3683 = vpop.f32.mrb[0].mxu0
  %3684 = vmatprep.mubr.bf16.mxu0 0
  %3685 = vmatmul.mubr.bf16.gmra.mrb[0].mxu0 %v3616
  %v3686 = vpop.f32.mrb[0].mxu0
  %v3687 = vadd.f32 0.0, %v3686
  %v3688 = vpop.f32.mrb[0].mxu0
  %v3689 = vpop.f32.mrb[0].mxu0
  %v3690 = vadd.f32 0.0, %v3689
  %v3691 = vpop.f32.mrb[0].mxu0
  %3692 = vmatprep.mubr.bf16.mxu0 0
  %3693 = vmatmul.mubr.bf16.gmra.mrb[0].mxu0 %v3619
  %v3694 = vpop.f32.mrb[0].mxu0
  %v3695 = vadd.f32 0.0, %v3694
  %v3696 = vpop.f32.mrb[0].mxu0
  %v3697 = vpop.f32.mrb[0].mxu0
  %v3698 = vadd.f32 0.0, %v3697
  %v3699 = vpop.f32.mrb[0].mxu0
  %3700 = vmatprep.mubr.bf16.mxu0 0
  %3701 = vmatmul.mubr.bf16.gmra.mrb[0].mxu0 %v3622
  %v3702 = vpop.f32.mrb[0].mxu0
  %v3703 = vadd.f32 0.0, %v3702
  %v3704 = vpop.f32.mrb[0].mxu0
  %v3705 = vpop.f32.mrb[0].mxu0
  %v3706 = vadd.f32 0.0, %v3705
  %v3707 = vpop.f32.mrb[0].mxu0
  %3708 = vmatprep.mubr.bf16.mxu0 0
  %3709 = vmatmul.mubr.bf16.gmra.mrb[0].mxu0 %v3625
  %v3710 = vpop.f32.mrb[0].mxu0
  %v3711 = vadd.f32 0.0, %v3710
  %v3712 = vpop.f32.mrb[0].mxu0
  %v3713 = vpop.f32.mrb[0].mxu0
  %v3714 = vadd.f32 0.0, %v3713
  %v3715 = vpop.f32.mrb[0].mxu0
  %3716 = vmatprep.mubr.bf16.mxu0 0
  %3717 = vmatmul.mubr.bf16.gmra.mrb[0].mxu0 %v3628
  %v3718 = vpop.f32.mrb[0].mxu0
  %v3719 = vadd.f32 0.0, %v3718
  %v3720 = vpop.f32.mrb[0].mxu0
  %v3721 = vpop.f32.mrb[0].mxu0
  %v3722 = vadd.f32 0.0, %v3721
  %v3723 = vpop.f32.mrb[0].mxu0
  %3724 = vmatprep.mubr.bf16.mxu0 0
  %3725 = vmatmul.mubr.bf16.gmra.mrb[0].mxu0 %v3631
  %v3726 = vpop.f32.mrb[0].mxu0
  %v3727 = vadd.f32 0.0, %v3726
  %v3728 = vpop.f32.mrb[0].mxu0
  %v3729 = vpop.f32.mrb[0].mxu0
  %v3730 = vadd.f32 0.0, %v3729
  %v3731 = vpop.f32.mrb[0].mxu0
  %3732 = vmatprep.mubr.bf16.mxu0 0
  %3733 = vmatmul.mubr.bf16.gmra.mrb[0].mxu0 %v3634
  %v3734 = vpop.f32.mrb[0].mxu0
  %v3735 = vadd.f32 0.0, %v3734
  %v3736 = vpop.f32.mrb[0].mxu0
  %v3737 = vpop.f32.mrb[0].mxu0
  %v3738 = vadd.f32 0.0, %v3737
  %v3739 = vpop.f32.mrb[0].mxu0
  %3740 = vdwg.mxu0
  %v3741 = vpack.c.bf16 %v3674, %v3671
  %v3742 = vpack.c.bf16 %v3682, %v3679
  %v3743 = vpack.c.bf16 %v3690, %v3687
  %v3744 = vpack.c.bf16 %v3698, %v3695
  %v3745 = vpack.c.bf16 %v3706, %v3703
  %v3746 = vpack.c.bf16 %v3714, %v3711
  %v3747 = vpack.c.bf16 %v3722, %v3719
  %v3748 = vpack.c.bf16 %v3730, %v3727
  %v3749 = vpack.c.bf16 %v3738, %v3735
  %3750 = vst.msk [vmem:[#allocation5] sm:$0xff] %vm3535, %v3741
  %3752 = vrot.lane.b32.xlu0 %v3742, 64
  %v3753 = vpop.permute.xlu0 %3752
  %vm3755 = vcmask 1048064
  %3756 = vst.msk [vmem:[#allocation5] sm:$0xff] %vm3755, %v3753
  %3757 = vst.msk [vmem:[#allocation5 + $0x8] sm:$0xff] %vm3535, %v3743
  %3759 = vrot.lane.b32.xlu0 %v3744, 64
  %v3760 = vpop.permute.xlu0 %3759
  %3762 = vst.msk [vmem:[#allocation5 + $0x8] sm:$0xff] %vm3755, %v3760
  %3763 = vst.msk [vmem:[#allocation5 + $0x10] sm:$0xff] %vm3535, %v3745
  %3765 = vrot.lane.b32.xlu0 %v3746, 64
  %v3766 = vpop.permute.xlu0 %3765
  %3768 = vst.msk [vmem:[#allocation5 + $0x10] sm:$0xff] %vm3755, %v3766
  %3769 = vst.msk [vmem:[#allocation5 + $0x18] sm:$0xff] %vm3535, %v3747
  %3771 = vrot.lane.b32.xlu0 %v3748, 64
  %v3772 = vpop.permute.xlu0 %3771
  %3774 = vst.msk [vmem:[#allocation5 + $0x18] sm:$0xff] %vm3755, %v3772
  %3775 = vst.msk [vmem:[#allocation5 + $0x20] sm:$0xff] %vm3535, %v3749
  %v3776 = vld [vmem:[#allocation4 + $0x18] sm:$0xff]
  %v3777 = vld [vmem:[#allocation4 + $0x20] sm:$0xff]
  %v3778 = vld [vmem:[#allocation4 + $0x28] sm:$0xff]
  %3779 = vmatprep.subr.bf16.mxu0 0
  %3780 = vmatpush1.bf16.msra.mxu0 %v3776
  %3781 = vmatprep.subr.bf16.mxu0 0
  %3782 = vmatpush1.bf16.msra.mxu0 %v3777
  %3783 = vmatprep.subr.bf16.mxu0 0
  %3784 = vmatpush1.bf16.msra.mxu0 %v3778
  %3785 = vmatprep.subr.bf16.mxu0 0
  %3786 = vmatpush1.bf16.msra.mxu0 0
  %3787 = vmatprep.subr.bf16.mxu0 0
  %3788 = vmatpush1.bf16.msra.mxu0 0
  %3789 = vmatprep.subr.bf16.mxu0 0
  %3790 = vmatpush1.bf16.msra.mxu0 0
  %3791 = vmatprep.subr.bf16.mxu0 0
  %3792 = vmatpush1.bf16.msra.mxu0 0
  %3793 = vmatprep.subr.bf16.mxu0 0
  %3794 = vmatpush1.bf16.msra.mxu0 0
  %3795 = vmatprep.subr.bf16.mxu0 0
  %3796 = vmatpush1.bf16.msra.mxu0 0
  %3797 = vmatprep.subr.bf16.mxu0 0
  %3798 = vmatpush1.bf16.msra.mxu0 0
  %3799 = vmatprep.subr.bf16.mxu0 0
  %3800 = vmatpush1.bf16.msra.mxu0 0
  %3801 = vmatprep.subr.bf16.mxu0 0
  %3802 = vmatpush1.bf16.msra.mxu0 0
  %3803 = vmatprep.subr.bf16.mxu0 0
  %3804 = vmatpush1.bf16.msra.mxu0 0
  %3805 = vmatprep.subr.bf16.mxu0 0
  %3806 = vmatpush1.bf16.msra.mxu0 0
  %3807 = vmatprep.subr.bf16.mxu0 0
  %3808 = vmatpush1.bf16.msra.mxu0 0
  %3809 = vmatprep.subr.bf16.mxu0 0
  %3810 = vmatpush1.bf16.msra.mxu0 0
  %3811 = vmatprep.mubr.bf16.mxu0 0
  %3812 = vmatmul.mubr.bf16.gmra.mrb[0].mxu0 %v3610
  %v3813 = vpop.f32.mrb[0].mxu0
  %v3814 = vadd.f32 0.0, %v3813
  %v3815 = vpop.f32.mrb[0].mxu0
  %v3816 = vpop.f32.mrb[0].mxu0
  %v3817 = vadd.f32 0.0, %v3816
  %v3818 = vpop.f32.mrb[0].mxu0
  %3819 = vmatprep.mubr.bf16.mxu0 0
  %3820 = vmatmul.mubr.bf16.gmra.mrb[0].mxu0 %v3613
  %v3821 = vpop.f32.mrb[0].mxu0
  %v3822 = vadd.f32 0.0, %v3821
  %v3823 = vpop.f32.mrb[0].mxu0
  %v3824 = vpop.f32.mrb[0].mxu0
  %v3825 = vadd.f32 0.0, %v3824
  %v3826 = vpop.f32.mrb[0].mxu0
  %3827 = vmatprep.mubr.bf16.mxu0 0
  %3828 = vmatmul.mubr.bf16.gmra.mrb[0].mxu0 %v3616
  %v3829 = vpop.f32.mrb[0].mxu0
  %v3830 = vadd.f32 0.0, %v3829
  %v3831 = vpop.f32.mrb[0].mxu0
  %v3832 = vpop.f32.mrb[0].mxu0
  %v3833 = vadd.f32 0.0, %v3832
  %v3834 = vpop.f32.mrb[0].mxu0
  %3835 = vmatprep.mubr.bf16.mxu0 0
  %3836 = vmatmul.mubr.bf16.gmra.mrb[0].mxu0 %v3619
  %v3837 = vpop.f32.mrb[0].mxu0
  %v3838 = vadd.f32 0.0, %v3837
  %v3839 = vpop.f32.mrb[0].mxu0
  %v3840 = vpop.f32.mrb[0].mxu0
  %v3841 = vadd.f32 0.0, %v3840
  %v3842 = vpop.f32.mrb[0].mxu0
  %3843 = vmatprep.mubr.bf16.mxu0 0
  %3844 = vmatmul.mubr.bf16.gmra.mrb[0].mxu0 %v3622
  %v3845 = vpop.f32.mrb[0].mxu0
  %v3846 = vadd.f32 0.0, %v3845
  %v3847 = vpop.f32.mrb[0].mxu0
  %v3848 = vpop.f32.mrb[0].mxu0
  %v3849 = vadd.f32 0.0, %v3848
  %v3850 = vpop.f32.mrb[0].mxu0
  %3851 = vmatprep.mubr.bf16.mxu0 0
  %3852 = vmatmul.mubr.bf16.gmra.mrb[0].mxu0 %v3625
  %v3853 = vpop.f32.mrb[0].mxu0
  %v3854 = vadd.f32 0.0, %v3853
  %v3855 = vpop.f32.mrb[0].mxu0
  %v3856 = vpop.f32.mrb[0].mxu0
  %v3857 = vadd.f32 0.0, %v3856
  %v3858 = vpop.f32.mrb[0].mxu0
  %3859 = vmatprep.mubr.bf16.mxu0 0
  %3860 = vmatmul.mubr.bf16.gmra.mrb[0].mxu0 %v3628
  %v3861 = vpop.f32.mrb[0].mxu0
  %v3862 = vadd.f32 0.0, %v3861
  %v3863 = vpop.f32.mrb[0].mxu0
  %v3864 = vpop.f32.mrb[0].mxu0
  %v3865 = vadd.f32 0.0, %v3864
  %v3866 = vpop.f32.mrb[0].mxu0
  %3867 = vmatprep.mubr.bf16.mxu0 0
  %3868 = vmatmul.mubr.bf16.gmra.mrb[0].mxu0 %v3631
  %v3869 = vpop.f32.mrb[0].mxu0
  %v3870 = vadd.f32 0.0, %v3869
  %v3871 = vpop.f32.mrb[0].mxu0
  %v3872 = vpop.f32.mrb[0].mxu0
  %v3873 = vadd.f32 0.0, %v3872
  %v3874 = vpop.f32.mrb[0].mxu0
  %3875 = vmatprep.mubr.bf16.mxu0 0
  %3876 = vmatmul.mubr.bf16.gmra.mrb[0].mxu0 %v3634
  %v3877 = vpop.f32.mrb[0].mxu0
  %v3878 = vadd.f32 0.0, %v3877
  %v3879 = vpop.f32.mrb[0].mxu0
  %v3880 = vpop.f32.mrb[0].mxu0
  %v3881 = vadd.f32 0.0, %v3880
  %v3882 = vpop.f32.mrb[0].mxu0
  %3883 = vdwg.mxu0
  %v3884 = vpack.c.bf16 %v3817, %v3814
  %v3885 = vpack.c.bf16 %v3825, %v3822
  %v3886 = vpack.c.bf16 %v3833, %v3830
  %v3887 = vpack.c.bf16 %v3841, %v3838
  %v3888 = vpack.c.bf16 %v3849, %v3846
  %v3889 = vpack.c.bf16 %v3857, %v3854
  %v3890 = vpack.c.bf16 %v3865, %v3862
  %v3891 = vpack.c.bf16 %v3873, %v3870
  %v3892 = vpack.c.bf16 %v3881, %v3878
  %3893 = vst.msk [vmem:[#allocation5 + $0x28] sm:$0xff] %vm3535, %v3884
  %3895 = vrot.lane.b32.xlu0 %v3885, 64
  %v3896 = vpop.permute.xlu0 %3895
  %3898 = vst.msk [vmem:[#allocation5 + $0x28] sm:$0xff] %vm3755, %v3896
  %3899 = vst.msk [vmem:[#allocation5 + $0x30] sm:$0xff] %vm3535, %v3886
  %3901 = vrot.lane.b32.xlu0 %v3887, 64
  %v3902 = vpop.permute.xlu0 %3901
  %3904 = vst.msk [vmem:[#allocation5 + $0x30] sm:$0xff] %vm3755, %v3902
  %3905 = vst.msk [vmem:[#allocation5 + $0x38] sm:$0xff] %vm3535, %v3888
  %3907 = vrot.lane.b32.xlu0 %v3889, 64
  %v3908 = vpop.permute.xlu0 %3907
  %3910 = vst.msk [vmem:[#allocation5 + $0x38] sm:$0xff] %vm3755, %v3908
  %3911 = vst.msk [vmem:[#allocation5 + $0x40] sm:$0xff] %vm3535, %v3890
  %3913 = vrot.lane.b32.xlu0 %v3891, 64
  %v3914 = vpop.permute.xlu0 %3913
  %3916 = vst.msk [vmem:[#allocation5 + $0x40] sm:$0xff] %vm3755, %v3914
  %3917 = vst.msk [vmem:[#allocation5 + $0x48] sm:$0xff] %vm3535, %v3892
  %v3918 = vld [vmem:[#allocation5] sm:$0xff]
  %v3919 = vld [vmem:[#allocation5 + $0x8] sm:$0xff]
  %v3920 = vld [vmem:[#allocation5 + $0x10] sm:$0xff]
  %v3921 = vld [vmem:[#allocation5 + $0x18] sm:$0xff]
  %v3922 = vld [vmem:[#allocation5 + $0x20] sm:$0xff]
  %v3923 = vld [vmem:[#allocation5 + $0x28] sm:$0xff]
  %v3924 = vld [vmem:[#allocation5 + $0x30] sm:$0xff]
  %v3925 = vld [vmem:[#allocation5 + $0x38] sm:$0xff]
  %v3926 = vld [vmem:[#allocation5 + $0x40] sm:$0xff]
  %v3927 = vld [vmem:[#allocation5 + $0x48] sm:$0xff]
  %v3928 = vld [vmem:[%s15] sm:$0xf]
  %v3929 = vld [vmem:[%s15 + $0x4] sm:$0xf]
  %v3930 = vld [vmem:[%s15 + $0x8] sm:$0xf]
  %v3931 = vld [vmem:[%s15 + $0xc] sm:$0xf]
  %v3932 = vld [vmem:[%s15 + $0x10] sm:$0xf]
  %v3933 = vld [vmem:[%s15 + $0x14] sm:$0xf]
  %v3934 = vld [vmem:[%s15 + $0x18] sm:$0xf]
  %v3935 = vld [vmem:[%s15 + $0x1c] sm:$0xf]
  %v3936 = vld [vmem:[%s15 + $0x20] sm:$0xf]
  %v3937 = vld [vmem:[%s15 + $0x24] sm:$0xf]
  %v3938 = vld [vmem:[%s15 + $0x28] sm:$0xf]
  %v3939 = vld [vmem:[%s15 + $0x2c] sm:$0xf]
  %v3940 = vld [vmem:[%s15 + $0x30] sm:$0xf]
  %v3941 = vld [vmem:[%s15 + $0x34] sm:$0xf]
  %v3942 = vld [vmem:[%s15 + $0x38] sm:$0xf]
  %v3943 = vld [vmem:[%s15 + $0x3c] sm:$0xf]
  %v3944 = vld [vmem:[%s15 + $0x40] sm:$0xf]
  %v3945 = vld [vmem:[%s15 + $0x44] sm:$0xf]
  %v3946 = vld [vmem:[%s15 + $0x48] sm:$0xf]
  %v3947 = vld [vmem:[%s15 + $0x4c] sm:$0xf]
  %v3948 = vld [vmem:[%s15 + $0x50] sm:$0xf]
  %v3949 = vld [vmem:[%s15 + $0x54] sm:$0xf]
  %v3950 = vld [vmem:[%s15 + $0x58] sm:$0xf]
  %v3951 = vld [vmem:[%s15 + $0x5c] sm:$0xf]
  %v3952 = vld [vmem:[%s15 + $0x60] sm:$0xf]
  %v3953 = vld [vmem:[%s15 + $0x64] sm:$0xf]
  %v3954 = vld [vmem:[%s15 + $0x68] sm:$0xf]
  %v3955 = vld [vmem:[%s15 + $0x6c] sm:$0xf]
  %v3956 = vld [vmem:[%s15 + $0x70] sm:$0xf]
  %v3957 = vld [vmem:[%s15 + $0x74] sm:$0xf]
  %v3958 = vld [vmem:[%s15 + $0x78] sm:$0xf]
  %v3959 = vld [vmem:[%s15 + $0x7c] sm:$0xf]
  %v3960 = vld [vmem:[%s15 + $0x80] sm:$0xf]
  %v3961 = vld [vmem:[%s15 + $0x84] sm:$0xf]
  %v3962 = vld [vmem:[%s15 + $0x88] sm:$0xf]
  %v3963 = vld [vmem:[%s15 + $0x8c] sm:$0xf]
  %v3964 = vld [vmem:[%s15 + $0x90] sm:$0xf]
  %v3965 = vld [vmem:[%s15 + $0x94] sm:$0xf]
  %v3966 = vld [vmem:[%s15 + $0x98] sm:$0xf]
  %v3967 = vld [vmem:[%s15 + $0x9c] sm:$0xf]
  %v3968 = vld [vmem:[%s15 + $0xa0] sm:$0xf]
  %v3969 = vld [vmem:[%s15 + $0xa4] sm:$0xf]
  %v3970 = vld [vmem:[%s15 + $0xa8] sm:$0xf]
  %v3971 = vld [vmem:[%s15 + $0xac] sm:$0xf]
  %v3972 = vld [vmem:[%s15 + $0xb0] sm:$0xf]
  %v3973 = vld [vmem:[%s15 + $0xb4] sm:$0xf]
  %v3974 = vld [vmem:[%s15 + $0xb8] sm:$0xf]
  %v3975 = vld [vmem:[%s15 + $0xbc] sm:$0xf]
  %v3976 = vld [vmem:[%s15 + $0xc0] sm:$0xf]
  %v3977 = vld [vmem:[%s15 + $0xc4] sm:$0xf]
  %v3978 = vld [vmem:[%s15 + $0xc8] sm:$0xf]
  %v3979 = vld [vmem:[%s15 + $0xcc] sm:$0xf]
  %v3980 = vld [vmem:[%s15 + $0xd0] sm:$0xf]
  %v3981 = vld [vmem:[%s15 + $0xd4] sm:$0xf]
  %v3982 = vld [vmem:[%s15 + $0xd8] sm:$0xf]
  %v3983 = vld [vmem:[%s15 + $0xdc] sm:$0xf]
  %v3984 = vld [vmem:[%s15 + $0xe0] sm:$0xf]
  %v3985 = vld [vmem:[%s15 + $0xe4] sm:$0xf]
  %v3986 = vld [vmem:[%s15 + $0xe8] sm:$0xf]
  %v3987 = vld [vmem:[%s15 + $0xec] sm:$0xf]
  %v3988 = vld [vmem:[%s15 + $0xf0] sm:$0xf]
  %v3989 = vld [vmem:[%s15 + $0xf4] sm:$0xf]
  %v3990 = vld [vmem:[%s15 + $0xf8] sm:$0xf]
  %v3991 = vld [vmem:[%s15 + $0xfc] sm:$0xf]
  %v3992 = vld [vmem:[%s15 + $0x100] sm:$0xf]
  %v3993 = vld [vmem:[%s15 + $0x104] sm:$0xf]
  %v3994 = vld [vmem:[%s15 + $0x108] sm:$0xf]
  %v3995 = vld [vmem:[%s15 + $0x10c] sm:$0xf]
  %v3996 = vld [vmem:[%s15 + $0x110] sm:$0xf]
  %v3997 = vld [vmem:[%s15 + $0x114] sm:$0xf]
  %v3998 = vld [vmem:[%s15 + $0x118] sm:$0xf]
  %v3999 = vld [vmem:[%s15 + $0x11c] sm:$0xf]
  %v4000 = vld [vmem:[%s17] sm:$0x1]
  %v4002 = vlaneseq
  %v4003 = vshrl.u32 %v4002, 7
  %v4004 = vsub.s32 0, %v4003
  %v4005 = vrot.slane %v4000, %v4004
  %v4079 = vunpack.c.l.b16 %v3928
  %v4080 = vunpack.c.l.b16 %v3929
  %v4081 = vunpack.c.l.b16 %v3930
  %v4082 = vunpack.c.l.b16 %v3931
  %v4083 = vunpack.c.l.b16 %v3932
  %v4084 = vunpack.c.l.b16 %v3933
  %v4085 = vunpack.c.l.b16 %v3934
  %v4086 = vunpack.c.l.b16 %v3935
  %v4087 = vunpack.c.l.b16 %v3936
  %v4088 = vunpack.c.l.b16 %v3937
  %v4089 = vunpack.c.l.b16 %v3938
  %v4090 = vunpack.c.l.b16 %v3939
  %v4091 = vunpack.c.l.b16 %v3940
  %v4092 = vunpack.c.l.b16 %v3941
  %v4093 = vunpack.c.l.b16 %v3942
  %v4094 = vunpack.c.l.b16 %v3943
  %v4095 = vunpack.c.l.b16 %v3944
  %v4096 = vunpack.c.l.b16 %v3945
  %v4097 = vunpack.c.l.b16 %v3946
  %v4098 = vunpack.c.l.b16 %v3947
  %v4099 = vunpack.c.l.b16 %v3948
  %v4100 = vunpack.c.l.b16 %v3949
  %v4101 = vunpack.c.l.b16 %v3950
  %v4102 = vunpack.c.l.b16 %v3951
  %v4103 = vunpack.c.l.b16 %v3952
  %v4104 = vunpack.c.l.b16 %v3953
  %v4105 = vunpack.c.l.b16 %v3954
  %v4106 = vunpack.c.l.b16 %v3955
  %v4107 = vunpack.c.l.b16 %v3956
  %v4108 = vunpack.c.l.b16 %v3957
  %v4109 = vunpack.c.l.b16 %v3958
  %v4110 = vunpack.c.l.b16 %v3959
  %v4111 = vunpack.c.l.b16 %v3960
  %v4112 = vunpack.c.l.b16 %v3961
  %v4113 = vunpack.c.l.b16 %v3962
  %v4114 = vunpack.c.l.b16 %v3963
  %v4115 = vunpack.c.l.b16 %v3964
  %v4116 = vunpack.c.l.b16 %v3965
  %v4117 = vunpack.c.l.b16 %v3966
  %v4118 = vunpack.c.l.b16 %v3967
  %v4119 = vunpack.c.l.b16 %v3968
  %v4120 = vunpack.c.l.b16 %v3969
  %v4121 = vunpack.c.l.b16 %v3970
  %v4122 = vunpack.c.l.b16 %v3971
  %v4123 = vunpack.c.l.b16 %v3972
  %v4124 = vunpack.c.l.b16 %v3973
  %v4125 = vunpack.c.l.b16 %v3974
  %v4126 = vunpack.c.l.b16 %v3975
  %v4127 = vunpack.c.l.b16 %v3976
  %v4128 = vunpack.c.l.b16 %v3977
  %v4129 = vunpack.c.l.b16 %v3978
  %v4130 = vunpack.c.l.b16 %v3979
  %v4131 = vunpack.c.l.b16 %v3980
  %v4132 = vunpack.c.l.b16 %v3981
  %v4133 = vunpack.c.l.b16 %v3982
  %v4134 = vunpack.c.l.b16 %v3983
  %v4135 = vunpack.c.l.b16 %v3984
  %v4136 = vunpack.c.l.b16 %v3985
  %v4137 = vunpack.c.l.b16 %v3986
  %v4138 = vunpack.c.l.b16 %v3987
  %v4139 = vunpack.c.l.b16 %v3988
  %v4140 = vunpack.c.l.b16 %v3989
  %v4141 = vunpack.c.l.b16 %v3990
  %v4142 = vunpack.c.l.b16 %v3991
  %v4143 = vunpack.c.l.b16 %v3992
  %v4144 = vunpack.c.l.b16 %v3993
  %v4145 = vunpack.c.l.b16 %v3994
  %v4146 = vunpack.c.l.b16 %v3995
  %v4147 = vunpack.c.l.b16 %v3996
  %v4148 = vunpack.c.l.b16 %v3997
  %v4149 = vunpack.c.l.b16 %v3998
  %v4150 = vunpack.c.l.b16 %v3999
  %v4151 = vpack.c.b16 %v4080, %v4079
  %v4152 = vpack.c.b16 %v4082, %v4081
  %v4153 = vpack.c.b16 %v4084, %v4083
  %v4154 = vpack.c.b16 %v4086, %v4085
  %v4155 = vpack.c.b16 %v4088, %v4087
  %v4156 = vpack.c.b16 %v4090, %v4089
  %v4157 = vpack.c.b16 %v4092, %v4091
  %v4158 = vpack.c.b16 %v4094, %v4093
  %v4159 = vpack.c.b16 %v4096, %v4095
  %v4160 = vpack.c.b16 %v4098, %v4097
  %v4161 = vpack.c.b16 %v4100, %v4099
  %v4162 = vpack.c.b16 %v4102, %v4101
  %v4163 = vpack.c.b16 %v4104, %v4103
  %v4164 = vpack.c.b16 %v4106, %v4105
  %v4165 = vpack.c.b16 %v4108, %v4107
  %v4166 = vpack.c.b16 %v4110, %v4109
  %v4167 = vpack.c.b16 %v4112, %v4111
  %v4168 = vpack.c.b16 %v4114, %v4113
  %v4169 = vpack.c.b16 %v4116, %v4115
  %v4170 = vpack.c.b16 %v4118, %v4117
  %v4171 = vpack.c.b16 %v4120, %v4119
  %v4172 = vpack.c.b16 %v4122, %v4121
  %v4173 = vpack.c.b16 %v4124, %v4123
  %v4174 = vpack.c.b16 %v4126, %v4125
  %v4175 = vpack.c.b16 %v4128, %v4127
  %v4176 = vpack.c.b16 %v4130, %v4129
  %v4177 = vpack.c.b16 %v4132, %v4131
  %v4178 = vpack.c.b16 %v4134, %v4133
  %v4179 = vpack.c.b16 %v4136, %v4135
  %v4180 = vpack.c.b16 %v4138, %v4137
  %v4181 = vpack.c.b16 %v4140, %v4139
  %v4182 = vpack.c.b16 %v4142, %v4141
  %v4183 = vpack.c.b16 %v4144, %v4143
  %v4184 = vpack.c.b16 %v4146, %v4145
  %v4185 = vpack.c.b16 %v4148, %v4147
  %v4186 = vpack.c.b16 %v4150, %v4149
  %v4224 = vsel %vm3535, %v3922, 0
  %v4227 = vsel %vm3535, %v3927, 0
  %4229 = vmatprep.subr.bf16.mxu0 0
  %4230 = vmatpush1.bf16.msra.mxu0 %v4151
  %4231 = vmatprep.subr.bf16.mxu0 0
  %4232 = vmatpush1.bf16.msra.mxu0 %v4152
  %4233 = vmatprep.subr.bf16.mxu0 0
  %4234 = vmatpush1.bf16.msra.mxu0 %v4153
  %4235 = vmatprep.subr.bf16.mxu0 0
  %4236 = vmatpush1.bf16.msra.mxu0 %v4154
  %4237 = vmatprep.subr.bf16.mxu0 0
  %4238 = vmatpush1.bf16.msra.mxu0 %v4155
  %4239 = vmatprep.subr.bf16.mxu0 0
  %4240 = vmatpush1.bf16.msra.mxu0 %v4156
  %4241 = vmatprep.subr.bf16.mxu0 0
  %4242 = vmatpush1.bf16.msra.mxu0 %v4157
  %4243 = vmatprep.subr.bf16.mxu0 0
  %4244 = vmatpush1.bf16.msra.mxu0 %v4158
  %4245 = vmatprep.subr.bf16.mxu0 0
  %4246 = vmatpush1.bf16.msra.mxu0 %v4159
  %4247 = vmatprep.subr.bf16.mxu0 0
  %4248 = vmatpush1.bf16.msra.mxu0 %v4160
  %4249 = vmatprep.subr.bf16.mxu0 0
  %4250 = vmatpush1.bf16.msra.mxu0 %v4161
  %4251 = vmatprep.subr.bf16.mxu0 0
  %4252 = vmatpush1.bf16.msra.mxu0 %v4162
  %4253 = vmatprep.subr.bf16.mxu0 0
  %4254 = vmatpush1.bf16.msra.mxu0 %v4163
  %4255 = vmatprep.subr.bf16.mxu0 0
  %4256 = vmatpush1.bf16.msra.mxu0 %v4164
  %4257 = vmatprep.subr.bf16.mxu0 0
  %4258 = vmatpush1.bf16.msra.mxu0 %v4165
  %4259 = vmatprep.subr.bf16.mxu0 0
  %4260 = vmatpush1.bf16.msra.mxu0 %v4166
  %4261 = vmatprep.mubr.bf16.mxu0 %v3919
  %4262 = vmatmul.mubr.bf16.gmra.mrb[0].mxu0 %v3918
  %v4263 = vpop.f32.mrb[0].mxu0
  %v4264 = vadd.f32 %v4005, %v4263
  %v4265 = vpop.f32.mrb[0].mxu0
  %v4266 = vpop.f32.mrb[0].mxu0
  %v4267 = vadd.f32 %v4005, %v4266
  %v4268 = vpop.f32.mrb[0].mxu0
  %4269 = vmatprep.mubr.bf16.mxu0 %v3924
  %4270 = vmatmul.mubr.bf16.gmra.mrb[0].mxu0 %v3923
  %v4271 = vpop.f32.mrb[0].mxu0
  %v4272 = vadd.f32 %v4005, %v4271
  %v4273 = vpop.f32.mrb[0].mxu0
  %v4274 = vpop.f32.mrb[0].mxu0
  %v4275 = vadd.f32 %v4005, %v4274
  %v4276 = vpop.f32.mrb[0].mxu0
  %4277 = vdwg.mxu0
  %4278 = vmatprep.subr.bf16.mxu0 0
  %4279 = vmatpush1.bf16.msra.mxu0 %v4167
  %4280 = vmatprep.subr.bf16.mxu0 0
  %4281 = vmatpush1.bf16.msra.mxu0 %v4168
  %4282 = vmatprep.subr.bf16.mxu0 0
  %4283 = vmatpush1.bf16.msra.mxu0 %v4169
  %4284 = vmatprep.subr.bf16.mxu0 0
  %4285 = vmatpush1.bf16.msra.mxu0 %v4170
  %4286 = vmatprep.subr.bf16.mxu0 0
  %4287 = vmatpush1.bf16.msra.mxu0 %v4171
  %4288 = vmatprep.subr.bf16.mxu0 0
  %4289 = vmatpush1.bf16.msra.mxu0 %v4172
  %4290 = vmatprep.subr.bf16.mxu0 0
  %4291 = vmatpush1.bf16.msra.mxu0 %v4173
  %4292 = vmatprep.subr.bf16.mxu0 0
  %4293 = vmatpush1.bf16.msra.mxu0 %v4174
  %4294 = vmatprep.subr.bf16.mxu0 0
  %4295 = vmatpush1.bf16.msra.mxu0 %v4175
  %4296 = vmatprep.subr.bf16.mxu0 0
  %4297 = vmatpush1.bf16.msra.mxu0 %v4176
  %4298 = vmatprep.subr.bf16.mxu0 0
  %4299 = vmatpush1.bf16.msra.mxu0 %v4177
  %4300 = vmatprep.subr.bf16.mxu0 0
  %4301 = vmatpush1.bf16.msra.mxu0 %v4178
  %4302 = vmatprep.subr.bf16.mxu0 0
  %4303 = vmatpush1.bf16.msra.mxu0 %v4179
  %4304 = vmatprep.subr.bf16.mxu0 0
  %4305 = vmatpush1.bf16.msra.mxu0 %v4180
  %4306 = vmatprep.subr.bf16.mxu0 0
  %4307 = vmatpush1.bf16.msra.mxu0 %v4181
  %4308 = vmatprep.subr.bf16.mxu0 0
  %4309 = vmatpush1.bf16.msra.mxu0 %v4182
  %4310 = vmatprep.mubr.bf16.mxu0 %v3921
  %4311 = vmatmul.mubr.bf16.gmra.mrb[0].mxu0 %v3920
  %v4312 = vpop.f32.mrb[0].mxu0
  %v4313 = vadd.f32 %v4264, %v4312
  %v4314 = vpop.f32.mrb[0].mxu0
  %v4315 = vpop.f32.mrb[0].mxu0
  %v4316 = vadd.f32 %v4267, %v4315
  %v4317 = vpop.f32.mrb[0].mxu0
  %4318 = vmatprep.mubr.bf16.mxu0 %v3926
  %4319 = vmatmul.mubr.bf16.gmra.mrb[0].mxu0 %v3925
  %v4320 = vpop.f32.mrb[0].mxu0
  %v4321 = vadd.f32 %v4272, %v4320
  %v4322 = vpop.f32.mrb[0].mxu0
  %v4323 = vpop.f32.mrb[0].mxu0
  %v4324 = vadd.f32 %v4275, %v4323
  %v4325 = vpop.f32.mrb[0].mxu0
  %4326 = vdwg.mxu0
  %4327 = vmatprep.subr.bf16.mxu0 0
  %4328 = vmatpush1.bf16.msra.mxu0 %v4183
  %4329 = vmatprep.subr.bf16.mxu0 0
  %4330 = vmatpush1.bf16.msra.mxu0 %v4184
  %4331 = vmatprep.subr.bf16.mxu0 0
  %4332 = vmatpush1.bf16.msra.mxu0 %v4185
  %4333 = vmatprep.subr.bf16.mxu0 0
  %4334 = vmatpush1.bf16.msra.mxu0 %v4186
  %4335 = vmatprep.subr.bf16.mxu0 0
  %4336 = vmatpush1.bf16.msra.mxu0 0
  %4337 = vmatprep.subr.bf16.mxu0 0
  %4338 = vmatpush1.bf16.msra.mxu0 0
  %4339 = vmatprep.subr.bf16.mxu0 0
  %4340 = vmatpush1.bf16.msra.mxu0 0
  %4341 = vmatprep.subr.bf16.mxu0 0
  %4342 = vmatpush1.bf16.msra.mxu0 0
  %4343 = vmatprep.subr.bf16.mxu0 0
  %4344 = vmatpush1.bf16.msra.mxu0 0
  %4345 = vmatprep.subr.bf16.mxu0 0
  %4346 = vmatpush1.bf16.msra.mxu0 0
  %4347 = vmatprep.subr.bf16.mxu0 0
  %4348 = vmatpush1.bf16.msra.mxu0 0
  %4349 = vmatprep.subr.bf16.mxu0 0
  %4350 = vmatpush1.bf16.msra.mxu0 0
  %4351 = vmatprep.subr.bf16.mxu0 0
  %4352 = vmatpush1.bf16.msra.mxu0 0
  %4353 = vmatprep.subr.bf16.mxu0 0
  %4354 = vmatpush1.bf16.msra.mxu0 0
  %4355 = vmatprep.subr.bf16.mxu0 0
  %4356 = vmatpush1.bf16.msra.mxu0 0
  %4357 = vmatprep.subr.bf16.mxu0 0
  %4358 = vmatpush1.bf16.msra.mxu0 0
  %4359 = vmatprep.mubr.bf16.mxu0 0
  %4360 = vmatmul.mubr.bf16.gmra.mrb[0].mxu0 %v4224
  %v4361 = vpop.f32.mrb[0].mxu0
  %v4362 = vadd.f32 %v4313, %v4361
  %v4363 = vpop.f32.mrb[0].mxu0
  %v4364 = vpop.f32.mrb[0].mxu0
  %v4365 = vadd.f32 %v4316, %v4364
  %v4366 = vpop.f32.mrb[0].mxu0
  %4367 = vmatprep.mubr.bf16.mxu0 0
  %4368 = vmatmul.mubr.bf16.gmra.mrb[0].mxu0 %v4227
  %v4369 = vpop.f32.mrb[0].mxu0
  %v4370 = vadd.f32 %v4321, %v4369
  %v4371 = vpop.f32.mrb[0].mxu0
  %v4372 = vpop.f32.mrb[0].mxu0
  %v4373 = vadd.f32 %v4324, %v4372
  %v4374 = vpop.f32.mrb[0].mxu0
  %4375 = vdwg.mxu0
  %v4376 = vpack.c.bf16 %v4365, %v4362
  %v4377 = vpack.c.bf16 %v4373, %v4370
  %4378 = vst.msk [vmem:[#allocation6] sm:$0xff] %vm1017, %v4376
  %4379 = vst.msk [vmem:[#allocation6 + $0x8] sm:$0xff] %vm1017, %v4377
  %v4380 = vld [vmem:[%s19] sm:$0xf]
  %v4381 = vld [vmem:[%s19 + $0x4] sm:$0xf]
  %v4382 = vld [vmem:[%s19 + $0x8] sm:$0xf]
  %v4383 = vld [vmem:[%s19 + $0xc] sm:$0xf]
  %v4384 = vld [vmem:[%s19 + $0x10] sm:$0xf]
  %v4385 = vld [vmem:[%s19 + $0x14] sm:$0xf]
  %v4386 = vld [vmem:[%s19 + $0x18] sm:$0xf]
  %v4387 = vld [vmem:[%s19 + $0x1c] sm:$0xf]
  %v4388 = vld [vmem:[%s19 + $0x20] sm:$0xf]
  %v4389 = vld [vmem:[%s19 + $0x24] sm:$0xf]
  %v4390 = vld [vmem:[%s19 + $0x28] sm:$0xf]
  %v4391 = vld [vmem:[%s19 + $0x2c] sm:$0xf]
  %v4392 = vld [vmem:[%s19 + $0x30] sm:$0xf]
  %v4393 = vld [vmem:[%s19 + $0x34] sm:$0xf]
  %v4394 = vld [vmem:[%s19 + $0x38] sm:$0xf]
  %v4395 = vld [vmem:[%s19 + $0x3c] sm:$0xf]
  %v4396 = vld [vmem:[%s19 + $0x40] sm:$0xf]
  %v4397 = vld [vmem:[%s19 + $0x44] sm:$0xf]
  %v4398 = vld [vmem:[%s19 + $0x48] sm:$0xf]
  %v4399 = vld [vmem:[%s19 + $0x4c] sm:$0xf]
  %v4400 = vld [vmem:[%s19 + $0x50] sm:$0xf]
  %v4401 = vld [vmem:[%s19 + $0x54] sm:$0xf]
  %v4402 = vld [vmem:[%s19 + $0x58] sm:$0xf]
  %v4403 = vld [vmem:[%s19 + $0x5c] sm:$0xf]
  %v4404 = vld [vmem:[%s19 + $0x60] sm:$0xf]
  %v4405 = vld [vmem:[%s19 + $0x64] sm:$0xf]
  %v4406 = vld [vmem:[%s19 + $0x68] sm:$0xf]
  %v4407 = vld [vmem:[%s19 + $0x6c] sm:$0xf]
  %v4408 = vld [vmem:[%s19 + $0x70] sm:$0xf]
  %v4409 = vld [vmem:[%s19 + $0x74] sm:$0xf]
  %v4410 = vld [vmem:[%s19 + $0x78] sm:$0xf]
  %v4411 = vld [vmem:[%s19 + $0x7c] sm:$0xf]
  %v4412 = vld [vmem:[#allocation6] sm:$0xff]
  %v4445 = vunpack.c.l.b16 %v4380
  %v4446 = vunpack.c.l.b16 %v4381
  %v4447 = vunpack.c.l.b16 %v4382
  %v4448 = vunpack.c.l.b16 %v4383
  %v4449 = vunpack.c.l.b16 %v4384
  %v4450 = vunpack.c.l.b16 %v4385
  %v4451 = vunpack.c.l.b16 %v4386
  %v4452 = vunpack.c.l.b16 %v4387
  %v4453 = vunpack.c.l.b16 %v4388
  %v4454 = vunpack.c.l.b16 %v4389
  %v4455 = vunpack.c.l.b16 %v4390
  %v4456 = vunpack.c.l.b16 %v4391
  %v4457 = vunpack.c.l.b16 %v4392
  %v4458 = vunpack.c.l.b16 %v4393
  %v4459 = vunpack.c.l.b16 %v4394
  %v4460 = vunpack.c.l.b16 %v4395
  %v4461 = vunpack.c.l.b16 %v4396
  %v4462 = vunpack.c.l.b16 %v4397
  %v4463 = vunpack.c.l.b16 %v4398
  %v4464 = vunpack.c.l.b16 %v4399
  %v4465 = vunpack.c.l.b16 %v4400
  %v4466 = vunpack.c.l.b16 %v4401
  %v4467 = vunpack.c.l.b16 %v4402
  %v4468 = vunpack.c.l.b16 %v4403
  %v4469 = vunpack.c.l.b16 %v4404
  %v4470 = vunpack.c.l.b16 %v4405
  %v4471 = vunpack.c.l.b16 %v4406
  %v4472 = vunpack.c.l.b16 %v4407
  %v4473 = vunpack.c.l.b16 %v4408
  %v4474 = vunpack.c.l.b16 %v4409
  %v4475 = vunpack.c.l.b16 %v4410
  %v4476 = vunpack.c.l.b16 %v4411
  %v4477 = vpack.c.b16 %v4446, %v4445
  %v4478 = vpack.c.b16 %v4448, %v4447
  %v4479 = vpack.c.b16 %v4450, %v4449
  %v4480 = vpack.c.b16 %v4452, %v4451
  %v4481 = vpack.c.b16 %v4454, %v4453
  %v4482 = vpack.c.b16 %v4456, %v4455
  %v4483 = vpack.c.b16 %v4458, %v4457
  %v4484 = vpack.c.b16 %v4460, %v4459
  %v4485 = vpack.c.b16 %v4462, %v4461
  %v4486 = vpack.c.b16 %v4464, %v4463
  %v4487 = vpack.c.b16 %v4466, %v4465
  %v4488 = vpack.c.b16 %v4468, %v4467
  %v4489 = vpack.c.b16 %v4470, %v4469
  %v4490 = vpack.c.b16 %v4472, %v4471
  %v4491 = vpack.c.b16 %v4474, %v4473
  %v4492 = vpack.c.b16 %v4476, %v4475
  %vm4493 = vcmask 130048
  %v4495 = vsel %vm4493, %v4477, 0
  %v4498 = vsel %vm4493, %v4478, 0
  %v4501 = vsel %vm4493, %v4479, 0
  %v4504 = vsel %vm4493, %v4480, 0
  %v4507 = vsel %vm4493, %v4481, 0
  %v4510 = vsel %vm4493, %v4482, 0
  %v4513 = vsel %vm4493, %v4483, 0
  %v4516 = vsel %vm4493, %v4484, 0
  %v4519 = vsel %vm4493, %v4485, 0
  %v4522 = vsel %vm4493, %v4486, 0
  %v4525 = vsel %vm4493, %v4487, 0
  %v4528 = vsel %vm4493, %v4488, 0
  %v4531 = vsel %vm4493, %v4489, 0
  %v4534 = vsel %vm4493, %v4490, 0
  %v4537 = vsel %vm4493, %v4491, 0
  %v4540 = vsel %vm4493, %v4492, 0
  %4542 = vmatprep.subr.bf16.mxu0 0
  %4543 = vmatpush1.bf16.msra.mxu0 %v4412
  %4544 = vmatprep.subr.bf16.mxu0 0
  %4545 = vmatpush1.bf16.msra.mxu0 0
  %4546 = vmatprep.subr.bf16.mxu0 0
  %4547 = vmatpush1.bf16.msra.mxu0 0
  %4548 = vmatprep.subr.bf16.mxu0 0
  %4549 = vmatpush1.bf16.msra.mxu0 0
  %4550 = vmatprep.subr.bf16.mxu0 0
  %4551 = vmatpush1.bf16.msra.mxu0 0
  %4552 = vmatprep.subr.bf16.mxu0 0
  %4553 = vmatpush1.bf16.msra.mxu0 0
  %4554 = vmatprep.subr.bf16.mxu0 0
  %4555 = vmatpush1.bf16.msra.mxu0 0
  %4556 = vmatprep.subr.bf16.mxu0 0
  %4557 = vmatpush1.bf16.msra.mxu0 0
  %4558 = vmatprep.subr.bf16.mxu0 0
  %4559 = vmatpush1.bf16.msra.mxu0 0
  %4560 = vmatprep.subr.bf16.mxu0 0
  %4561 = vmatpush1.bf16.msra.mxu0 0
  %4562 = vmatprep.subr.bf16.mxu0 0
  %4563 = vmatpush1.bf16.msra.mxu0 0
  %4564 = vmatprep.subr.bf16.mxu0 0
  %4565 = vmatpush1.bf16.msra.mxu0 0
  %4566 = vmatprep.subr.bf16.mxu0 0
  %4567 = vmatpush1.bf16.msra.mxu0 0
  %4568 = vmatprep.subr.bf16.mxu0 0
  %4569 = vmatpush1.bf16.msra.mxu0 0
  %4570 = vmatprep.subr.bf16.mxu0 0
  %4571 = vmatpush1.bf16.msra.mxu0 0
  %4572 = vmatprep.subr.bf16.mxu0 0
  %4573 = vmatpush1.bf16.msra.mxu0 0
  %4574 = vmatprep.mubr.bf16.mxu0 0
  %4575 = vmatmul.mubr.bf16.gmra.mrb[0].mxu0 %v4495
  %v4576 = vpop.f32.mrb[0].mxu0
  %v4577 = vadd.f32 0.0, %v4576
  %v4578 = vpop.f32.mrb[0].mxu0
  %v4579 = vpop.f32.mrb[0].mxu0
  %v4580 = vadd.f32 0.0, %v4579
  %v4581 = vpop.f32.mrb[0].mxu0
  %4582 = vmatprep.mubr.bf16.mxu0 0
  %4583 = vmatmul.mubr.bf16.gmra.mrb[0].mxu0 %v4498
  %v4584 = vpop.f32.mrb[0].mxu0
  %v4585 = vadd.f32 0.0, %v4584
  %v4586 = vpop.f32.mrb[0].mxu0
  %v4587 = vpop.f32.mrb[0].mxu0
  %v4588 = vadd.f32 0.0, %v4587
  %v4589 = vpop.f32.mrb[0].mxu0
  %4590 = vmatprep.mubr.bf16.mxu0 0
  %4591 = vmatmul.mubr.bf16.gmra.mrb[0].mxu0 %v4501
  %v4592 = vpop.f32.mrb[0].mxu0
  %v4593 = vadd.f32 0.0, %v4592
  %v4594 = vpop.f32.mrb[0].mxu0
  %v4595 = vpop.f32.mrb[0].mxu0
  %v4596 = vadd.f32 0.0, %v4595
  %v4597 = vpop.f32.mrb[0].mxu0
  %4598 = vmatprep.mubr.bf16.mxu0 0
  %4599 = vmatmul.mubr.bf16.gmra.mrb[0].mxu0 %v4504
  %v4600 = vpop.f32.mrb[0].mxu0
  %v4601 = vadd.f32 0.0, %v4600
  %v4602 = vpop.f32.mrb[0].mxu0
  %v4603 = vpop.f32.mrb[0].mxu0
  %v4604 = vadd.f32 0.0, %v4603
  %v4605 = vpop.f32.mrb[0].mxu0
  %4606 = vmatprep.mubr.bf16.mxu0 0
  %4607 = vmatmul.mubr.bf16.gmra.mrb[0].mxu0 %v4507
  %v4608 = vpop.f32.mrb[0].mxu0
  %v4609 = vadd.f32 0.0, %v4608
  %v4610 = vpop.f32.mrb[0].mxu0
  %v4611 = vpop.f32.mrb[0].mxu0
  %v4612 = vadd.f32 0.0, %v4611
  %v4613 = vpop.f32.mrb[0].mxu0
  %4614 = vmatprep.mubr.bf16.mxu0 0
  %4615 = vmatmul.mubr.bf16.gmra.mrb[0].mxu0 %v4510
  %v4616 = vpop.f32.mrb[0].mxu0
  %v4617 = vadd.f32 0.0, %v4616
  %v4618 = vpop.f32.mrb[0].mxu0
  %v4619 = vpop.f32.mrb[0].mxu0
  %v4620 = vadd.f32 0.0, %v4619
  %v4621 = vpop.f32.mrb[0].mxu0
  %4622 = vmatprep.mubr.bf16.mxu0 0
  %4623 = vmatmul.mubr.bf16.gmra.mrb[0].mxu0 %v4513
  %v4624 = vpop.f32.mrb[0].mxu0
  %v4625 = vadd.f32 0.0, %v4624
  %v4626 = vpop.f32.mrb[0].mxu0
  %v4627 = vpop.f32.mrb[0].mxu0
  %v4628 = vadd.f32 0.0, %v4627
  %v4629 = vpop.f32.mrb[0].mxu0
  %4630 = vmatprep.mubr.bf16.mxu0 0
  %4631 = vmatmul.mubr.bf16.gmra.mrb[0].mxu0 %v4516
  %v4632 = vpop.f32.mrb[0].mxu0
  %v4633 = vadd.f32 0.0, %v4632
  %v4634 = vpop.f32.mrb[0].mxu0
  %v4635 = vpop.f32.mrb[0].mxu0
  %v4636 = vadd.f32 0.0, %v4635
  %v4637 = vpop.f32.mrb[0].mxu0
  %4638 = vmatprep.mubr.bf16.mxu0 0
  %4639 = vmatmul.mubr.bf16.gmra.mrb[0].mxu0 %v4519
  %v4640 = vpop.f32.mrb[0].mxu0
  %v4641 = vadd.f32 0.0, %v4640
  %v4642 = vpop.f32.mrb[0].mxu0
  %v4643 = vpop.f32.mrb[0].mxu0
  %v4644 = vadd.f32 0.0, %v4643
  %v4645 = vpop.f32.mrb[0].mxu0
  %4646 = vmatprep.mubr.bf16.mxu0 0
  %4647 = vmatmul.mubr.bf16.gmra.mrb[0].mxu0 %v4522
  %v4648 = vpop.f32.mrb[0].mxu0
  %v4649 = vadd.f32 0.0, %v4648
  %v4650 = vpop.f32.mrb[0].mxu0
  %v4651 = vpop.f32.mrb[0].mxu0
  %v4652 = vadd.f32 0.0, %v4651
  %v4653 = vpop.f32.mrb[0].mxu0
  %4654 = vmatprep.mubr.bf16.mxu0 0
  %4655 = vmatmul.mubr.bf16.gmra.mrb[0].mxu0 %v4525
  %v4656 = vpop.f32.mrb[0].mxu0
  %v4657 = vadd.f32 0.0, %v4656
  %v4658 = vpop.f32.mrb[0].mxu0
  %v4659 = vpop.f32.mrb[0].mxu0
  %v4660 = vadd.f32 0.0, %v4659
  %v4661 = vpop.f32.mrb[0].mxu0
  %4662 = vmatprep.mubr.bf16.mxu0 0
  %4663 = vmatmul.mubr.bf16.gmra.mrb[0].mxu0 %v4528
  %v4664 = vpop.f32.mrb[0].mxu0
  %v4665 = vadd.f32 0.0, %v4664
  %v4666 = vpop.f32.mrb[0].mxu0
  %v4667 = vpop.f32.mrb[0].mxu0
  %v4668 = vadd.f32 0.0, %v4667
  %v4669 = vpop.f32.mrb[0].mxu0
  %4670 = vmatprep.mubr.bf16.mxu0 0
  %4671 = vmatmul.mubr.bf16.gmra.mrb[0].mxu0 %v4531
  %v4672 = vpop.f32.mrb[0].mxu0
  %v4673 = vadd.f32 0.0, %v4672
  %v4674 = vpop.f32.mrb[0].mxu0
  %v4675 = vpop.f32.mrb[0].mxu0
  %v4676 = vadd.f32 0.0, %v4675
  %v4677 = vpop.f32.mrb[0].mxu0
  %4678 = vmatprep.mubr.bf16.mxu0 0
  %4679 = vmatmul.mubr.bf16.gmra.mrb[0].mxu0 %v4534
  %v4680 = vpop.f32.mrb[0].mxu0
  %v4681 = vadd.f32 0.0, %v4680
  %v4682 = vpop.f32.mrb[0].mxu0
  %v4683 = vpop.f32.mrb[0].mxu0
  %v4684 = vadd.f32 0.0, %v4683
  %v4685 = vpop.f32.mrb[0].mxu0
  %4686 = vmatprep.mubr.bf16.mxu0 0
  %4687 = vmatmul.mubr.bf16.gmra.mrb[0].mxu0 %v4537
  %v4688 = vpop.f32.mrb[0].mxu0
  %v4689 = vadd.f32 0.0, %v4688
  %v4690 = vpop.f32.mrb[0].mxu0
  %v4691 = vpop.f32.mrb[0].mxu0
  %v4692 = vadd.f32 0.0, %v4691
  %v4693 = vpop.f32.mrb[0].mxu0
  %4694 = vmatprep.mubr.bf16.mxu0 0
  %4695 = vmatmul.mubr.bf16.gmra.mrb[0].mxu0 %v4540
  %v4696 = vpop.f32.mrb[0].mxu0
  %v4697 = vadd.f32 0.0, %v4696
  %v4698 = vpop.f32.mrb[0].mxu0
  %v4699 = vpop.f32.mrb[0].mxu0
  %v4700 = vadd.f32 0.0, %v4699
  %v4701 = vpop.f32.mrb[0].mxu0
  %4702 = vdwg.mxu0
  %v4703 = vpack.c.bf16 %v4580, %v4577
  %v4704 = vpack.c.bf16 %v4588, %v4585
  %v4705 = vpack.c.bf16 %v4596, %v4593
  %v4706 = vpack.c.bf16 %v4604, %v4601
  %v4707 = vpack.c.bf16 %v4612, %v4609
  %v4708 = vpack.c.bf16 %v4620, %v4617
  %v4709 = vpack.c.bf16 %v4628, %v4625
  %v4710 = vpack.c.bf16 %v4636, %v4633
  %v4711 = vpack.c.bf16 %v4644, %v4641
  %v4712 = vpack.c.bf16 %v4652, %v4649
  %v4713 = vpack.c.bf16 %v4660, %v4657
  %v4714 = vpack.c.bf16 %v4668, %v4665
  %v4715 = vpack.c.bf16 %v4676, %v4673
  %v4716 = vpack.c.bf16 %v4684, %v4681
  %v4717 = vpack.c.bf16 %v4692, %v4689
  %v4718 = vpack.c.bf16 %v4700, %v4697
  %4719 = vst.msk [vmem:[#allocation7] sm:$0xff] %vm1017, %v4703
  %4721 = vrot.lane.b32.xlu0 %v4704, 32
  %v4722 = vpop.permute.xlu0 %4721
  %4724 = vst.msk [vmem:[#allocation7] sm:$0xff] %vm2216, %v4722
  %4726 = vrot.lane.b32.xlu0 %v4705, 64
  %v4727 = vpop.permute.xlu0 %4726
  %4729 = vst.msk [vmem:[#allocation7] sm:$0xff] %vm2232, %v4727
  %4731 = vrot.lane.b32.xlu0 %v4706, 96
  %v4732 = vpop.permute.xlu0 %4731
  %4734 = vst.msk [vmem:[#allocation7] sm:$0xff] %vm2248, %v4732
  %4735 = vst.msk [vmem:[#allocation7 + $0x8] sm:$0xff] %vm1017, %v4707
  %4737 = vrot.lane.b32.xlu0 %v4708, 32
  %v4738 = vpop.permute.xlu0 %4737
  %4740 = vst.msk [vmem:[#allocation7 + $0x8] sm:$0xff] %vm2216, %v4738
  %4742 = vrot.lane.b32.xlu0 %v4709, 64
  %v4743 = vpop.permute.xlu0 %4742
  %4745 = vst.msk [vmem:[#allocation7 + $0x8] sm:$0xff] %vm2232, %v4743
  %4747 = vrot.lane.b32.xlu0 %v4710, 96
  %v4748 = vpop.permute.xlu0 %4747
  %4750 = vst.msk [vmem:[#allocation7 + $0x8] sm:$0xff] %vm2248, %v4748
  %4751 = vst.msk [vmem:[#allocation7 + $0x10] sm:$0xff] %vm1017, %v4711
  %4753 = vrot.lane.b32.xlu0 %v4712, 32
  %v4754 = vpop.permute.xlu0 %4753
  %4756 = vst.msk [vmem:[#allocation7 + $0x10] sm:$0xff] %vm2216, %v4754
  %4758 = vrot.lane.b32.xlu0 %v4713, 64
  %v4759 = vpop.permute.xlu0 %4758
  %4761 = vst.msk [vmem:[#allocation7 + $0x10] sm:$0xff] %vm2232, %v4759
  %4763 = vrot.lane.b32.xlu0 %v4714, 96
  %v4764 = vpop.permute.xlu0 %4763
  %4766 = vst.msk [vmem:[#allocation7 + $0x10] sm:$0xff] %vm2248, %v4764
  %4767 = vst.msk [vmem:[#allocation7 + $0x18] sm:$0xff] %vm1017, %v4715
  %4769 = vrot.lane.b32.xlu0 %v4716, 32
  %v4770 = vpop.permute.xlu0 %4769
  %4772 = vst.msk [vmem:[#allocation7 + $0x18] sm:$0xff] %vm2216, %v4770
  %4774 = vrot.lane.b32.xlu0 %v4717, 64
  %v4775 = vpop.permute.xlu0 %4774
  %4777 = vst.msk [vmem:[#allocation7 + $0x18] sm:$0xff] %vm2232, %v4775
  %4779 = vrot.lane.b32.xlu0 %v4718, 96
  %v4780 = vpop.permute.xlu0 %4779
  %4782 = vst.msk [vmem:[#allocation7 + $0x18] sm:$0xff] %vm2248, %v4780
  %v4783 = vld [vmem:[#allocation6 + $0x8] sm:$0xff]
  %4784 = vmatprep.subr.bf16.mxu0 0
  %4785 = vmatpush1.bf16.msra.mxu0 %v4783
  %4786 = vmatprep.subr.bf16.mxu0 0
  %4787 = vmatpush1.bf16.msra.mxu0 0
  %4788 = vmatprep.subr.bf16.mxu0 0
  %4789 = vmatpush1.bf16.msra.mxu0 0
  %4790 = vmatprep.subr.bf16.mxu0 0
  %4791 = vmatpush1.bf16.msra.mxu0 0
  %4792 = vmatprep.subr.bf16.mxu0 0
  %4793 = vmatpush1.bf16.msra.mxu0 0
  %4794 = vmatprep.subr.bf16.mxu0 0
  %4795 = vmatpush1.bf16.msra.mxu0 0
  %4796 = vmatprep.subr.bf16.mxu0 0
  %4797 = vmatpush1.bf16.msra.mxu0 0
  %4798 = vmatprep.subr.bf16.mxu0 0
  %4799 = vmatpush1.bf16.msra.mxu0 0
  %4800 = vmatprep.subr.bf16.mxu0 0
  %4801 = vmatpush1.bf16.msra.mxu0 0
  %4802 = vmatprep.subr.bf16.mxu0 0
  %4803 = vmatpush1.bf16.msra.mxu0 0
  %4804 = vmatprep.subr.bf16.mxu0 0
  %4805 = vmatpush1.bf16.msra.mxu0 0
  %4806 = vmatprep.subr.bf16.mxu0 0
  %4807 = vmatpush1.bf16.msra.mxu0 0
  %4808 = vmatprep.subr.bf16.mxu0 0
  %4809 = vmatpush1.bf16.msra.mxu0 0
  %4810 = vmatprep.subr.bf16.mxu0 0
  %4811 = vmatpush1.bf16.msra.mxu0 0
  %4812 = vmatprep.subr.bf16.mxu0 0
  %4813 = vmatpush1.bf16.msra.mxu0 0
  %4814 = vmatprep.subr.bf16.mxu0 0
  %4815 = vmatpush1.bf16.msra.mxu0 0
  %4816 = vmatprep.mubr.bf16.mxu0 0
  %4817 = vmatmul.mubr.bf16.gmra.mrb[0].mxu0 %v4495
  %v4818 = vpop.f32.mrb[0].mxu0
  %v4819 = vadd.f32 0.0, %v4818
  %v4820 = vpop.f32.mrb[0].mxu0
  %v4821 = vpop.f32.mrb[0].mxu0
  %v4822 = vadd.f32 0.0, %v4821
  %v4823 = vpop.f32.mrb[0].mxu0
  %4824 = vmatprep.mubr.bf16.mxu0 0
  %4825 = vmatmul.mubr.bf16.gmra.mrb[0].mxu0 %v4498
  %v4826 = vpop.f32.mrb[0].mxu0
  %v4827 = vadd.f32 0.0, %v4826
  %v4828 = vpop.f32.mrb[0].mxu0
  %v4829 = vpop.f32.mrb[0].mxu0
  %v4830 = vadd.f32 0.0, %v4829
  %v4831 = vpop.f32.mrb[0].mxu0
  %4832 = vmatprep.mubr.bf16.mxu0 0
  %4833 = vmatmul.mubr.bf16.gmra.mrb[0].mxu0 %v4501
  %v4834 = vpop.f32.mrb[0].mxu0
  %v4835 = vadd.f32 0.0, %v4834
  %v4836 = vpop.f32.mrb[0].mxu0
  %v4837 = vpop.f32.mrb[0].mxu0
  %v4838 = vadd.f32 0.0, %v4837
  %v4839 = vpop.f32.mrb[0].mxu0
  %4840 = vmatprep.mubr.bf16.mxu0 0
  %4841 = vmatmul.mubr.bf16.gmra.mrb[0].mxu0 %v4504
  %v4842 = vpop.f32.mrb[0].mxu0
  %v4843 = vadd.f32 0.0, %v4842
  %v4844 = vpop.f32.mrb[0].mxu0
  %v4845 = vpop.f32.mrb[0].mxu0
  %v4846 = vadd.f32 0.0, %v4845
  %v4847 = vpop.f32.mrb[0].mxu0
  %4848 = vmatprep.mubr.bf16.mxu0 0
  %4849 = vmatmul.mubr.bf16.gmra.mrb[0].mxu0 %v4507
  %v4850 = vpop.f32.mrb[0].mxu0
  %v4851 = vadd.f32 0.0, %v4850
  %v4852 = vpop.f32.mrb[0].mxu0
  %v4853 = vpop.f32.mrb[0].mxu0
  %v4854 = vadd.f32 0.0, %v4853
  %v4855 = vpop.f32.mrb[0].mxu0
  %4856 = vmatprep.mubr.bf16.mxu0 0
  %4857 = vmatmul.mubr.bf16.gmra.mrb[0].mxu0 %v4510
  %v4858 = vpop.f32.mrb[0].mxu0
  %v4859 = vadd.f32 0.0, %v4858
  %v4860 = vpop.f32.mrb[0].mxu0
  %v4861 = vpop.f32.mrb[0].mxu0
  %v4862 = vadd.f32 0.0, %v4861
  %v4863 = vpop.f32.mrb[0].mxu0
  %4864 = vmatprep.mubr.bf16.mxu0 0
  %4865 = vmatmul.mubr.bf16.gmra.mrb[0].mxu0 %v4513
  %v4866 = vpop.f32.mrb[0].mxu0
  %v4867 = vadd.f32 0.0, %v4866
  %v4868 = vpop.f32.mrb[0].mxu0
  %v4869 = vpop.f32.mrb[0].mxu0
  %v4870 = vadd.f32 0.0, %v4869
  %v4871 = vpop.f32.mrb[0].mxu0
  %4872 = vmatprep.mubr.bf16.mxu0 0
  %4873 = vmatmul.mubr.bf16.gmra.mrb[0].mxu0 %v4516
  %v4874 = vpop.f32.mrb[0].mxu0
  %v4875 = vadd.f32 0.0, %v4874
  %v4876 = vpop.f32.mrb[0].mxu0
  %v4877 = vpop.f32.mrb[0].mxu0
  %v4878 = vadd.f32 0.0, %v4877
  %v4879 = vpop.f32.mrb[0].mxu0
  %4880 = vmatprep.mubr.bf16.mxu0 0
  %4881 = vmatmul.mubr.bf16.gmra.mrb[0].mxu0 %v4519
  %v4882 = vpop.f32.mrb[0].mxu0
  %v4883 = vadd.f32 0.0, %v4882
  %v4884 = vpop.f32.mrb[0].mxu0
  %v4885 = vpop.f32.mrb[0].mxu0
  %v4886 = vadd.f32 0.0, %v4885
  %v4887 = vpop.f32.mrb[0].mxu0
  %4888 = vmatprep.mubr.bf16.mxu0 0
  %4889 = vmatmul.mubr.bf16.gmra.mrb[0].mxu0 %v4522
  %v4890 = vpop.f32.mrb[0].mxu0
  %v4891 = vadd.f32 0.0, %v4890
  %v4892 = vpop.f32.mrb[0].mxu0
  %v4893 = vpop.f32.mrb[0].mxu0
  %v4894 = vadd.f32 0.0, %v4893
  %v4895 = vpop.f32.mrb[0].mxu0
  %4896 = vmatprep.mubr.bf16.mxu0 0
  %4897 = vmatmul.mubr.bf16.gmra.mrb[0].mxu0 %v4525
  %v4898 = vpop.f32.mrb[0].mxu0
  %v4899 = vadd.f32 0.0, %v4898
  %v4900 = vpop.f32.mrb[0].mxu0
  %v4901 = vpop.f32.mrb[0].mxu0
  %v4902 = vadd.f32 0.0, %v4901
  %v4903 = vpop.f32.mrb[0].mxu0
  %4904 = vmatprep.mubr.bf16.mxu0 0
  %4905 = vmatmul.mubr.bf16.gmra.mrb[0].mxu0 %v4528
  %v4906 = vpop.f32.mrb[0].mxu0
  %v4907 = vadd.f32 0.0, %v4906
  %v4908 = vpop.f32.mrb[0].mxu0
  %v4909 = vpop.f32.mrb[0].mxu0
  %v4910 = vadd.f32 0.0, %v4909
  %v4911 = vpop.f32.mrb[0].mxu0
  %4912 = vmatprep.mubr.bf16.mxu0 0
  %4913 = vmatmul.mubr.bf16.gmra.mrb[0].mxu0 %v4531
  %v4914 = vpop.f32.mrb[0].mxu0
  %v4915 = vadd.f32 0.0, %v4914
  %v4916 = vpop.f32.mrb[0].mxu0
  %v4917 = vpop.f32.mrb[0].mxu0
  %v4918 = vadd.f32 0.0, %v4917
  %v4919 = vpop.f32.mrb[0].mxu0
  %4920 = vmatprep.mubr.bf16.mxu0 0
  %4921 = vmatmul.mubr.bf16.gmra.mrb[0].mxu0 %v4534
  %v4922 = vpop.f32.mrb[0].mxu0
  %v4923 = vadd.f32 0.0, %v4922
  %v4924 = vpop.f32.mrb[0].mxu0
  %v4925 = vpop.f32.mrb[0].mxu0
  %v4926 = vadd.f32 0.0, %v4925
  %v4927 = vpop.f32.mrb[0].mxu0
  %4928 = vmatprep.mubr.bf16.mxu0 0
  %4929 = vmatmul.mubr.bf16.gmra.mrb[0].mxu0 %v4537
  %v4930 = vpop.f32.mrb[0].mxu0
  %v4931 = vadd.f32 0.0, %v4930
  %v4932 = vpop.f32.mrb[0].mxu0
  %v4933 = vpop.f32.mrb[0].mxu0
  %v4934 = vadd.f32 0.0, %v4933
  %v4935 = vpop.f32.mrb[0].mxu0
  %4936 = vmatprep.mubr.bf16.mxu0 0
  %4937 = vmatmul.mubr.bf16.gmra.mrb[0].mxu0 %v4540
  %v4938 = vpop.f32.mrb[0].mxu0
  %v4939 = vadd.f32 0.0, %v4938
  %v4940 = vpop.f32.mrb[0].mxu0
  %v4941 = vpop.f32.mrb[0].mxu0
  %v4942 = vadd.f32 0.0, %v4941
  %v4943 = vpop.f32.mrb[0].mxu0
  %4944 = vdwg.mxu0
  %v4945 = vpack.c.bf16 %v4822, %v4819
  %v4946 = vpack.c.bf16 %v4830, %v4827
  %v4947 = vpack.c.bf16 %v4838, %v4835
  %v4948 = vpack.c.bf16 %v4846, %v4843
  %v4949 = vpack.c.bf16 %v4854, %v4851
  %v4950 = vpack.c.bf16 %v4862, %v4859
  %v4951 = vpack.c.bf16 %v4870, %v4867
  %v4952 = vpack.c.bf16 %v4878, %v4875
  %v4953 = vpack.c.bf16 %v4886, %v4883
  %v4954 = vpack.c.bf16 %v4894, %v4891
  %v4955 = vpack.c.bf16 %v4902, %v4899
  %v4956 = vpack.c.bf16 %v4910, %v4907
  %v4957 = vpack.c.bf16 %v4918, %v4915
  %v4958 = vpack.c.bf16 %v4926, %v4923
  %v4959 = vpack.c.bf16 %v4934, %v4931
  %v4960 = vpack.c.bf16 %v4942, %v4939
  %4961 = vst.msk [vmem:[#allocation7 + $0x20] sm:$0xff] %vm1017, %v4945
  %4963 = vrot.lane.b32.xlu0 %v4946, 32
  %v4964 = vpop.permute.xlu0 %4963
  %4966 = vst.msk [vmem:[#allocation7 + $0x20] sm:$0xff] %vm2216, %v4964
  %4968 = vrot.lane.b32.xlu0 %v4947, 64
  %v4969 = vpop.permute.xlu0 %4968
  %4971 = vst.msk [vmem:[#allocation7 + $0x20] sm:$0xff] %vm2232, %v4969
  %4973 = vrot.lane.b32.xlu0 %v4948, 96
  %v4974 = vpop.permute.xlu0 %4973
  %4976 = vst.msk [vmem:[#allocation7 + $0x20] sm:$0xff] %vm2248, %v4974
  %4977 = vst.msk [vmem:[#allocation7 + $0x28] sm:$0xff] %vm1017, %v4949
  %4979 = vrot.lane.b32.xlu0 %v4950, 32
  %v4980 = vpop.permute.xlu0 %4979
  %4982 = vst.msk [vmem:[#allocation7 + $0x28] sm:$0xff] %vm2216, %v4980
  %4984 = vrot.lane.b32.xlu0 %v4951, 64
  %v4985 = vpop.permute.xlu0 %4984
  %4987 = vst.msk [vmem:[#allocation7 + $0x28] sm:$0xff] %vm2232, %v4985
  %4989 = vrot.lane.b32.xlu0 %v4952, 96
  %v4990 = vpop.permute.xlu0 %4989
  %4992 = vst.msk [vmem:[#allocation7 + $0x28] sm:$0xff] %vm2248, %v4990
  %4993 = vst.msk [vmem:[#allocation7 + $0x30] sm:$0xff] %vm1017, %v4953
  %4995 = vrot.lane.b32.xlu0 %v4954, 32
  %v4996 = vpop.permute.xlu0 %4995
  %4998 = vst.msk [vmem:[#allocation7 + $0x30] sm:$0xff] %vm2216, %v4996
  %5000 = vrot.lane.b32.xlu0 %v4955, 64
  %v5001 = vpop.permute.xlu0 %5000
  %5003 = vst.msk [vmem:[#allocation7 + $0x30] sm:$0xff] %vm2232, %v5001
  %5005 = vrot.lane.b32.xlu0 %v4956, 96
  %v5006 = vpop.permute.xlu0 %5005
  %5008 = vst.msk [vmem:[#allocation7 + $0x30] sm:$0xff] %vm2248, %v5006
  %5009 = vst.msk [vmem:[#allocation7 + $0x38] sm:$0xff] %vm1017, %v4957
  %5011 = vrot.lane.b32.xlu0 %v4958, 32
  %v5012 = vpop.permute.xlu0 %5011
  %5014 = vst.msk [vmem:[#allocation7 + $0x38] sm:$0xff] %vm2216, %v5012
  %5016 = vrot.lane.b32.xlu0 %v4959, 64
  %v5017 = vpop.permute.xlu0 %5016
  %5019 = vst.msk [vmem:[#allocation7 + $0x38] sm:$0xff] %vm2232, %v5017
  %5021 = vrot.lane.b32.xlu0 %v4960, 96
  %v5022 = vpop.permute.xlu0 %5021
  %5024 = vst.msk [vmem:[#allocation7 + $0x38] sm:$0xff] %vm2248, %v5022
  %v5025 = vld [vmem:[#allocation7] sm:$0xff]
  %v5026 = vld [vmem:[#allocation7 + $0x8] sm:$0xff]
  %v5027 = vld [vmem:[#allocation7 + $0x10] sm:$0xff]
  %v5028 = vld [vmem:[#allocation7 + $0x18] sm:$0xff]
  %v5029 = vld [vmem:[#allocation7 + $0x20] sm:$0xff]
  %v5030 = vld [vmem:[#allocation7 + $0x28] sm:$0xff]
  %v5031 = vld [vmem:[#allocation7 + $0x30] sm:$0xff]
  %v5032 = vld [vmem:[#allocation7 + $0x38] sm:$0xff]
  %v5033 = vld [vmem:[%s21] sm:$0xf]
  %v5034 = vld [vmem:[%s21 + $0x4] sm:$0xf]
  %v5035 = vld [vmem:[%s21 + $0x8] sm:$0xf]
  %v5036 = vld [vmem:[%s21 + $0xc] sm:$0xf]
  %v5037 = vld [vmem:[%s21 + $0x10] sm:$0xf]
  %v5038 = vld [vmem:[%s21 + $0x14] sm:$0xf]
  %v5039 = vld [vmem:[%s21 + $0x18] sm:$0xf]
  %v5040 = vld [vmem:[%s21 + $0x1c] sm:$0xf]
  %v5041 = vld [vmem:[%s21 + $0x20] sm:$0xf]
  %v5042 = vld [vmem:[%s21 + $0x24] sm:$0xf]
  %v5043 = vld [vmem:[%s21 + $0x28] sm:$0xf]
  %v5044 = vld [vmem:[%s21 + $0x2c] sm:$0xf]
  %v5045 = vld [vmem:[%s21 + $0x30] sm:$0xf]
  %v5046 = vld [vmem:[%s21 + $0x34] sm:$0xf]
  %v5047 = vld [vmem:[%s21 + $0x38] sm:$0xf]
  %v5048 = vld [vmem:[%s21 + $0x3c] sm:$0xf]
  %v5049 = vld [vmem:[%s21 + $0x40] sm:$0xf]
  %v5050 = vld [vmem:[%s21 + $0x44] sm:$0xf]
  %v5051 = vld [vmem:[%s21 + $0x48] sm:$0xf]
  %v5052 = vld [vmem:[%s21 + $0x4c] sm:$0xf]
  %v5053 = vld [vmem:[%s21 + $0x50] sm:$0xf]
  %v5054 = vld [vmem:[%s21 + $0x54] sm:$0xf]
  %v5055 = vld [vmem:[%s21 + $0x58] sm:$0xf]
  %v5056 = vld [vmem:[%s21 + $0x5c] sm:$0xf]
  %v5057 = vld [vmem:[%s21 + $0x60] sm:$0xf]
  %v5058 = vld [vmem:[%s21 + $0x64] sm:$0xf]
  %v5059 = vld [vmem:[%s21 + $0x68] sm:$0xf]
  %v5060 = vld [vmem:[%s21 + $0x6c] sm:$0xf]
  %v5061 = vld [vmem:[%s21 + $0x70] sm:$0xf]
  %v5062 = vld [vmem:[%s21 + $0x74] sm:$0xf]
  %v5063 = vld [vmem:[%s21 + $0x78] sm:$0xf]
  %v5064 = vld [vmem:[%s21 + $0x7c] sm:$0xf]
  %v5065 = vld [vmem:[%s21 + $0x80] sm:$0xf]
  %v5066 = vld [vmem:[%s21 + $0x84] sm:$0xf]
  %v5067 = vld [vmem:[%s21 + $0x88] sm:$0xf]
  %v5068 = vld [vmem:[%s21 + $0x8c] sm:$0xf]
  %v5069 = vld [vmem:[%s21 + $0x90] sm:$0xf]
  %v5070 = vld [vmem:[%s21 + $0x94] sm:$0xf]
  %v5071 = vld [vmem:[%s21 + $0x98] sm:$0xf]
  %v5072 = vld [vmem:[%s21 + $0x9c] sm:$0xf]
  %v5073 = vld [vmem:[%s21 + $0xa0] sm:$0xf]
  %v5074 = vld [vmem:[%s21 + $0xa4] sm:$0xf]
  %v5075 = vld [vmem:[%s21 + $0xa8] sm:$0xf]
  %v5076 = vld [vmem:[%s21 + $0xac] sm:$0xf]
  %v5077 = vld [vmem:[%s21 + $0xb0] sm:$0xf]
  %v5078 = vld [vmem:[%s21 + $0xb4] sm:$0xf]
  %v5079 = vld [vmem:[%s21 + $0xb8] sm:$0xf]
  %v5080 = vld [vmem:[%s21 + $0xbc] sm:$0xf]
  %v5081 = vld [vmem:[%s21 + $0xc0] sm:$0xf]
  %v5082 = vld [vmem:[%s21 + $0xc4] sm:$0xf]
  %v5083 = vld [vmem:[%s21 + $0xc8] sm:$0xf]
  %v5084 = vld [vmem:[%s21 + $0xcc] sm:$0xf]
  %v5085 = vld [vmem:[%s21 + $0xd0] sm:$0xf]
  %v5086 = vld [vmem:[%s21 + $0xd4] sm:$0xf]
  %v5087 = vld [vmem:[%s21 + $0xd8] sm:$0xf]
  %v5088 = vld [vmem:[%s21 + $0xdc] sm:$0xf]
  %v5089 = vld [vmem:[%s21 + $0xe0] sm:$0xf]
  %v5090 = vld [vmem:[%s21 + $0xe4] sm:$0xf]
  %v5091 = vld [vmem:[%s21 + $0xe8] sm:$0xf]
  %v5092 = vld [vmem:[%s21 + $0xec] sm:$0xf]
  %v5093 = vld [vmem:[%s21 + $0xf0] sm:$0xf]
  %v5094 = vld [vmem:[%s21 + $0xf4] sm:$0xf]
  %v5095 = vld [vmem:[%s21 + $0xf8] sm:$0xf]
  %v5096 = vld [vmem:[%s21 + $0xfc] sm:$0xf]
  %v5097 = vld [vmem:[%s23] sm:$0x1]
  %v5099 = vlaneseq
  %v5100 = vshrl.u32 %v5099, 7
  %v5101 = vsub.s32 0, %v5100
  %v5102 = vrot.slane %v5097, %v5101
  %v5168 = vunpack.c.l.b16 %v5033
  %v5169 = vunpack.c.l.b16 %v5034
  %v5170 = vunpack.c.l.b16 %v5035
  %v5171 = vunpack.c.l.b16 %v5036
  %v5172 = vunpack.c.l.b16 %v5037
  %v5173 = vunpack.c.l.b16 %v5038
  %v5174 = vunpack.c.l.b16 %v5039
  %v5175 = vunpack.c.l.b16 %v5040
  %v5176 = vunpack.c.l.b16 %v5041
  %v5177 = vunpack.c.l.b16 %v5042
  %v5178 = vunpack.c.l.b16 %v5043
  %v5179 = vunpack.c.l.b16 %v5044
  %v5180 = vunpack.c.l.b16 %v5045
  %v5181 = vunpack.c.l.b16 %v5046
  %v5182 = vunpack.c.l.b16 %v5047
  %v5183 = vunpack.c.l.b16 %v5048
  %v5184 = vunpack.c.l.b16 %v5049
  %v5185 = vunpack.c.l.b16 %v5050
  %v5186 = vunpack.c.l.b16 %v5051
  %v5187 = vunpack.c.l.b16 %v5052
  %v5188 = vunpack.c.l.b16 %v5053
  %v5189 = vunpack.c.l.b16 %v5054
  %v5190 = vunpack.c.l.b16 %v5055
  %v5191 = vunpack.c.l.b16 %v5056
  %v5192 = vunpack.c.l.b16 %v5057
  %v5193 = vunpack.c.l.b16 %v5058
  %v5194 = vunpack.c.l.b16 %v5059
  %v5195 = vunpack.c.l.b16 %v5060
  %v5196 = vunpack.c.l.b16 %v5061
  %v5197 = vunpack.c.l.b16 %v5062
  %v5198 = vunpack.c.l.b16 %v5063
  %v5199 = vunpack.c.l.b16 %v5064
  %v5200 = vunpack.c.l.b16 %v5065
  %v5201 = vunpack.c.l.b16 %v5066
  %v5202 = vunpack.c.l.b16 %v5067
  %v5203 = vunpack.c.l.b16 %v5068
  %v5204 = vunpack.c.l.b16 %v5069
  %v5205 = vunpack.c.l.b16 %v5070
  %v5206 = vunpack.c.l.b16 %v5071
  %v5207 = vunpack.c.l.b16 %v5072
  %v5208 = vunpack.c.l.b16 %v5073
  %v5209 = vunpack.c.l.b16 %v5074
  %v5210 = vunpack.c.l.b16 %v5075
  %v5211 = vunpack.c.l.b16 %v5076
  %v5212 = vunpack.c.l.b16 %v5077
  %v5213 = vunpack.c.l.b16 %v5078
  %v5214 = vunpack.c.l.b16 %v5079
  %v5215 = vunpack.c.l.b16 %v5080
  %v5216 = vunpack.c.l.b16 %v5081
  %v5217 = vunpack.c.l.b16 %v5082
  %v5218 = vunpack.c.l.b16 %v5083
  %v5219 = vunpack.c.l.b16 %v5084
  %v5220 = vunpack.c.l.b16 %v5085
  %v5221 = vunpack.c.l.b16 %v5086
  %v5222 = vunpack.c.l.b16 %v5087
  %v5223 = vunpack.c.l.b16 %v5088
  %v5224 = vunpack.c.l.b16 %v5089
  %v5225 = vunpack.c.l.b16 %v5090
  %v5226 = vunpack.c.l.b16 %v5091
  %v5227 = vunpack.c.l.b16 %v5092
  %v5228 = vunpack.c.l.b16 %v5093
  %v5229 = vunpack.c.l.b16 %v5094
  %v5230 = vunpack.c.l.b16 %v5095
  %v5231 = vunpack.c.l.b16 %v5096
  %v5232 = vpack.c.b16 %v5169, %v5168
  %v5233 = vpack.c.b16 %v5171, %v5170
  %v5234 = vpack.c.b16 %v5173, %v5172
  %v5235 = vpack.c.b16 %v5175, %v5174
  %v5236 = vpack.c.b16 %v5177, %v5176
  %v5237 = vpack.c.b16 %v5179, %v5178
  %v5238 = vpack.c.b16 %v5181, %v5180
  %v5239 = vpack.c.b16 %v5183, %v5182
  %v5240 = vpack.c.b16 %v5185, %v5184
  %v5241 = vpack.c.b16 %v5187, %v5186
  %v5242 = vpack.c.b16 %v5189, %v5188
  %v5243 = vpack.c.b16 %v5191, %v5190
  %v5244 = vpack.c.b16 %v5193, %v5192
  %v5245 = vpack.c.b16 %v5195, %v5194
  %v5246 = vpack.c.b16 %v5197, %v5196
  %v5247 = vpack.c.b16 %v5199, %v5198
  %v5248 = vpack.c.b16 %v5201, %v5200
  %v5249 = vpack.c.b16 %v5203, %v5202
  %v5250 = vpack.c.b16 %v5205, %v5204
  %v5251 = vpack.c.b16 %v5207, %v5206
  %v5252 = vpack.c.b16 %v5209, %v5208
  %v5253 = vpack.c.b16 %v5211, %v5210
  %v5254 = vpack.c.b16 %v5213, %v5212
  %v5255 = vpack.c.b16 %v5215, %v5214
  %v5256 = vpack.c.b16 %v5217, %v5216
  %v5257 = vpack.c.b16 %v5219, %v5218
  %v5258 = vpack.c.b16 %v5221, %v5220
  %v5259 = vpack.c.b16 %v5223, %v5222
  %v5260 = vpack.c.b16 %v5225, %v5224
  %v5261 = vpack.c.b16 %v5227, %v5226
  %v5262 = vpack.c.b16 %v5229, %v5228
  %v5263 = vpack.c.b16 %v5231, %v5230
  %5296 = vmatprep.subr.bf16.mxu0 0
  %5297 = vmatpush1.bf16.msra.mxu0 %v5232
  %5298 = vmatprep.subr.bf16.mxu0 0
  %5299 = vmatpush1.bf16.msra.mxu0 %v5233
  %5300 = vmatprep.subr.bf16.mxu0 0
  %5301 = vmatpush1.bf16.msra.mxu0 %v5234
  %5302 = vmatprep.subr.bf16.mxu0 0
  %5303 = vmatpush1.bf16.msra.mxu0 %v5235
  %5304 = vmatprep.subr.bf16.mxu0 0
  %5305 = vmatpush1.bf16.msra.mxu0 %v5236
  %5306 = vmatprep.subr.bf16.mxu0 0
  %5307 = vmatpush1.bf16.msra.mxu0 %v5237
  %5308 = vmatprep.subr.bf16.mxu0 0
  %5309 = vmatpush1.bf16.msra.mxu0 %v5238
  %5310 = vmatprep.subr.bf16.mxu0 0
  %5311 = vmatpush1.bf16.msra.mxu0 %v5239
  %5312 = vmatprep.subr.bf16.mxu0 0
  %5313 = vmatpush1.bf16.msra.mxu0 %v5240
  %5314 = vmatprep.subr.bf16.mxu0 0
  %5315 = vmatpush1.bf16.msra.mxu0 %v5241
  %5316 = vmatprep.subr.bf16.mxu0 0
  %5317 = vmatpush1.bf16.msra.mxu0 %v5242
  %5318 = vmatprep.subr.bf16.mxu0 0
  %5319 = vmatpush1.bf16.msra.mxu0 %v5243
  %5320 = vmatprep.subr.bf16.mxu0 0
  %5321 = vmatpush1.bf16.msra.mxu0 %v5244
  %5322 = vmatprep.subr.bf16.mxu0 0
  %5323 = vmatpush1.bf16.msra.mxu0 %v5245
  %5324 = vmatprep.subr.bf16.mxu0 0
  %5325 = vmatpush1.bf16.msra.mxu0 %v5246
  %5326 = vmatprep.subr.bf16.mxu0 0
  %5327 = vmatpush1.bf16.msra.mxu0 %v5247
  %5328 = vmatprep.mubr.bf16.mxu0 %v5026
  %5329 = vmatmul.mubr.bf16.gmra.mrb[0].mxu0 %v5025
  %v5330 = vpop.f32.mrb[0].mxu0
  %v5331 = vadd.f32 %v5102, %v5330
  %v5332 = vpop.f32.mrb[0].mxu0
  %v5333 = vpop.f32.mrb[0].mxu0
  %v5334 = vpop.f32.mrb[0].mxu0
  %5335 = vmatprep.mubr.bf16.mxu0 %v5030
  %5336 = vmatmul.mubr.bf16.gmra.mrb[0].mxu0 %v5029
  %v5337 = vpop.f32.mrb[0].mxu0
  %v5338 = vadd.f32 %v5102, %v5337
  %v5339 = vpop.f32.mrb[0].mxu0
  %v5340 = vpop.f32.mrb[0].mxu0
  %v5341 = vpop.f32.mrb[0].mxu0
  %5342 = vdwg.mxu0
  %5343 = vmatprep.subr.bf16.mxu0 0
  %5344 = vmatpush1.bf16.msra.mxu0 %v5248
  %5345 = vmatprep.subr.bf16.mxu0 0
  %5346 = vmatpush1.bf16.msra.mxu0 %v5249
  %5347 = vmatprep.subr.bf16.mxu0 0
  %5348 = vmatpush1.bf16.msra.mxu0 %v5250
  %5349 = vmatprep.subr.bf16.mxu0 0
  %5350 = vmatpush1.bf16.msra.mxu0 %v5251
  %5351 = vmatprep.subr.bf16.mxu0 0
  %5352 = vmatpush1.bf16.msra.mxu0 %v5252
  %5353 = vmatprep.subr.bf16.mxu0 0
  %5354 = vmatpush1.bf16.msra.mxu0 %v5253
  %5355 = vmatprep.subr.bf16.mxu0 0
  %5356 = vmatpush1.bf16.msra.mxu0 %v5254
  %5357 = vmatprep.subr.bf16.mxu0 0
  %5358 = vmatpush1.bf16.msra.mxu0 %v5255
  %5359 = vmatprep.subr.bf16.mxu0 0
  %5360 = vmatpush1.bf16.msra.mxu0 %v5256
  %5361 = vmatprep.subr.bf16.mxu0 0
  %5362 = vmatpush1.bf16.msra.mxu0 %v5257
  %5363 = vmatprep.subr.bf16.mxu0 0
  %5364 = vmatpush1.bf16.msra.mxu0 %v5258
  %5365 = vmatprep.subr.bf16.mxu0 0
  %5366 = vmatpush1.bf16.msra.mxu0 %v5259
  %5367 = vmatprep.subr.bf16.mxu0 0
  %5368 = vmatpush1.bf16.msra.mxu0 %v5260
  %5369 = vmatprep.subr.bf16.mxu0 0
  %5370 = vmatpush1.bf16.msra.mxu0 %v5261
  %5371 = vmatprep.subr.bf16.mxu0 0
  %5372 = vmatpush1.bf16.msra.mxu0 %v5262
  %5373 = vmatprep.subr.bf16.mxu0 0
  %5374 = vmatpush1.bf16.msra.mxu0 %v5263
  %5375 = vmatprep.mubr.bf16.mxu0 %v5028
  %5376 = vmatmul.mubr.bf16.gmra.mrb[0].mxu0 %v5027
  %v5377 = vpop.f32.mrb[0].mxu0
  %v5378 = vadd.f32 %v5331, %v5377
  %v5379 = vpop.f32.mrb[0].mxu0
  %v5380 = vpop.f32.mrb[0].mxu0
  %v5381 = vpop.f32.mrb[0].mxu0
  %5382 = vmatprep.mubr.bf16.mxu0 %v5032
  %5383 = vmatmul.mubr.bf16.gmra.mrb[0].mxu0 %v5031
  %v5384 = vpop.f32.mrb[0].mxu0
  %v5385 = vadd.f32 %v5338, %v5384
  %v5386 = vpop.f32.mrb[0].mxu0
  %v5387 = vpop.f32.mrb[0].mxu0
  %v5388 = vpop.f32.mrb[0].mxu0
  %5389 = vdwg.mxu0
  %v5390 = vmax.f32 %v5378, 0.0
  %v5391 = vmax.f32 %v5385, 0.0
  %vm5392 = vcmask 253952
  %5393 = vst.msk [vmem:[#allocation16] sm:$0x1] %vm5392, %v5390
  %5394 = vst.msk [vmem:[#allocation16 + $0x1] sm:$0x1] %vm5392, %v5391
  %v5395 = vld [vmem:[%s29] sm:$0xff]
  %v5396 = vld [vmem:[%s29 + $0x8] sm:$0xff]
  %v5397 = vld [vmem:[%s29 + $0x10] sm:$0xff]
  %v5398 = vld [vmem:[%s29 + $0x18] sm:$0xff]
  %v5399 = vld [vmem:[%s29 + $0x20] sm:$0xff]
  %v5400 = vld [vmem:[%s29 + $0x28] sm:$0xff]
  %v5401 = vld [vmem:[%s29 + $0x30] sm:$0xff]
  %v5402 = vld [vmem:[%s29 + $0x38] sm:$0xff]
  %v5403 = vld [vmem:[%s29 + $0x40] sm:$0xff]
  %v5404 = vld [vmem:[%s29 + $0x48] sm:$0xff]
  %v5405 = vld [vmem:[%s29 + $0x50] sm:$0xff]
  %v5406 = vld [vmem:[%s29 + $0x58] sm:$0xff]
  %v5407 = vld [vmem:[%s29 + $0x60] sm:$0xff]
  %v5408 = vld [vmem:[%s29 + $0x68] sm:$0xff]
  %v5409 = vld [vmem:[%s29 + $0x70] sm:$0xff]
  %v5410 = vld [vmem:[%s29 + $0x78] sm:$0xff]
  %v5411 = vld [vmem:[%s29 + $0x80] sm:$0xff]
  %v5412 = vld [vmem:[%s29 + $0x88] sm:$0xff]
  %v5413 = vld [vmem:[%s29 + $0x90] sm:$0xff]
  %v5414 = vld [vmem:[%s29 + $0x98] sm:$0xff]
  %v5415 = vld [vmem:[%s29 + $0xa0] sm:$0xff]
  %v5416 = vld [vmem:[%s29 + $0xa8] sm:$0xff]
  %v5417 = vld [vmem:[%s29 + $0xb0] sm:$0xff]
  %v5418 = vld [vmem:[%s29 + $0xb8] sm:$0xff]
  %v5419 = vld [vmem:[%s29 + $0xc0] sm:$0xff]
  %v5420 = vld [vmem:[%s29 + $0xc8] sm:$0xff]
  %v5421 = vld [vmem:[%s29 + $0xd0] sm:$0xff]
  %v5422 = vld [vmem:[%s29 + $0xd8] sm:$0xff]
  %v5423 = vld [vmem:[%s29 + $0xe0] sm:$0xff]
  %v5424 = vld [vmem:[%s29 + $0xe8] sm:$0xff]
  %v5425 = vld [vmem:[%s29 + $0xf0] sm:$0xff]
  %v5426 = vld [vmem:[%s29 + $0xf8] sm:$0xff]
  %v5427 = vld [vmem:[%s31] sm:$0xf]
  %v5428 = vld [vmem:[%s31 + $0x4] sm:$0xf]
  %v5429 = vld [vmem:[%s31 + $0x8] sm:$0xf]
  %v5430 = vld [vmem:[%s31 + $0xc] sm:$0xf]
  %v5431 = vld [vmem:[%s31 + $0x10] sm:$0xf]
  %v5432 = vld [vmem:[%s31 + $0x14] sm:$0xf]
  %v5433 = vld [vmem:[%s31 + $0x18] sm:$0xf]
  %v5434 = vld [vmem:[%s31 + $0x1c] sm:$0xf]
  %v5435 = vld [vmem:[%s31 + $0x20] sm:$0xf]
  %v5436 = vld [vmem:[%s31 + $0x24] sm:$0xf]
  %v5437 = vld [vmem:[%s31 + $0x28] sm:$0xf]
  %v5438 = vld [vmem:[%s31 + $0x2c] sm:$0xf]
  %v5439 = vld [vmem:[%s31 + $0x30] sm:$0xf]
  %v5440 = vld [vmem:[%s31 + $0x34] sm:$0xf]
  %v5441 = vld [vmem:[%s31 + $0x38] sm:$0xf]
  %v5442 = vld [vmem:[%s31 + $0x3c] sm:$0xf]
  %v5443 = vld [vmem:[%s31 + $0x40] sm:$0xf]
  %v5444 = vld [vmem:[%s31 + $0x44] sm:$0xf]
  %v5445 = vld [vmem:[%s31 + $0x48] sm:$0xf]
  %v5446 = vld [vmem:[%s31 + $0x4c] sm:$0xf]
  %v5447 = vld [vmem:[%s31 + $0x50] sm:$0xf]
  %v5448 = vld [vmem:[%s31 + $0x54] sm:$0xf]
  %v5449 = vld [vmem:[%s31 + $0x58] sm:$0xf]
  %v5450 = vld [vmem:[%s31 + $0x5c] sm:$0xf]
  %v5451 = vld [vmem:[%s31 + $0x60] sm:$0xf]
  %v5452 = vld [vmem:[%s31 + $0x64] sm:$0xf]
  %v5453 = vld [vmem:[%s31 + $0x68] sm:$0xf]
  %v5454 = vld [vmem:[%s31 + $0x6c] sm:$0xf]
  %v5455 = vld [vmem:[%s31 + $0x70] sm:$0xf]
  %v5456 = vld [vmem:[%s31 + $0x74] sm:$0xf]
  %v5457 = vld [vmem:[%s31 + $0x78] sm:$0xf]
  %v5458 = vld [vmem:[%s31 + $0x7c] sm:$0xf]
  %v5459 = vld [vmem:[%s31 + $0x80] sm:$0xf]
  %v5460 = vld [vmem:[%s31 + $0x84] sm:$0xf]
  %v5461 = vld [vmem:[%s31 + $0x88] sm:$0xf]
  %v5462 = vld [vmem:[%s31 + $0x8c] sm:$0xf]
  %v5463 = vld [vmem:[%s31 + $0x90] sm:$0xf]
  %v5464 = vld [vmem:[%s31 + $0x94] sm:$0xf]
  %v5465 = vld [vmem:[%s31 + $0x98] sm:$0xf]
  %v5466 = vld [vmem:[%s31 + $0x9c] sm:$0xf]
  %v5467 = vld [vmem:[%s31 + $0xa0] sm:$0xf]
  %v5468 = vld [vmem:[%s31 + $0xa4] sm:$0xf]
  %v5469 = vld [vmem:[%s31 + $0xa8] sm:$0xf]
  %v5470 = vld [vmem:[%s31 + $0xac] sm:$0xf]
  %v5471 = vld [vmem:[%s31 + $0xb0] sm:$0xf]
  %v5472 = vld [vmem:[%s31 + $0xb4] sm:$0xf]
  %v5473 = vld [vmem:[%s31 + $0xb8] sm:$0xf]
  %v5474 = vld [vmem:[%s31 + $0xbc] sm:$0xf]
  %v5475 = vld [vmem:[%s31 + $0xc0] sm:$0xf]
  %v5476 = vld [vmem:[%s31 + $0xc4] sm:$0xf]
  %v5477 = vld [vmem:[%s31 + $0xc8] sm:$0xf]
  %v5478 = vld [vmem:[%s31 + $0xcc] sm:$0xf]
  %v5479 = vld [vmem:[%s31 + $0xd0] sm:$0xf]
  %v5480 = vld [vmem:[%s31 + $0xd4] sm:$0xf]
  %v5481 = vld [vmem:[%s31 + $0xd8] sm:$0xf]
  %v5482 = vld [vmem:[%s31 + $0xdc] sm:$0xf]
  %v5483 = vld [vmem:[%s31 + $0xe0] sm:$0xf]
  %v5484 = vld [vmem:[%s31 + $0xe4] sm:$0xf]
  %v5485 = vld [vmem:[%s31 + $0xe8] sm:$0xf]
  %v5486 = vld [vmem:[%s31 + $0xec] sm:$0xf]
  %v5487 = vld [vmem:[%s31 + $0xf0] sm:$0xf]
  %v5488 = vld [vmem:[%s31 + $0xf4] sm:$0xf]
  %v5489 = vld [vmem:[%s31 + $0xf8] sm:$0xf]
  %v5490 = vld [vmem:[%s31 + $0xfc] sm:$0xf]
  %v5491 = vld [vmem:[%s33] sm:$0x1]
  %v5493 = vlaneseq
  %v5494 = vshrl.u32 %v5493, 7
  %v5495 = vsub.s32 0, %v5494
  %v5496 = vrot.slane %v5491, %v5495
  %v5530 = vunpack.c.l.b16 %v5395
  %v5531 = vunpack.c.h.b16 %v5395
  %v5532 = vunpack.c.l.b16 %v5396
  %v5533 = vunpack.c.h.b16 %v5396
  %v5534 = vunpack.c.l.b16 %v5397
  %v5535 = vunpack.c.h.b16 %v5397
  %v5536 = vunpack.c.l.b16 %v5398
  %v5537 = vunpack.c.h.b16 %v5398
  %v5538 = vunpack.c.l.b16 %v5399
  %v5539 = vunpack.c.h.b16 %v5399
  %v5540 = vunpack.c.l.b16 %v5400
  %v5541 = vunpack.c.h.b16 %v5400
  %v5542 = vunpack.c.l.b16 %v5401
  %v5543 = vunpack.c.h.b16 %v5401
  %v5544 = vunpack.c.l.b16 %v5402
  %v5545 = vunpack.c.h.b16 %v5402
  %v5546 = vunpack.c.l.b16 %v5403
  %v5547 = vunpack.c.h.b16 %v5403
  %v5548 = vunpack.c.l.b16 %v5404
  %v5549 = vunpack.c.h.b16 %v5404
  %v5550 = vunpack.c.l.b16 %v5405
  %v5551 = vunpack.c.h.b16 %v5405
  %v5552 = vunpack.c.l.b16 %v5406
  %v5553 = vunpack.c.h.b16 %v5406
  %v5554 = vunpack.c.l.b16 %v5407
  %v5555 = vunpack.c.h.b16 %v5407
  %v5556 = vunpack.c.l.b16 %v5408
  %v5557 = vunpack.c.h.b16 %v5408
  %v5558 = vunpack.c.l.b16 %v5409
  %v5559 = vunpack.c.h.b16 %v5409
  %v5560 = vunpack.c.l.b16 %v5410
  %v5561 = vunpack.c.h.b16 %v5410
  %v5562 = vunpack.c.l.b16 %v5411
  %v5563 = vunpack.c.h.b16 %v5411
  %v5564 = vunpack.c.l.b16 %v5412
  %v5565 = vunpack.c.h.b16 %v5412
  %v5566 = vunpack.c.l.b16 %v5413
  %v5567 = vunpack.c.h.b16 %v5413
  %v5568 = vunpack.c.l.b16 %v5414
  %v5569 = vunpack.c.h.b16 %v5414
  %v5570 = vunpack.c.l.b16 %v5415
  %v5571 = vunpack.c.h.b16 %v5415
  %v5572 = vunpack.c.l.b16 %v5416
  %v5573 = vunpack.c.h.b16 %v5416
  %v5574 = vunpack.c.l.b16 %v5417
  %v5575 = vunpack.c.h.b16 %v5417
  %v5576 = vunpack.c.l.b16 %v5418
  %v5577 = vunpack.c.h.b16 %v5418
  %v5578 = vunpack.c.l.b16 %v5419
  %v5579 = vunpack.c.h.b16 %v5419
  %v5580 = vunpack.c.l.b16 %v5420
  %v5581 = vunpack.c.h.b16 %v5420
  %v5582 = vunpack.c.l.b16 %v5421
  %v5583 = vunpack.c.h.b16 %v5421
  %v5584 = vunpack.c.l.b16 %v5422
  %v5585 = vunpack.c.h.b16 %v5422
  %v5586 = vunpack.c.l.b16 %v5423
  %v5587 = vunpack.c.h.b16 %v5423
  %v5588 = vunpack.c.l.b16 %v5424
  %v5589 = vunpack.c.h.b16 %v5424
  %v5590 = vunpack.c.l.b16 %v5425
  %v5591 = vunpack.c.h.b16 %v5425
  %v5592 = vunpack.c.l.b16 %v5426
  %v5593 = vunpack.c.h.b16 %v5426
  %v5594 = vpack.c.b16 %v5534, %v5530
  %v5595 = vpack.c.b16 %v5535, %v5531
  %v5596 = vpack.c.b16 %v5536, %v5532
  %v5597 = vpack.c.b16 %v5537, %v5533
  %v5598 = vpack.c.b16 %v5542, %v5538
  %v5599 = vpack.c.b16 %v5543, %v5539
  %v5600 = vpack.c.b16 %v5544, %v5540
  %v5601 = vpack.c.b16 %v5545, %v5541
  %v5602 = vpack.c.b16 %v5550, %v5546
  %v5603 = vpack.c.b16 %v5551, %v5547
  %v5604 = vpack.c.b16 %v5552, %v5548
  %v5605 = vpack.c.b16 %v5553, %v5549
  %v5606 = vpack.c.b16 %v5558, %v5554
  %v5607 = vpack.c.b16 %v5559, %v5555
  %v5608 = vpack.c.b16 %v5560, %v5556
  %v5609 = vpack.c.b16 %v5561, %v5557
  %v5610 = vpack.c.b16 %v5566, %v5562
  %v5611 = vpack.c.b16 %v5567, %v5563
  %v5612 = vpack.c.b16 %v5568, %v5564
  %v5613 = vpack.c.b16 %v5569, %v5565
  %v5614 = vpack.c.b16 %v5574, %v5570
  %v5615 = vpack.c.b16 %v5575, %v5571
  %v5616 = vpack.c.b16 %v5576, %v5572
  %v5617 = vpack.c.b16 %v5577, %v5573
  %v5618 = vpack.c.b16 %v5582, %v5578
  %v5619 = vpack.c.b16 %v5583, %v5579
  %v5620 = vpack.c.b16 %v5584, %v5580
  %v5621 = vpack.c.b16 %v5585, %v5581
  %v5622 = vpack.c.b16 %v5590, %v5586
  %v5623 = vpack.c.b16 %v5591, %v5587
  %v5624 = vpack.c.b16 %v5592, %v5588
  %v5625 = vpack.c.b16 %v5593, %v5589
  %v5722 = vunpack.c.l.b16 %v5427
  %v5723 = vunpack.c.l.b16 %v5428
  %v5724 = vunpack.c.l.b16 %v5429
  %v5725 = vunpack.c.l.b16 %v5430
  %v5726 = vunpack.c.l.b16 %v5431
  %v5727 = vunpack.c.l.b16 %v5432
  %v5728 = vunpack.c.l.b16 %v5433
  %v5729 = vunpack.c.l.b16 %v5434
  %v5730 = vunpack.c.l.b16 %v5435
  %v5731 = vunpack.c.l.b16 %v5436
  %v5732 = vunpack.c.l.b16 %v5437
  %v5733 = vunpack.c.l.b16 %v5438
  %v5734 = vunpack.c.l.b16 %v5439
  %v5735 = vunpack.c.l.b16 %v5440
  %v5736 = vunpack.c.l.b16 %v5441
  %v5737 = vunpack.c.l.b16 %v5442
  %v5738 = vunpack.c.l.b16 %v5443
  %v5739 = vunpack.c.l.b16 %v5444
  %v5740 = vunpack.c.l.b16 %v5445
  %v5741 = vunpack.c.l.b16 %v5446
  %v5742 = vunpack.c.l.b16 %v5447
  %v5743 = vunpack.c.l.b16 %v5448
  %v5744 = vunpack.c.l.b16 %v5449
  %v5745 = vunpack.c.l.b16 %v5450
  %v5746 = vunpack.c.l.b16 %v5451
  %v5747 = vunpack.c.l.b16 %v5452
  %v5748 = vunpack.c.l.b16 %v5453
  %v5749 = vunpack.c.l.b16 %v5454
  %v5750 = vunpack.c.l.b16 %v5455
  %v5751 = vunpack.c.l.b16 %v5456
  %v5752 = vunpack.c.l.b16 %v5457
  %v5753 = vunpack.c.l.b16 %v5458
  %v5754 = vunpack.c.l.b16 %v5459
  %v5755 = vunpack.c.l.b16 %v5460
  %v5756 = vunpack.c.l.b16 %v5461
  %v5757 = vunpack.c.l.b16 %v5462
  %v5758 = vunpack.c.l.b16 %v5463
  %v5759 = vunpack.c.l.b16 %v5464
  %v5760 = vunpack.c.l.b16 %v5465
  %v5761 = vunpack.c.l.b16 %v5466
  %v5762 = vunpack.c.l.b16 %v5467
  %v5763 = vunpack.c.l.b16 %v5468
  %v5764 = vunpack.c.l.b16 %v5469
  %v5765 = vunpack.c.l.b16 %v5470
  %v5766 = vunpack.c.l.b16 %v5471
  %v5767 = vunpack.c.l.b16 %v5472
  %v5768 = vunpack.c.l.b16 %v5473
  %v5769 = vunpack.c.l.b16 %v5474
  %v5770 = vunpack.c.l.b16 %v5475
  %v5771 = vunpack.c.l.b16 %v5476
  %v5772 = vunpack.c.l.b16 %v5477
  %v5773 = vunpack.c.l.b16 %v5478
  %v5774 = vunpack.c.l.b16 %v5479
  %v5775 = vunpack.c.l.b16 %v5480
  %v5776 = vunpack.c.l.b16 %v5481
  %v5777 = vunpack.c.l.b16 %v5482
  %v5778 = vunpack.c.l.b16 %v5483
  %v5779 = vunpack.c.l.b16 %v5484
  %v5780 = vunpack.c.l.b16 %v5485
  %v5781 = vunpack.c.l.b16 %v5486
  %v5782 = vunpack.c.l.b16 %v5487
  %v5783 = vunpack.c.l.b16 %v5488
  %v5784 = vunpack.c.l.b16 %v5489
  %v5785 = vunpack.c.l.b16 %v5490
  %v5786 = vpack.c.b16 %v5723, %v5722
  %v5787 = vpack.c.b16 %v5725, %v5724
  %v5788 = vpack.c.b16 %v5727, %v5726
  %v5789 = vpack.c.b16 %v5729, %v5728
  %v5790 = vpack.c.b16 %v5731, %v5730
  %v5791 = vpack.c.b16 %v5733, %v5732
  %v5792 = vpack.c.b16 %v5735, %v5734
  %v5793 = vpack.c.b16 %v5737, %v5736
  %v5794 = vpack.c.b16 %v5739, %v5738
  %v5795 = vpack.c.b16 %v5741, %v5740
  %v5796 = vpack.c.b16 %v5743, %v5742
  %v5797 = vpack.c.b16 %v5745, %v5744
  %v5798 = vpack.c.b16 %v5747, %v5746
  %v5799 = vpack.c.b16 %v5749, %v5748
  %v5800 = vpack.c.b16 %v5751, %v5750
  %v5801 = vpack.c.b16 %v5753, %v5752
  %v5802 = vpack.c.b16 %v5755, %v5754
  %v5803 = vpack.c.b16 %v5757, %v5756
  %v5804 = vpack.c.b16 %v5759, %v5758
  %v5805 = vpack.c.b16 %v5761, %v5760
  %v5806 = vpack.c.b16 %v5763, %v5762
  %v5807 = vpack.c.b16 %v5765, %v5764
  %v5808 = vpack.c.b16 %v5767, %v5766
  %v5809 = vpack.c.b16 %v5769, %v5768
  %v5810 = vpack.c.b16 %v5771, %v5770
  %v5811 = vpack.c.b16 %v5773, %v5772
  %v5812 = vpack.c.b16 %v5775, %v5774
  %v5813 = vpack.c.b16 %v5777, %v5776
  %v5814 = vpack.c.b16 %v5779, %v5778
  %v5815 = vpack.c.b16 %v5781, %v5780
  %v5816 = vpack.c.b16 %v5783, %v5782
  %v5817 = vpack.c.b16 %v5785, %v5784
  %5850 = vmatprep.subr.bf16.mxu0 0
  %5851 = vmatpush1.bf16.msra.mxu0 %v5786
  %5852 = vmatprep.subr.bf16.mxu0 0
  %5853 = vmatpush1.bf16.msra.mxu0 %v5787
  %5854 = vmatprep.subr.bf16.mxu0 0
  %5855 = vmatpush1.bf16.msra.mxu0 %v5788
  %5856 = vmatprep.subr.bf16.mxu0 0
  %5857 = vmatpush1.bf16.msra.mxu0 %v5789
  %5858 = vmatprep.subr.bf16.mxu0 0
  %5859 = vmatpush1.bf16.msra.mxu0 %v5790
  %5860 = vmatprep.subr.bf16.mxu0 0
  %5861 = vmatpush1.bf16.msra.mxu0 %v5791
  %5862 = vmatprep.subr.bf16.mxu0 0
  %5863 = vmatpush1.bf16.msra.mxu0 %v5792
  %5864 = vmatprep.subr.bf16.mxu0 0
  %5865 = vmatpush1.bf16.msra.mxu0 %v5793
  %5866 = vmatprep.subr.bf16.mxu0 0
  %5867 = vmatpush1.bf16.msra.mxu0 %v5794
  %5868 = vmatprep.subr.bf16.mxu0 0
  %5869 = vmatpush1.bf16.msra.mxu0 %v5795
  %5870 = vmatprep.subr.bf16.mxu0 0
  %5871 = vmatpush1.bf16.msra.mxu0 %v5796
  %5872 = vmatprep.subr.bf16.mxu0 0
  %5873 = vmatpush1.bf16.msra.mxu0 %v5797
  %5874 = vmatprep.subr.bf16.mxu0 0
  %5875 = vmatpush1.bf16.msra.mxu0 %v5798
  %5876 = vmatprep.subr.bf16.mxu0 0
  %5877 = vmatpush1.bf16.msra.mxu0 %v5799
  %5878 = vmatprep.subr.bf16.mxu0 0
  %5879 = vmatpush1.bf16.msra.mxu0 %v5800
  %5880 = vmatprep.subr.bf16.mxu0 0
  %5881 = vmatpush1.bf16.msra.mxu0 %v5801
  %5882 = vmatprep.mubr.bf16.mxu0 %v5595
  %5883 = vmatmul.mubr.bf16.gmra.mrb[0].mxu0 %v5594
  %v5884 = vpop.f32.mrb[0].mxu0
  %v5885 = vadd.f32 %v5496, %v5884
  %v5886 = vpop.f32.mrb[0].mxu0
  %v5887 = vpop.f32.mrb[0].mxu0
  %v5888 = vadd.f32 %v5496, %v5887
  %v5889 = vpop.f32.mrb[0].mxu0
  %5890 = vmatprep.mubr.bf16.mxu0 %v5599
  %5891 = vmatmul.mubr.bf16.gmra.mrb[0].mxu0 %v5598
  %v5892 = vpop.f32.mrb[0].mxu0
  %v5893 = vadd.f32 %v5496, %v5892
  %v5894 = vpop.f32.mrb[0].mxu0
  %v5895 = vpop.f32.mrb[0].mxu0
  %v5896 = vadd.f32 %v5496, %v5895
  %v5897 = vpop.f32.mrb[0].mxu0
  %5898 = vmatprep.mubr.bf16.mxu0 %v5603
  %5899 = vmatmul.mubr.bf16.gmra.mrb[0].mxu0 %v5602
  %v5900 = vpop.f32.mrb[0].mxu0
  %v5901 = vadd.f32 %v5496, %v5900
  %v5902 = vpop.f32.mrb[0].mxu0
  %v5903 = vpop.f32.mrb[0].mxu0
  %v5904 = vadd.f32 %v5496, %v5903
  %v5905 = vpop.f32.mrb[0].mxu0
  %5906 = vmatprep.mubr.bf16.mxu0 %v5607
  %5907 = vmatmul.mubr.bf16.gmra.mrb[0].mxu0 %v5606
  %v5908 = vpop.f32.mrb[0].mxu0
  %v5909 = vadd.f32 %v5496, %v5908
  %v5910 = vpop.f32.mrb[0].mxu0
  %v5911 = vpop.f32.mrb[0].mxu0
  %v5912 = vadd.f32 %v5496, %v5911
  %v5913 = vpop.f32.mrb[0].mxu0
  %5914 = vmatprep.mubr.bf16.mxu0 %v5611
  %5915 = vmatmul.mubr.bf16.gmra.mrb[0].mxu0 %v5610
  %v5916 = vpop.f32.mrb[0].mxu0
  %v5917 = vadd.f32 %v5496, %v5916
  %v5918 = vpop.f32.mrb[0].mxu0
  %v5919 = vpop.f32.mrb[0].mxu0
  %v5920 = vadd.f32 %v5496, %v5919
  %v5921 = vpop.f32.mrb[0].mxu0
  %5922 = vmatprep.mubr.bf16.mxu0 %v5615
  %5923 = vmatmul.mubr.bf16.gmra.mrb[0].mxu0 %v5614
  %v5924 = vpop.f32.mrb[0].mxu0
  %v5925 = vadd.f32 %v5496, %v5924
  %v5926 = vpop.f32.mrb[0].mxu0
  %v5927 = vpop.f32.mrb[0].mxu0
  %v5928 = vadd.f32 %v5496, %v5927
  %v5929 = vpop.f32.mrb[0].mxu0
  %5930 = vmatprep.mubr.bf16.mxu0 %v5619
  %5931 = vmatmul.mubr.bf16.gmra.mrb[0].mxu0 %v5618
  %v5932 = vpop.f32.mrb[0].mxu0
  %v5933 = vadd.f32 %v5496, %v5932
  %v5934 = vpop.f32.mrb[0].mxu0
  %v5935 = vpop.f32.mrb[0].mxu0
  %v5936 = vadd.f32 %v5496, %v5935
  %v5937 = vpop.f32.mrb[0].mxu0
  %5938 = vmatprep.mubr.bf16.mxu0 %v5623
  %5939 = vmatmul.mubr.bf16.gmra.mrb[0].mxu0 %v5622
  %v5940 = vpop.f32.mrb[0].mxu0
  %v5941 = vadd.f32 %v5496, %v5940
  %v5942 = vpop.f32.mrb[0].mxu0
  %v5943 = vpop.f32.mrb[0].mxu0
  %v5944 = vadd.f32 %v5496, %v5943
  %v5945 = vpop.f32.mrb[0].mxu0
  %5946 = vdwg.mxu0
  %5947 = vmatprep.subr.bf16.mxu0 0
  %5948 = vmatpush1.bf16.msra.mxu0 %v5802
  %5949 = vmatprep.subr.bf16.mxu0 0
  %5950 = vmatpush1.bf16.msra.mxu0 %v5803
  %5951 = vmatprep.subr.bf16.mxu0 0
  %5952 = vmatpush1.bf16.msra.mxu0 %v5804
  %5953 = vmatprep.subr.bf16.mxu0 0
  %5954 = vmatpush1.bf16.msra.mxu0 %v5805
  %5955 = vmatprep.subr.bf16.mxu0 0
  %5956 = vmatpush1.bf16.msra.mxu0 %v5806
  %5957 = vmatprep.subr.bf16.mxu0 0
  %5958 = vmatpush1.bf16.msra.mxu0 %v5807
  %5959 = vmatprep.subr.bf16.mxu0 0
  %5960 = vmatpush1.bf16.msra.mxu0 %v5808
  %5961 = vmatprep.subr.bf16.mxu0 0
  %5962 = vmatpush1.bf16.msra.mxu0 %v5809
  %5963 = vmatprep.subr.bf16.mxu0 0
  %5964 = vmatpush1.bf16.msra.mxu0 %v5810
  %5965 = vmatprep.subr.bf16.mxu0 0
  %5966 = vmatpush1.bf16.msra.mxu0 %v5811
  %5967 = vmatprep.subr.bf16.mxu0 0
  %5968 = vmatpush1.bf16.msra.mxu0 %v5812
  %5969 = vmatprep.subr.bf16.mxu0 0
  %5970 = vmatpush1.bf16.msra.mxu0 %v5813
  %5971 = vmatprep.subr.bf16.mxu0 0
  %5972 = vmatpush1.bf16.msra.mxu0 %v5814
  %5973 = vmatprep.subr.bf16.mxu0 0
  %5974 = vmatpush1.bf16.msra.mxu0 %v5815
  %5975 = vmatprep.subr.bf16.mxu0 0
  %5976 = vmatpush1.bf16.msra.mxu0 %v5816
  %5977 = vmatprep.subr.bf16.mxu0 0
  %5978 = vmatpush1.bf16.msra.mxu0 %v5817
  %5979 = vmatprep.mubr.bf16.mxu0 %v5597
  %5980 = vmatmul.mubr.bf16.gmra.mrb[0].mxu0 %v5596
  %v5981 = vpop.f32.mrb[0].mxu0
  %v5982 = vadd.f32 %v5885, %v5981
  %v5983 = vpop.f32.mrb[0].mxu0
  %v5984 = vpop.f32.mrb[0].mxu0
  %v5985 = vadd.f32 %v5888, %v5984
  %v5986 = vpop.f32.mrb[0].mxu0
  %5987 = vmatprep.mubr.bf16.mxu0 %v5601
  %5988 = vmatmul.mubr.bf16.gmra.mrb[0].mxu0 %v5600
  %v5989 = vpop.f32.mrb[0].mxu0
  %v5990 = vadd.f32 %v5893, %v5989
  %v5991 = vpop.f32.mrb[0].mxu0
  %v5992 = vpop.f32.mrb[0].mxu0
  %v5993 = vadd.f32 %v5896, %v5992
  %v5994 = vpop.f32.mrb[0].mxu0
  %5995 = vmatprep.mubr.bf16.mxu0 %v5605
  %5996 = vmatmul.mubr.bf16.gmra.mrb[0].mxu0 %v5604
  %v5997 = vpop.f32.mrb[0].mxu0
  %v5998 = vadd.f32 %v5901, %v5997
  %v5999 = vpop.f32.mrb[0].mxu0
  %v6000 = vpop.f32.mrb[0].mxu0
  %v6001 = vadd.f32 %v5904, %v6000
  %v6002 = vpop.f32.mrb[0].mxu0
  %6003 = vmatprep.mubr.bf16.mxu0 %v5609
  %6004 = vmatmul.mubr.bf16.gmra.mrb[0].mxu0 %v5608
  %v6005 = vpop.f32.mrb[0].mxu0
  %v6006 = vadd.f32 %v5909, %v6005
  %v6007 = vpop.f32.mrb[0].mxu0
  %v6008 = vpop.f32.mrb[0].mxu0
  %v6009 = vadd.f32 %v5912, %v6008
  %v6010 = vpop.f32.mrb[0].mxu0
  %6011 = vmatprep.mubr.bf16.mxu0 %v5613
  %6012 = vmatmul.mubr.bf16.gmra.mrb[0].mxu0 %v5612
  %v6013 = vpop.f32.mrb[0].mxu0
  %v6014 = vadd.f32 %v5917, %v6013
  %v6015 = vpop.f32.mrb[0].mxu0
  %v6016 = vpop.f32.mrb[0].mxu0
  %v6017 = vadd.f32 %v5920, %v6016
  %v6018 = vpop.f32.mrb[0].mxu0
  %6019 = vmatprep.mubr.bf16.mxu0 %v5617
  %6020 = vmatmul.mubr.bf16.gmra.mrb[0].mxu0 %v5616
  %v6021 = vpop.f32.mrb[0].mxu0
  %v6022 = vadd.f32 %v5925, %v6021
  %v6023 = vpop.f32.mrb[0].mxu0
  %v6024 = vpop.f32.mrb[0].mxu0
  %v6025 = vadd.f32 %v5928, %v6024
  %v6026 = vpop.f32.mrb[0].mxu0
  %6027 = vmatprep.mubr.bf16.mxu0 %v5621
  %6028 = vmatmul.mubr.bf16.gmra.mrb[0].mxu0 %v5620
  %v6029 = vpop.f32.mrb[0].mxu0
  %v6030 = vadd.f32 %v5933, %v6029
  %v6031 = vpop.f32.mrb[0].mxu0
  %v6032 = vpop.f32.mrb[0].mxu0
  %v6033 = vadd.f32 %v5936, %v6032
  %v6034 = vpop.f32.mrb[0].mxu0
  %6035 = vmatprep.mubr.bf16.mxu0 %v5625
  %6036 = vmatmul.mubr.bf16.gmra.mrb[0].mxu0 %v5624
  %v6037 = vpop.f32.mrb[0].mxu0
  %v6038 = vadd.f32 %v5941, %v6037
  %v6039 = vpop.f32.mrb[0].mxu0
  %v6040 = vpop.f32.mrb[0].mxu0
  %v6041 = vadd.f32 %v5944, %v6040
  %v6042 = vpop.f32.mrb[0].mxu0
  %6043 = vdwg.mxu0
  %v6044 = vmax.f32 %v5982, 0.0
  %v6045 = vmax.f32 %v5985, 0.0
  %v6046 = vmax.f32 %v5990, 0.0
  %v6047 = vmax.f32 %v5993, 0.0
  %v6048 = vmax.f32 %v5998, 0.0
  %v6049 = vmax.f32 %v6001, 0.0
  %v6050 = vmax.f32 %v6006, 0.0
  %v6051 = vmax.f32 %v6009, 0.0
  %v6052 = vmax.f32 %v6014, 0.0
  %v6053 = vmax.f32 %v6017, 0.0
  %v6054 = vmax.f32 %v6022, 0.0
  %v6055 = vmax.f32 %v6025, 0.0
  %v6056 = vmax.f32 %v6030, 0.0
  %v6057 = vmax.f32 %v6033, 0.0
  %v6058 = vmax.f32 %v6038, 0.0
  %v6059 = vmax.f32 %v6041, 0.0
  %v6060 = vpack.c.bf16 %v6045, %v6044
  %v6061 = vpack.c.bf16 %v6047, %v6046
  %v6062 = vpack.c.bf16 %v6049, %v6048
  %v6063 = vpack.c.bf16 %v6051, %v6050
  %v6064 = vpack.c.bf16 %v6053, %v6052
  %v6065 = vpack.c.bf16 %v6055, %v6054
  %v6066 = vpack.c.bf16 %v6057, %v6056
  %v6067 = vpack.c.bf16 %v6059, %v6058
  %6068 = vst.msk [vmem:[#allocation8] sm:$0xff] %vm1017, %v6060
  %6069 = vst.msk [vmem:[#allocation8 + $0x8] sm:$0xff] %vm1017, %v6061
  %6070 = vst.msk [vmem:[#allocation8 + $0x10] sm:$0xff] %vm1017, %v6062
  %6071 = vst.msk [vmem:[#allocation8 + $0x18] sm:$0xff] %vm1017, %v6063
  %6072 = vst.msk [vmem:[#allocation8 + $0x20] sm:$0xff] %vm1017, %v6064
  %6073 = vst.msk [vmem:[#allocation8 + $0x28] sm:$0xff] %vm1017, %v6065
  %6074 = vst.msk [vmem:[#allocation8 + $0x30] sm:$0xff] %vm1017, %v6066
  %6075 = vst.msk [vmem:[#allocation8 + $0x38] sm:$0xff] %vm1017, %v6067
  %v6076 = vld [vmem:[%s25] sm:$0xf]
  %v6077 = vld [vmem:[%s25 + $0x4] sm:$0xf]
  %v6078 = vld [vmem:[%s25 + $0x8] sm:$0xf]
  %v6079 = vld [vmem:[%s25 + $0xc] sm:$0xf]
  %v6080 = vld [vmem:[%s25 + $0x10] sm:$0xf]
  %v6081 = vld [vmem:[%s25 + $0x14] sm:$0xf]
  %v6082 = vld [vmem:[%s25 + $0x18] sm:$0xf]
  %v6083 = vld [vmem:[%s25 + $0x1c] sm:$0xf]
  %v6084 = vld [vmem:[%s25 + $0x20] sm:$0xf]
  %v6085 = vld [vmem:[%s25 + $0x24] sm:$0xf]
  %v6086 = vld [vmem:[%s25 + $0x28] sm:$0xf]
  %v6087 = vld [vmem:[%s25 + $0x2c] sm:$0xf]
  %v6088 = vld [vmem:[%s25 + $0x30] sm:$0xf]
  %v6089 = vld [vmem:[%s25 + $0x34] sm:$0xf]
  %v6090 = vld [vmem:[%s25 + $0x38] sm:$0xf]
  %v6091 = vld [vmem:[%s25 + $0x3c] sm:$0xf]
  %v6092 = vld [vmem:[%s25 + $0x40] sm:$0xf]
  %v6093 = vld [vmem:[%s25 + $0x44] sm:$0xf]
  %v6094 = vld [vmem:[#allocation8] sm:$0xff]
  %v6095 = vld [vmem:[#allocation8 + $0x8] sm:$0xff]
  %v6096 = vld [vmem:[#allocation8 + $0x10] sm:$0xff]
  %v6097 = vld [vmem:[#allocation8 + $0x18] sm:$0xff]
  %v6116 = vunpack.c.l.b16 %v6076
  %v6117 = vunpack.c.l.b16 %v6077
  %v6118 = vunpack.c.l.b16 %v6078
  %v6119 = vunpack.c.l.b16 %v6079
  %v6120 = vunpack.c.l.b16 %v6080
  %v6121 = vunpack.c.l.b16 %v6081
  %v6122 = vunpack.c.l.b16 %v6082
  %v6123 = vunpack.c.l.b16 %v6083
  %v6124 = vunpack.c.l.b16 %v6084
  %v6125 = vunpack.c.l.b16 %v6085
  %v6126 = vunpack.c.l.b16 %v6086
  %v6127 = vunpack.c.l.b16 %v6087
  %v6128 = vunpack.c.l.b16 %v6088
  %v6129 = vunpack.c.l.b16 %v6089
  %v6130 = vunpack.c.l.b16 %v6090
  %v6131 = vunpack.c.l.b16 %v6091
  %v6132 = vunpack.c.l.b16 %v6092
  %v6133 = vunpack.c.l.b16 %v6093
  %v6134 = vpack.c.b16 %v6117, %v6116
  %v6135 = vpack.c.b16 %v6119, %v6118
  %v6136 = vpack.c.b16 %v6121, %v6120
  %v6137 = vpack.c.b16 %v6123, %v6122
  %v6138 = vpack.c.b16 %v6125, %v6124
  %v6139 = vpack.c.b16 %v6127, %v6126
  %v6140 = vpack.c.b16 %v6129, %v6128
  %v6141 = vpack.c.b16 %v6131, %v6130
  %v6142 = vpack.c.b16 %v6133, %v6132
  %v6144 = vsel %vm3535, %v6134, 0
  %v6147 = vsel %vm3535, %v6135, 0
  %v6150 = vsel %vm3535, %v6136, 0
  %v6153 = vsel %vm3535, %v6137, 0
  %v6156 = vsel %vm3535, %v6138, 0
  %v6159 = vsel %vm3535, %v6139, 0
  %v6162 = vsel %vm3535, %v6140, 0
  %v6165 = vsel %vm3535, %v6141, 0
  %v6168 = vsel %vm3535, %v6142, 0
  %6170 = vmatprep.subr.bf16.mxu0 0
  %6171 = vmatpush1.bf16.msra.mxu0 %v6094
  %6172 = vmatprep.subr.bf16.mxu0 0
  %6173 = vmatpush1.bf16.msra.mxu0 %v6095
  %6174 = vmatprep.subr.bf16.mxu0 0
  %6175 = vmatpush1.bf16.msra.mxu0 %v6096
  %6176 = vmatprep.subr.bf16.mxu0 0
  %6177 = vmatpush1.bf16.msra.mxu0 %v6097
  %6178 = vmatprep.subr.bf16.mxu0 0
  %6179 = vmatpush1.bf16.msra.mxu0 0
  %6180 = vmatprep.subr.bf16.mxu0 0
  %6181 = vmatpush1.bf16.msra.mxu0 0
  %6182 = vmatprep.subr.bf16.mxu0 0
  %6183 = vmatpush1.bf16.msra.mxu0 0
  %6184 = vmatprep.subr.bf16.mxu0 0
  %6185 = vmatpush1.bf16.msra.mxu0 0
  %6186 = vmatprep.subr.bf16.mxu0 0
  %6187 = vmatpush1.bf16.msra.mxu0 0
  %6188 = vmatprep.subr.bf16.mxu0 0
  %6189 = vmatpush1.bf16.msra.mxu0 0
  %6190 = vmatprep.subr.bf16.mxu0 0
  %6191 = vmatpush1.bf16.msra.mxu0 0
  %6192 = vmatprep.subr.bf16.mxu0 0
  %6193 = vmatpush1.bf16.msra.mxu0 0
  %6194 = vmatprep.subr.bf16.mxu0 0
  %6195 = vmatpush1.bf16.msra.mxu0 0
  %6196 = vmatprep.subr.bf16.mxu0 0
  %6197 = vmatpush1.bf16.msra.mxu0 0
  %6198 = vmatprep.subr.bf16.mxu0 0
  %6199 = vmatpush1.bf16.msra.mxu0 0
  %6200 = vmatprep.subr.bf16.mxu0 0
  %6201 = vmatpush1.bf16.msra.mxu0 0
  %6202 = vmatprep.mubr.bf16.mxu0 0
  %6203 = vmatmul.mubr.bf16.gmra.mrb[0].mxu0 %v6144
  %v6204 = vpop.f32.mrb[0].mxu0
  %v6205 = vadd.f32 0.0, %v6204
  %v6206 = vpop.f32.mrb[0].mxu0
  %v6207 = vpop.f32.mrb[0].mxu0
  %v6208 = vadd.f32 0.0, %v6207
  %v6209 = vpop.f32.mrb[0].mxu0
  %6210 = vmatprep.mubr.bf16.mxu0 0
  %6211 = vmatmul.mubr.bf16.gmra.mrb[0].mxu0 %v6147
  %v6212 = vpop.f32.mrb[0].mxu0
  %v6213 = vadd.f32 0.0, %v6212
  %v6214 = vpop.f32.mrb[0].mxu0
  %v6215 = vpop.f32.mrb[0].mxu0
  %v6216 = vadd.f32 0.0, %v6215
  %v6217 = vpop.f32.mrb[0].mxu0
  %6218 = vmatprep.mubr.bf16.mxu0 0
  %6219 = vmatmul.mubr.bf16.gmra.mrb[0].mxu0 %v6150
  %v6220 = vpop.f32.mrb[0].mxu0
  %v6221 = vadd.f32 0.0, %v6220
  %v6222 = vpop.f32.mrb[0].mxu0
  %v6223 = vpop.f32.mrb[0].mxu0
  %v6224 = vadd.f32 0.0, %v6223
  %v6225 = vpop.f32.mrb[0].mxu0
  %6226 = vmatprep.mubr.bf16.mxu0 0
  %6227 = vmatmul.mubr.bf16.gmra.mrb[0].mxu0 %v6153
  %v6228 = vpop.f32.mrb[0].mxu0
  %v6229 = vadd.f32 0.0, %v6228
  %v6230 = vpop.f32.mrb[0].mxu0
  %v6231 = vpop.f32.mrb[0].mxu0
  %v6232 = vadd.f32 0.0, %v6231
  %v6233 = vpop.f32.mrb[0].mxu0
  %6234 = vmatprep.mubr.bf16.mxu0 0
  %6235 = vmatmul.mubr.bf16.gmra.mrb[0].mxu0 %v6156
  %v6236 = vpop.f32.mrb[0].mxu0
  %v6237 = vadd.f32 0.0, %v6236
  %v6238 = vpop.f32.mrb[0].mxu0
  %v6239 = vpop.f32.mrb[0].mxu0
  %v6240 = vadd.f32 0.0, %v6239
  %v6241 = vpop.f32.mrb[0].mxu0
  %6242 = vmatprep.mubr.bf16.mxu0 0
  %6243 = vmatmul.mubr.bf16.gmra.mrb[0].mxu0 %v6159
  %v6244 = vpop.f32.mrb[0].mxu0
  %v6245 = vadd.f32 0.0, %v6244
  %v6246 = vpop.f32.mrb[0].mxu0
  %v6247 = vpop.f32.mrb[0].mxu0
  %v6248 = vadd.f32 0.0, %v6247
  %v6249 = vpop.f32.mrb[0].mxu0
  %6250 = vmatprep.mubr.bf16.mxu0 0
  %6251 = vmatmul.mubr.bf16.gmra.mrb[0].mxu0 %v6162
  %v6252 = vpop.f32.mrb[0].mxu0
  %v6253 = vadd.f32 0.0, %v6252
  %v6254 = vpop.f32.mrb[0].mxu0
  %v6255 = vpop.f32.mrb[0].mxu0
  %v6256 = vadd.f32 0.0, %v6255
  %v6257 = vpop.f32.mrb[0].mxu0
  %6258 = vmatprep.mubr.bf16.mxu0 0
  %6259 = vmatmul.mubr.bf16.gmra.mrb[0].mxu0 %v6165
  %v6260 = vpop.f32.mrb[0].mxu0
  %v6261 = vadd.f32 0.0, %v6260
  %v6262 = vpop.f32.mrb[0].mxu0
  %v6263 = vpop.f32.mrb[0].mxu0
  %v6264 = vadd.f32 0.0, %v6263
  %v6265 = vpop.f32.mrb[0].mxu0
  %6266 = vmatprep.mubr.bf16.mxu0 0
  %6267 = vmatmul.mubr.bf16.gmra.mrb[0].mxu0 %v6168
  %v6268 = vpop.f32.mrb[0].mxu0
  %v6269 = vadd.f32 0.0, %v6268
  %v6270 = vpop.f32.mrb[0].mxu0
  %v6271 = vpop.f32.mrb[0].mxu0
  %v6272 = vadd.f32 0.0, %v6271
  %v6273 = vpop.f32.mrb[0].mxu0
  %6274 = vdwg.mxu0
  %v6275 = vpack.c.bf16 %v6208, %v6205
  %v6276 = vpack.c.bf16 %v6216, %v6213
  %v6277 = vpack.c.bf16 %v6224, %v6221
  %v6278 = vpack.c.bf16 %v6232, %v6229
  %v6279 = vpack.c.bf16 %v6240, %v6237
  %v6280 = vpack.c.bf16 %v6248, %v6245
  %v6281 = vpack.c.bf16 %v6256, %v6253
  %v6282 = vpack.c.bf16 %v6264, %v6261
  %v6283 = vpack.c.bf16 %v6272, %v6269
  %6284 = vst.msk [vmem:[#allocation9] sm:$0xff] %vm1017, %v6275
  %6286 = vrot.lane.b32.xlu0 %v6276, 32
  %v6287 = vpop.permute.xlu0 %6286
  %6289 = vst.msk [vmem:[#allocation9] sm:$0xff] %vm2216, %v6287
  %6291 = vrot.lane.b32.xlu0 %v6277, 64
  %v6292 = vpop.permute.xlu0 %6291
  %6294 = vst.msk [vmem:[#allocation9] sm:$0xff] %vm2232, %v6292
  %6296 = vrot.lane.b32.xlu0 %v6278, 96
  %v6297 = vpop.permute.xlu0 %6296
  %6299 = vst.msk [vmem:[#allocation9] sm:$0xff] %vm2248, %v6297
  %6300 = vst.msk [vmem:[#allocation9 + $0x8] sm:$0xff] %vm1017, %v6279
  %6302 = vrot.lane.b32.xlu0 %v6280, 32
  %v6303 = vpop.permute.xlu0 %6302
  %6305 = vst.msk [vmem:[#allocation9 + $0x8] sm:$0xff] %vm2216, %v6303
  %6307 = vrot.lane.b32.xlu0 %v6281, 64
  %v6308 = vpop.permute.xlu0 %6307
  %6310 = vst.msk [vmem:[#allocation9 + $0x8] sm:$0xff] %vm2232, %v6308
  %6312 = vrot.lane.b32.xlu0 %v6282, 96
  %v6313 = vpop.permute.xlu0 %6312
  %6315 = vst.msk [vmem:[#allocation9 + $0x8] sm:$0xff] %vm2248, %v6313
  %6316 = vst.msk [vmem:[#allocation9 + $0x10] sm:$0xff] %vm1017, %v6283
  %v6317 = vld [vmem:[#allocation8 + $0x20] sm:$0xff]
  %v6318 = vld [vmem:[#allocation8 + $0x28] sm:$0xff]
  %v6319 = vld [vmem:[#allocation8 + $0x30] sm:$0xff]
  %v6320 = vld [vmem:[#allocation8 + $0x38] sm:$0xff]
  %6321 = vmatprep.subr.bf16.mxu0 0
  %6322 = vmatpush1.bf16.msra.mxu0 %v6317
  %6323 = vmatprep.subr.bf16.mxu0 0
  %6324 = vmatpush1.bf16.msra.mxu0 %v6318
  %6325 = vmatprep.subr.bf16.mxu0 0
  %6326 = vmatpush1.bf16.msra.mxu0 %v6319
  %6327 = vmatprep.subr.bf16.mxu0 0
  %6328 = vmatpush1.bf16.msra.mxu0 %v6320
  %6329 = vmatprep.subr.bf16.mxu0 0
  %6330 = vmatpush1.bf16.msra.mxu0 0
  %6331 = vmatprep.subr.bf16.mxu0 0
  %6332 = vmatpush1.bf16.msra.mxu0 0
  %6333 = vmatprep.subr.bf16.mxu0 0
  %6334 = vmatpush1.bf16.msra.mxu0 0
  %6335 = vmatprep.subr.bf16.mxu0 0
  %6336 = vmatpush1.bf16.msra.mxu0 0
  %6337 = vmatprep.subr.bf16.mxu0 0
  %6338 = vmatpush1.bf16.msra.mxu0 0
  %6339 = vmatprep.subr.bf16.mxu0 0
  %6340 = vmatpush1.bf16.msra.mxu0 0
  %6341 = vmatprep.subr.bf16.mxu0 0
  %6342 = vmatpush1.bf16.msra.mxu0 0
  %6343 = vmatprep.subr.bf16.mxu0 0
  %6344 = vmatpush1.bf16.msra.mxu0 0
  %6345 = vmatprep.subr.bf16.mxu0 0
  %6346 = vmatpush1.bf16.msra.mxu0 0
  %6347 = vmatprep.subr.bf16.mxu0 0
  %6348 = vmatpush1.bf16.msra.mxu0 0
  %6349 = vmatprep.subr.bf16.mxu0 0
  %6350 = vmatpush1.bf16.msra.mxu0 0
  %6351 = vmatprep.subr.bf16.mxu0 0
  %6352 = vmatpush1.bf16.msra.mxu0 0
  %6353 = vmatprep.mubr.bf16.mxu0 0
  %6354 = vmatmul.mubr.bf16.gmra.mrb[0].mxu0 %v6144
  %v6355 = vpop.f32.mrb[0].mxu0
  %v6356 = vadd.f32 0.0, %v6355
  %v6357 = vpop.f32.mrb[0].mxu0
  %v6358 = vpop.f32.mrb[0].mxu0
  %v6359 = vadd.f32 0.0, %v6358
  %v6360 = vpop.f32.mrb[0].mxu0
  %6361 = vmatprep.mubr.bf16.mxu0 0
  %6362 = vmatmul.mubr.bf16.gmra.mrb[0].mxu0 %v6147
  %v6363 = vpop.f32.mrb[0].mxu0
  %v6364 = vadd.f32 0.0, %v6363
  %v6365 = vpop.f32.mrb[0].mxu0
  %v6366 = vpop.f32.mrb[0].mxu0
  %v6367 = vadd.f32 0.0, %v6366
  %v6368 = vpop.f32.mrb[0].mxu0
  %6369 = vmatprep.mubr.bf16.mxu0 0
  %6370 = vmatmul.mubr.bf16.gmra.mrb[0].mxu0 %v6150
  %v6371 = vpop.f32.mrb[0].mxu0
  %v6372 = vadd.f32 0.0, %v6371
  %v6373 = vpop.f32.mrb[0].mxu0
  %v6374 = vpop.f32.mrb[0].mxu0
  %v6375 = vadd.f32 0.0, %v6374
  %v6376 = vpop.f32.mrb[0].mxu0
  %6377 = vmatprep.mubr.bf16.mxu0 0
  %6378 = vmatmul.mubr.bf16.gmra.mrb[0].mxu0 %v6153
  %v6379 = vpop.f32.mrb[0].mxu0
  %v6380 = vadd.f32 0.0, %v6379
  %v6381 = vpop.f32.mrb[0].mxu0
  %v6382 = vpop.f32.mrb[0].mxu0
  %v6383 = vadd.f32 0.0, %v6382
  %v6384 = vpop.f32.mrb[0].mxu0
  %6385 = vmatprep.mubr.bf16.mxu0 0
  %6386 = vmatmul.mubr.bf16.gmra.mrb[0].mxu0 %v6156
  %v6387 = vpop.f32.mrb[0].mxu0
  %v6388 = vadd.f32 0.0, %v6387
  %v6389 = vpop.f32.mrb[0].mxu0
  %v6390 = vpop.f32.mrb[0].mxu0
  %v6391 = vadd.f32 0.0, %v6390
  %v6392 = vpop.f32.mrb[0].mxu0
  %6393 = vmatprep.mubr.bf16.mxu0 0
  %6394 = vmatmul.mubr.bf16.gmra.mrb[0].mxu0 %v6159
  %v6395 = vpop.f32.mrb[0].mxu0
  %v6396 = vadd.f32 0.0, %v6395
  %v6397 = vpop.f32.mrb[0].mxu0
  %v6398 = vpop.f32.mrb[0].mxu0
  %v6399 = vadd.f32 0.0, %v6398
  %v6400 = vpop.f32.mrb[0].mxu0
  %6401 = vmatprep.mubr.bf16.mxu0 0
  %6402 = vmatmul.mubr.bf16.gmra.mrb[0].mxu0 %v6162
  %v6403 = vpop.f32.mrb[0].mxu0
  %v6404 = vadd.f32 0.0, %v6403
  %v6405 = vpop.f32.mrb[0].mxu0
  %v6406 = vpop.f32.mrb[0].mxu0
  %v6407 = vadd.f32 0.0, %v6406
  %v6408 = vpop.f32.mrb[0].mxu0
  %6409 = vmatprep.mubr.bf16.mxu0 0
  %6410 = vmatmul.mubr.bf16.gmra.mrb[0].mxu0 %v6165
  %v6411 = vpop.f32.mrb[0].mxu0
  %v6412 = vadd.f32 0.0, %v6411
  %v6413 = vpop.f32.mrb[0].mxu0
  %v6414 = vpop.f32.mrb[0].mxu0
  %v6415 = vadd.f32 0.0, %v6414
  %v6416 = vpop.f32.mrb[0].mxu0
  %6417 = vmatprep.mubr.bf16.mxu0 0
  %6418 = vmatmul.mubr.bf16.gmra.mrb[0].mxu0 %v6168
  %v6419 = vpop.f32.mrb[0].mxu0
  %v6420 = vadd.f32 0.0, %v6419
  %v6421 = vpop.f32.mrb[0].mxu0
  %v6422 = vpop.f32.mrb[0].mxu0
  %v6423 = vadd.f32 0.0, %v6422
  %v6424 = vpop.f32.mrb[0].mxu0
  %6425 = vdwg.mxu0
  %v6426 = vpack.c.bf16 %v6359, %v6356
  %v6427 = vpack.c.bf16 %v6367, %v6364
  %v6428 = vpack.c.bf16 %v6375, %v6372
  %v6429 = vpack.c.bf16 %v6383, %v6380
  %v6430 = vpack.c.bf16 %v6391, %v6388
  %v6431 = vpack.c.bf16 %v6399, %v6396
  %v6432 = vpack.c.bf16 %v6407, %v6404
  %v6433 = vpack.c.bf16 %v6415, %v6412
  %v6434 = vpack.c.bf16 %v6423, %v6420
  %6435 = vst.msk [vmem:[#allocation9 + $0x18] sm:$0xff] %vm1017, %v6426
  %6437 = vrot.lane.b32.xlu0 %v6427, 32
  %v6438 = vpop.permute.xlu0 %6437
  %6440 = vst.msk [vmem:[#allocation9 + $0x18] sm:$0xff] %vm2216, %v6438
  %6442 = vrot.lane.b32.xlu0 %v6428, 64
  %v6443 = vpop.permute.xlu0 %6442
  %6445 = vst.msk [vmem:[#allocation9 + $0x18] sm:$0xff] %vm2232, %v6443
  %6447 = vrot.lane.b32.xlu0 %v6429, 96
  %v6448 = vpop.permute.xlu0 %6447
  %6450 = vst.msk [vmem:[#allocation9 + $0x18] sm:$0xff] %vm2248, %v6448
  %6451 = vst.msk [vmem:[#allocation9 + $0x20] sm:$0xff] %vm1017, %v6430
  %6453 = vrot.lane.b32.xlu0 %v6431, 32
  %v6454 = vpop.permute.xlu0 %6453
  %6456 = vst.msk [vmem:[#allocation9 + $0x20] sm:$0xff] %vm2216, %v6454
  %6458 = vrot.lane.b32.xlu0 %v6432, 64
  %v6459 = vpop.permute.xlu0 %6458
  %6461 = vst.msk [vmem:[#allocation9 + $0x20] sm:$0xff] %vm2232, %v6459
  %6463 = vrot.lane.b32.xlu0 %v6433, 96
  %v6464 = vpop.permute.xlu0 %6463
  %6466 = vst.msk [vmem:[#allocation9 + $0x20] sm:$0xff] %vm2248, %v6464
  %6467 = vst.msk [vmem:[#allocation9 + $0x28] sm:$0xff] %vm1017, %v6434
  %v6468 = vld [vmem:[#allocation9] sm:$0xff]
  %v6469 = vld [vmem:[#allocation9 + $0x8] sm:$0xff]
  %v6470 = vld [vmem:[#allocation9 + $0x10] sm:$0xff]
  %v6471 = vld [vmem:[#allocation9 + $0x18] sm:$0xff]
  %v6472 = vld [vmem:[#allocation9 + $0x20] sm:$0xff]
  %v6473 = vld [vmem:[#allocation9 + $0x28] sm:$0xff]
  %v6474 = vld [vmem:[%s35] sm:$0xf]
  %v6475 = vld [vmem:[%s35 + $0x4] sm:$0xf]
  %v6476 = vld [vmem:[%s35 + $0x8] sm:$0xf]
  %v6477 = vld [vmem:[%s35 + $0xc] sm:$0xf]
  %v6478 = vld [vmem:[%s35 + $0x10] sm:$0xf]
  %v6479 = vld [vmem:[%s35 + $0x14] sm:$0xf]
  %v6480 = vld [vmem:[%s35 + $0x18] sm:$0xf]
  %v6481 = vld [vmem:[%s35 + $0x1c] sm:$0xf]
  %v6482 = vld [vmem:[%s35 + $0x20] sm:$0xf]
  %v6483 = vld [vmem:[%s35 + $0x24] sm:$0xf]
  %v6484 = vld [vmem:[%s35 + $0x28] sm:$0xf]
  %v6485 = vld [vmem:[%s35 + $0x2c] sm:$0xf]
  %v6486 = vld [vmem:[%s35 + $0x30] sm:$0xf]
  %v6487 = vld [vmem:[%s35 + $0x34] sm:$0xf]
  %v6488 = vld [vmem:[%s35 + $0x38] sm:$0xf]
  %v6489 = vld [vmem:[%s35 + $0x3c] sm:$0xf]
  %v6490 = vld [vmem:[%s35 + $0x40] sm:$0xf]
  %v6491 = vld [vmem:[%s35 + $0x44] sm:$0xf]
  %v6492 = vld [vmem:[%s35 + $0x48] sm:$0xf]
  %v6493 = vld [vmem:[%s35 + $0x4c] sm:$0xf]
  %v6494 = vld [vmem:[%s35 + $0x50] sm:$0xf]
  %v6495 = vld [vmem:[%s35 + $0x54] sm:$0xf]
  %v6496 = vld [vmem:[%s35 + $0x58] sm:$0xf]
  %v6497 = vld [vmem:[%s35 + $0x5c] sm:$0xf]
  %v6498 = vld [vmem:[%s35 + $0x60] sm:$0xf]
  %v6499 = vld [vmem:[%s35 + $0x64] sm:$0xf]
  %v6500 = vld [vmem:[%s35 + $0x68] sm:$0xf]
  %v6501 = vld [vmem:[%s35 + $0x6c] sm:$0xf]
  %v6502 = vld [vmem:[%s35 + $0x70] sm:$0xf]
  %v6503 = vld [vmem:[%s35 + $0x74] sm:$0xf]
  %v6504 = vld [vmem:[%s35 + $0x78] sm:$0xf]
  %v6505 = vld [vmem:[%s35 + $0x7c] sm:$0xf]
  %v6506 = vld [vmem:[%s35 + $0x80] sm:$0xf]
  %v6507 = vld [vmem:[%s35 + $0x84] sm:$0xf]
  %v6508 = vld [vmem:[%s35 + $0x88] sm:$0xf]
  %v6509 = vld [vmem:[%s35 + $0x8c] sm:$0xf]
  %v6510 = vld [vmem:[%s37] sm:$0x1]
  %v6512 = vlaneseq
  %v6513 = vshrl.u32 %v6512, 7
  %v6514 = vsub.s32 0, %v6513
  %v6515 = vrot.slane %v6510, %v6514
  %v6553 = vunpack.c.l.b16 %v6474
  %v6554 = vunpack.c.l.b16 %v6475
  %v6555 = vunpack.c.l.b16 %v6476
  %v6556 = vunpack.c.l.b16 %v6477
  %v6557 = vunpack.c.l.b16 %v6478
  %v6558 = vunpack.c.l.b16 %v6479
  %v6559 = vunpack.c.l.b16 %v6480
  %v6560 = vunpack.c.l.b16 %v6481
  %v6561 = vunpack.c.l.b16 %v6482
  %v6562 = vunpack.c.l.b16 %v6483
  %v6563 = vunpack.c.l.b16 %v6484
  %v6564 = vunpack.c.l.b16 %v6485
  %v6565 = vunpack.c.l.b16 %v6486
  %v6566 = vunpack.c.l.b16 %v6487
  %v6567 = vunpack.c.l.b16 %v6488
  %v6568 = vunpack.c.l.b16 %v6489
  %v6569 = vunpack.c.l.b16 %v6490
  %v6570 = vunpack.c.l.b16 %v6491
  %v6571 = vunpack.c.l.b16 %v6492
  %v6572 = vunpack.c.l.b16 %v6493
  %v6573 = vunpack.c.l.b16 %v6494
  %v6574 = vunpack.c.l.b16 %v6495
  %v6575 = vunpack.c.l.b16 %v6496
  %v6576 = vunpack.c.l.b16 %v6497
  %v6577 = vunpack.c.l.b16 %v6498
  %v6578 = vunpack.c.l.b16 %v6499
  %v6579 = vunpack.c.l.b16 %v6500
  %v6580 = vunpack.c.l.b16 %v6501
  %v6581 = vunpack.c.l.b16 %v6502
  %v6582 = vunpack.c.l.b16 %v6503
  %v6583 = vunpack.c.l.b16 %v6504
  %v6584 = vunpack.c.l.b16 %v6505
  %v6585 = vunpack.c.l.b16 %v6506
  %v6586 = vunpack.c.l.b16 %v6507
  %v6587 = vunpack.c.l.b16 %v6508
  %v6588 = vunpack.c.l.b16 %v6509
  %v6589 = vpack.c.b16 %v6554, %v6553
  %v6590 = vpack.c.b16 %v6556, %v6555
  %v6591 = vpack.c.b16 %v6558, %v6557
  %v6592 = vpack.c.b16 %v6560, %v6559
  %v6593 = vpack.c.b16 %v6562, %v6561
  %v6594 = vpack.c.b16 %v6564, %v6563
  %v6595 = vpack.c.b16 %v6566, %v6565
  %v6596 = vpack.c.b16 %v6568, %v6567
  %v6597 = vpack.c.b16 %v6570, %v6569
  %v6598 = vpack.c.b16 %v6572, %v6571
  %v6599 = vpack.c.b16 %v6574, %v6573
  %v6600 = vpack.c.b16 %v6576, %v6575
  %v6601 = vpack.c.b16 %v6578, %v6577
  %v6602 = vpack.c.b16 %v6580, %v6579
  %v6603 = vpack.c.b16 %v6582, %v6581
  %v6604 = vpack.c.b16 %v6584, %v6583
  %v6605 = vpack.c.b16 %v6586, %v6585
  %v6606 = vpack.c.b16 %v6588, %v6587
  %v6626 = vsel %vm1017, %v6470, 0
  %v6629 = vsel %vm1017, %v6473, 0
  %6631 = vmatprep.subr.bf16.mxu0 0
  %6632 = vmatpush1.bf16.msra.mxu0 %v6589
  %6633 = vmatprep.subr.bf16.mxu0 0
  %6634 = vmatpush1.bf16.msra.mxu0 %v6590
  %6635 = vmatprep.subr.bf16.mxu0 0
  %6636 = vmatpush1.bf16.msra.mxu0 %v6591
  %6637 = vmatprep.subr.bf16.mxu0 0
  %6638 = vmatpush1.bf16.msra.mxu0 %v6592
  %6639 = vmatprep.subr.bf16.mxu0 0
  %6640 = vmatpush1.bf16.msra.mxu0 %v6593
  %6641 = vmatprep.subr.bf16.mxu0 0
  %6642 = vmatpush1.bf16.msra.mxu0 %v6594
  %6643 = vmatprep.subr.bf16.mxu0 0
  %6644 = vmatpush1.bf16.msra.mxu0 %v6595
  %6645 = vmatprep.subr.bf16.mxu0 0
  %6646 = vmatpush1.bf16.msra.mxu0 %v6596
  %6647 = vmatprep.subr.bf16.mxu0 0
  %6648 = vmatpush1.bf16.msra.mxu0 %v6597
  %6649 = vmatprep.subr.bf16.mxu0 0
  %6650 = vmatpush1.bf16.msra.mxu0 %v6598
  %6651 = vmatprep.subr.bf16.mxu0 0
  %6652 = vmatpush1.bf16.msra.mxu0 %v6599
  %6653 = vmatprep.subr.bf16.mxu0 0
  %6654 = vmatpush1.bf16.msra.mxu0 %v6600
  %6655 = vmatprep.subr.bf16.mxu0 0
  %6656 = vmatpush1.bf16.msra.mxu0 %v6601
  %6657 = vmatprep.subr.bf16.mxu0 0
  %6658 = vmatpush1.bf16.msra.mxu0 %v6602
  %6659 = vmatprep.subr.bf16.mxu0 0
  %6660 = vmatpush1.bf16.msra.mxu0 %v6603
  %6661 = vmatprep.subr.bf16.mxu0 0
  %6662 = vmatpush1.bf16.msra.mxu0 %v6604
  %6663 = vmatprep.mubr.bf16.mxu0 %v6469
  %6664 = vmatmul.mubr.bf16.gmra.mrb[0].mxu0 %v6468
  %v6665 = vpop.f32.mrb[0].mxu0
  %v6666 = vadd.f32 %v6515, %v6665
  %v6667 = vpop.f32.mrb[0].mxu0
  %v6668 = vpop.f32.mrb[0].mxu0
  %v6669 = vadd.f32 %v6515, %v6668
  %v6670 = vpop.f32.mrb[0].mxu0
  %6671 = vmatprep.mubr.bf16.mxu0 %v6472
  %6672 = vmatmul.mubr.bf16.gmra.mrb[0].mxu0 %v6471
  %v6673 = vpop.f32.mrb[0].mxu0
  %v6674 = vadd.f32 %v6515, %v6673
  %v6675 = vpop.f32.mrb[0].mxu0
  %v6676 = vpop.f32.mrb[0].mxu0
  %v6677 = vadd.f32 %v6515, %v6676
  %v6678 = vpop.f32.mrb[0].mxu0
  %6679 = vdwg.mxu0
  %6680 = vmatprep.subr.bf16.mxu0 0
  %6681 = vmatpush1.bf16.msra.mxu0 %v6605
  %6682 = vmatprep.subr.bf16.mxu0 0
  %6683 = vmatpush1.bf16.msra.mxu0 %v6606
  %6684 = vmatprep.subr.bf16.mxu0 0
  %6685 = vmatpush1.bf16.msra.mxu0 0
  %6686 = vmatprep.subr.bf16.mxu0 0
  %6687 = vmatpush1.bf16.msra.mxu0 0
  %6688 = vmatprep.subr.bf16.mxu0 0
  %6689 = vmatpush1.bf16.msra.mxu0 0
  %6690 = vmatprep.subr.bf16.mxu0 0
  %6691 = vmatpush1.bf16.msra.mxu0 0
  %6692 = vmatprep.subr.bf16.mxu0 0
  %6693 = vmatpush1.bf16.msra.mxu0 0
  %6694 = vmatprep.subr.bf16.mxu0 0
  %6695 = vmatpush1.bf16.msra.mxu0 0
  %6696 = vmatprep.subr.bf16.mxu0 0
  %6697 = vmatpush1.bf16.msra.mxu0 0
  %6698 = vmatprep.subr.bf16.mxu0 0
  %6699 = vmatpush1.bf16.msra.mxu0 0
  %6700 = vmatprep.subr.bf16.mxu0 0
  %6701 = vmatpush1.bf16.msra.mxu0 0
  %6702 = vmatprep.subr.bf16.mxu0 0
  %6703 = vmatpush1.bf16.msra.mxu0 0
  %6704 = vmatprep.subr.bf16.mxu0 0
  %6705 = vmatpush1.bf16.msra.mxu0 0
  %6706 = vmatprep.subr.bf16.mxu0 0
  %6707 = vmatpush1.bf16.msra.mxu0 0
  %6708 = vmatprep.subr.bf16.mxu0 0
  %6709 = vmatpush1.bf16.msra.mxu0 0
  %6710 = vmatprep.subr.bf16.mxu0 0
  %6711 = vmatpush1.bf16.msra.mxu0 0
  %6712 = vmatprep.mubr.bf16.mxu0 0
  %6713 = vmatmul.mubr.bf16.gmra.mrb[0].mxu0 %v6626
  %v6714 = vpop.f32.mrb[0].mxu0
  %v6715 = vadd.f32 %v6666, %v6714
  %v6716 = vpop.f32.mrb[0].mxu0
  %v6717 = vpop.f32.mrb[0].mxu0
  %v6718 = vadd.f32 %v6669, %v6717
  %v6719 = vpop.f32.mrb[0].mxu0
  %6720 = vmatprep.mubr.bf16.mxu0 0
  %6721 = vmatmul.mubr.bf16.gmra.mrb[0].mxu0 %v6629
  %v6722 = vpop.f32.mrb[0].mxu0
  %v6723 = vadd.f32 %v6674, %v6722
  %v6724 = vpop.f32.mrb[0].mxu0
  %v6725 = vpop.f32.mrb[0].mxu0
  %v6726 = vadd.f32 %v6677, %v6725
  %v6727 = vpop.f32.mrb[0].mxu0
  %6728 = vdwg.mxu0
  %v6729 = vmax.f32 %v6715, 0.0
  %v6730 = vmax.f32 %v6718, 0.0
  %v6731 = vmax.f32 %v6723, 0.0
  %v6732 = vmax.f32 %v6726, 0.0
  %v6733 = vpack.c.bf16 %v6730, %v6729
  %v6734 = vpack.c.bf16 %v6732, %v6731
  %6735 = vst.msk [vmem:[#allocation10] sm:$0xff] %vm3535, %v6733
  %6736 = vst.msk [vmem:[#allocation10 + $0x8] sm:$0xff] %vm3535, %v6734
  %v6737 = vld [vmem:[%s27] sm:$0xf]
  %v6738 = vld [vmem:[%s27 + $0x4] sm:$0xf]
  %v6739 = vld [vmem:[%s27 + $0x8] sm:$0xf]
  %v6740 = vld [vmem:[%s27 + $0xc] sm:$0xf]
  %v6741 = vld [vmem:[%s27 + $0x10] sm:$0xf]
  %v6742 = vld [vmem:[%s27 + $0x14] sm:$0xf]
  %v6743 = vld [vmem:[%s27 + $0x18] sm:$0xf]
  %v6744 = vld [vmem:[%s27 + $0x1c] sm:$0xf]
  %v6745 = vld [vmem:[%s27 + $0x20] sm:$0xf]
  %v6746 = vld [vmem:[%s27 + $0x24] sm:$0xf]
  %v6747 = vld [vmem:[%s27 + $0x28] sm:$0xf]
  %v6748 = vld [vmem:[%s27 + $0x2c] sm:$0xf]
  %v6749 = vld [vmem:[%s27 + $0x30] sm:$0xf]
  %v6750 = vld [vmem:[%s27 + $0x34] sm:$0xf]
  %v6751 = vld [vmem:[%s27 + $0x38] sm:$0xf]
  %v6752 = vld [vmem:[%s27 + $0x3c] sm:$0xf]
  %v6753 = vld [vmem:[%s27 + $0x40] sm:$0xf]
  %v6754 = vld [vmem:[%s27 + $0x44] sm:$0xf]
  %v6755 = vld [vmem:[#allocation10] sm:$0xff]
  %v6774 = vunpack.c.l.b16 %v6737
  %v6775 = vunpack.c.l.b16 %v6738
  %v6776 = vunpack.c.l.b16 %v6739
  %v6777 = vunpack.c.l.b16 %v6740
  %v6778 = vunpack.c.l.b16 %v6741
  %v6779 = vunpack.c.l.b16 %v6742
  %v6780 = vunpack.c.l.b16 %v6743
  %v6781 = vunpack.c.l.b16 %v6744
  %v6782 = vunpack.c.l.b16 %v6745
  %v6783 = vunpack.c.l.b16 %v6746
  %v6784 = vunpack.c.l.b16 %v6747
  %v6785 = vunpack.c.l.b16 %v6748
  %v6786 = vunpack.c.l.b16 %v6749
  %v6787 = vunpack.c.l.b16 %v6750
  %v6788 = vunpack.c.l.b16 %v6751
  %v6789 = vunpack.c.l.b16 %v6752
  %v6790 = vunpack.c.l.b16 %v6753
  %v6791 = vunpack.c.l.b16 %v6754
  %v6792 = vpack.c.b16 %v6775, %v6774
  %v6793 = vpack.c.b16 %v6777, %v6776
  %v6794 = vpack.c.b16 %v6779, %v6778
  %v6795 = vpack.c.b16 %v6781, %v6780
  %v6796 = vpack.c.b16 %v6783, %v6782
  %v6797 = vpack.c.b16 %v6785, %v6784
  %v6798 = vpack.c.b16 %v6787, %v6786
  %v6799 = vpack.c.b16 %v6789, %v6788
  %v6800 = vpack.c.b16 %v6791, %v6790
  %v6802 = vsel %vm4493, %v6792, 0
  %v6805 = vsel %vm4493, %v6793, 0
  %v6808 = vsel %vm4493, %v6794, 0
  %v6811 = vsel %vm4493, %v6795, 0
  %v6814 = vsel %vm4493, %v6796, 0
  %v6817 = vsel %vm4493, %v6797, 0
  %v6820 = vsel %vm4493, %v6798, 0
  %v6823 = vsel %vm4493, %v6799, 0
  %v6826 = vsel %vm4493, %v6800, 0
  %6828 = vmatprep.subr.bf16.mxu0 0
  %6829 = vmatpush1.bf16.msra.mxu0 %v6755
  %6830 = vmatprep.subr.bf16.mxu0 0
  %6831 = vmatpush1.bf16.msra.mxu0 0
  %6832 = vmatprep.subr.bf16.mxu0 0
  %6833 = vmatpush1.bf16.msra.mxu0 0
  %6834 = vmatprep.subr.bf16.mxu0 0
  %6835 = vmatpush1.bf16.msra.mxu0 0
  %6836 = vmatprep.subr.bf16.mxu0 0
  %6837 = vmatpush1.bf16.msra.mxu0 0
  %6838 = vmatprep.subr.bf16.mxu0 0
  %6839 = vmatpush1.bf16.msra.mxu0 0
  %6840 = vmatprep.subr.bf16.mxu0 0
  %6841 = vmatpush1.bf16.msra.mxu0 0
  %6842 = vmatprep.subr.bf16.mxu0 0
  %6843 = vmatpush1.bf16.msra.mxu0 0
  %6844 = vmatprep.subr.bf16.mxu0 0
  %6845 = vmatpush1.bf16.msra.mxu0 0
  %6846 = vmatprep.subr.bf16.mxu0 0
  %6847 = vmatpush1.bf16.msra.mxu0 0
  %6848 = vmatprep.subr.bf16.mxu0 0
  %6849 = vmatpush1.bf16.msra.mxu0 0
  %6850 = vmatprep.subr.bf16.mxu0 0
  %6851 = vmatpush1.bf16.msra.mxu0 0
  %6852 = vmatprep.subr.bf16.mxu0 0
  %6853 = vmatpush1.bf16.msra.mxu0 0
  %6854 = vmatprep.subr.bf16.mxu0 0
  %6855 = vmatpush1.bf16.msra.mxu0 0
  %6856 = vmatprep.subr.bf16.mxu0 0
  %6857 = vmatpush1.bf16.msra.mxu0 0
  %6858 = vmatprep.subr.bf16.mxu0 0
  %6859 = vmatpush1.bf16.msra.mxu0 0
  %6860 = vmatprep.mubr.bf16.mxu0 0
  %6861 = vmatmul.mubr.bf16.gmra.mrb[0].mxu0 %v6802
  %v6862 = vpop.f32.mrb[0].mxu0
  %v6863 = vadd.f32 0.0, %v6862
  %v6864 = vpop.f32.mrb[0].mxu0
  %v6865 = vpop.f32.mrb[0].mxu0
  %v6866 = vadd.f32 0.0, %v6865
  %v6867 = vpop.f32.mrb[0].mxu0
  %6868 = vmatprep.mubr.bf16.mxu0 0
  %6869 = vmatmul.mubr.bf16.gmra.mrb[0].mxu0 %v6805
  %v6870 = vpop.f32.mrb[0].mxu0
  %v6871 = vadd.f32 0.0, %v6870
  %v6872 = vpop.f32.mrb[0].mxu0
  %v6873 = vpop.f32.mrb[0].mxu0
  %v6874 = vadd.f32 0.0, %v6873
  %v6875 = vpop.f32.mrb[0].mxu0
  %6876 = vmatprep.mubr.bf16.mxu0 0
  %6877 = vmatmul.mubr.bf16.gmra.mrb[0].mxu0 %v6808
  %v6878 = vpop.f32.mrb[0].mxu0
  %v6879 = vadd.f32 0.0, %v6878
  %v6880 = vpop.f32.mrb[0].mxu0
  %v6881 = vpop.f32.mrb[0].mxu0
  %v6882 = vadd.f32 0.0, %v6881
  %v6883 = vpop.f32.mrb[0].mxu0
  %6884 = vmatprep.mubr.bf16.mxu0 0
  %6885 = vmatmul.mubr.bf16.gmra.mrb[0].mxu0 %v6811
  %v6886 = vpop.f32.mrb[0].mxu0
  %v6887 = vadd.f32 0.0, %v6886
  %v6888 = vpop.f32.mrb[0].mxu0
  %v6889 = vpop.f32.mrb[0].mxu0
  %v6890 = vadd.f32 0.0, %v6889
  %v6891 = vpop.f32.mrb[0].mxu0
  %6892 = vmatprep.mubr.bf16.mxu0 0
  %6893 = vmatmul.mubr.bf16.gmra.mrb[0].mxu0 %v6814
  %v6894 = vpop.f32.mrb[0].mxu0
  %v6895 = vadd.f32 0.0, %v6894
  %v6896 = vpop.f32.mrb[0].mxu0
  %v6897 = vpop.f32.mrb[0].mxu0
  %v6898 = vadd.f32 0.0, %v6897
  %v6899 = vpop.f32.mrb[0].mxu0
  %6900 = vmatprep.mubr.bf16.mxu0 0
  %6901 = vmatmul.mubr.bf16.gmra.mrb[0].mxu0 %v6817
  %v6902 = vpop.f32.mrb[0].mxu0
  %v6903 = vadd.f32 0.0, %v6902
  %v6904 = vpop.f32.mrb[0].mxu0
  %v6905 = vpop.f32.mrb[0].mxu0
  %v6906 = vadd.f32 0.0, %v6905
  %v6907 = vpop.f32.mrb[0].mxu0
  %6908 = vmatprep.mubr.bf16.mxu0 0
  %6909 = vmatmul.mubr.bf16.gmra.mrb[0].mxu0 %v6820
  %v6910 = vpop.f32.mrb[0].mxu0
  %v6911 = vadd.f32 0.0, %v6910
  %v6912 = vpop.f32.mrb[0].mxu0
  %v6913 = vpop.f32.mrb[0].mxu0
  %v6914 = vadd.f32 0.0, %v6913
  %v6915 = vpop.f32.mrb[0].mxu0
  %6916 = vmatprep.mubr.bf16.mxu0 0
  %6917 = vmatmul.mubr.bf16.gmra.mrb[0].mxu0 %v6823
  %v6918 = vpop.f32.mrb[0].mxu0
  %v6919 = vadd.f32 0.0, %v6918
  %v6920 = vpop.f32.mrb[0].mxu0
  %v6921 = vpop.f32.mrb[0].mxu0
  %v6922 = vadd.f32 0.0, %v6921
  %v6923 = vpop.f32.mrb[0].mxu0
  %6924 = vmatprep.mubr.bf16.mxu0 0
  %6925 = vmatmul.mubr.bf16.gmra.mrb[0].mxu0 %v6826
  %v6926 = vpop.f32.mrb[0].mxu0
  %v6927 = vadd.f32 0.0, %v6926
  %v6928 = vpop.f32.mrb[0].mxu0
  %v6929 = vpop.f32.mrb[0].mxu0
  %v6930 = vadd.f32 0.0, %v6929
  %v6931 = vpop.f32.mrb[0].mxu0
  %6932 = vdwg.mxu0
  %v6933 = vpack.c.bf16 %v6866, %v6863
  %v6934 = vpack.c.bf16 %v6874, %v6871
  %v6935 = vpack.c.bf16 %v6882, %v6879
  %v6936 = vpack.c.bf16 %v6890, %v6887
  %v6937 = vpack.c.bf16 %v6898, %v6895
  %v6938 = vpack.c.bf16 %v6906, %v6903
  %v6939 = vpack.c.bf16 %v6914, %v6911
  %v6940 = vpack.c.bf16 %v6922, %v6919
  %v6941 = vpack.c.bf16 %v6930, %v6927
  %6942 = vst.msk [vmem:[#allocation11] sm:$0xff] %vm3535, %v6933
  %6944 = vrot.lane.b32.xlu0 %v6934, 64
  %v6945 = vpop.permute.xlu0 %6944
  %6947 = vst.msk [vmem:[#allocation11] sm:$0xff] %vm3755, %v6945
  %6948 = vst.msk [vmem:[#allocation11 + $0x8] sm:$0xff] %vm3535, %v6935
  %6950 = vrot.lane.b32.xlu0 %v6936, 64
  %v6951 = vpop.permute.xlu0 %6950
  %6953 = vst.msk [vmem:[#allocation11 + $0x8] sm:$0xff] %vm3755, %v6951
  %6954 = vst.msk [vmem:[#allocation11 + $0x10] sm:$0xff] %vm3535, %v6937
  %6956 = vrot.lane.b32.xlu0 %v6938, 64
  %v6957 = vpop.permute.xlu0 %6956
  %6959 = vst.msk [vmem:[#allocation11 + $0x10] sm:$0xff] %vm3755, %v6957
  %6960 = vst.msk [vmem:[#allocation11 + $0x18] sm:$0xff] %vm3535, %v6939
  %6962 = vrot.lane.b32.xlu0 %v6940, 64
  %v6963 = vpop.permute.xlu0 %6962
  %6965 = vst.msk [vmem:[#allocation11 + $0x18] sm:$0xff] %vm3755, %v6963
  %6966 = vst.msk [vmem:[#allocation11 + $0x20] sm:$0xff] %vm3535, %v6941
  %v6967 = vld [vmem:[#allocation10 + $0x8] sm:$0xff]
  %6968 = vmatprep.subr.bf16.mxu0 0
  %6969 = vmatpush1.bf16.msra.mxu0 %v6967
  %6970 = vmatprep.subr.bf16.mxu0 0
  %6971 = vmatpush1.bf16.msra.mxu0 0
  %6972 = vmatprep.subr.bf16.mxu0 0
  %6973 = vmatpush1.bf16.msra.mxu0 0
  %6974 = vmatprep.subr.bf16.mxu0 0
  %6975 = vmatpush1.bf16.msra.mxu0 0
  %6976 = vmatprep.subr.bf16.mxu0 0
  %6977 = vmatpush1.bf16.msra.mxu0 0
  %6978 = vmatprep.subr.bf16.mxu0 0
  %6979 = vmatpush1.bf16.msra.mxu0 0
  %6980 = vmatprep.subr.bf16.mxu0 0
  %6981 = vmatpush1.bf16.msra.mxu0 0
  %6982 = vmatprep.subr.bf16.mxu0 0
  %6983 = vmatpush1.bf16.msra.mxu0 0
  %6984 = vmatprep.subr.bf16.mxu0 0
  %6985 = vmatpush1.bf16.msra.mxu0 0
  %6986 = vmatprep.subr.bf16.mxu0 0
  %6987 = vmatpush1.bf16.msra.mxu0 0
  %6988 = vmatprep.subr.bf16.mxu0 0
  %6989 = vmatpush1.bf16.msra.mxu0 0
  %6990 = vmatprep.subr.bf16.mxu0 0
  %6991 = vmatpush1.bf16.msra.mxu0 0
  %6992 = vmatprep.subr.bf16.mxu0 0
  %6993 = vmatpush1.bf16.msra.mxu0 0
  %6994 = vmatprep.subr.bf16.mxu0 0
  %6995 = vmatpush1.bf16.msra.mxu0 0
  %6996 = vmatprep.subr.bf16.mxu0 0
  %6997 = vmatpush1.bf16.msra.mxu0 0
  %6998 = vmatprep.subr.bf16.mxu0 0
  %6999 = vmatpush1.bf16.msra.mxu0 0
  %7000 = vmatprep.mubr.bf16.mxu0 0
  %7001 = vmatmul.mubr.bf16.gmra.mrb[0].mxu0 %v6802
  %v7002 = vpop.f32.mrb[0].mxu0
  %v7003 = vadd.f32 0.0, %v7002
  %v7004 = vpop.f32.mrb[0].mxu0
  %v7005 = vpop.f32.mrb[0].mxu0
  %v7006 = vadd.f32 0.0, %v7005
  %v7007 = vpop.f32.mrb[0].mxu0
  %7008 = vmatprep.mubr.bf16.mxu0 0
  %7009 = vmatmul.mubr.bf16.gmra.mrb[0].mxu0 %v6805
  %v7010 = vpop.f32.mrb[0].mxu0
  %v7011 = vadd.f32 0.0, %v7010
  %v7012 = vpop.f32.mrb[0].mxu0
  %v7013 = vpop.f32.mrb[0].mxu0
  %v7014 = vadd.f32 0.0, %v7013
  %v7015 = vpop.f32.mrb[0].mxu0
  %7016 = vmatprep.mubr.bf16.mxu0 0
  %7017 = vmatmul.mubr.bf16.gmra.mrb[0].mxu0 %v6808
  %v7018 = vpop.f32.mrb[0].mxu0
  %v7019 = vadd.f32 0.0, %v7018
  %v7020 = vpop.f32.mrb[0].mxu0
  %v7021 = vpop.f32.mrb[0].mxu0
  %v7022 = vadd.f32 0.0, %v7021
  %v7023 = vpop.f32.mrb[0].mxu0
  %7024 = vmatprep.mubr.bf16.mxu0 0
  %7025 = vmatmul.mubr.bf16.gmra.mrb[0].mxu0 %v6811
  %v7026 = vpop.f32.mrb[0].mxu0
  %v7027 = vadd.f32 0.0, %v7026
  %v7028 = vpop.f32.mrb[0].mxu0
  %v7029 = vpop.f32.mrb[0].mxu0
  %v7030 = vadd.f32 0.0, %v7029
  %v7031 = vpop.f32.mrb[0].mxu0
  %7032 = vmatprep.mubr.bf16.mxu0 0
  %7033 = vmatmul.mubr.bf16.gmra.mrb[0].mxu0 %v6814
  %v7034 = vpop.f32.mrb[0].mxu0
  %v7035 = vadd.f32 0.0, %v7034
  %v7036 = vpop.f32.mrb[0].mxu0
  %v7037 = vpop.f32.mrb[0].mxu0
  %v7038 = vadd.f32 0.0, %v7037
  %v7039 = vpop.f32.mrb[0].mxu0
  %7040 = vmatprep.mubr.bf16.mxu0 0
  %7041 = vmatmul.mubr.bf16.gmra.mrb[0].mxu0 %v6817
  %v7042 = vpop.f32.mrb[0].mxu0
  %v7043 = vadd.f32 0.0, %v7042
  %v7044 = vpop.f32.mrb[0].mxu0
  %v7045 = vpop.f32.mrb[0].mxu0
  %v7046 = vadd.f32 0.0, %v7045
  %v7047 = vpop.f32.mrb[0].mxu0
  %7048 = vmatprep.mubr.bf16.mxu0 0
  %7049 = vmatmul.mubr.bf16.gmra.mrb[0].mxu0 %v6820
  %v7050 = vpop.f32.mrb[0].mxu0
  %v7051 = vadd.f32 0.0, %v7050
  %v7052 = vpop.f32.mrb[0].mxu0
  %v7053 = vpop.f32.mrb[0].mxu0
  %v7054 = vadd.f32 0.0, %v7053
  %v7055 = vpop.f32.mrb[0].mxu0
  %7056 = vmatprep.mubr.bf16.mxu0 0
  %7057 = vmatmul.mubr.bf16.gmra.mrb[0].mxu0 %v6823
  %v7058 = vpop.f32.mrb[0].mxu0
  %v7059 = vadd.f32 0.0, %v7058
  %v7060 = vpop.f32.mrb[0].mxu0
  %v7061 = vpop.f32.mrb[0].mxu0
  %v7062 = vadd.f32 0.0, %v7061
  %v7063 = vpop.f32.mrb[0].mxu0
  %7064 = vmatprep.mubr.bf16.mxu0 0
  %7065 = vmatmul.mubr.bf16.gmra.mrb[0].mxu0 %v6826
  %v7066 = vpop.f32.mrb[0].mxu0
  %v7067 = vadd.f32 0.0, %v7066
  %v7068 = vpop.f32.mrb[0].mxu0
  %v7069 = vpop.f32.mrb[0].mxu0
  %v7070 = vadd.f32 0.0, %v7069
  %v7071 = vpop.f32.mrb[0].mxu0
  %7072 = vdwg.mxu0
  %v7073 = vpack.c.bf16 %v7006, %v7003
  %v7074 = vpack.c.bf16 %v7014, %v7011
  %v7075 = vpack.c.bf16 %v7022, %v7019
  %v7076 = vpack.c.bf16 %v7030, %v7027
  %v7077 = vpack.c.bf16 %v7038, %v7035
  %v7078 = vpack.c.bf16 %v7046, %v7043
  %v7079 = vpack.c.bf16 %v7054, %v7051
  %v7080 = vpack.c.bf16 %v7062, %v7059
  %v7081 = vpack.c.bf16 %v7070, %v7067
  %7082 = vst.msk [vmem:[#allocation11 + $0x28] sm:$0xff] %vm3535, %v7073
  %7084 = vrot.lane.b32.xlu0 %v7074, 64
  %v7085 = vpop.permute.xlu0 %7084
  %7087 = vst.msk [vmem:[#allocation11 + $0x28] sm:$0xff] %vm3755, %v7085
  %7088 = vst.msk [vmem:[#allocation11 + $0x30] sm:$0xff] %vm3535, %v7075
  %7090 = vrot.lane.b32.xlu0 %v7076, 64
  %v7091 = vpop.permute.xlu0 %7090
  %7093 = vst.msk [vmem:[#allocation11 + $0x30] sm:$0xff] %vm3755, %v7091
  %7094 = vst.msk [vmem:[#allocation11 + $0x38] sm:$0xff] %vm3535, %v7077
  %7096 = vrot.lane.b32.xlu0 %v7078, 64
  %v7097 = vpop.permute.xlu0 %7096
  %7099 = vst.msk [vmem:[#allocation11 + $0x38] sm:$0xff] %vm3755, %v7097
  %7100 = vst.msk [vmem:[#allocation11 + $0x40] sm:$0xff] %vm3535, %v7079
  %7102 = vrot.lane.b32.xlu0 %v7080, 64
  %v7103 = vpop.permute.xlu0 %7102
  %7105 = vst.msk [vmem:[#allocation11 + $0x40] sm:$0xff] %vm3755, %v7103
  %7106 = vst.msk [vmem:[#allocation11 + $0x48] sm:$0xff] %vm3535, %v7081
  %v7107 = vld [vmem:[#allocation11] sm:$0xff]
  %v7108 = vld [vmem:[#allocation11 + $0x8] sm:$0xff]
  %v7109 = vld [vmem:[#allocation11 + $0x10] sm:$0xff]
  %v7110 = vld [vmem:[#allocation11 + $0x18] sm:$0xff]
  %v7111 = vld [vmem:[#allocation11 + $0x20] sm:$0xff]
  %v7112 = vld [vmem:[#allocation11 + $0x28] sm:$0xff]
  %v7113 = vld [vmem:[#allocation11 + $0x30] sm:$0xff]
  %v7114 = vld [vmem:[#allocation11 + $0x38] sm:$0xff]
  %v7115 = vld [vmem:[#allocation11 + $0x40] sm:$0xff]
  %v7116 = vld [vmem:[#allocation11 + $0x48] sm:$0xff]
  %v7117 = vld [vmem:[%s39] sm:$0xf]
  %v7118 = vld [vmem:[%s39 + $0x4] sm:$0xf]
  %v7119 = vld [vmem:[%s39 + $0x8] sm:$0xf]
  %v7120 = vld [vmem:[%s39 + $0xc] sm:$0xf]
  %v7121 = vld [vmem:[%s39 + $0x10] sm:$0xf]
  %v7122 = vld [vmem:[%s39 + $0x14] sm:$0xf]
  %v7123 = vld [vmem:[%s39 + $0x18] sm:$0xf]
  %v7124 = vld [vmem:[%s39 + $0x1c] sm:$0xf]
  %v7125 = vld [vmem:[%s39 + $0x20] sm:$0xf]
  %v7126 = vld [vmem:[%s39 + $0x24] sm:$0xf]
  %v7127 = vld [vmem:[%s39 + $0x28] sm:$0xf]
  %v7128 = vld [vmem:[%s39 + $0x2c] sm:$0xf]
  %v7129 = vld [vmem:[%s39 + $0x30] sm:$0xf]
  %v7130 = vld [vmem:[%s39 + $0x34] sm:$0xf]
  %v7131 = vld [vmem:[%s39 + $0x38] sm:$0xf]
  %v7132 = vld [vmem:[%s39 + $0x3c] sm:$0xf]
  %v7133 = vld [vmem:[%s39 + $0x40] sm:$0xf]
  %v7134 = vld [vmem:[%s39 + $0x44] sm:$0xf]
  %v7135 = vld [vmem:[%s39 + $0x48] sm:$0xf]
  %v7136 = vld [vmem:[%s39 + $0x4c] sm:$0xf]
  %v7137 = vld [vmem:[%s39 + $0x50] sm:$0xf]
  %v7138 = vld [vmem:[%s39 + $0x54] sm:$0xf]
  %v7139 = vld [vmem:[%s39 + $0x58] sm:$0xf]
  %v7140 = vld [vmem:[%s39 + $0x5c] sm:$0xf]
  %v7141 = vld [vmem:[%s39 + $0x60] sm:$0xf]
  %v7142 = vld [vmem:[%s39 + $0x64] sm:$0xf]
  %v7143 = vld [vmem:[%s39 + $0x68] sm:$0xf]
  %v7144 = vld [vmem:[%s39 + $0x6c] sm:$0xf]
  %v7145 = vld [vmem:[%s39 + $0x70] sm:$0xf]
  %v7146 = vld [vmem:[%s39 + $0x74] sm:$0xf]
  %v7147 = vld [vmem:[%s39 + $0x78] sm:$0xf]
  %v7148 = vld [vmem:[%s39 + $0x7c] sm:$0xf]
  %v7149 = vld [vmem:[%s39 + $0x80] sm:$0xf]
  %v7150 = vld [vmem:[%s39 + $0x84] sm:$0xf]
  %v7151 = vld [vmem:[%s39 + $0x88] sm:$0xf]
  %v7152 = vld [vmem:[%s39 + $0x8c] sm:$0xf]
  %v7153 = vld [vmem:[%s39 + $0x90] sm:$0xf]
  %v7154 = vld [vmem:[%s39 + $0x94] sm:$0xf]
  %v7155 = vld [vmem:[%s39 + $0x98] sm:$0xf]
  %v7156 = vld [vmem:[%s39 + $0x9c] sm:$0xf]
  %v7157 = vld [vmem:[%s39 + $0xa0] sm:$0xf]
  %v7158 = vld [vmem:[%s39 + $0xa4] sm:$0xf]
  %v7159 = vld [vmem:[%s39 + $0xa8] sm:$0xf]
  %v7160 = vld [vmem:[%s39 + $0xac] sm:$0xf]
  %v7161 = vld [vmem:[%s39 + $0xb0] sm:$0xf]
  %v7162 = vld [vmem:[%s39 + $0xb4] sm:$0xf]
  %v7163 = vld [vmem:[%s39 + $0xb8] sm:$0xf]
  %v7164 = vld [vmem:[%s39 + $0xbc] sm:$0xf]
  %v7165 = vld [vmem:[%s39 + $0xc0] sm:$0xf]
  %v7166 = vld [vmem:[%s39 + $0xc4] sm:$0xf]
  %v7167 = vld [vmem:[%s39 + $0xc8] sm:$0xf]
  %v7168 = vld [vmem:[%s39 + $0xcc] sm:$0xf]
  %v7169 = vld [vmem:[%s39 + $0xd0] sm:$0xf]
  %v7170 = vld [vmem:[%s39 + $0xd4] sm:$0xf]
  %v7171 = vld [vmem:[%s39 + $0xd8] sm:$0xf]
  %v7172 = vld [vmem:[%s39 + $0xdc] sm:$0xf]
  %v7173 = vld [vmem:[%s39 + $0xe0] sm:$0xf]
  %v7174 = vld [vmem:[%s39 + $0xe4] sm:$0xf]
  %v7175 = vld [vmem:[%s39 + $0xe8] sm:$0xf]
  %v7176 = vld [vmem:[%s39 + $0xec] sm:$0xf]
  %v7177 = vld [vmem:[%s39 + $0xf0] sm:$0xf]
  %v7178 = vld [vmem:[%s39 + $0xf4] sm:$0xf]
  %v7179 = vld [vmem:[%s39 + $0xf8] sm:$0xf]
  %v7180 = vld [vmem:[%s39 + $0xfc] sm:$0xf]
  %v7181 = vld [vmem:[%s39 + $0x100] sm:$0xf]
  %v7182 = vld [vmem:[%s39 + $0x104] sm:$0xf]
  %v7183 = vld [vmem:[%s39 + $0x108] sm:$0xf]
  %v7184 = vld [vmem:[%s39 + $0x10c] sm:$0xf]
  %v7185 = vld [vmem:[%s39 + $0x110] sm:$0xf]
  %v7186 = vld [vmem:[%s39 + $0x114] sm:$0xf]
  %v7187 = vld [vmem:[%s39 + $0x118] sm:$0xf]
  %v7188 = vld [vmem:[%s39 + $0x11c] sm:$0xf]
  %v7189 = vld [vmem:[%s41] sm:$0x1]
  %v7191 = vlaneseq
  %v7192 = vshrl.u32 %v7191, 7
  %v7193 = vsub.s32 0, %v7192
  %v7194 = vrot.slane %v7189, %v7193
  %v7268 = vunpack.c.l.b16 %v7117
  %v7269 = vunpack.c.l.b16 %v7118
  %v7270 = vunpack.c.l.b16 %v7119
  %v7271 = vunpack.c.l.b16 %v7120
  %v7272 = vunpack.c.l.b16 %v7121
  %v7273 = vunpack.c.l.b16 %v7122
  %v7274 = vunpack.c.l.b16 %v7123
  %v7275 = vunpack.c.l.b16 %v7124
  %v7276 = vunpack.c.l.b16 %v7125
  %v7277 = vunpack.c.l.b16 %v7126
  %v7278 = vunpack.c.l.b16 %v7127
  %v7279 = vunpack.c.l.b16 %v7128
  %v7280 = vunpack.c.l.b16 %v7129
  %v7281 = vunpack.c.l.b16 %v7130
  %v7282 = vunpack.c.l.b16 %v7131
  %v7283 = vunpack.c.l.b16 %v7132
  %v7284 = vunpack.c.l.b16 %v7133
  %v7285 = vunpack.c.l.b16 %v7134
  %v7286 = vunpack.c.l.b16 %v7135
  %v7287 = vunpack.c.l.b16 %v7136
  %v7288 = vunpack.c.l.b16 %v7137
  %v7289 = vunpack.c.l.b16 %v7138
  %v7290 = vunpack.c.l.b16 %v7139
  %v7291 = vunpack.c.l.b16 %v7140
  %v7292 = vunpack.c.l.b16 %v7141
  %v7293 = vunpack.c.l.b16 %v7142
  %v7294 = vunpack.c.l.b16 %v7143
  %v7295 = vunpack.c.l.b16 %v7144
  %v7296 = vunpack.c.l.b16 %v7145
  %v7297 = vunpack.c.l.b16 %v7146
  %v7298 = vunpack.c.l.b16 %v7147
  %v7299 = vunpack.c.l.b16 %v7148
  %v7300 = vunpack.c.l.b16 %v7149
  %v7301 = vunpack.c.l.b16 %v7150
  %v7302 = vunpack.c.l.b16 %v7151
  %v7303 = vunpack.c.l.b16 %v7152
  %v7304 = vunpack.c.l.b16 %v7153
  %v7305 = vunpack.c.l.b16 %v7154
  %v7306 = vunpack.c.l.b16 %v7155
  %v7307 = vunpack.c.l.b16 %v7156
  %v7308 = vunpack.c.l.b16 %v7157
  %v7309 = vunpack.c.l.b16 %v7158
  %v7310 = vunpack.c.l.b16 %v7159
  %v7311 = vunpack.c.l.b16 %v7160
  %v7312 = vunpack.c.l.b16 %v7161
  %v7313 = vunpack.c.l.b16 %v7162
  %v7314 = vunpack.c.l.b16 %v7163
  %v7315 = vunpack.c.l.b16 %v7164
  %v7316 = vunpack.c.l.b16 %v7165
  %v7317 = vunpack.c.l.b16 %v7166
  %v7318 = vunpack.c.l.b16 %v7167
  %v7319 = vunpack.c.l.b16 %v7168
  %v7320 = vunpack.c.l.b16 %v7169
  %v7321 = vunpack.c.l.b16 %v7170
  %v7322 = vunpack.c.l.b16 %v7171
  %v7323 = vunpack.c.l.b16 %v7172
  %v7324 = vunpack.c.l.b16 %v7173
  %v7325 = vunpack.c.l.b16 %v7174
  %v7326 = vunpack.c.l.b16 %v7175
  %v7327 = vunpack.c.l.b16 %v7176
  %v7328 = vunpack.c.l.b16 %v7177
  %v7329 = vunpack.c.l.b16 %v7178
  %v7330 = vunpack.c.l.b16 %v7179
  %v7331 = vunpack.c.l.b16 %v7180
  %v7332 = vunpack.c.l.b16 %v7181
  %v7333 = vunpack.c.l.b16 %v7182
  %v7334 = vunpack.c.l.b16 %v7183
  %v7335 = vunpack.c.l.b16 %v7184
  %v7336 = vunpack.c.l.b16 %v7185
  %v7337 = vunpack.c.l.b16 %v7186
  %v7338 = vunpack.c.l.b16 %v7187
  %v7339 = vunpack.c.l.b16 %v7188
  %v7340 = vpack.c.b16 %v7269, %v7268
  %v7341 = vpack.c.b16 %v7271, %v7270
  %v7342 = vpack.c.b16 %v7273, %v7272
  %v7343 = vpack.c.b16 %v7275, %v7274
  %v7344 = vpack.c.b16 %v7277, %v7276
  %v7345 = vpack.c.b16 %v7279, %v7278
  %v7346 = vpack.c.b16 %v7281, %v7280
  %v7347 = vpack.c.b16 %v7283, %v7282
  %v7348 = vpack.c.b16 %v7285, %v7284
  %v7349 = vpack.c.b16 %v7287, %v7286
  %v7350 = vpack.c.b16 %v7289, %v7288
  %v7351 = vpack.c.b16 %v7291, %v7290
  %v7352 = vpack.c.b16 %v7293, %v7292
  %v7353 = vpack.c.b16 %v7295, %v7294
  %v7354 = vpack.c.b16 %v7297, %v7296
  %v7355 = vpack.c.b16 %v7299, %v7298
  %v7356 = vpack.c.b16 %v7301, %v7300
  %v7357 = vpack.c.b16 %v7303, %v7302
  %v7358 = vpack.c.b16 %v7305, %v7304
  %v7359 = vpack.c.b16 %v7307, %v7306
  %v7360 = vpack.c.b16 %v7309, %v7308
  %v7361 = vpack.c.b16 %v7311, %v7310
  %v7362 = vpack.c.b16 %v7313, %v7312
  %v7363 = vpack.c.b16 %v7315, %v7314
  %v7364 = vpack.c.b16 %v7317, %v7316
  %v7365 = vpack.c.b16 %v7319, %v7318
  %v7366 = vpack.c.b16 %v7321, %v7320
  %v7367 = vpack.c.b16 %v7323, %v7322
  %v7368 = vpack.c.b16 %v7325, %v7324
  %v7369 = vpack.c.b16 %v7327, %v7326
  %v7370 = vpack.c.b16 %v7329, %v7328
  %v7371 = vpack.c.b16 %v7331, %v7330
  %v7372 = vpack.c.b16 %v7333, %v7332
  %v7373 = vpack.c.b16 %v7335, %v7334
  %v7374 = vpack.c.b16 %v7337, %v7336
  %v7375 = vpack.c.b16 %v7339, %v7338
  %v7413 = vsel %vm3535, %v7111, 0
  %v7416 = vsel %vm3535, %v7116, 0
  %7418 = vmatprep.subr.bf16.mxu0 0
  %7419 = vmatpush1.bf16.msra.mxu0 %v7340
  %7420 = vmatprep.subr.bf16.mxu0 0
  %7421 = vmatpush1.bf16.msra.mxu0 %v7341
  %7422 = vmatprep.subr.bf16.mxu0 0
  %7423 = vmatpush1.bf16.msra.mxu0 %v7342
  %7424 = vmatprep.subr.bf16.mxu0 0
  %7425 = vmatpush1.bf16.msra.mxu0 %v7343
  %7426 = vmatprep.subr.bf16.mxu0 0
  %7427 = vmatpush1.bf16.msra.mxu0 %v7344
  %7428 = vmatprep.subr.bf16.mxu0 0
  %7429 = vmatpush1.bf16.msra.mxu0 %v7345
  %7430 = vmatprep.subr.bf16.mxu0 0
  %7431 = vmatpush1.bf16.msra.mxu0 %v7346
  %7432 = vmatprep.subr.bf16.mxu0 0
  %7433 = vmatpush1.bf16.msra.mxu0 %v7347
  %7434 = vmatprep.subr.bf16.mxu0 0
  %7435 = vmatpush1.bf16.msra.mxu0 %v7348
  %7436 = vmatprep.subr.bf16.mxu0 0
  %7437 = vmatpush1.bf16.msra.mxu0 %v7349
  %7438 = vmatprep.subr.bf16.mxu0 0
  %7439 = vmatpush1.bf16.msra.mxu0 %v7350
  %7440 = vmatprep.subr.bf16.mxu0 0
  %7441 = vmatpush1.bf16.msra.mxu0 %v7351
  %7442 = vmatprep.subr.bf16.mxu0 0
  %7443 = vmatpush1.bf16.msra.mxu0 %v7352
  %7444 = vmatprep.subr.bf16.mxu0 0
  %7445 = vmatpush1.bf16.msra.mxu0 %v7353
  %7446 = vmatprep.subr.bf16.mxu0 0
  %7447 = vmatpush1.bf16.msra.mxu0 %v7354
  %7448 = vmatprep.subr.bf16.mxu0 0
  %7449 = vmatpush1.bf16.msra.mxu0 %v7355
  %7450 = vmatprep.mubr.bf16.mxu0 %v7108
  %7451 = vmatmul.mubr.bf16.gmra.mrb[0].mxu0 %v7107
  %v7452 = vpop.f32.mrb[0].mxu0
  %v7453 = vadd.f32 %v7194, %v7452
  %v7454 = vpop.f32.mrb[0].mxu0
  %v7455 = vpop.f32.mrb[0].mxu0
  %v7456 = vadd.f32 %v7194, %v7455
  %v7457 = vpop.f32.mrb[0].mxu0
  %7458 = vmatprep.mubr.bf16.mxu0 %v7113
  %7459 = vmatmul.mubr.bf16.gmra.mrb[0].mxu0 %v7112
  %v7460 = vpop.f32.mrb[0].mxu0
  %v7461 = vadd.f32 %v7194, %v7460
  %v7462 = vpop.f32.mrb[0].mxu0
  %v7463 = vpop.f32.mrb[0].mxu0
  %v7464 = vadd.f32 %v7194, %v7463
  %v7465 = vpop.f32.mrb[0].mxu0
  %7466 = vdwg.mxu0
  %7467 = vmatprep.subr.bf16.mxu0 0
  %7468 = vmatpush1.bf16.msra.mxu0 %v7356
  %7469 = vmatprep.subr.bf16.mxu0 0
  %7470 = vmatpush1.bf16.msra.mxu0 %v7357
  %7471 = vmatprep.subr.bf16.mxu0 0
  %7472 = vmatpush1.bf16.msra.mxu0 %v7358
  %7473 = vmatprep.subr.bf16.mxu0 0
  %7474 = vmatpush1.bf16.msra.mxu0 %v7359
  %7475 = vmatprep.subr.bf16.mxu0 0
  %7476 = vmatpush1.bf16.msra.mxu0 %v7360
  %7477 = vmatprep.subr.bf16.mxu0 0
  %7478 = vmatpush1.bf16.msra.mxu0 %v7361
  %7479 = vmatprep.subr.bf16.mxu0 0
  %7480 = vmatpush1.bf16.msra.mxu0 %v7362
  %7481 = vmatprep.subr.bf16.mxu0 0
  %7482 = vmatpush1.bf16.msra.mxu0 %v7363
  %7483 = vmatprep.subr.bf16.mxu0 0
  %7484 = vmatpush1.bf16.msra.mxu0 %v7364
  %7485 = vmatprep.subr.bf16.mxu0 0
  %7486 = vmatpush1.bf16.msra.mxu0 %v7365
  %7487 = vmatprep.subr.bf16.mxu0 0
  %7488 = vmatpush1.bf16.msra.mxu0 %v7366
  %7489 = vmatprep.subr.bf16.mxu0 0
  %7490 = vmatpush1.bf16.msra.mxu0 %v7367
  %7491 = vmatprep.subr.bf16.mxu0 0
  %7492 = vmatpush1.bf16.msra.mxu0 %v7368
  %7493 = vmatprep.subr.bf16.mxu0 0
  %7494 = vmatpush1.bf16.msra.mxu0 %v7369
  %7495 = vmatprep.subr.bf16.mxu0 0
  %7496 = vmatpush1.bf16.msra.mxu0 %v7370
  %7497 = vmatprep.subr.bf16.mxu0 0
  %7498 = vmatpush1.bf16.msra.mxu0 %v7371
  %7499 = vmatprep.mubr.bf16.mxu0 %v7110
  %7500 = vmatmul.mubr.bf16.gmra.mrb[0].mxu0 %v7109
  %v7501 = vpop.f32.mrb[0].mxu0
  %v7502 = vadd.f32 %v7453, %v7501
  %v7503 = vpop.f32.mrb[0].mxu0
  %v7504 = vpop.f32.mrb[0].mxu0
  %v7505 = vadd.f32 %v7456, %v7504
  %v7506 = vpop.f32.mrb[0].mxu0
  %7507 = vmatprep.mubr.bf16.mxu0 %v7115
  %7508 = vmatmul.mubr.bf16.gmra.mrb[0].mxu0 %v7114
  %v7509 = vpop.f32.mrb[0].mxu0
  %v7510 = vadd.f32 %v7461, %v7509
  %v7511 = vpop.f32.mrb[0].mxu0
  %v7512 = vpop.f32.mrb[0].mxu0
  %v7513 = vadd.f32 %v7464, %v7512
  %v7514 = vpop.f32.mrb[0].mxu0
  %7515 = vdwg.mxu0
  %7516 = vmatprep.subr.bf16.mxu0 0
  %7517 = vmatpush1.bf16.msra.mxu0 %v7372
  %7518 = vmatprep.subr.bf16.mxu0 0
  %7519 = vmatpush1.bf16.msra.mxu0 %v7373
  %7520 = vmatprep.subr.bf16.mxu0 0
  %7521 = vmatpush1.bf16.msra.mxu0 %v7374
  %7522 = vmatprep.subr.bf16.mxu0 0
  %7523 = vmatpush1.bf16.msra.mxu0 %v7375
  %7524 = vmatprep.subr.bf16.mxu0 0
  %7525 = vmatpush1.bf16.msra.mxu0 0
  %7526 = vmatprep.subr.bf16.mxu0 0
  %7527 = vmatpush1.bf16.msra.mxu0 0
  %7528 = vmatprep.subr.bf16.mxu0 0
  %7529 = vmatpush1.bf16.msra.mxu0 0
  %7530 = vmatprep.subr.bf16.mxu0 0
  %7531 = vmatpush1.bf16.msra.mxu0 0
  %7532 = vmatprep.subr.bf16.mxu0 0
  %7533 = vmatpush1.bf16.msra.mxu0 0
  %7534 = vmatprep.subr.bf16.mxu0 0
  %7535 = vmatpush1.bf16.msra.mxu0 0
  %7536 = vmatprep.subr.bf16.mxu0 0
  %7537 = vmatpush1.bf16.msra.mxu0 0
  %7538 = vmatprep.subr.bf16.mxu0 0
  %7539 = vmatpush1.bf16.msra.mxu0 0
  %7540 = vmatprep.subr.bf16.mxu0 0
  %7541 = vmatpush1.bf16.msra.mxu0 0
  %7542 = vmatprep.subr.bf16.mxu0 0
  %7543 = vmatpush1.bf16.msra.mxu0 0
  %7544 = vmatprep.subr.bf16.mxu0 0
  %7545 = vmatpush1.bf16.msra.mxu0 0
  %7546 = vmatprep.subr.bf16.mxu0 0
  %7547 = vmatpush1.bf16.msra.mxu0 0
  %7548 = vmatprep.mubr.bf16.mxu0 0
  %7549 = vmatmul.mubr.bf16.gmra.mrb[0].mxu0 %v7413
  %v7550 = vpop.f32.mrb[0].mxu0
  %v7551 = vadd.f32 %v7502, %v7550
  %v7552 = vpop.f32.mrb[0].mxu0
  %v7553 = vpop.f32.mrb[0].mxu0
  %v7554 = vadd.f32 %v7505, %v7553
  %v7555 = vpop.f32.mrb[0].mxu0
  %7556 = vmatprep.mubr.bf16.mxu0 0
  %7557 = vmatmul.mubr.bf16.gmra.mrb[0].mxu0 %v7416
  %v7558 = vpop.f32.mrb[0].mxu0
  %v7559 = vadd.f32 %v7510, %v7558
  %v7560 = vpop.f32.mrb[0].mxu0
  %v7561 = vpop.f32.mrb[0].mxu0
  %v7562 = vadd.f32 %v7513, %v7561
  %v7563 = vpop.f32.mrb[0].mxu0
  %7564 = vdwg.mxu0
  %v7565 = vpack.c.bf16 %v7554, %v7551
  %v7566 = vpack.c.bf16 %v7562, %v7559
  %v7567 = vld [vmem:[%s43] sm:$0xf]
  %v7568 = vld [vmem:[%s43 + $0x4] sm:$0xf]
  %v7569 = vld [vmem:[%s43 + $0x8] sm:$0xf]
  %v7570 = vld [vmem:[%s43 + $0xc] sm:$0xf]
  %v7571 = vld [vmem:[%s45] sm:$0x1]
  %v7573 = vlaneseq
  %v7574 = vshrl.u32 %v7573, 7
  %v7575 = vsub.s32 0, %v7574
  %v7576 = vrot.slane %v7571, %v7575
  %v7582 = vunpack.c.l.b16 %v7567
  %v7583 = vunpack.c.l.b16 %v7568
  %v7584 = vunpack.c.l.b16 %v7569
  %v7585 = vunpack.c.l.b16 %v7570
  %v7586 = vpack.c.b16 %v7583, %v7582
  %v7587 = vpack.c.b16 %v7585, %v7584
  %v7591 = vsel %vm1017, %v7565, 0
  %v7594 = vsel %vm1017, %v7566, 0
  %7596 = vmatprep.subr.bf16.mxu0 0
  %7597 = vmatpush1.bf16.msra.mxu0 %v7586
  %7598 = vmatprep.subr.bf16.mxu0 0
  %7599 = vmatpush1.bf16.msra.mxu0 %v7587
  %7600 = vmatprep.subr.bf16.mxu0 0
  %7601 = vmatpush1.bf16.msra.mxu0 0
  %7602 = vmatprep.subr.bf16.mxu0 0
  %7603 = vmatpush1.bf16.msra.mxu0 0
  %7604 = vmatprep.subr.bf16.mxu0 0
  %7605 = vmatpush1.bf16.msra.mxu0 0
  %7606 = vmatprep.subr.bf16.mxu0 0
  %7607 = vmatpush1.bf16.msra.mxu0 0
  %7608 = vmatprep.subr.bf16.mxu0 0
  %7609 = vmatpush1.bf16.msra.mxu0 0
  %7610 = vmatprep.subr.bf16.mxu0 0
  %7611 = vmatpush1.bf16.msra.mxu0 0
  %7612 = vmatprep.subr.bf16.mxu0 0
  %7613 = vmatpush1.bf16.msra.mxu0 0
  %7614 = vmatprep.subr.bf16.mxu0 0
  %7615 = vmatpush1.bf16.msra.mxu0 0
  %7616 = vmatprep.subr.bf16.mxu0 0
  %7617 = vmatpush1.bf16.msra.mxu0 0
  %7618 = vmatprep.subr.bf16.mxu0 0
  %7619 = vmatpush1.bf16.msra.mxu0 0
  %7620 = vmatprep.subr.bf16.mxu0 0
  %7621 = vmatpush1.bf16.msra.mxu0 0
  %7622 = vmatprep.subr.bf16.mxu0 0
  %7623 = vmatpush1.bf16.msra.mxu0 0
  %7624 = vmatprep.subr.bf16.mxu0 0
  %7625 = vmatpush1.bf16.msra.mxu0 0
  %7626 = vmatprep.subr.bf16.mxu0 0
  %7627 = vmatpush1.bf16.msra.mxu0 0
  %7628 = vmatprep.mubr.bf16.mxu0 0
  %7629 = vmatmul.mubr.bf16.gmra.mrb[0].mxu0 %v7591
  %v7630 = vpop.f32.mrb[0].mxu0
  %v7631 = vadd.f32 %v7576, %v7630
  %v7632 = vpop.f32.mrb[0].mxu0
  %v7633 = vpop.f32.mrb[0].mxu0
  %v7634 = vpop.f32.mrb[0].mxu0
  %7635 = vmatprep.mubr.bf16.mxu0 0
  %7636 = vmatmul.mubr.bf16.gmra.mrb[0].mxu0 %v7594
  %v7637 = vpop.f32.mrb[0].mxu0
  %v7638 = vadd.f32 %v7576, %v7637
  %v7639 = vpop.f32.mrb[0].mxu0
  %v7640 = vpop.f32.mrb[0].mxu0
  %v7641 = vpop.f32.mrb[0].mxu0
  %7642 = vdwg.mxu0
  %v7643 = vmax.f32 %v7631, 0.0
  %v7644 = vmax.f32 %v7638, 0.0
  %7646 = vrot.lane.b32.xlu0 %v7643, 32
  %v7647 = vpop.permute.xlu0 %7646
  %vm7649 = vcmask 516352
  %7650 = vst.msk [vmem:[#allocation16] sm:$0x1] %vm7649, %v7647
  %7652 = vrot.lane.b32.xlu0 %v7644, 32
  %v7653 = vpop.permute.xlu0 %7652
  %7655 = vst.msk [vmem:[#allocation16 + $0x1] sm:$0x1] %vm7649, %v7653
  %v7656 = vld [vmem:[%s47] sm:$0xff]
  %v7657 = vld [vmem:[%s47 + $0x8] sm:$0xff]
  %v7658 = vld [vmem:[%s47 + $0x10] sm:$0xff]
  %v7659 = vld [vmem:[%s47 + $0x18] sm:$0xff]
  %v7660 = vld [vmem:[%s47 + $0x20] sm:$0xff]
  %v7661 = vld [vmem:[%s47 + $0x28] sm:$0xff]
  %v7662 = vld [vmem:[%s47 + $0x30] sm:$0xff]
  %v7663 = vld [vmem:[%s47 + $0x38] sm:$0xff]
  %v7664 = vld [vmem:[%s47 + $0x40] sm:$0xff]
  %v7665 = vld [vmem:[%s47 + $0x48] sm:$0xff]
  %v7666 = vld [vmem:[%s47 + $0x50] sm:$0xff]
  %v7667 = vld [vmem:[%s47 + $0x58] sm:$0xff]
  %v7668 = vld [vmem:[%s47 + $0x60] sm:$0xff]
  %v7669 = vld [vmem:[%s47 + $0x68] sm:$0xff]
  %v7670 = vld [vmem:[%s47 + $0x70] sm:$0xff]
  %v7671 = vld [vmem:[%s47 + $0x78] sm:$0xff]
  %v7672 = vld [vmem:[%s47 + $0x80] sm:$0xff]
  %v7673 = vld [vmem:[%s47 + $0x88] sm:$0xff]
  %v7674 = vld [vmem:[%s47 + $0x90] sm:$0xff]
  %v7675 = vld [vmem:[%s47 + $0x98] sm:$0xff]
  %v7676 = vld [vmem:[%s47 + $0xa0] sm:$0xff]
  %v7677 = vld [vmem:[%s47 + $0xa8] sm:$0xff]
  %v7678 = vld [vmem:[%s47 + $0xb0] sm:$0xff]
  %v7679 = vld [vmem:[%s47 + $0xb8] sm:$0xff]
  %v7680 = vld [vmem:[%s47 + $0xc0] sm:$0xff]
  %v7681 = vld [vmem:[%s47 + $0xc8] sm:$0xff]
  %v7682 = vld [vmem:[%s47 + $0xd0] sm:$0xff]
  %v7683 = vld [vmem:[%s47 + $0xd8] sm:$0xff]
  %v7684 = vld [vmem:[%s47 + $0xe0] sm:$0xff]
  %v7685 = vld [vmem:[%s47 + $0xe8] sm:$0xff]
  %v7686 = vld [vmem:[%s47 + $0xf0] sm:$0xff]
  %v7687 = vld [vmem:[%s47 + $0xf8] sm:$0xff]
  %v7688 = vld [vmem:[%s49] sm:$0xf]
  %v7689 = vld [vmem:[%s49 + $0x4] sm:$0xf]
  %v7690 = vld [vmem:[%s49 + $0x8] sm:$0xf]
  %v7691 = vld [vmem:[%s49 + $0xc] sm:$0xf]
  %v7692 = vld [vmem:[%s49 + $0x10] sm:$0xf]
  %v7693 = vld [vmem:[%s49 + $0x14] sm:$0xf]
  %v7694 = vld [vmem:[%s49 + $0x18] sm:$0xf]
  %v7695 = vld [vmem:[%s49 + $0x1c] sm:$0xf]
  %v7696 = vld [vmem:[%s49 + $0x20] sm:$0xf]
  %v7697 = vld [vmem:[%s49 + $0x24] sm:$0xf]
  %v7698 = vld [vmem:[%s49 + $0x28] sm:$0xf]
  %v7699 = vld [vmem:[%s49 + $0x2c] sm:$0xf]
  %v7700 = vld [vmem:[%s49 + $0x30] sm:$0xf]
  %v7701 = vld [vmem:[%s49 + $0x34] sm:$0xf]
  %v7702 = vld [vmem:[%s49 + $0x38] sm:$0xf]
  %v7703 = vld [vmem:[%s49 + $0x3c] sm:$0xf]
  %v7704 = vld [vmem:[%s49 + $0x40] sm:$0xf]
  %v7705 = vld [vmem:[%s49 + $0x44] sm:$0xf]
  %v7706 = vld [vmem:[%s49 + $0x48] sm:$0xf]
  %v7707 = vld [vmem:[%s49 + $0x4c] sm:$0xf]
  %v7708 = vld [vmem:[%s49 + $0x50] sm:$0xf]
  %v7709 = vld [vmem:[%s49 + $0x54] sm:$0xf]
  %v7710 = vld [vmem:[%s49 + $0x58] sm:$0xf]
  %v7711 = vld [vmem:[%s49 + $0x5c] sm:$0xf]
  %v7712 = vld [vmem:[%s49 + $0x60] sm:$0xf]
  %v7713 = vld [vmem:[%s49 + $0x64] sm:$0xf]
  %v7714 = vld [vmem:[%s49 + $0x68] sm:$0xf]
  %v7715 = vld [vmem:[%s49 + $0x6c] sm:$0xf]
  %v7716 = vld [vmem:[%s49 + $0x70] sm:$0xf]
  %v7717 = vld [vmem:[%s49 + $0x74] sm:$0xf]
  %v7718 = vld [vmem:[%s49 + $0x78] sm:$0xf]
  %v7719 = vld [vmem:[%s49 + $0x7c] sm:$0xf]
  %v7720 = vld [vmem:[%s49 + $0x80] sm:$0xf]
  %v7721 = vld [vmem:[%s49 + $0x84] sm:$0xf]
  %v7722 = vld [vmem:[%s49 + $0x88] sm:$0xf]
  %v7723 = vld [vmem:[%s49 + $0x8c] sm:$0xf]
  %v7724 = vld [vmem:[%s49 + $0x90] sm:$0xf]
  %v7725 = vld [vmem:[%s49 + $0x94] sm:$0xf]
  %v7726 = vld [vmem:[%s49 + $0x98] sm:$0xf]
  %v7727 = vld [vmem:[%s49 + $0x9c] sm:$0xf]
  %v7728 = vld [vmem:[%s49 + $0xa0] sm:$0xf]
  %v7729 = vld [vmem:[%s49 + $0xa4] sm:$0xf]
  %v7730 = vld [vmem:[%s49 + $0xa8] sm:$0xf]
  %v7731 = vld [vmem:[%s49 + $0xac] sm:$0xf]
  %v7732 = vld [vmem:[%s49 + $0xb0] sm:$0xf]
  %v7733 = vld [vmem:[%s49 + $0xb4] sm:$0xf]
  %v7734 = vld [vmem:[%s49 + $0xb8] sm:$0xf]
  %v7735 = vld [vmem:[%s49 + $0xbc] sm:$0xf]
  %v7736 = vld [vmem:[%s49 + $0xc0] sm:$0xf]
  %v7737 = vld [vmem:[%s49 + $0xc4] sm:$0xf]
  %v7738 = vld [vmem:[%s49 + $0xc8] sm:$0xf]
  %v7739 = vld [vmem:[%s49 + $0xcc] sm:$0xf]
  %v7740 = vld [vmem:[%s49 + $0xd0] sm:$0xf]
  %v7741 = vld [vmem:[%s49 + $0xd4] sm:$0xf]
  %v7742 = vld [vmem:[%s49 + $0xd8] sm:$0xf]
  %v7743 = vld [vmem:[%s49 + $0xdc] sm:$0xf]
  %v7744 = vld [vmem:[%s49 + $0xe0] sm:$0xf]
  %v7745 = vld [vmem:[%s49 + $0xe4] sm:$0xf]
  %v7746 = vld [vmem:[%s49 + $0xe8] sm:$0xf]
  %v7747 = vld [vmem:[%s49 + $0xec] sm:$0xf]
  %v7748 = vld [vmem:[%s49 + $0xf0] sm:$0xf]
  %v7749 = vld [vmem:[%s49 + $0xf4] sm:$0xf]
  %v7750 = vld [vmem:[%s49 + $0xf8] sm:$0xf]
  %v7751 = vld [vmem:[%s49 + $0xfc] sm:$0xf]
  %v7752 = vld [vmem:[%s51] sm:$0x1]
  %v7754 = vlaneseq
  %v7755 = vshrl.u32 %v7754, 7
  %v7756 = vsub.s32 0, %v7755
  %v7757 = vrot.slane %v7752, %v7756
  %v7791 = vunpack.c.l.b16 %v7656
  %v7792 = vunpack.c.h.b16 %v7656
  %v7793 = vunpack.c.l.b16 %v7657
  %v7794 = vunpack.c.h.b16 %v7657
  %v7795 = vunpack.c.l.b16 %v7658
  %v7796 = vunpack.c.h.b16 %v7658
  %v7797 = vunpack.c.l.b16 %v7659
  %v7798 = vunpack.c.h.b16 %v7659
  %v7799 = vunpack.c.l.b16 %v7660
  %v7800 = vunpack.c.h.b16 %v7660
  %v7801 = vunpack.c.l.b16 %v7661
  %v7802 = vunpack.c.h.b16 %v7661
  %v7803 = vunpack.c.l.b16 %v7662
  %v7804 = vunpack.c.h.b16 %v7662
  %v7805 = vunpack.c.l.b16 %v7663
  %v7806 = vunpack.c.h.b16 %v7663
  %v7807 = vunpack.c.l.b16 %v7664
  %v7808 = vunpack.c.h.b16 %v7664
  %v7809 = vunpack.c.l.b16 %v7665
  %v7810 = vunpack.c.h.b16 %v7665
  %v7811 = vunpack.c.l.b16 %v7666
  %v7812 = vunpack.c.h.b16 %v7666
  %v7813 = vunpack.c.l.b16 %v7667
  %v7814 = vunpack.c.h.b16 %v7667
  %v7815 = vunpack.c.l.b16 %v7668
  %v7816 = vunpack.c.h.b16 %v7668
  %v7817 = vunpack.c.l.b16 %v7669
  %v7818 = vunpack.c.h.b16 %v7669
  %v7819 = vunpack.c.l.b16 %v7670
  %v7820 = vunpack.c.h.b16 %v7670
  %v7821 = vunpack.c.l.b16 %v7671
  %v7822 = vunpack.c.h.b16 %v7671
  %v7823 = vunpack.c.l.b16 %v7672
  %v7824 = vunpack.c.h.b16 %v7672
  %v7825 = vunpack.c.l.b16 %v7673
  %v7826 = vunpack.c.h.b16 %v7673
  %v7827 = vunpack.c.l.b16 %v7674
  %v7828 = vunpack.c.h.b16 %v7674
  %v7829 = vunpack.c.l.b16 %v7675
  %v7830 = vunpack.c.h.b16 %v7675
  %v7831 = vunpack.c.l.b16 %v7676
  %v7832 = vunpack.c.h.b16 %v7676
  %v7833 = vunpack.c.l.b16 %v7677
  %v7834 = vunpack.c.h.b16 %v7677
  %v7835 = vunpack.c.l.b16 %v7678
  %v7836 = vunpack.c.h.b16 %v7678
  %v7837 = vunpack.c.l.b16 %v7679
  %v7838 = vunpack.c.h.b16 %v7679
  %v7839 = vunpack.c.l.b16 %v7680
  %v7840 = vunpack.c.h.b16 %v7680
  %v7841 = vunpack.c.l.b16 %v7681
  %v7842 = vunpack.c.h.b16 %v7681
  %v7843 = vunpack.c.l.b16 %v7682
  %v7844 = vunpack.c.h.b16 %v7682
  %v7845 = vunpack.c.l.b16 %v7683
  %v7846 = vunpack.c.h.b16 %v7683
  %v7847 = vunpack.c.l.b16 %v7684
  %v7848 = vunpack.c.h.b16 %v7684
  %v7849 = vunpack.c.l.b16 %v7685
  %v7850 = vunpack.c.h.b16 %v7685
  %v7851 = vunpack.c.l.b16 %v7686
  %v7852 = vunpack.c.h.b16 %v7686
  %v7853 = vunpack.c.l.b16 %v7687
  %v7854 = vunpack.c.h.b16 %v7687
  %v7855 = vpack.c.b16 %v7795, %v7791
  %v7856 = vpack.c.b16 %v7796, %v7792
  %v7857 = vpack.c.b16 %v7797, %v7793
  %v7858 = vpack.c.b16 %v7798, %v7794
  %v7859 = vpack.c.b16 %v7803, %v7799
  %v7860 = vpack.c.b16 %v7804, %v7800
  %v7861 = vpack.c.b16 %v7805, %v7801
  %v7862 = vpack.c.b16 %v7806, %v7802
  %v7863 = vpack.c.b16 %v7811, %v7807
  %v7864 = vpack.c.b16 %v7812, %v7808
  %v7865 = vpack.c.b16 %v7813, %v7809
  %v7866 = vpack.c.b16 %v7814, %v7810
  %v7867 = vpack.c.b16 %v7819, %v7815
  %v7868 = vpack.c.b16 %v7820, %v7816
  %v7869 = vpack.c.b16 %v7821, %v7817
  %v7870 = vpack.c.b16 %v7822, %v7818
  %v7871 = vpack.c.b16 %v7827, %v7823
  %v7872 = vpack.c.b16 %v7828, %v7824
  %v7873 = vpack.c.b16 %v7829, %v7825
  %v7874 = vpack.c.b16 %v7830, %v7826
  %v7875 = vpack.c.b16 %v7835, %v7831
  %v7876 = vpack.c.b16 %v7836, %v7832
  %v7877 = vpack.c.b16 %v7837, %v7833
  %v7878 = vpack.c.b16 %v7838, %v7834
  %v7879 = vpack.c.b16 %v7843, %v7839
  %v7880 = vpack.c.b16 %v7844, %v7840
  %v7881 = vpack.c.b16 %v7845, %v7841
  %v7882 = vpack.c.b16 %v7846, %v7842
  %v7883 = vpack.c.b16 %v7851, %v7847
  %v7884 = vpack.c.b16 %v7852, %v7848
  %v7885 = vpack.c.b16 %v7853, %v7849
  %v7886 = vpack.c.b16 %v7854, %v7850
  %v7983 = vunpack.c.l.b16 %v7688
  %v7984 = vunpack.c.l.b16 %v7689
  %v7985 = vunpack.c.l.b16 %v7690
  %v7986 = vunpack.c.l.b16 %v7691
  %v7987 = vunpack.c.l.b16 %v7692
  %v7988 = vunpack.c.l.b16 %v7693
  %v7989 = vunpack.c.l.b16 %v7694
  %v7990 = vunpack.c.l.b16 %v7695
  %v7991 = vunpack.c.l.b16 %v7696
  %v7992 = vunpack.c.l.b16 %v7697
  %v7993 = vunpack.c.l.b16 %v7698
  %v7994 = vunpack.c.l.b16 %v7699
  %v7995 = vunpack.c.l.b16 %v7700
  %v7996 = vunpack.c.l.b16 %v7701
  %v7997 = vunpack.c.l.b16 %v7702
  %v7998 = vunpack.c.l.b16 %v7703
  %v7999 = vunpack.c.l.b16 %v7704
  %v8000 = vunpack.c.l.b16 %v7705
  %v8001 = vunpack.c.l.b16 %v7706
  %v8002 = vunpack.c.l.b16 %v7707
  %v8003 = vunpack.c.l.b16 %v7708
  %v8004 = vunpack.c.l.b16 %v7709
  %v8005 = vunpack.c.l.b16 %v7710
  %v8006 = vunpack.c.l.b16 %v7711
  %v8007 = vunpack.c.l.b16 %v7712
  %v8008 = vunpack.c.l.b16 %v7713
  %v8009 = vunpack.c.l.b16 %v7714
  %v8010 = vunpack.c.l.b16 %v7715
  %v8011 = vunpack.c.l.b16 %v7716
  %v8012 = vunpack.c.l.b16 %v7717
  %v8013 = vunpack.c.l.b16 %v7718
  %v8014 = vunpack.c.l.b16 %v7719
  %v8015 = vunpack.c.l.b16 %v7720
  %v8016 = vunpack.c.l.b16 %v7721
  %v8017 = vunpack.c.l.b16 %v7722
  %v8018 = vunpack.c.l.b16 %v7723
  %v8019 = vunpack.c.l.b16 %v7724
  %v8020 = vunpack.c.l.b16 %v7725
  %v8021 = vunpack.c.l.b16 %v7726
  %v8022 = vunpack.c.l.b16 %v7727
  %v8023 = vunpack.c.l.b16 %v7728
  %v8024 = vunpack.c.l.b16 %v7729
  %v8025 = vunpack.c.l.b16 %v7730
  %v8026 = vunpack.c.l.b16 %v7731
  %v8027 = vunpack.c.l.b16 %v7732
  %v8028 = vunpack.c.l.b16 %v7733
  %v8029 = vunpack.c.l.b16 %v7734
  %v8030 = vunpack.c.l.b16 %v7735
  %v8031 = vunpack.c.l.b16 %v7736
  %v8032 = vunpack.c.l.b16 %v7737
  %v8033 = vunpack.c.l.b16 %v7738
  %v8034 = vunpack.c.l.b16 %v7739
  %v8035 = vunpack.c.l.b16 %v7740
  %v8036 = vunpack.c.l.b16 %v7741
  %v8037 = vunpack.c.l.b16 %v7742
  %v8038 = vunpack.c.l.b16 %v7743
  %v8039 = vunpack.c.l.b16 %v7744
  %v8040 = vunpack.c.l.b16 %v7745
  %v8041 = vunpack.c.l.b16 %v7746
  %v8042 = vunpack.c.l.b16 %v7747
  %v8043 = vunpack.c.l.b16 %v7748
  %v8044 = vunpack.c.l.b16 %v7749
  %v8045 = vunpack.c.l.b16 %v7750
  %v8046 = vunpack.c.l.b16 %v7751
  %v8047 = vpack.c.b16 %v7984, %v7983
  %v8048 = vpack.c.b16 %v7986, %v7985
  %v8049 = vpack.c.b16 %v7988, %v7987
  %v8050 = vpack.c.b16 %v7990, %v7989
  %v8051 = vpack.c.b16 %v7992, %v7991
  %v8052 = vpack.c.b16 %v7994, %v7993
  %v8053 = vpack.c.b16 %v7996, %v7995
  %v8054 = vpack.c.b16 %v7998, %v7997
  %v8055 = vpack.c.b16 %v8000, %v7999
  %v8056 = vpack.c.b16 %v8002, %v8001
  %v8057 = vpack.c.b16 %v8004, %v8003
  %v8058 = vpack.c.b16 %v8006, %v8005
  %v8059 = vpack.c.b16 %v8008, %v8007
  %v8060 = vpack.c.b16 %v8010, %v8009
  %v8061 = vpack.c.b16 %v8012, %v8011
  %v8062 = vpack.c.b16 %v8014, %v8013
  %v8063 = vpack.c.b16 %v8016, %v8015
  %v8064 = vpack.c.b16 %v8018, %v8017
  %v8065 = vpack.c.b16 %v8020, %v8019
  %v8066 = vpack.c.b16 %v8022, %v8021
  %v8067 = vpack.c.b16 %v8024, %v8023
  %v8068 = vpack.c.b16 %v8026, %v8025
  %v8069 = vpack.c.b16 %v8028, %v8027
  %v8070 = vpack.c.b16 %v8030, %v8029
  %v8071 = vpack.c.b16 %v8032, %v8031
  %v8072 = vpack.c.b16 %v8034, %v8033
  %v8073 = vpack.c.b16 %v8036, %v8035
  %v8074 = vpack.c.b16 %v8038, %v8037
  %v8075 = vpack.c.b16 %v8040, %v8039
  %v8076 = vpack.c.b16 %v8042, %v8041
  %v8077 = vpack.c.b16 %v8044, %v8043
  %v8078 = vpack.c.b16 %v8046, %v8045
  %8111 = vmatprep.subr.bf16.mxu0 0
  %8112 = vmatpush1.bf16.msra.mxu0 %v8047
  %8113 = vmatprep.subr.bf16.mxu0 0
  %8114 = vmatpush1.bf16.msra.mxu0 %v8048
  %8115 = vmatprep.subr.bf16.mxu0 0
  %8116 = vmatpush1.bf16.msra.mxu0 %v8049
  %8117 = vmatprep.subr.bf16.mxu0 0
  %8118 = vmatpush1.bf16.msra.mxu0 %v8050
  %8119 = vmatprep.subr.bf16.mxu0 0
  %8120 = vmatpush1.bf16.msra.mxu0 %v8051
  %8121 = vmatprep.subr.bf16.mxu0 0
  %8122 = vmatpush1.bf16.msra.mxu0 %v8052
  %8123 = vmatprep.subr.bf16.mxu0 0
  %8124 = vmatpush1.bf16.msra.mxu0 %v8053
  %8125 = vmatprep.subr.bf16.mxu0 0
  %8126 = vmatpush1.bf16.msra.mxu0 %v8054
  %8127 = vmatprep.subr.bf16.mxu0 0
  %8128 = vmatpush1.bf16.msra.mxu0 %v8055
  %8129 = vmatprep.subr.bf16.mxu0 0
  %8130 = vmatpush1.bf16.msra.mxu0 %v8056
  %8131 = vmatprep.subr.bf16.mxu0 0
  %8132 = vmatpush1.bf16.msra.mxu0 %v8057
  %8133 = vmatprep.subr.bf16.mxu0 0
  %8134 = vmatpush1.bf16.msra.mxu0 %v8058
  %8135 = vmatprep.subr.bf16.mxu0 0
  %8136 = vmatpush1.bf16.msra.mxu0 %v8059
  %8137 = vmatprep.subr.bf16.mxu0 0
  %8138 = vmatpush1.bf16.msra.mxu0 %v8060
  %8139 = vmatprep.subr.bf16.mxu0 0
  %8140 = vmatpush1.bf16.msra.mxu0 %v8061
  %8141 = vmatprep.subr.bf16.mxu0 0
  %8142 = vmatpush1.bf16.msra.mxu0 %v8062
  %8143 = vmatprep.mubr.bf16.mxu0 %v7856
  %8144 = vmatmul.mubr.bf16.gmra.mrb[0].mxu0 %v7855
  %v8145 = vpop.f32.mrb[0].mxu0
  %v8146 = vadd.f32 %v7757, %v8145
  %v8147 = vpop.f32.mrb[0].mxu0
  %v8148 = vpop.f32.mrb[0].mxu0
  %v8149 = vadd.f32 %v7757, %v8148
  %v8150 = vpop.f32.mrb[0].mxu0
  %8151 = vmatprep.mubr.bf16.mxu0 %v7860
  %8152 = vmatmul.mubr.bf16.gmra.mrb[0].mxu0 %v7859
  %v8153 = vpop.f32.mrb[0].mxu0
  %v8154 = vadd.f32 %v7757, %v8153
  %v8155 = vpop.f32.mrb[0].mxu0
  %v8156 = vpop.f32.mrb[0].mxu0
  %v8157 = vadd.f32 %v7757, %v8156
  %v8158 = vpop.f32.mrb[0].mxu0
  %8159 = vmatprep.mubr.bf16.mxu0 %v7864
  %8160 = vmatmul.mubr.bf16.gmra.mrb[0].mxu0 %v7863
  %v8161 = vpop.f32.mrb[0].mxu0
  %v8162 = vadd.f32 %v7757, %v8161
  %v8163 = vpop.f32.mrb[0].mxu0
  %v8164 = vpop.f32.mrb[0].mxu0
  %v8165 = vadd.f32 %v7757, %v8164
  %v8166 = vpop.f32.mrb[0].mxu0
  %8167 = vmatprep.mubr.bf16.mxu0 %v7868
  %8168 = vmatmul.mubr.bf16.gmra.mrb[0].mxu0 %v7867
  %v8169 = vpop.f32.mrb[0].mxu0
  %v8170 = vadd.f32 %v7757, %v8169
  %v8171 = vpop.f32.mrb[0].mxu0
  %v8172 = vpop.f32.mrb[0].mxu0
  %v8173 = vadd.f32 %v7757, %v8172
  %v8174 = vpop.f32.mrb[0].mxu0
  %8175 = vmatprep.mubr.bf16.mxu0 %v7872
  %8176 = vmatmul.mubr.bf16.gmra.mrb[0].mxu0 %v7871
  %v8177 = vpop.f32.mrb[0].mxu0
  %v8178 = vadd.f32 %v7757, %v8177
  %v8179 = vpop.f32.mrb[0].mxu0
  %v8180 = vpop.f32.mrb[0].mxu0
  %v8181 = vadd.f32 %v7757, %v8180
  %v8182 = vpop.f32.mrb[0].mxu0
  %8183 = vmatprep.mubr.bf16.mxu0 %v7876
  %8184 = vmatmul.mubr.bf16.gmra.mrb[0].mxu0 %v7875
  %v8185 = vpop.f32.mrb[0].mxu0
  %v8186 = vadd.f32 %v7757, %v8185
  %v8187 = vpop.f32.mrb[0].mxu0
  %v8188 = vpop.f32.mrb[0].mxu0
  %v8189 = vadd.f32 %v7757, %v8188
  %v8190 = vpop.f32.mrb[0].mxu0
  %8191 = vmatprep.mubr.bf16.mxu0 %v7880
  %8192 = vmatmul.mubr.bf16.gmra.mrb[0].mxu0 %v7879
  %v8193 = vpop.f32.mrb[0].mxu0
  %v8194 = vadd.f32 %v7757, %v8193
  %v8195 = vpop.f32.mrb[0].mxu0
  %v8196 = vpop.f32.mrb[0].mxu0
  %v8197 = vadd.f32 %v7757, %v8196
  %v8198 = vpop.f32.mrb[0].mxu0
  %8199 = vmatprep.mubr.bf16.mxu0 %v7884
  %8200 = vmatmul.mubr.bf16.gmra.mrb[0].mxu0 %v7883
  %v8201 = vpop.f32.mrb[0].mxu0
  %v8202 = vadd.f32 %v7757, %v8201
  %v8203 = vpop.f32.mrb[0].mxu0
  %v8204 = vpop.f32.mrb[0].mxu0
  %v8205 = vadd.f32 %v7757, %v8204
  %v8206 = vpop.f32.mrb[0].mxu0
  %8207 = vdwg.mxu0
  %8208 = vmatprep.subr.bf16.mxu0 0
  %8209 = vmatpush1.bf16.msra.mxu0 %v8063
  %8210 = vmatprep.subr.bf16.mxu0 0
  %8211 = vmatpush1.bf16.msra.mxu0 %v8064
  %8212 = vmatprep.subr.bf16.mxu0 0
  %8213 = vmatpush1.bf16.msra.mxu0 %v8065
  %8214 = vmatprep.subr.bf16.mxu0 0
  %8215 = vmatpush1.bf16.msra.mxu0 %v8066
  %8216 = vmatprep.subr.bf16.mxu0 0
  %8217 = vmatpush1.bf16.msra.mxu0 %v8067
  %8218 = vmatprep.subr.bf16.mxu0 0
  %8219 = vmatpush1.bf16.msra.mxu0 %v8068
  %8220 = vmatprep.subr.bf16.mxu0 0
  %8221 = vmatpush1.bf16.msra.mxu0 %v8069
  %8222 = vmatprep.subr.bf16.mxu0 0
  %8223 = vmatpush1.bf16.msra.mxu0 %v8070
  %8224 = vmatprep.subr.bf16.mxu0 0
  %8225 = vmatpush1.bf16.msra.mxu0 %v8071
  %8226 = vmatprep.subr.bf16.mxu0 0
  %8227 = vmatpush1.bf16.msra.mxu0 %v8072
  %8228 = vmatprep.subr.bf16.mxu0 0
  %8229 = vmatpush1.bf16.msra.mxu0 %v8073
  %8230 = vmatprep.subr.bf16.mxu0 0
  %8231 = vmatpush1.bf16.msra.mxu0 %v8074
  %8232 = vmatprep.subr.bf16.mxu0 0
  %8233 = vmatpush1.bf16.msra.mxu0 %v8075
  %8234 = vmatprep.subr.bf16.mxu0 0
  %8235 = vmatpush1.bf16.msra.mxu0 %v8076
  %8236 = vmatprep.subr.bf16.mxu0 0
  %8237 = vmatpush1.bf16.msra.mxu0 %v8077
  %8238 = vmatprep.subr.bf16.mxu0 0
  %8239 = vmatpush1.bf16.msra.mxu0 %v8078
  %8240 = vmatprep.mubr.bf16.mxu0 %v7858
  %8241 = vmatmul.mubr.bf16.gmra.mrb[0].mxu0 %v7857
  %v8242 = vpop.f32.mrb[0].mxu0
  %v8243 = vadd.f32 %v8146, %v8242
  %v8244 = vpop.f32.mrb[0].mxu0
  %v8245 = vpop.f32.mrb[0].mxu0
  %v8246 = vadd.f32 %v8149, %v8245
  %v8247 = vpop.f32.mrb[0].mxu0
  %8248 = vmatprep.mubr.bf16.mxu0 %v7862
  %8249 = vmatmul.mubr.bf16.gmra.mrb[0].mxu0 %v7861
  %v8250 = vpop.f32.mrb[0].mxu0
  %v8251 = vadd.f32 %v8154, %v8250
  %v8252 = vpop.f32.mrb[0].mxu0
  %v8253 = vpop.f32.mrb[0].mxu0
  %v8254 = vadd.f32 %v8157, %v8253
  %v8255 = vpop.f32.mrb[0].mxu0
  %8256 = vmatprep.mubr.bf16.mxu0 %v7866
  %8257 = vmatmul.mubr.bf16.gmra.mrb[0].mxu0 %v7865
  %v8258 = vpop.f32.mrb[0].mxu0
  %v8259 = vadd.f32 %v8162, %v8258
  %v8260 = vpop.f32.mrb[0].mxu0
  %v8261 = vpop.f32.mrb[0].mxu0
  %v8262 = vadd.f32 %v8165, %v8261
  %v8263 = vpop.f32.mrb[0].mxu0
  %8264 = vmatprep.mubr.bf16.mxu0 %v7870
  %8265 = vmatmul.mubr.bf16.gmra.mrb[0].mxu0 %v7869
  %v8266 = vpop.f32.mrb[0].mxu0
  %v8267 = vadd.f32 %v8170, %v8266
  %v8268 = vpop.f32.mrb[0].mxu0
  %v8269 = vpop.f32.mrb[0].mxu0
  %v8270 = vadd.f32 %v8173, %v8269
  %v8271 = vpop.f32.mrb[0].mxu0
  %8272 = vmatprep.mubr.bf16.mxu0 %v7874
  %8273 = vmatmul.mubr.bf16.gmra.mrb[0].mxu0 %v7873
  %v8274 = vpop.f32.mrb[0].mxu0
  %v8275 = vadd.f32 %v8178, %v8274
  %v8276 = vpop.f32.mrb[0].mxu0
  %v8277 = vpop.f32.mrb[0].mxu0
  %v8278 = vadd.f32 %v8181, %v8277
  %v8279 = vpop.f32.mrb[0].mxu0
  %8280 = vmatprep.mubr.bf16.mxu0 %v7878
  %8281 = vmatmul.mubr.bf16.gmra.mrb[0].mxu0 %v7877
  %v8282 = vpop.f32.mrb[0].mxu0
  %v8283 = vadd.f32 %v8186, %v8282
  %v8284 = vpop.f32.mrb[0].mxu0
  %v8285 = vpop.f32.mrb[0].mxu0
  %v8286 = vadd.f32 %v8189, %v8285
  %v8287 = vpop.f32.mrb[0].mxu0
  %8288 = vmatprep.mubr.bf16.mxu0 %v7882
  %8289 = vmatmul.mubr.bf16.gmra.mrb[0].mxu0 %v7881
  %v8290 = vpop.f32.mrb[0].mxu0
  %v8291 = vadd.f32 %v8194, %v8290
  %v8292 = vpop.f32.mrb[0].mxu0
  %v8293 = vpop.f32.mrb[0].mxu0
  %v8294 = vadd.f32 %v8197, %v8293
  %v8295 = vpop.f32.mrb[0].mxu0
  %8296 = vmatprep.mubr.bf16.mxu0 %v7886
  %8297 = vmatmul.mubr.bf16.gmra.mrb[0].mxu0 %v7885
  %v8298 = vpop.f32.mrb[0].mxu0
  %v8299 = vadd.f32 %v8202, %v8298
  %v8300 = vpop.f32.mrb[0].mxu0
  %v8301 = vpop.f32.mrb[0].mxu0
  %v8302 = vadd.f32 %v8205, %v8301
  %v8303 = vpop.f32.mrb[0].mxu0
  %8304 = vdwg.mxu0
  %v8305 = vmax.f32 %v8243, 0.0
  %v8306 = vmax.f32 %v8246, 0.0
  %v8307 = vmax.f32 %v8251, 0.0
  %v8308 = vmax.f32 %v8254, 0.0
  %v8309 = vmax.f32 %v8259, 0.0
  %v8310 = vmax.f32 %v8262, 0.0
  %v8311 = vmax.f32 %v8267, 0.0
  %v8312 = vmax.f32 %v8270, 0.0
  %v8313 = vmax.f32 %v8275, 0.0
  %v8314 = vmax.f32 %v8278, 0.0
  %v8315 = vmax.f32 %v8283, 0.0
  %v8316 = vmax.f32 %v8286, 0.0
  %v8317 = vmax.f32 %v8291, 0.0
  %v8318 = vmax.f32 %v8294, 0.0
  %v8319 = vmax.f32 %v8299, 0.0
  %v8320 = vmax.f32 %v8302, 0.0
  %v8321 = vpack.c.bf16 %v8306, %v8305
  %v8322 = vpack.c.bf16 %v8308, %v8307
  %v8323 = vpack.c.bf16 %v8310, %v8309
  %v8324 = vpack.c.bf16 %v8312, %v8311
  %v8325 = vpack.c.bf16 %v8314, %v8313
  %v8326 = vpack.c.bf16 %v8316, %v8315
  %v8327 = vpack.c.bf16 %v8318, %v8317
  %v8328 = vpack.c.bf16 %v8320, %v8319
  %8329 = vst.msk [vmem:[#allocation12] sm:$0xff] %vm1017, %v8321
  %8330 = vst.msk [vmem:[#allocation12 + $0x8] sm:$0xff] %vm1017, %v8322
  %8331 = vst.msk [vmem:[#allocation12 + $0x10] sm:$0xff] %vm1017, %v8323
  %8332 = vst.msk [vmem:[#allocation12 + $0x18] sm:$0xff] %vm1017, %v8324
  %8333 = vst.msk [vmem:[#allocation12 + $0x20] sm:$0xff] %vm1017, %v8325
  %8334 = vst.msk [vmem:[#allocation12 + $0x28] sm:$0xff] %vm1017, %v8326
  %8335 = vst.msk [vmem:[#allocation12 + $0x30] sm:$0xff] %vm1017, %v8327
  %8336 = vst.msk [vmem:[#allocation12 + $0x38] sm:$0xff] %vm1017, %v8328
  %v8337 = vld [vmem:[%s25] sm:$0xf]
  %v8338 = vld [vmem:[%s25 + $0x4] sm:$0xf]
  %v8339 = vld [vmem:[%s25 + $0x8] sm:$0xf]
  %v8340 = vld [vmem:[%s25 + $0xc] sm:$0xf]
  %v8341 = vld [vmem:[%s25 + $0x10] sm:$0xf]
  %v8342 = vld [vmem:[%s25 + $0x14] sm:$0xf]
  %v8343 = vld [vmem:[%s25 + $0x18] sm:$0xf]
  %v8344 = vld [vmem:[%s25 + $0x1c] sm:$0xf]
  %v8345 = vld [vmem:[%s25 + $0x20] sm:$0xf]
  %v8346 = vld [vmem:[%s25 + $0x24] sm:$0xf]
  %v8347 = vld [vmem:[%s25 + $0x28] sm:$0xf]
  %v8348 = vld [vmem:[%s25 + $0x2c] sm:$0xf]
  %v8349 = vld [vmem:[%s25 + $0x30] sm:$0xf]
  %v8350 = vld [vmem:[%s25 + $0x34] sm:$0xf]
  %v8351 = vld [vmem:[%s25 + $0x38] sm:$0xf]
  %v8352 = vld [vmem:[%s25 + $0x3c] sm:$0xf]
  %v8353 = vld [vmem:[%s25 + $0x40] sm:$0xf]
  %v8354 = vld [vmem:[%s25 + $0x44] sm:$0xf]
  %v8355 = vld [vmem:[#allocation12] sm:$0xff]
  %v8356 = vld [vmem:[#allocation12 + $0x8] sm:$0xff]
  %v8357 = vld [vmem:[#allocation12 + $0x10] sm:$0xff]
  %v8358 = vld [vmem:[#allocation12 + $0x18] sm:$0xff]
  %v8377 = vunpack.c.l.b16 %v8337
  %v8378 = vunpack.c.l.b16 %v8338
  %v8379 = vunpack.c.l.b16 %v8339
  %v8380 = vunpack.c.l.b16 %v8340
  %v8381 = vunpack.c.l.b16 %v8341
  %v8382 = vunpack.c.l.b16 %v8342
  %v8383 = vunpack.c.l.b16 %v8343
  %v8384 = vunpack.c.l.b16 %v8344
  %v8385 = vunpack.c.l.b16 %v8345
  %v8386 = vunpack.c.l.b16 %v8346
  %v8387 = vunpack.c.l.b16 %v8347
  %v8388 = vunpack.c.l.b16 %v8348
  %v8389 = vunpack.c.l.b16 %v8349
  %v8390 = vunpack.c.l.b16 %v8350
  %v8391 = vunpack.c.l.b16 %v8351
  %v8392 = vunpack.c.l.b16 %v8352
  %v8393 = vunpack.c.l.b16 %v8353
  %v8394 = vunpack.c.l.b16 %v8354
  %v8395 = vpack.c.b16 %v8378, %v8377
  %v8396 = vpack.c.b16 %v8380, %v8379
  %v8397 = vpack.c.b16 %v8382, %v8381
  %v8398 = vpack.c.b16 %v8384, %v8383
  %v8399 = vpack.c.b16 %v8386, %v8385
  %v8400 = vpack.c.b16 %v8388, %v8387
  %v8401 = vpack.c.b16 %v8390, %v8389
  %v8402 = vpack.c.b16 %v8392, %v8391
  %v8403 = vpack.c.b16 %v8394, %v8393
  %v8405 = vsel %vm3535, %v8395, 0
  %v8408 = vsel %vm3535, %v8396, 0
  %v8411 = vsel %vm3535, %v8397, 0
  %v8414 = vsel %vm3535, %v8398, 0
  %v8417 = vsel %vm3535, %v8399, 0
  %v8420 = vsel %vm3535, %v8400, 0
  %v8423 = vsel %vm3535, %v8401, 0
  %v8426 = vsel %vm3535, %v8402, 0
  %v8429 = vsel %vm3535, %v8403, 0
  %8431 = vmatprep.subr.bf16.mxu0 0
  %8432 = vmatpush1.bf16.msra.mxu0 %v8355
  %8433 = vmatprep.subr.bf16.mxu0 0
  %8434 = vmatpush1.bf16.msra.mxu0 %v8356
  %8435 = vmatprep.subr.bf16.mxu0 0
  %8436 = vmatpush1.bf16.msra.mxu0 %v8357
  %8437 = vmatprep.subr.bf16.mxu0 0
  %8438 = vmatpush1.bf16.msra.mxu0 %v8358
  %8439 = vmatprep.subr.bf16.mxu0 0
  %8440 = vmatpush1.bf16.msra.mxu0 0
  %8441 = vmatprep.subr.bf16.mxu0 0
  %8442 = vmatpush1.bf16.msra.mxu0 0
  %8443 = vmatprep.subr.bf16.mxu0 0
  %8444 = vmatpush1.bf16.msra.mxu0 0
  %8445 = vmatprep.subr.bf16.mxu0 0
  %8446 = vmatpush1.bf16.msra.mxu0 0
  %8447 = vmatprep.subr.bf16.mxu0 0
  %8448 = vmatpush1.bf16.msra.mxu0 0
  %8449 = vmatprep.subr.bf16.mxu0 0
  %8450 = vmatpush1.bf16.msra.mxu0 0
  %8451 = vmatprep.subr.bf16.mxu0 0
  %8452 = vmatpush1.bf16.msra.mxu0 0
  %8453 = vmatprep.subr.bf16.mxu0 0
  %8454 = vmatpush1.bf16.msra.mxu0 0
  %8455 = vmatprep.subr.bf16.mxu0 0
  %8456 = vmatpush1.bf16.msra.mxu0 0
  %8457 = vmatprep.subr.bf16.mxu0 0
  %8458 = vmatpush1.bf16.msra.mxu0 0
  %8459 = vmatprep.subr.bf16.mxu0 0
  %8460 = vmatpush1.bf16.msra.mxu0 0
  %8461 = vmatprep.subr.bf16.mxu0 0
  %8462 = vmatpush1.bf16.msra.mxu0 0
  %8463 = vmatprep.mubr.bf16.mxu0 0
  %8464 = vmatmul.mubr.bf16.gmra.mrb[0].mxu0 %v8405
  %v8465 = vpop.f32.mrb[0].mxu0
  %v8466 = vadd.f32 0.0, %v8465
  %v8467 = vpop.f32.mrb[0].mxu0
  %v8468 = vpop.f32.mrb[0].mxu0
  %v8469 = vadd.f32 0.0, %v8468
  %v8470 = vpop.f32.mrb[0].mxu0
  %8471 = vmatprep.mubr.bf16.mxu0 0
  %8472 = vmatmul.mubr.bf16.gmra.mrb[0].mxu0 %v8408
  %v8473 = vpop.f32.mrb[0].mxu0
  %v8474 = vadd.f32 0.0, %v8473
  %v8475 = vpop.f32.mrb[0].mxu0
  %v8476 = vpop.f32.mrb[0].mxu0
  %v8477 = vadd.f32 0.0, %v8476
  %v8478 = vpop.f32.mrb[0].mxu0
  %8479 = vmatprep.mubr.bf16.mxu0 0
  %8480 = vmatmul.mubr.bf16.gmra.mrb[0].mxu0 %v8411
  %v8481 = vpop.f32.mrb[0].mxu0
  %v8482 = vadd.f32 0.0, %v8481
  %v8483 = vpop.f32.mrb[0].mxu0
  %v8484 = vpop.f32.mrb[0].mxu0
  %v8485 = vadd.f32 0.0, %v8484
  %v8486 = vpop.f32.mrb[0].mxu0
  %8487 = vmatprep.mubr.bf16.mxu0 0
  %8488 = vmatmul.mubr.bf16.gmra.mrb[0].mxu0 %v8414
  %v8489 = vpop.f32.mrb[0].mxu0
  %v8490 = vadd.f32 0.0, %v8489
  %v8491 = vpop.f32.mrb[0].mxu0
  %v8492 = vpop.f32.mrb[0].mxu0
  %v8493 = vadd.f32 0.0, %v8492
  %v8494 = vpop.f32.mrb[0].mxu0
  %8495 = vmatprep.mubr.bf16.mxu0 0
  %8496 = vmatmul.mubr.bf16.gmra.mrb[0].mxu0 %v8417
  %v8497 = vpop.f32.mrb[0].mxu0
  %v8498 = vadd.f32 0.0, %v8497
  %v8499 = vpop.f32.mrb[0].mxu0
  %v8500 = vpop.f32.mrb[0].mxu0
  %v8501 = vadd.f32 0.0, %v8500
  %v8502 = vpop.f32.mrb[0].mxu0
  %8503 = vmatprep.mubr.bf16.mxu0 0
  %8504 = vmatmul.mubr.bf16.gmra.mrb[0].mxu0 %v8420
  %v8505 = vpop.f32.mrb[0].mxu0
  %v8506 = vadd.f32 0.0, %v8505
  %v8507 = vpop.f32.mrb[0].mxu0
  %v8508 = vpop.f32.mrb[0].mxu0
  %v8509 = vadd.f32 0.0, %v8508
  %v8510 = vpop.f32.mrb[0].mxu0
  %8511 = vmatprep.mubr.bf16.mxu0 0
  %8512 = vmatmul.mubr.bf16.gmra.mrb[0].mxu0 %v8423
  %v8513 = vpop.f32.mrb[0].mxu0
  %v8514 = vadd.f32 0.0, %v8513
  %v8515 = vpop.f32.mrb[0].mxu0
  %v8516 = vpop.f32.mrb[0].mxu0
  %v8517 = vadd.f32 0.0, %v8516
  %v8518 = vpop.f32.mrb[0].mxu0
  %8519 = vmatprep.mubr.bf16.mxu0 0
  %8520 = vmatmul.mubr.bf16.gmra.mrb[0].mxu0 %v8426
  %v8521 = vpop.f32.mrb[0].mxu0
  %v8522 = vadd.f32 0.0, %v8521
  %v8523 = vpop.f32.mrb[0].mxu0
  %v8524 = vpop.f32.mrb[0].mxu0
  %v8525 = vadd.f32 0.0, %v8524
  %v8526 = vpop.f32.mrb[0].mxu0
  %8527 = vmatprep.mubr.bf16.mxu0 0
  %8528 = vmatmul.mubr.bf16.gmra.mrb[0].mxu0 %v8429
  %v8529 = vpop.f32.mrb[0].mxu0
  %v8530 = vadd.f32 0.0, %v8529
  %v8531 = vpop.f32.mrb[0].mxu0
  %v8532 = vpop.f32.mrb[0].mxu0
  %v8533 = vadd.f32 0.0, %v8532
  %v8534 = vpop.f32.mrb[0].mxu0
  %8535 = vdwg.mxu0
  %v8536 = vpack.c.bf16 %v8469, %v8466
  %v8537 = vpack.c.bf16 %v8477, %v8474
  %v8538 = vpack.c.bf16 %v8485, %v8482
  %v8539 = vpack.c.bf16 %v8493, %v8490
  %v8540 = vpack.c.bf16 %v8501, %v8498
  %v8541 = vpack.c.bf16 %v8509, %v8506
  %v8542 = vpack.c.bf16 %v8517, %v8514
  %v8543 = vpack.c.bf16 %v8525, %v8522
  %v8544 = vpack.c.bf16 %v8533, %v8530
  %8545 = vst.msk [vmem:[#allocation13] sm:$0xff] %vm1017, %v8536
  %8547 = vrot.lane.b32.xlu0 %v8537, 32
  %v8548 = vpop.permute.xlu0 %8547
  %8550 = vst.msk [vmem:[#allocation13] sm:$0xff] %vm2216, %v8548
  %8552 = vrot.lane.b32.xlu0 %v8538, 64
  %v8553 = vpop.permute.xlu0 %8552
  %8555 = vst.msk [vmem:[#allocation13] sm:$0xff] %vm2232, %v8553
  %8557 = vrot.lane.b32.xlu0 %v8539, 96
  %v8558 = vpop.permute.xlu0 %8557
  %8560 = vst.msk [vmem:[#allocation13] sm:$0xff] %vm2248, %v8558
  %8561 = vst.msk [vmem:[#allocation13 + $0x8] sm:$0xff] %vm1017, %v8540
  %8563 = vrot.lane.b32.xlu0 %v8541, 32
  %v8564 = vpop.permute.xlu0 %8563
  %8566 = vst.msk [vmem:[#allocation13 + $0x8] sm:$0xff] %vm2216, %v8564
  %8568 = vrot.lane.b32.xlu0 %v8542, 64
  %v8569 = vpop.permute.xlu0 %8568
  %8571 = vst.msk [vmem:[#allocation13 + $0x8] sm:$0xff] %vm2232, %v8569
  %8573 = vrot.lane.b32.xlu0 %v8543, 96
  %v8574 = vpop.permute.xlu0 %8573
  %8576 = vst.msk [vmem:[#allocation13 + $0x8] sm:$0xff] %vm2248, %v8574
  %8577 = vst.msk [vmem:[#allocation13 + $0x10] sm:$0xff] %vm1017, %v8544
  %v8578 = vld [vmem:[#allocation12 + $0x20] sm:$0xff]
  %v8579 = vld [vmem:[#allocation12 + $0x28] sm:$0xff]
  %v8580 = vld [vmem:[#allocation12 + $0x30] sm:$0xff]
  %v8581 = vld [vmem:[#allocation12 + $0x38] sm:$0xff]
  %8582 = vmatprep.subr.bf16.mxu0 0
  %8583 = vmatpush1.bf16.msra.mxu0 %v8578
  %8584 = vmatprep.subr.bf16.mxu0 0
  %8585 = vmatpush1.bf16.msra.mxu0 %v8579
  %8586 = vmatprep.subr.bf16.mxu0 0
  %8587 = vmatpush1.bf16.msra.mxu0 %v8580
  %8588 = vmatprep.subr.bf16.mxu0 0
  %8589 = vmatpush1.bf16.msra.mxu0 %v8581
  %8590 = vmatprep.subr.bf16.mxu0 0
  %8591 = vmatpush1.bf16.msra.mxu0 0
  %8592 = vmatprep.subr.bf16.mxu0 0
  %8593 = vmatpush1.bf16.msra.mxu0 0
  %8594 = vmatprep.subr.bf16.mxu0 0
  %8595 = vmatpush1.bf16.msra.mxu0 0
  %8596 = vmatprep.subr.bf16.mxu0 0
  %8597 = vmatpush1.bf16.msra.mxu0 0
  %8598 = vmatprep.subr.bf16.mxu0 0
  %8599 = vmatpush1.bf16.msra.mxu0 0
  %8600 = vmatprep.subr.bf16.mxu0 0
  %8601 = vmatpush1.bf16.msra.mxu0 0
  %8602 = vmatprep.subr.bf16.mxu0 0
  %8603 = vmatpush1.bf16.msra.mxu0 0
  %8604 = vmatprep.subr.bf16.mxu0 0
  %8605 = vmatpush1.bf16.msra.mxu0 0
  %8606 = vmatprep.subr.bf16.mxu0 0
  %8607 = vmatpush1.bf16.msra.mxu0 0
  %8608 = vmatprep.subr.bf16.mxu0 0
  %8609 = vmatpush1.bf16.msra.mxu0 0
  %8610 = vmatprep.subr.bf16.mxu0 0
  %8611 = vmatpush1.bf16.msra.mxu0 0
  %8612 = vmatprep.subr.bf16.mxu0 0
  %8613 = vmatpush1.bf16.msra.mxu0 0
  %8614 = vmatprep.mubr.bf16.mxu0 0
  %8615 = vmatmul.mubr.bf16.gmra.mrb[0].mxu0 %v8405
  %v8616 = vpop.f32.mrb[0].mxu0
  %v8617 = vadd.f32 0.0, %v8616
  %v8618 = vpop.f32.mrb[0].mxu0
  %v8619 = vpop.f32.mrb[0].mxu0
  %v8620 = vadd.f32 0.0, %v8619
  %v8621 = vpop.f32.mrb[0].mxu0
  %8622 = vmatprep.mubr.bf16.mxu0 0
  %8623 = vmatmul.mubr.bf16.gmra.mrb[0].mxu0 %v8408
  %v8624 = vpop.f32.mrb[0].mxu0
  %v8625 = vadd.f32 0.0, %v8624
  %v8626 = vpop.f32.mrb[0].mxu0
  %v8627 = vpop.f32.mrb[0].mxu0
  %v8628 = vadd.f32 0.0, %v8627
  %v8629 = vpop.f32.mrb[0].mxu0
  %8630 = vmatprep.mubr.bf16.mxu0 0
  %8631 = vmatmul.mubr.bf16.gmra.mrb[0].mxu0 %v8411
  %v8632 = vpop.f32.mrb[0].mxu0
  %v8633 = vadd.f32 0.0, %v8632
  %v8634 = vpop.f32.mrb[0].mxu0
  %v8635 = vpop.f32.mrb[0].mxu0
  %v8636 = vadd.f32 0.0, %v8635
  %v8637 = vpop.f32.mrb[0].mxu0
  %8638 = vmatprep.mubr.bf16.mxu0 0
  %8639 = vmatmul.mubr.bf16.gmra.mrb[0].mxu0 %v8414
  %v8640 = vpop.f32.mrb[0].mxu0
  %v8641 = vadd.f32 0.0, %v8640
  %v8642 = vpop.f32.mrb[0].mxu0
  %v8643 = vpop.f32.mrb[0].mxu0
  %v8644 = vadd.f32 0.0, %v8643
  %v8645 = vpop.f32.mrb[0].mxu0
  %8646 = vmatprep.mubr.bf16.mxu0 0
  %8647 = vmatmul.mubr.bf16.gmra.mrb[0].mxu0 %v8417
  %v8648 = vpop.f32.mrb[0].mxu0
  %v8649 = vadd.f32 0.0, %v8648
  %v8650 = vpop.f32.mrb[0].mxu0
  %v8651 = vpop.f32.mrb[0].mxu0
  %v8652 = vadd.f32 0.0, %v8651
  %v8653 = vpop.f32.mrb[0].mxu0
  %8654 = vmatprep.mubr.bf16.mxu0 0
  %8655 = vmatmul.mubr.bf16.gmra.mrb[0].mxu0 %v8420
  %v8656 = vpop.f32.mrb[0].mxu0
  %v8657 = vadd.f32 0.0, %v8656
  %v8658 = vpop.f32.mrb[0].mxu0
  %v8659 = vpop.f32.mrb[0].mxu0
  %v8660 = vadd.f32 0.0, %v8659
  %v8661 = vpop.f32.mrb[0].mxu0
  %8662 = vmatprep.mubr.bf16.mxu0 0
  %8663 = vmatmul.mubr.bf16.gmra.mrb[0].mxu0 %v8423
  %v8664 = vpop.f32.mrb[0].mxu0
  %v8665 = vadd.f32 0.0, %v8664
  %v8666 = vpop.f32.mrb[0].mxu0
  %v8667 = vpop.f32.mrb[0].mxu0
  %v8668 = vadd.f32 0.0, %v8667
  %v8669 = vpop.f32.mrb[0].mxu0
  %8670 = vmatprep.mubr.bf16.mxu0 0
  %8671 = vmatmul.mubr.bf16.gmra.mrb[0].mxu0 %v8426
  %v8672 = vpop.f32.mrb[0].mxu0
  %v8673 = vadd.f32 0.0, %v8672
  %v8674 = vpop.f32.mrb[0].mxu0
  %v8675 = vpop.f32.mrb[0].mxu0
  %v8676 = vadd.f32 0.0, %v8675
  %v8677 = vpop.f32.mrb[0].mxu0
  %8678 = vmatprep.mubr.bf16.mxu0 0
  %8679 = vmatmul.mubr.bf16.gmra.mrb[0].mxu0 %v8429
  %v8680 = vpop.f32.mrb[0].mxu0
  %v8681 = vadd.f32 0.0, %v8680
  %v8682 = vpop.f32.mrb[0].mxu0
  %v8683 = vpop.f32.mrb[0].mxu0
  %v8684 = vadd.f32 0.0, %v8683
  %v8685 = vpop.f32.mrb[0].mxu0
  %8686 = vdwg.mxu0
  %v8687 = vpack.c.bf16 %v8620, %v8617
  %v8688 = vpack.c.bf16 %v8628, %v8625
  %v8689 = vpack.c.bf16 %v8636, %v8633
  %v8690 = vpack.c.bf16 %v8644, %v8641
  %v8691 = vpack.c.bf16 %v8652, %v8649
  %v8692 = vpack.c.bf16 %v8660, %v8657
  %v8693 = vpack.c.bf16 %v8668, %v8665
  %v8694 = vpack.c.bf16 %v8676, %v8673
  %v8695 = vpack.c.bf16 %v8684, %v8681
  %8696 = vst.msk [vmem:[#allocation13 + $0x18] sm:$0xff] %vm1017, %v8687
  %8698 = vrot.lane.b32.xlu0 %v8688, 32
  %v8699 = vpop.permute.xlu0 %8698
  %8701 = vst.msk [vmem:[#allocation13 + $0x18] sm:$0xff] %vm2216, %v8699
  %8703 = vrot.lane.b32.xlu0 %v8689, 64
  %v8704 = vpop.permute.xlu0 %8703
  %8706 = vst.msk [vmem:[#allocation13 + $0x18] sm:$0xff] %vm2232, %v8704
  %8708 = vrot.lane.b32.xlu0 %v8690, 96
  %v8709 = vpop.permute.xlu0 %8708
  %8711 = vst.msk [vmem:[#allocation13 + $0x18] sm:$0xff] %vm2248, %v8709
  %8712 = vst.msk [vmem:[#allocation13 + $0x20] sm:$0xff] %vm1017, %v8691
  %8714 = vrot.lane.b32.xlu0 %v8692, 32
  %v8715 = vpop.permute.xlu0 %8714
  %8717 = vst.msk [vmem:[#allocation13 + $0x20] sm:$0xff] %vm2216, %v8715
  %8719 = vrot.lane.b32.xlu0 %v8693, 64
  %v8720 = vpop.permute.xlu0 %8719
  %8722 = vst.msk [vmem:[#allocation13 + $0x20] sm:$0xff] %vm2232, %v8720
  %8724 = vrot.lane.b32.xlu0 %v8694, 96
  %v8725 = vpop.permute.xlu0 %8724
  %8727 = vst.msk [vmem:[#allocation13 + $0x20] sm:$0xff] %vm2248, %v8725
  %8728 = vst.msk [vmem:[#allocation13 + $0x28] sm:$0xff] %vm1017, %v8695
  %v8729 = vld [vmem:[#allocation13] sm:$0xff]
  %v8730 = vld [vmem:[#allocation13 + $0x8] sm:$0xff]
  %v8731 = vld [vmem:[#allocation13 + $0x10] sm:$0xff]
  %v8732 = vld [vmem:[#allocation13 + $0x18] sm:$0xff]
  %v8733 = vld [vmem:[#allocation13 + $0x20] sm:$0xff]
  %v8734 = vld [vmem:[#allocation13 + $0x28] sm:$0xff]
  %v8735 = vld [vmem:[%s53] sm:$0xf]
  %v8736 = vld [vmem:[%s53 + $0x4] sm:$0xf]
  %v8737 = vld [vmem:[%s53 + $0x8] sm:$0xf]
  %v8738 = vld [vmem:[%s53 + $0xc] sm:$0xf]
  %v8739 = vld [vmem:[%s53 + $0x10] sm:$0xf]
  %v8740 = vld [vmem:[%s53 + $0x14] sm:$0xf]
  %v8741 = vld [vmem:[%s53 + $0x18] sm:$0xf]
  %v8742 = vld [vmem:[%s53 + $0x1c] sm:$0xf]
  %v8743 = vld [vmem:[%s53 + $0x20] sm:$0xf]
  %v8744 = vld [vmem:[%s53 + $0x24] sm:$0xf]
  %v8745 = vld [vmem:[%s53 + $0x28] sm:$0xf]
  %v8746 = vld [vmem:[%s53 + $0x2c] sm:$0xf]
  %v8747 = vld [vmem:[%s53 + $0x30] sm:$0xf]
  %v8748 = vld [vmem:[%s53 + $0x34] sm:$0xf]
  %v8749 = vld [vmem:[%s53 + $0x38] sm:$0xf]
  %v8750 = vld [vmem:[%s53 + $0x3c] sm:$0xf]
  %v8751 = vld [vmem:[%s53 + $0x40] sm:$0xf]
  %v8752 = vld [vmem:[%s53 + $0x44] sm:$0xf]
  %v8753 = vld [vmem:[%s53 + $0x48] sm:$0xf]
  %v8754 = vld [vmem:[%s53 + $0x4c] sm:$0xf]
  %v8755 = vld [vmem:[%s53 + $0x50] sm:$0xf]
  %v8756 = vld [vmem:[%s53 + $0x54] sm:$0xf]
  %v8757 = vld [vmem:[%s53 + $0x58] sm:$0xf]
  %v8758 = vld [vmem:[%s53 + $0x5c] sm:$0xf]
  %v8759 = vld [vmem:[%s53 + $0x60] sm:$0xf]
  %v8760 = vld [vmem:[%s53 + $0x64] sm:$0xf]
  %v8761 = vld [vmem:[%s53 + $0x68] sm:$0xf]
  %v8762 = vld [vmem:[%s53 + $0x6c] sm:$0xf]
  %v8763 = vld [vmem:[%s53 + $0x70] sm:$0xf]
  %v8764 = vld [vmem:[%s53 + $0x74] sm:$0xf]
  %v8765 = vld [vmem:[%s53 + $0x78] sm:$0xf]
  %v8766 = vld [vmem:[%s53 + $0x7c] sm:$0xf]
  %v8767 = vld [vmem:[%s53 + $0x80] sm:$0xf]
  %v8768 = vld [vmem:[%s53 + $0x84] sm:$0xf]
  %v8769 = vld [vmem:[%s53 + $0x88] sm:$0xf]
  %v8770 = vld [vmem:[%s53 + $0x8c] sm:$0xf]
  %v8771 = vld [vmem:[%s55] sm:$0x1]
  %v8773 = vlaneseq
  %v8774 = vshrl.u32 %v8773, 7
  %v8775 = vsub.s32 0, %v8774
  %v8776 = vrot.slane %v8771, %v8775
  %v8814 = vunpack.c.l.b16 %v8735
  %v8815 = vunpack.c.l.b16 %v8736
  %v8816 = vunpack.c.l.b16 %v8737
  %v8817 = vunpack.c.l.b16 %v8738
  %v8818 = vunpack.c.l.b16 %v8739
  %v8819 = vunpack.c.l.b16 %v8740
  %v8820 = vunpack.c.l.b16 %v8741
  %v8821 = vunpack.c.l.b16 %v8742
  %v8822 = vunpack.c.l.b16 %v8743
  %v8823 = vunpack.c.l.b16 %v8744
  %v8824 = vunpack.c.l.b16 %v8745
  %v8825 = vunpack.c.l.b16 %v8746
  %v8826 = vunpack.c.l.b16 %v8747
  %v8827 = vunpack.c.l.b16 %v8748
  %v8828 = vunpack.c.l.b16 %v8749
  %v8829 = vunpack.c.l.b16 %v8750
  %v8830 = vunpack.c.l.b16 %v8751
  %v8831 = vunpack.c.l.b16 %v8752
  %v8832 = vunpack.c.l.b16 %v8753
  %v8833 = vunpack.c.l.b16 %v8754
  %v8834 = vunpack.c.l.b16 %v8755
  %v8835 = vunpack.c.l.b16 %v8756
  %v8836 = vunpack.c.l.b16 %v8757
  %v8837 = vunpack.c.l.b16 %v8758
  %v8838 = vunpack.c.l.b16 %v8759
  %v8839 = vunpack.c.l.b16 %v8760
  %v8840 = vunpack.c.l.b16 %v8761
  %v8841 = vunpack.c.l.b16 %v8762
  %v8842 = vunpack.c.l.b16 %v8763
  %v8843 = vunpack.c.l.b16 %v8764
  %v8844 = vunpack.c.l.b16 %v8765
  %v8845 = vunpack.c.l.b16 %v8766
  %v8846 = vunpack.c.l.b16 %v8767
  %v8847 = vunpack.c.l.b16 %v8768
  %v8848 = vunpack.c.l.b16 %v8769
  %v8849 = vunpack.c.l.b16 %v8770
  %v8850 = vpack.c.b16 %v8815, %v8814
  %v8851 = vpack.c.b16 %v8817, %v8816
  %v8852 = vpack.c.b16 %v8819, %v8818
  %v8853 = vpack.c.b16 %v8821, %v8820
  %v8854 = vpack.c.b16 %v8823, %v8822
  %v8855 = vpack.c.b16 %v8825, %v8824
  %v8856 = vpack.c.b16 %v8827, %v8826
  %v8857 = vpack.c.b16 %v8829, %v8828
  %v8858 = vpack.c.b16 %v8831, %v8830
  %v8859 = vpack.c.b16 %v8833, %v8832
  %v8860 = vpack.c.b16 %v8835, %v8834
  %v8861 = vpack.c.b16 %v8837, %v8836
  %v8862 = vpack.c.b16 %v8839, %v8838
  %v8863 = vpack.c.b16 %v8841, %v8840
  %v8864 = vpack.c.b16 %v8843, %v8842
  %v8865 = vpack.c.b16 %v8845, %v8844
  %v8866 = vpack.c.b16 %v8847, %v8846
  %v8867 = vpack.c.b16 %v8849, %v8848
  %v8887 = vsel %vm1017, %v8731, 0
  %v8890 = vsel %vm1017, %v8734, 0
  %8892 = vmatprep.subr.bf16.mxu0 0
  %8893 = vmatpush1.bf16.msra.mxu0 %v8850
  %8894 = vmatprep.subr.bf16.mxu0 0
  %8895 = vmatpush1.bf16.msra.mxu0 %v8851
  %8896 = vmatprep.subr.bf16.mxu0 0
  %8897 = vmatpush1.bf16.msra.mxu0 %v8852
  %8898 = vmatprep.subr.bf16.mxu0 0
  %8899 = vmatpush1.bf16.msra.mxu0 %v8853
  %8900 = vmatprep.subr.bf16.mxu0 0
  %8901 = vmatpush1.bf16.msra.mxu0 %v8854
  %8902 = vmatprep.subr.bf16.mxu0 0
  %8903 = vmatpush1.bf16.msra.mxu0 %v8855
  %8904 = vmatprep.subr.bf16.mxu0 0
  %8905 = vmatpush1.bf16.msra.mxu0 %v8856
  %8906 = vmatprep.subr.bf16.mxu0 0
  %8907 = vmatpush1.bf16.msra.mxu0 %v8857
  %8908 = vmatprep.subr.bf16.mxu0 0
  %8909 = vmatpush1.bf16.msra.mxu0 %v8858
  %8910 = vmatprep.subr.bf16.mxu0 0
  %8911 = vmatpush1.bf16.msra.mxu0 %v8859
  %8912 = vmatprep.subr.bf16.mxu0 0
  %8913 = vmatpush1.bf16.msra.mxu0 %v8860
  %8914 = vmatprep.subr.bf16.mxu0 0
  %8915 = vmatpush1.bf16.msra.mxu0 %v8861
  %8916 = vmatprep.subr.bf16.mxu0 0
  %8917 = vmatpush1.bf16.msra.mxu0 %v8862
  %8918 = vmatprep.subr.bf16.mxu0 0
  %8919 = vmatpush1.bf16.msra.mxu0 %v8863
  %8920 = vmatprep.subr.bf16.mxu0 0
  %8921 = vmatpush1.bf16.msra.mxu0 %v8864
  %8922 = vmatprep.subr.bf16.mxu0 0
  %8923 = vmatpush1.bf16.msra.mxu0 %v8865
  %8924 = vmatprep.mubr.bf16.mxu0 %v8730
  %8925 = vmatmul.mubr.bf16.gmra.mrb[0].mxu0 %v8729
  %v8926 = vpop.f32.mrb[0].mxu0
  %v8927 = vadd.f32 %v8776, %v8926
  %v8928 = vpop.f32.mrb[0].mxu0
  %v8929 = vpop.f32.mrb[0].mxu0
  %v8930 = vadd.f32 %v8776, %v8929
  %v8931 = vpop.f32.mrb[0].mxu0
  %8932 = vmatprep.mubr.bf16.mxu0 %v8733
  %8933 = vmatmul.mubr.bf16.gmra.mrb[0].mxu0 %v8732
  %v8934 = vpop.f32.mrb[0].mxu0
  %v8935 = vadd.f32 %v8776, %v8934
  %v8936 = vpop.f32.mrb[0].mxu0
  %v8937 = vpop.f32.mrb[0].mxu0
  %v8938 = vadd.f32 %v8776, %v8937
  %v8939 = vpop.f32.mrb[0].mxu0
  %8940 = vdwg.mxu0
  %8941 = vmatprep.subr.bf16.mxu0 0
  %8942 = vmatpush1.bf16.msra.mxu0 %v8866
  %8943 = vmatprep.subr.bf16.mxu0 0
  %8944 = vmatpush1.bf16.msra.mxu0 %v8867
  %8945 = vmatprep.subr.bf16.mxu0 0
  %8946 = vmatpush1.bf16.msra.mxu0 0
  %8947 = vmatprep.subr.bf16.mxu0 0
  %8948 = vmatpush1.bf16.msra.mxu0 0
  %8949 = vmatprep.subr.bf16.mxu0 0
  %8950 = vmatpush1.bf16.msra.mxu0 0
  %8951 = vmatprep.subr.bf16.mxu0 0
  %8952 = vmatpush1.bf16.msra.mxu0 0
  %8953 = vmatprep.subr.bf16.mxu0 0
  %8954 = vmatpush1.bf16.msra.mxu0 0
  %8955 = vmatprep.subr.bf16.mxu0 0
  %8956 = vmatpush1.bf16.msra.mxu0 0
  %8957 = vmatprep.subr.bf16.mxu0 0
  %8958 = vmatpush1.bf16.msra.mxu0 0
  %8959 = vmatprep.subr.bf16.mxu0 0
  %8960 = vmatpush1.bf16.msra.mxu0 0
  %8961 = vmatprep.subr.bf16.mxu0 0
  %8962 = vmatpush1.bf16.msra.mxu0 0
  %8963 = vmatprep.subr.bf16.mxu0 0
  %8964 = vmatpush1.bf16.msra.mxu0 0
  %8965 = vmatprep.subr.bf16.mxu0 0
  %8966 = vmatpush1.bf16.msra.mxu0 0
  %8967 = vmatprep.subr.bf16.mxu0 0
  %8968 = vmatpush1.bf16.msra.mxu0 0
  %8969 = vmatprep.subr.bf16.mxu0 0
  %8970 = vmatpush1.bf16.msra.mxu0 0
  %8971 = vmatprep.subr.bf16.mxu0 0
  %8972 = vmatpush1.bf16.msra.mxu0 0
  %8973 = vmatprep.mubr.bf16.mxu0 0
  %8974 = vmatmul.mubr.bf16.gmra.mrb[0].mxu0 %v8887
  %v8975 = vpop.f32.mrb[0].mxu0
  %v8976 = vadd.f32 %v8927, %v8975
  %v8977 = vpop.f32.mrb[0].mxu0
  %v8978 = vpop.f32.mrb[0].mxu0
  %v8979 = vadd.f32 %v8930, %v8978
  %v8980 = vpop.f32.mrb[0].mxu0
  %8981 = vmatprep.mubr.bf16.mxu0 0
  %8982 = vmatmul.mubr.bf16.gmra.mrb[0].mxu0 %v8890
  %v8983 = vpop.f32.mrb[0].mxu0
  %v8984 = vadd.f32 %v8935, %v8983
  %v8985 = vpop.f32.mrb[0].mxu0
  %v8986 = vpop.f32.mrb[0].mxu0
  %v8987 = vadd.f32 %v8938, %v8986
  %v8988 = vpop.f32.mrb[0].mxu0
  %8989 = vdwg.mxu0
  %v8990 = vmax.f32 %v8976, 0.0
  %v8991 = vmax.f32 %v8979, 0.0
  %v8992 = vmax.f32 %v8984, 0.0
  %v8993 = vmax.f32 %v8987, 0.0
  %v8994 = vpack.c.bf16 %v8991, %v8990
  %v8995 = vpack.c.bf16 %v8993, %v8992
  %8996 = vst.msk [vmem:[#allocation14] sm:$0xff] %vm3535, %v8994
  %8997 = vst.msk [vmem:[#allocation14 + $0x8] sm:$0xff] %vm3535, %v8995
  %v8998 = vld [vmem:[%s27] sm:$0xf]
  %v8999 = vld [vmem:[%s27 + $0x4] sm:$0xf]
  %v9000 = vld [vmem:[%s27 + $0x8] sm:$0xf]
  %v9001 = vld [vmem:[%s27 + $0xc] sm:$0xf]
  %v9002 = vld [vmem:[%s27 + $0x10] sm:$0xf]
  %v9003 = vld [vmem:[%s27 + $0x14] sm:$0xf]
  %v9004 = vld [vmem:[%s27 + $0x18] sm:$0xf]
  %v9005 = vld [vmem:[%s27 + $0x1c] sm:$0xf]
  %v9006 = vld [vmem:[%s27 + $0x20] sm:$0xf]
  %v9007 = vld [vmem:[%s27 + $0x24] sm:$0xf]
  %v9008 = vld [vmem:[%s27 + $0x28] sm:$0xf]
  %v9009 = vld [vmem:[%s27 + $0x2c] sm:$0xf]
  %v9010 = vld [vmem:[%s27 + $0x30] sm:$0xf]
  %v9011 = vld [vmem:[%s27 + $0x34] sm:$0xf]
  %v9012 = vld [vmem:[%s27 + $0x38] sm:$0xf]
  %v9013 = vld [vmem:[%s27 + $0x3c] sm:$0xf]
  %v9014 = vld [vmem:[%s27 + $0x40] sm:$0xf]
  %v9015 = vld [vmem:[%s27 + $0x44] sm:$0xf]
  %v9016 = vld [vmem:[#allocation14] sm:$0xff]
  %v9035 = vunpack.c.l.b16 %v8998
  %v9036 = vunpack.c.l.b16 %v8999
  %v9037 = vunpack.c.l.b16 %v9000
  %v9038 = vunpack.c.l.b16 %v9001
  %v9039 = vunpack.c.l.b16 %v9002
  %v9040 = vunpack.c.l.b16 %v9003
  %v9041 = vunpack.c.l.b16 %v9004
  %v9042 = vunpack.c.l.b16 %v9005
  %v9043 = vunpack.c.l.b16 %v9006
  %v9044 = vunpack.c.l.b16 %v9007
  %v9045 = vunpack.c.l.b16 %v9008
  %v9046 = vunpack.c.l.b16 %v9009
  %v9047 = vunpack.c.l.b16 %v9010
  %v9048 = vunpack.c.l.b16 %v9011
  %v9049 = vunpack.c.l.b16 %v9012
  %v9050 = vunpack.c.l.b16 %v9013
  %v9051 = vunpack.c.l.b16 %v9014
  %v9052 = vunpack.c.l.b16 %v9015
  %v9053 = vpack.c.b16 %v9036, %v9035
  %v9054 = vpack.c.b16 %v9038, %v9037
  %v9055 = vpack.c.b16 %v9040, %v9039
  %v9056 = vpack.c.b16 %v9042, %v9041
  %v9057 = vpack.c.b16 %v9044, %v9043
  %v9058 = vpack.c.b16 %v9046, %v9045
  %v9059 = vpack.c.b16 %v9048, %v9047
  %v9060 = vpack.c.b16 %v9050, %v9049
  %v9061 = vpack.c.b16 %v9052, %v9051
  %v9063 = vsel %vm4493, %v9053, 0
  %v9066 = vsel %vm4493, %v9054, 0
  %v9069 = vsel %vm4493, %v9055, 0
  %v9072 = vsel %vm4493, %v9056, 0
  %v9075 = vsel %vm4493, %v9057, 0
  %v9078 = vsel %vm4493, %v9058, 0
  %v9081 = vsel %vm4493, %v9059, 0
  %v9084 = vsel %vm4493, %v9060, 0
  %v9087 = vsel %vm4493, %v9061, 0
  %9089 = vmatprep.subr.bf16.mxu0 0
  %9090 = vmatpush1.bf16.msra.mxu0 %v9016
  %9091 = vmatprep.subr.bf16.mxu0 0
  %9092 = vmatpush1.bf16.msra.mxu0 0
  %9093 = vmatprep.subr.bf16.mxu0 0
  %9094 = vmatpush1.bf16.msra.mxu0 0
  %9095 = vmatprep.subr.bf16.mxu0 0
  %9096 = vmatpush1.bf16.msra.mxu0 0
  %9097 = vmatprep.subr.bf16.mxu0 0
  %9098 = vmatpush1.bf16.msra.mxu0 0
  %9099 = vmatprep.subr.bf16.mxu0 0
  %9100 = vmatpush1.bf16.msra.mxu0 0
  %9101 = vmatprep.subr.bf16.mxu0 0
  %9102 = vmatpush1.bf16.msra.mxu0 0
  %9103 = vmatprep.subr.bf16.mxu0 0
  %9104 = vmatpush1.bf16.msra.mxu0 0
  %9105 = vmatprep.subr.bf16.mxu0 0
  %9106 = vmatpush1.bf16.msra.mxu0 0
  %9107 = vmatprep.subr.bf16.mxu0 0
  %9108 = vmatpush1.bf16.msra.mxu0 0
  %9109 = vmatprep.subr.bf16.mxu0 0
  %9110 = vmatpush1.bf16.msra.mxu0 0
  %9111 = vmatprep.subr.bf16.mxu0 0
  %9112 = vmatpush1.bf16.msra.mxu0 0
  %9113 = vmatprep.subr.bf16.mxu0 0
  %9114 = vmatpush1.bf16.msra.mxu0 0
  %9115 = vmatprep.subr.bf16.mxu0 0
  %9116 = vmatpush1.bf16.msra.mxu0 0
  %9117 = vmatprep.subr.bf16.mxu0 0
  %9118 = vmatpush1.bf16.msra.mxu0 0
  %9119 = vmatprep.subr.bf16.mxu0 0
  %9120 = vmatpush1.bf16.msra.mxu0 0
  %9121 = vmatprep.mubr.bf16.mxu0 0
  %9122 = vmatmul.mubr.bf16.gmra.mrb[0].mxu0 %v9063
  %v9123 = vpop.f32.mrb[0].mxu0
  %v9124 = vadd.f32 0.0, %v9123
  %v9125 = vpop.f32.mrb[0].mxu0
  %v9126 = vpop.f32.mrb[0].mxu0
  %v9127 = vadd.f32 0.0, %v9126
  %v9128 = vpop.f32.mrb[0].mxu0
  %9129 = vmatprep.mubr.bf16.mxu0 0
  %9130 = vmatmul.mubr.bf16.gmra.mrb[0].mxu0 %v9066
  %v9131 = vpop.f32.mrb[0].mxu0
  %v9132 = vadd.f32 0.0, %v9131
  %v9133 = vpop.f32.mrb[0].mxu0
  %v9134 = vpop.f32.mrb[0].mxu0
  %v9135 = vadd.f32 0.0, %v9134
  %v9136 = vpop.f32.mrb[0].mxu0
  %9137 = vmatprep.mubr.bf16.mxu0 0
  %9138 = vmatmul.mubr.bf16.gmra.mrb[0].mxu0 %v9069
  %v9139 = vpop.f32.mrb[0].mxu0
  %v9140 = vadd.f32 0.0, %v9139
  %v9141 = vpop.f32.mrb[0].mxu0
  %v9142 = vpop.f32.mrb[0].mxu0
  %v9143 = vadd.f32 0.0, %v9142
  %v9144 = vpop.f32.mrb[0].mxu0
  %9145 = vmatprep.mubr.bf16.mxu0 0
  %9146 = vmatmul.mubr.bf16.gmra.mrb[0].mxu0 %v9072
  %v9147 = vpop.f32.mrb[0].mxu0
  %v9148 = vadd.f32 0.0, %v9147
  %v9149 = vpop.f32.mrb[0].mxu0
  %v9150 = vpop.f32.mrb[0].mxu0
  %v9151 = vadd.f32 0.0, %v9150
  %v9152 = vpop.f32.mrb[0].mxu0
  %9153 = vmatprep.mubr.bf16.mxu0 0
  %9154 = vmatmul.mubr.bf16.gmra.mrb[0].mxu0 %v9075
  %v9155 = vpop.f32.mrb[0].mxu0
  %v9156 = vadd.f32 0.0, %v9155
  %v9157 = vpop.f32.mrb[0].mxu0
  %v9158 = vpop.f32.mrb[0].mxu0
  %v9159 = vadd.f32 0.0, %v9158
  %v9160 = vpop.f32.mrb[0].mxu0
  %9161 = vmatprep.mubr.bf16.mxu0 0
  %9162 = vmatmul.mubr.bf16.gmra.mrb[0].mxu0 %v9078
  %v9163 = vpop.f32.mrb[0].mxu0
  %v9164 = vadd.f32 0.0, %v9163
  %v9165 = vpop.f32.mrb[0].mxu0
  %v9166 = vpop.f32.mrb[0].mxu0
  %v9167 = vadd.f32 0.0, %v9166
  %v9168 = vpop.f32.mrb[0].mxu0
  %9169 = vmatprep.mubr.bf16.mxu0 0
  %9170 = vmatmul.mubr.bf16.gmra.mrb[0].mxu0 %v9081
  %v9171 = vpop.f32.mrb[0].mxu0
  %v9172 = vadd.f32 0.0, %v9171
  %v9173 = vpop.f32.mrb[0].mxu0
  %v9174 = vpop.f32.mrb[0].mxu0
  %v9175 = vadd.f32 0.0, %v9174
  %v9176 = vpop.f32.mrb[0].mxu0
  %9177 = vmatprep.mubr.bf16.mxu0 0
  %9178 = vmatmul.mubr.bf16.gmra.mrb[0].mxu0 %v9084
  %v9179 = vpop.f32.mrb[0].mxu0
  %v9180 = vadd.f32 0.0, %v9179
  %v9181 = vpop.f32.mrb[0].mxu0
  %v9182 = vpop.f32.mrb[0].mxu0
  %v9183 = vadd.f32 0.0, %v9182
  %v9184 = vpop.f32.mrb[0].mxu0
  %9185 = vmatprep.mubr.bf16.mxu0 0
  %9186 = vmatmul.mubr.bf16.gmra.mrb[0].mxu0 %v9087
  %v9187 = vpop.f32.mrb[0].mxu0
  %v9188 = vadd.f32 0.0, %v9187
  %v9189 = vpop.f32.mrb[0].mxu0
  %v9190 = vpop.f32.mrb[0].mxu0
  %v9191 = vadd.f32 0.0, %v9190
  %v9192 = vpop.f32.mrb[0].mxu0
  %9193 = vdwg.mxu0
  %v9194 = vpack.c.bf16 %v9127, %v9124
  %v9195 = vpack.c.bf16 %v9135, %v9132
  %v9196 = vpack.c.bf16 %v9143, %v9140
  %v9197 = vpack.c.bf16 %v9151, %v9148
  %v9198 = vpack.c.bf16 %v9159, %v9156
  %v9199 = vpack.c.bf16 %v9167, %v9164
  %v9200 = vpack.c.bf16 %v9175, %v9172
  %v9201 = vpack.c.bf16 %v9183, %v9180
  %v9202 = vpack.c.bf16 %v9191, %v9188
  %9203 = vst.msk [vmem:[#allocation15] sm:$0xff] %vm3535, %v9194
  %9205 = vrot.lane.b32.xlu0 %v9195, 64
  %v9206 = vpop.permute.xlu0 %9205
  %9208 = vst.msk [vmem:[#allocation15] sm:$0xff] %vm3755, %v9206
  %9209 = vst.msk [vmem:[#allocation15 + $0x8] sm:$0xff] %vm3535, %v9196
  %9211 = vrot.lane.b32.xlu0 %v9197, 64
  %v9212 = vpop.permute.xlu0 %9211
  %9214 = vst.msk [vmem:[#allocation15 + $0x8] sm:$0xff] %vm3755, %v9212
  %9215 = vst.msk [vmem:[#allocation15 + $0x10] sm:$0xff] %vm3535, %v9198
  %9217 = vrot.lane.b32.xlu0 %v9199, 64
  %v9218 = vpop.permute.xlu0 %9217
  %9220 = vst.msk [vmem:[#allocation15 + $0x10] sm:$0xff] %vm3755, %v9218
  %9221 = vst.msk [vmem:[#allocation15 + $0x18] sm:$0xff] %vm3535, %v9200
  %9223 = vrot.lane.b32.xlu0 %v9201, 64
  %v9224 = vpop.permute.xlu0 %9223
  %9226 = vst.msk [vmem:[#allocation15 + $0x18] sm:$0xff] %vm3755, %v9224
  %9227 = vst.msk [vmem:[#allocation15 + $0x20] sm:$0xff] %vm3535, %v9202
  %v9228 = vld [vmem:[#allocation14 + $0x8] sm:$0xff]
  %9229 = vmatprep.subr.bf16.mxu0 0
  %9230 = vmatpush1.bf16.msra.mxu0 %v9228
  %9231 = vmatprep.subr.bf16.mxu0 0
  %9232 = vmatpush1.bf16.msra.mxu0 0
  %9233 = vmatprep.subr.bf16.mxu0 0
  %9234 = vmatpush1.bf16.msra.mxu0 0
  %9235 = vmatprep.subr.bf16.mxu0 0
  %9236 = vmatpush1.bf16.msra.mxu0 0
  %9237 = vmatprep.subr.bf16.mxu0 0
  %9238 = vmatpush1.bf16.msra.mxu0 0
  %9239 = vmatprep.subr.bf16.mxu0 0
  %9240 = vmatpush1.bf16.msra.mxu0 0
  %9241 = vmatprep.subr.bf16.mxu0 0
  %9242 = vmatpush1.bf16.msra.mxu0 0
  %9243 = vmatprep.subr.bf16.mxu0 0
  %9244 = vmatpush1.bf16.msra.mxu0 0
  %9245 = vmatprep.subr.bf16.mxu0 0
  %9246 = vmatpush1.bf16.msra.mxu0 0
  %9247 = vmatprep.subr.bf16.mxu0 0
  %9248 = vmatpush1.bf16.msra.mxu0 0
  %9249 = vmatprep.subr.bf16.mxu0 0
  %9250 = vmatpush1.bf16.msra.mxu0 0
  %9251 = vmatprep.subr.bf16.mxu0 0
  %9252 = vmatpush1.bf16.msra.mxu0 0
  %9253 = vmatprep.subr.bf16.mxu0 0
  %9254 = vmatpush1.bf16.msra.mxu0 0
  %9255 = vmatprep.subr.bf16.mxu0 0
  %9256 = vmatpush1.bf16.msra.mxu0 0
  %9257 = vmatprep.subr.bf16.mxu0 0
  %9258 = vmatpush1.bf16.msra.mxu0 0
  %9259 = vmatprep.subr.bf16.mxu0 0
  %9260 = vmatpush1.bf16.msra.mxu0 0
  %9261 = vmatprep.mubr.bf16.mxu0 0
  %9262 = vmatmul.mubr.bf16.gmra.mrb[0].mxu0 %v9063
  %v9263 = vpop.f32.mrb[0].mxu0
  %v9264 = vadd.f32 0.0, %v9263
  %v9265 = vpop.f32.mrb[0].mxu0
  %v9266 = vpop.f32.mrb[0].mxu0
  %v9267 = vadd.f32 0.0, %v9266
  %v9268 = vpop.f32.mrb[0].mxu0
  %9269 = vmatprep.mubr.bf16.mxu0 0
  %9270 = vmatmul.mubr.bf16.gmra.mrb[0].mxu0 %v9066
  %v9271 = vpop.f32.mrb[0].mxu0
  %v9272 = vadd.f32 0.0, %v9271
  %v9273 = vpop.f32.mrb[0].mxu0
  %v9274 = vpop.f32.mrb[0].mxu0
  %v9275 = vadd.f32 0.0, %v9274
  %v9276 = vpop.f32.mrb[0].mxu0
  %9277 = vmatprep.mubr.bf16.mxu0 0
  %9278 = vmatmul.mubr.bf16.gmra.mrb[0].mxu0 %v9069
  %v9279 = vpop.f32.mrb[0].mxu0
  %v9280 = vadd.f32 0.0, %v9279
  %v9281 = vpop.f32.mrb[0].mxu0
  %v9282 = vpop.f32.mrb[0].mxu0
  %v9283 = vadd.f32 0.0, %v9282
  %v9284 = vpop.f32.mrb[0].mxu0
  %9285 = vmatprep.mubr.bf16.mxu0 0
  %9286 = vmatmul.mubr.bf16.gmra.mrb[0].mxu0 %v9072
  %v9287 = vpop.f32.mrb[0].mxu0
  %v9288 = vadd.f32 0.0, %v9287
  %v9289 = vpop.f32.mrb[0].mxu0
  %v9290 = vpop.f32.mrb[0].mxu0
  %v9291 = vadd.f32 0.0, %v9290
  %v9292 = vpop.f32.mrb[0].mxu0
  %9293 = vmatprep.mubr.bf16.mxu0 0
  %9294 = vmatmul.mubr.bf16.gmra.mrb[0].mxu0 %v9075
  %v9295 = vpop.f32.mrb[0].mxu0
  %v9296 = vadd.f32 0.0, %v9295
  %v9297 = vpop.f32.mrb[0].mxu0
  %v9298 = vpop.f32.mrb[0].mxu0
  %v9299 = vadd.f32 0.0, %v9298
  %v9300 = vpop.f32.mrb[0].mxu0
  %9301 = vmatprep.mubr.bf16.mxu0 0
  %9302 = vmatmul.mubr.bf16.gmra.mrb[0].mxu0 %v9078
  %v9303 = vpop.f32.mrb[0].mxu0
  %v9304 = vadd.f32 0.0, %v9303
  %v9305 = vpop.f32.mrb[0].mxu0
  %v9306 = vpop.f32.mrb[0].mxu0
  %v9307 = vadd.f32 0.0, %v9306
  %v9308 = vpop.f32.mrb[0].mxu0
  %9309 = vmatprep.mubr.bf16.mxu0 0
  %9310 = vmatmul.mubr.bf16.gmra.mrb[0].mxu0 %v9081
  %v9311 = vpop.f32.mrb[0].mxu0
  %v9312 = vadd.f32 0.0, %v9311
  %v9313 = vpop.f32.mrb[0].mxu0
  %v9314 = vpop.f32.mrb[0].mxu0
  %v9315 = vadd.f32 0.0, %v9314
  %v9316 = vpop.f32.mrb[0].mxu0
  %9317 = vmatprep.mubr.bf16.mxu0 0
  %9318 = vmatmul.mubr.bf16.gmra.mrb[0].mxu0 %v9084
  %v9319 = vpop.f32.mrb[0].mxu0
  %v9320 = vadd.f32 0.0, %v9319
  %v9321 = vpop.f32.mrb[0].mxu0
  %v9322 = vpop.f32.mrb[0].mxu0
  %v9323 = vadd.f32 0.0, %v9322
  %v9324 = vpop.f32.mrb[0].mxu0
  %9325 = vmatprep.mubr.bf16.mxu0 0
  %9326 = vmatmul.mubr.bf16.gmra.mrb[0].mxu0 %v9087
  %v9327 = vpop.f32.mrb[0].mxu0
  %v9328 = vadd.f32 0.0, %v9327
  %v9329 = vpop.f32.mrb[0].mxu0
  %v9330 = vpop.f32.mrb[0].mxu0
  %v9331 = vadd.f32 0.0, %v9330
  %v9332 = vpop.f32.mrb[0].mxu0
  %9333 = vdwg.mxu0
  %v9334 = vpack.c.bf16 %v9267, %v9264
  %v9335 = vpack.c.bf16 %v9275, %v9272
  %v9336 = vpack.c.bf16 %v9283, %v9280
  %v9337 = vpack.c.bf16 %v9291, %v9288
  %v9338 = vpack.c.bf16 %v9299, %v9296
  %v9339 = vpack.c.bf16 %v9307, %v9304
  %v9340 = vpack.c.bf16 %v9315, %v9312
  %v9341 = vpack.c.bf16 %v9323, %v9320
  %v9342 = vpack.c.bf16 %v9331, %v9328
  %9343 = vst.msk [vmem:[#allocation15 + $0x28] sm:$0xff] %vm3535, %v9334
  %9345 = vrot.lane.b32.xlu0 %v9335, 64
  %v9346 = vpop.permute.xlu0 %9345
  %9348 = vst.msk [vmem:[#allocation15 + $0x28] sm:$0xff] %vm3755, %v9346
  %9349 = vst.msk [vmem:[#allocation15 + $0x30] sm:$0xff] %vm3535, %v9336
  %9351 = vrot.lane.b32.xlu0 %v9337, 64
  %v9352 = vpop.permute.xlu0 %9351
  %9354 = vst.msk [vmem:[#allocation15 + $0x30] sm:$0xff] %vm3755, %v9352
  %9355 = vst.msk [vmem:[#allocation15 + $0x38] sm:$0xff] %vm3535, %v9338
  %9357 = vrot.lane.b32.xlu0 %v9339, 64
  %v9358 = vpop.permute.xlu0 %9357
  %9360 = vst.msk [vmem:[#allocation15 + $0x38] sm:$0xff] %vm3755, %v9358
  %9361 = vst.msk [vmem:[#allocation15 + $0x40] sm:$0xff] %vm3535, %v9340
  %9363 = vrot.lane.b32.xlu0 %v9341, 64
  %v9364 = vpop.permute.xlu0 %9363
  %9366 = vst.msk [vmem:[#allocation15 + $0x40] sm:$0xff] %vm3755, %v9364
  %9367 = vst.msk [vmem:[#allocation15 + $0x48] sm:$0xff] %vm3535, %v9342
  %v9368 = vld [vmem:[#allocation15] sm:$0xff]
  %v9369 = vld [vmem:[#allocation15 + $0x8] sm:$0xff]
  %v9370 = vld [vmem:[#allocation15 + $0x10] sm:$0xff]
  %v9371 = vld [vmem:[#allocation15 + $0x18] sm:$0xff]
  %v9372 = vld [vmem:[#allocation15 + $0x20] sm:$0xff]
  %v9373 = vld [vmem:[#allocation15 + $0x28] sm:$0xff]
  %v9374 = vld [vmem:[#allocation15 + $0x30] sm:$0xff]
  %v9375 = vld [vmem:[#allocation15 + $0x38] sm:$0xff]
  %v9376 = vld [vmem:[#allocation15 + $0x40] sm:$0xff]
  %v9377 = vld [vmem:[#allocation15 + $0x48] sm:$0xff]
  %v9378 = vld [vmem:[%s57] sm:$0xf]
  %v9379 = vld [vmem:[%s57 + $0x4] sm:$0xf]
  %v9380 = vld [vmem:[%s57 + $0x8] sm:$0xf]
  %v9381 = vld [vmem:[%s57 + $0xc] sm:$0xf]
  %v9382 = vld [vmem:[%s57 + $0x10] sm:$0xf]
  %v9383 = vld [vmem:[%s57 + $0x14] sm:$0xf]
  %v9384 = vld [vmem:[%s57 + $0x18] sm:$0xf]
  %v9385 = vld [vmem:[%s57 + $0x1c] sm:$0xf]
  %v9386 = vld [vmem:[%s57 + $0x20] sm:$0xf]
  %v9387 = vld [vmem:[%s57 + $0x24] sm:$0xf]
  %v9388 = vld [vmem:[%s57 + $0x28] sm:$0xf]
  %v9389 = vld [vmem:[%s57 + $0x2c] sm:$0xf]
  %v9390 = vld [vmem:[%s57 + $0x30] sm:$0xf]
  %v9391 = vld [vmem:[%s57 + $0x34] sm:$0xf]
  %v9392 = vld [vmem:[%s57 + $0x38] sm:$0xf]
  %v9393 = vld [vmem:[%s57 + $0x3c] sm:$0xf]
  %v9394 = vld [vmem:[%s57 + $0x40] sm:$0xf]
  %v9395 = vld [vmem:[%s57 + $0x44] sm:$0xf]
  %v9396 = vld [vmem:[%s57 + $0x48] sm:$0xf]
  %v9397 = vld [vmem:[%s57 + $0x4c] sm:$0xf]
  %v9398 = vld [vmem:[%s57 + $0x50] sm:$0xf]
  %v9399 = vld [vmem:[%s57 + $0x54] sm:$0xf]
  %v9400 = vld [vmem:[%s57 + $0x58] sm:$0xf]
  %v9401 = vld [vmem:[%s57 + $0x5c] sm:$0xf]
  %v9402 = vld [vmem:[%s57 + $0x60] sm:$0xf]
  %v9403 = vld [vmem:[%s57 + $0x64] sm:$0xf]
  %v9404 = vld [vmem:[%s57 + $0x68] sm:$0xf]
  %v9405 = vld [vmem:[%s57 + $0x6c] sm:$0xf]
  %v9406 = vld [vmem:[%s57 + $0x70] sm:$0xf]
  %v9407 = vld [vmem:[%s57 + $0x74] sm:$0xf]
  %v9408 = vld [vmem:[%s57 + $0x78] sm:$0xf]
  %v9409 = vld [vmem:[%s57 + $0x7c] sm:$0xf]
  %v9410 = vld [vmem:[%s57 + $0x80] sm:$0xf]
  %v9411 = vld [vmem:[%s57 + $0x84] sm:$0xf]
  %v9412 = vld [vmem:[%s57 + $0x88] sm:$0xf]
  %v9413 = vld [vmem:[%s57 + $0x8c] sm:$0xf]
  %v9414 = vld [vmem:[%s57 + $0x90] sm:$0xf]
  %v9415 = vld [vmem:[%s57 + $0x94] sm:$0xf]
  %v9416 = vld [vmem:[%s57 + $0x98] sm:$0xf]
  %v9417 = vld [vmem:[%s57 + $0x9c] sm:$0xf]
  %v9418 = vld [vmem:[%s57 + $0xa0] sm:$0xf]
  %v9419 = vld [vmem:[%s57 + $0xa4] sm:$0xf]
  %v9420 = vld [vmem:[%s57 + $0xa8] sm:$0xf]
  %v9421 = vld [vmem:[%s57 + $0xac] sm:$0xf]
  %v9422 = vld [vmem:[%s57 + $0xb0] sm:$0xf]
  %v9423 = vld [vmem:[%s57 + $0xb4] sm:$0xf]
  %v9424 = vld [vmem:[%s57 + $0xb8] sm:$0xf]
  %v9425 = vld [vmem:[%s57 + $0xbc] sm:$0xf]
  %v9426 = vld [vmem:[%s57 + $0xc0] sm:$0xf]
  %v9427 = vld [vmem:[%s57 + $0xc4] sm:$0xf]
  %v9428 = vld [vmem:[%s57 + $0xc8] sm:$0xf]
  %v9429 = vld [vmem:[%s57 + $0xcc] sm:$0xf]
  %v9430 = vld [vmem:[%s57 + $0xd0] sm:$0xf]
  %v9431 = vld [vmem:[%s57 + $0xd4] sm:$0xf]
  %v9432 = vld [vmem:[%s57 + $0xd8] sm:$0xf]
  %v9433 = vld [vmem:[%s57 + $0xdc] sm:$0xf]
  %v9434 = vld [vmem:[%s57 + $0xe0] sm:$0xf]
  %v9435 = vld [vmem:[%s57 + $0xe4] sm:$0xf]
  %v9436 = vld [vmem:[%s57 + $0xe8] sm:$0xf]
  %v9437 = vld [vmem:[%s57 + $0xec] sm:$0xf]
  %v9438 = vld [vmem:[%s57 + $0xf0] sm:$0xf]
  %v9439 = vld [vmem:[%s57 + $0xf4] sm:$0xf]
  %v9440 = vld [vmem:[%s57 + $0xf8] sm:$0xf]
  %v9441 = vld [vmem:[%s57 + $0xfc] sm:$0xf]
  %v9442 = vld [vmem:[%s57 + $0x100] sm:$0xf]
  %v9443 = vld [vmem:[%s57 + $0x104] sm:$0xf]
  %v9444 = vld [vmem:[%s57 + $0x108] sm:$0xf]
  %v9445 = vld [vmem:[%s57 + $0x10c] sm:$0xf]
  %v9446 = vld [vmem:[%s57 + $0x110] sm:$0xf]
  %v9447 = vld [vmem:[%s57 + $0x114] sm:$0xf]
  %v9448 = vld [vmem:[%s57 + $0x118] sm:$0xf]
  %v9449 = vld [vmem:[%s57 + $0x11c] sm:$0xf]
  %v9450 = vld [vmem:[%s59] sm:$0x1]
  %v9452 = vlaneseq
  %v9453 = vshrl.u32 %v9452, 7
  %v9454 = vsub.s32 0, %v9453
  %v9455 = vrot.slane %v9450, %v9454
  %v9529 = vunpack.c.l.b16 %v9378
  %v9530 = vunpack.c.l.b16 %v9379
  %v9531 = vunpack.c.l.b16 %v9380
  %v9532 = vunpack.c.l.b16 %v9381
  %v9533 = vunpack.c.l.b16 %v9382
  %v9534 = vunpack.c.l.b16 %v9383
  %v9535 = vunpack.c.l.b16 %v9384
  %v9536 = vunpack.c.l.b16 %v9385
  %v9537 = vunpack.c.l.b16 %v9386
  %v9538 = vunpack.c.l.b16 %v9387
  %v9539 = vunpack.c.l.b16 %v9388
  %v9540 = vunpack.c.l.b16 %v9389
  %v9541 = vunpack.c.l.b16 %v9390
  %v9542 = vunpack.c.l.b16 %v9391
  %v9543 = vunpack.c.l.b16 %v9392
  %v9544 = vunpack.c.l.b16 %v9393
  %v9545 = vunpack.c.l.b16 %v9394
  %v9546 = vunpack.c.l.b16 %v9395
  %v9547 = vunpack.c.l.b16 %v9396
  %v9548 = vunpack.c.l.b16 %v9397
  %v9549 = vunpack.c.l.b16 %v9398
  %v9550 = vunpack.c.l.b16 %v9399
  %v9551 = vunpack.c.l.b16 %v9400
  %v9552 = vunpack.c.l.b16 %v9401
  %v9553 = vunpack.c.l.b16 %v9402
  %v9554 = vunpack.c.l.b16 %v9403
  %v9555 = vunpack.c.l.b16 %v9404
  %v9556 = vunpack.c.l.b16 %v9405
  %v9557 = vunpack.c.l.b16 %v9406
  %v9558 = vunpack.c.l.b16 %v9407
  %v9559 = vunpack.c.l.b16 %v9408
  %v9560 = vunpack.c.l.b16 %v9409
  %v9561 = vunpack.c.l.b16 %v9410
  %v9562 = vunpack.c.l.b16 %v9411
  %v9563 = vunpack.c.l.b16 %v9412
  %v9564 = vunpack.c.l.b16 %v9413
  %v9565 = vunpack.c.l.b16 %v9414
  %v9566 = vunpack.c.l.b16 %v9415
  %v9567 = vunpack.c.l.b16 %v9416
  %v9568 = vunpack.c.l.b16 %v9417
  %v9569 = vunpack.c.l.b16 %v9418
  %v9570 = vunpack.c.l.b16 %v9419
  %v9571 = vunpack.c.l.b16 %v9420
  %v9572 = vunpack.c.l.b16 %v9421
  %v9573 = vunpack.c.l.b16 %v9422
  %v9574 = vunpack.c.l.b16 %v9423
  %v9575 = vunpack.c.l.b16 %v9424
  %v9576 = vunpack.c.l.b16 %v9425
  %v9577 = vunpack.c.l.b16 %v9426
  %v9578 = vunpack.c.l.b16 %v9427
  %v9579 = vunpack.c.l.b16 %v9428
  %v9580 = vunpack.c.l.b16 %v9429
  %v9581 = vunpack.c.l.b16 %v9430
  %v9582 = vunpack.c.l.b16 %v9431
  %v9583 = vunpack.c.l.b16 %v9432
  %v9584 = vunpack.c.l.b16 %v9433
  %v9585 = vunpack.c.l.b16 %v9434
  %v9586 = vunpack.c.l.b16 %v9435
  %v9587 = vunpack.c.l.b16 %v9436
  %v9588 = vunpack.c.l.b16 %v9437
  %v9589 = vunpack.c.l.b16 %v9438
  %v9590 = vunpack.c.l.b16 %v9439
  %v9591 = vunpack.c.l.b16 %v9440
  %v9592 = vunpack.c.l.b16 %v9441
  %v9593 = vunpack.c.l.b16 %v9442
  %v9594 = vunpack.c.l.b16 %v9443
  %v9595 = vunpack.c.l.b16 %v9444
  %v9596 = vunpack.c.l.b16 %v9445
  %v9597 = vunpack.c.l.b16 %v9446
  %v9598 = vunpack.c.l.b16 %v9447
  %v9599 = vunpack.c.l.b16 %v9448
  %v9600 = vunpack.c.l.b16 %v9449
  %v9601 = vpack.c.b16 %v9530, %v9529
  %v9602 = vpack.c.b16 %v9532, %v9531
  %v9603 = vpack.c.b16 %v9534, %v9533
  %v9604 = vpack.c.b16 %v9536, %v9535
  %v9605 = vpack.c.b16 %v9538, %v9537
  %v9606 = vpack.c.b16 %v9540, %v9539
  %v9607 = vpack.c.b16 %v9542, %v9541
  %v9608 = vpack.c.b16 %v9544, %v9543
  %v9609 = vpack.c.b16 %v9546, %v9545
  %v9610 = vpack.c.b16 %v9548, %v9547
  %v9611 = vpack.c.b16 %v9550, %v9549
  %v9612 = vpack.c.b16 %v9552, %v9551
  %v9613 = vpack.c.b16 %v9554, %v9553
  %v9614 = vpack.c.b16 %v9556, %v9555
  %v9615 = vpack.c.b16 %v9558, %v9557
  %v9616 = vpack.c.b16 %v9560, %v9559
  %v9617 = vpack.c.b16 %v9562, %v9561
  %v9618 = vpack.c.b16 %v9564, %v9563
  %v9619 = vpack.c.b16 %v9566, %v9565
  %v9620 = vpack.c.b16 %v9568, %v9567
  %v9621 = vpack.c.b16 %v9570, %v9569
  %v9622 = vpack.c.b16 %v9572, %v9571
  %v9623 = vpack.c.b16 %v9574, %v9573
  %v9624 = vpack.c.b16 %v9576, %v9575
  %v9625 = vpack.c.b16 %v9578, %v9577
  %v9626 = vpack.c.b16 %v9580, %v9579
  %v9627 = vpack.c.b16 %v9582, %v9581
  %v9628 = vpack.c.b16 %v9584, %v9583
  %v9629 = vpack.c.b16 %v9586, %v9585
  %v9630 = vpack.c.b16 %v9588, %v9587
  %v9631 = vpack.c.b16 %v9590, %v9589
  %v9632 = vpack.c.b16 %v9592, %v9591
  %v9633 = vpack.c.b16 %v9594, %v9593
  %v9634 = vpack.c.b16 %v9596, %v9595
  %v9635 = vpack.c.b16 %v9598, %v9597
  %v9636 = vpack.c.b16 %v9600, %v9599
  %v9674 = vsel %vm3535, %v9372, 0
  %v9677 = vsel %vm3535, %v9377, 0
  %9679 = vmatprep.subr.bf16.mxu0 0
  %9680 = vmatpush1.bf16.msra.mxu0 %v9601
  %9681 = vmatprep.subr.bf16.mxu0 0
  %9682 = vmatpush1.bf16.msra.mxu0 %v9602
  %9683 = vmatprep.subr.bf16.mxu0 0
  %9684 = vmatpush1.bf16.msra.mxu0 %v9603
  %9685 = vmatprep.subr.bf16.mxu0 0
  %9686 = vmatpush1.bf16.msra.mxu0 %v9604
  %9687 = vmatprep.subr.bf16.mxu0 0
  %9688 = vmatpush1.bf16.msra.mxu0 %v9605
  %9689 = vmatprep.subr.bf16.mxu0 0
  %9690 = vmatpush1.bf16.msra.mxu0 %v9606
  %9691 = vmatprep.subr.bf16.mxu0 0
  %9692 = vmatpush1.bf16.msra.mxu0 %v9607
  %9693 = vmatprep.subr.bf16.mxu0 0
  %9694 = vmatpush1.bf16.msra.mxu0 %v9608
  %9695 = vmatprep.subr.bf16.mxu0 0
  %9696 = vmatpush1.bf16.msra.mxu0 %v9609
  %9697 = vmatprep.subr.bf16.mxu0 0
  %9698 = vmatpush1.bf16.msra.mxu0 %v9610
  %9699 = vmatprep.subr.bf16.mxu0 0
  %9700 = vmatpush1.bf16.msra.mxu0 %v9611
  %9701 = vmatprep.subr.bf16.mxu0 0
  %9702 = vmatpush1.bf16.msra.mxu0 %v9612
  %9703 = vmatprep.subr.bf16.mxu0 0
  %9704 = vmatpush1.bf16.msra.mxu0 %v9613
  %9705 = vmatprep.subr.bf16.mxu0 0
  %9706 = vmatpush1.bf16.msra.mxu0 %v9614
  %9707 = vmatprep.subr.bf16.mxu0 0
  %9708 = vmatpush1.bf16.msra.mxu0 %v9615
  %9709 = vmatprep.subr.bf16.mxu0 0
  %9710 = vmatpush1.bf16.msra.mxu0 %v9616
  %9711 = vmatprep.mubr.bf16.mxu0 %v9369
  %9712 = vmatmul.mubr.bf16.gmra.mrb[0].mxu0 %v9368
  %v9713 = vpop.f32.mrb[0].mxu0
  %v9714 = vadd.f32 %v9455, %v9713
  %v9715 = vpop.f32.mrb[0].mxu0
  %v9716 = vpop.f32.mrb[0].mxu0
  %v9717 = vadd.f32 %v9455, %v9716
  %v9718 = vpop.f32.mrb[0].mxu0
  %9719 = vmatprep.mubr.bf16.mxu0 %v9374
  %9720 = vmatmul.mubr.bf16.gmra.mrb[0].mxu0 %v9373
  %v9721 = vpop.f32.mrb[0].mxu0
  %v9722 = vadd.f32 %v9455, %v9721
  %v9723 = vpop.f32.mrb[0].mxu0
  %v9724 = vpop.f32.mrb[0].mxu0
  %v9725 = vadd.f32 %v9455, %v9724
  %v9726 = vpop.f32.mrb[0].mxu0
  %9727 = vdwg.mxu0
  %9728 = vmatprep.subr.bf16.mxu0 0
  %9729 = vmatpush1.bf16.msra.mxu0 %v9617
  %9730 = vmatprep.subr.bf16.mxu0 0
  %9731 = vmatpush1.bf16.msra.mxu0 %v9618
  %9732 = vmatprep.subr.bf16.mxu0 0
  %9733 = vmatpush1.bf16.msra.mxu0 %v9619
  %9734 = vmatprep.subr.bf16.mxu0 0
  %9735 = vmatpush1.bf16.msra.mxu0 %v9620
  %9736 = vmatprep.subr.bf16.mxu0 0
  %9737 = vmatpush1.bf16.msra.mxu0 %v9621
  %9738 = vmatprep.subr.bf16.mxu0 0
  %9739 = vmatpush1.bf16.msra.mxu0 %v9622
  %9740 = vmatprep.subr.bf16.mxu0 0
  %9741 = vmatpush1.bf16.msra.mxu0 %v9623
  %9742 = vmatprep.subr.bf16.mxu0 0
  %9743 = vmatpush1.bf16.msra.mxu0 %v9624
  %9744 = vmatprep.subr.bf16.mxu0 0
  %9745 = vmatpush1.bf16.msra.mxu0 %v9625
  %9746 = vmatprep.subr.bf16.mxu0 0
  %9747 = vmatpush1.bf16.msra.mxu0 %v9626
  %9748 = vmatprep.subr.bf16.mxu0 0
  %9749 = vmatpush1.bf16.msra.mxu0 %v9627
  %9750 = vmatprep.subr.bf16.mxu0 0
  %9751 = vmatpush1.bf16.msra.mxu0 %v9628
  %9752 = vmatprep.subr.bf16.mxu0 0
  %9753 = vmatpush1.bf16.msra.mxu0 %v9629
  %9754 = vmatprep.subr.bf16.mxu0 0
  %9755 = vmatpush1.bf16.msra.mxu0 %v9630
  %9756 = vmatprep.subr.bf16.mxu0 0
  %9757 = vmatpush1.bf16.msra.mxu0 %v9631
  %9758 = vmatprep.subr.bf16.mxu0 0
  %9759 = vmatpush1.bf16.msra.mxu0 %v9632
  %9760 = vmatprep.mubr.bf16.mxu0 %v9371
  %9761 = vmatmul.mubr.bf16.gmra.mrb[0].mxu0 %v9370
  %v9762 = vpop.f32.mrb[0].mxu0
  %v9763 = vadd.f32 %v9714, %v9762
  %v9764 = vpop.f32.mrb[0].mxu0
  %v9765 = vpop.f32.mrb[0].mxu0
  %v9766 = vadd.f32 %v9717, %v9765
  %v9767 = vpop.f32.mrb[0].mxu0
  %9768 = vmatprep.mubr.bf16.mxu0 %v9376
  %9769 = vmatmul.mubr.bf16.gmra.mrb[0].mxu0 %v9375
  %v9770 = vpop.f32.mrb[0].mxu0
  %v9771 = vadd.f32 %v9722, %v9770
  %v9772 = vpop.f32.mrb[0].mxu0
  %v9773 = vpop.f32.mrb[0].mxu0
  %v9774 = vadd.f32 %v9725, %v9773
  %v9775 = vpop.f32.mrb[0].mxu0
  %9776 = vdwg.mxu0
  %9777 = vmatprep.subr.bf16.mxu0 0
  %9778 = vmatpush1.bf16.msra.mxu0 %v9633
  %9779 = vmatprep.subr.bf16.mxu0 0
  %9780 = vmatpush1.bf16.msra.mxu0 %v9634
  %9781 = vmatprep.subr.bf16.mxu0 0
  %9782 = vmatpush1.bf16.msra.mxu0 %v9635
  %9783 = vmatprep.subr.bf16.mxu0 0
  %9784 = vmatpush1.bf16.msra.mxu0 %v9636
  %9785 = vmatprep.subr.bf16.mxu0 0
  %9786 = vmatpush1.bf16.msra.mxu0 0
  %9787 = vmatprep.subr.bf16.mxu0 0
  %9788 = vmatpush1.bf16.msra.mxu0 0
  %9789 = vmatprep.subr.bf16.mxu0 0
  %9790 = vmatpush1.bf16.msra.mxu0 0
  %9791 = vmatprep.subr.bf16.mxu0 0
  %9792 = vmatpush1.bf16.msra.mxu0 0
  %9793 = vmatprep.subr.bf16.mxu0 0
  %9794 = vmatpush1.bf16.msra.mxu0 0
  %9795 = vmatprep.subr.bf16.mxu0 0
  %9796 = vmatpush1.bf16.msra.mxu0 0
  %9797 = vmatprep.subr.bf16.mxu0 0
  %9798 = vmatpush1.bf16.msra.mxu0 0
  %9799 = vmatprep.subr.bf16.mxu0 0
  %9800 = vmatpush1.bf16.msra.mxu0 0
  %9801 = vmatprep.subr.bf16.mxu0 0
  %9802 = vmatpush1.bf16.msra.mxu0 0
  %9803 = vmatprep.subr.bf16.mxu0 0
  %9804 = vmatpush1.bf16.msra.mxu0 0
  %9805 = vmatprep.subr.bf16.mxu0 0
  %9806 = vmatpush1.bf16.msra.mxu0 0
  %9807 = vmatprep.subr.bf16.mxu0 0
  %9808 = vmatpush1.bf16.msra.mxu0 0
  %9809 = vmatprep.mubr.bf16.mxu0 0
  %9810 = vmatmul.mubr.bf16.gmra.mrb[0].mxu0 %v9674
  %v9811 = vpop.f32.mrb[0].mxu0
  %v9812 = vadd.f32 %v9763, %v9811
  %v9813 = vpop.f32.mrb[0].mxu0
  %v9814 = vpop.f32.mrb[0].mxu0
  %v9815 = vadd.f32 %v9766, %v9814
  %v9816 = vpop.f32.mrb[0].mxu0
  %9817 = vmatprep.mubr.bf16.mxu0 0
  %9818 = vmatmul.mubr.bf16.gmra.mrb[0].mxu0 %v9677
  %v9819 = vpop.f32.mrb[0].mxu0
  %v9820 = vadd.f32 %v9771, %v9819
  %v9821 = vpop.f32.mrb[0].mxu0
  %v9822 = vpop.f32.mrb[0].mxu0
  %v9823 = vadd.f32 %v9774, %v9822
  %v9824 = vpop.f32.mrb[0].mxu0
  %9825 = vdwg.mxu0
  %v9826 = vpack.c.bf16 %v9815, %v9812
  %v9827 = vpack.c.bf16 %v9823, %v9820
  %v9828 = vld [vmem:[%s61] sm:$0xf]
  %v9829 = vld [vmem:[%s61 + $0x4] sm:$0xf]
  %v9830 = vld [vmem:[%s61 + $0x8] sm:$0xf]
  %v9831 = vld [vmem:[%s61 + $0xc] sm:$0xf]
  %v9832 = vld [vmem:[%s63] sm:$0x1]
  %v9834 = vlaneseq
  %v9835 = vshrl.u32 %v9834, 7
  %v9836 = vsub.s32 0, %v9835
  %v9837 = vrot.slane %v9832, %v9836
  %v9843 = vunpack.c.l.b16 %v9828
  %v9844 = vunpack.c.l.b16 %v9829
  %v9845 = vunpack.c.l.b16 %v9830
  %v9846 = vunpack.c.l.b16 %v9831
  %v9847 = vpack.c.b16 %v9844, %v9843
  %v9848 = vpack.c.b16 %v9846, %v9845
  %v9852 = vsel %vm1017, %v9826, 0
  %v9855 = vsel %vm1017, %v9827, 0
  %9857 = vmatprep.subr.bf16.mxu0 0
  %9858 = vmatpush1.bf16.msra.mxu0 %v9847
  %9859 = vmatprep.subr.bf16.mxu0 0
  %9860 = vmatpush1.bf16.msra.mxu0 %v9848
  %9861 = vmatprep.subr.bf16.mxu0 0
  %9862 = vmatpush1.bf16.msra.mxu0 0
  %9863 = vmatprep.subr.bf16.mxu0 0
  %9864 = vmatpush1.bf16.msra.mxu0 0
  %9865 = vmatprep.subr.bf16.mxu0 0
  %9866 = vmatpush1.bf16.msra.mxu0 0
  %9867 = vmatprep.subr.bf16.mxu0 0
  %9868 = vmatpush1.bf16.msra.mxu0 0
  %9869 = vmatprep.subr.bf16.mxu0 0
  %9870 = vmatpush1.bf16.msra.mxu0 0
  %9871 = vmatprep.subr.bf16.mxu0 0
  %9872 = vmatpush1.bf16.msra.mxu0 0
  %9873 = vmatprep.subr.bf16.mxu0 0
  %9874 = vmatpush1.bf16.msra.mxu0 0
  %9875 = vmatprep.subr.bf16.mxu0 0
  %9876 = vmatpush1.bf16.msra.mxu0 0
  %9877 = vmatprep.subr.bf16.mxu0 0
  %9878 = vmatpush1.bf16.msra.mxu0 0
  %9879 = vmatprep.subr.bf16.mxu0 0
  %9880 = vmatpush1.bf16.msra.mxu0 0
  %9881 = vmatprep.subr.bf16.mxu0 0
  %9882 = vmatpush1.bf16.msra.mxu0 0
  %9883 = vmatprep.subr.bf16.mxu0 0
  %9884 = vmatpush1.bf16.msra.mxu0 0
  %9885 = vmatprep.subr.bf16.mxu0 0
  %9886 = vmatpush1.bf16.msra.mxu0 0
  %9887 = vmatprep.subr.bf16.mxu0 0
  %9888 = vmatpush1.bf16.msra.mxu0 0
  %9889 = vmatprep.mubr.bf16.mxu0 0
  %9890 = vmatmul.mubr.bf16.gmra.mrb[0].mxu0 %v9852
  %v9891 = vpop.f32.mrb[0].mxu0
  %v9892 = vadd.f32 %v9837, %v9891
  %v9893 = vpop.f32.mrb[0].mxu0
  %v9894 = vpop.f32.mrb[0].mxu0
  %v9895 = vpop.f32.mrb[0].mxu0
  %9896 = vmatprep.mubr.bf16.mxu0 0
  %9897 = vmatmul.mubr.bf16.gmra.mrb[0].mxu0 %v9855
  %v9898 = vpop.f32.mrb[0].mxu0
  %v9899 = vadd.f32 %v9837, %v9898
  %v9900 = vpop.f32.mrb[0].mxu0
  %v9901 = vpop.f32.mrb[0].mxu0
  %v9902 = vpop.f32.mrb[0].mxu0
  %9903 = vdwg.mxu0
  %v9904 = vmax.f32 %v9892, 0.0
  %v9905 = vmax.f32 %v9899, 0.0
  %9907 = vrot.lane.b32.xlu0 %v9904, 64
  %v9908 = vpop.permute.xlu0 %9907
  %vm9910 = vcmask 778752
  %9911 = vst.msk [vmem:[#allocation16] sm:$0x1] %vm9910, %v9908
  %9913 = vrot.lane.b32.xlu0 %v9905, 64
  %v9914 = vpop.permute.xlu0 %9913
  %9916 = vst.msk [vmem:[#allocation16 + $0x1] sm:$0x1] %vm9910, %v9914
  %v9917 = vld [vmem:[%s65] sm:$0x3]
  %v9918 = vld [vmem:[%s67] sm:$0x3]
  %9920 = vset.pattern.permute.xlu0 0
  %9921 = vperm.xlu0 %9920, %v9918
  %v9922 = vpop.permute.xlu0 %9921
  %v9924 = vmul.f32 %v9917, %v9922
  %v9925 = vld [vmem:[#allocation16] sm:$0x3]
  %v9926 = vpack.c.bf16 %v9925, %v9925
  %v9927 = vld [vmem:[%s69] sm:$0xf]
  %v9928 = vld [vmem:[%s69 + $0x4] sm:$0xf]
  %v9929 = vld [vmem:[%s69 + $0x8] sm:$0xf]
  %v9930 = vld [vmem:[%s69 + $0xc] sm:$0xf]
  %v9931 = vld [vmem:[%s69 + $0x10] sm:$0xf]
  %v9932 = vld [vmem:[%s69 + $0x14] sm:$0xf]
  %v9933 = vld [vmem:[%s69 + $0x18] sm:$0xf]
  %v9934 = vld [vmem:[%s69 + $0x1c] sm:$0xf]
  %v9935 = vld [vmem:[%s69 + $0x20] sm:$0xf]
  %v9936 = vld [vmem:[%s69 + $0x24] sm:$0xf]
  %v9937 = vld [vmem:[%s69 + $0x28] sm:$0xf]
  %v9938 = vld [vmem:[%s69 + $0x2c] sm:$0xf]
  %v9939 = vld [vmem:[%s71] sm:$0x1]
  %v9941 = vlaneseq
  %v9942 = vshrl.u32 %v9941, 7
  %v9943 = vsub.s32 0, %v9942
  %v9944 = vrot.slane %v9939, %v9943
  %v9958 = vunpack.c.l.b16 %v9927
  %v9959 = vunpack.c.l.b16 %v9928
  %v9960 = vunpack.c.l.b16 %v9929
  %v9961 = vunpack.c.l.b16 %v9930
  %v9962 = vunpack.c.l.b16 %v9931
  %v9963 = vunpack.c.l.b16 %v9932
  %v9964 = vunpack.c.l.b16 %v9933
  %v9965 = vunpack.c.l.b16 %v9934
  %v9966 = vunpack.c.l.b16 %v9935
  %v9967 = vunpack.c.l.b16 %v9936
  %v9968 = vunpack.c.l.b16 %v9937
  %v9969 = vunpack.c.l.b16 %v9938
  %v9970 = vpack.c.b16 %v9959, %v9958
  %v9971 = vpack.c.b16 %v9961, %v9960
  %v9972 = vpack.c.b16 %v9963, %v9962
  %v9973 = vpack.c.b16 %v9965, %v9964
  %v9974 = vpack.c.b16 %v9967, %v9966
  %v9975 = vpack.c.b16 %v9969, %v9968
  %vm9982 = vcmask 785408
  %v9984 = vsel %vm9982, %v9926, 0
  %9986 = vmatprep.subr.bf16.mxu0 0
  %9987 = vmatpush1.bf16.msra.mxu0 %v9970
  %9988 = vmatprep.subr.bf16.mxu0 0
  %9989 = vmatpush1.bf16.msra.mxu0 %v9971
  %9990 = vmatprep.subr.bf16.mxu0 0
  %9991 = vmatpush1.bf16.msra.mxu0 %v9972
  %9992 = vmatprep.subr.bf16.mxu0 0
  %9993 = vmatpush1.bf16.msra.mxu0 %v9973
  %9994 = vmatprep.subr.bf16.mxu0 0
  %9995 = vmatpush1.bf16.msra.mxu0 %v9974
  %9996 = vmatprep.subr.bf16.mxu0 0
  %9997 = vmatpush1.bf16.msra.mxu0 %v9975
  %9998 = vmatprep.subr.bf16.mxu0 0
  %9999 = vmatpush1.bf16.msra.mxu0 0
  %10000 = vmatprep.subr.bf16.mxu0 0
  %10001 = vmatpush1.bf16.msra.mxu0 0
  %10002 = vmatprep.subr.bf16.mxu0 0
  %10003 = vmatpush1.bf16.msra.mxu0 0
  %10004 = vmatprep.subr.bf16.mxu0 0
  %10005 = vmatpush1.bf16.msra.mxu0 0
  %10006 = vmatprep.subr.bf16.mxu0 0
  %10007 = vmatpush1.bf16.msra.mxu0 0
  %10008 = vmatprep.subr.bf16.mxu0 0
  %10009 = vmatpush1.bf16.msra.mxu0 0
  %10010 = vmatprep.subr.bf16.mxu0 0
  %10011 = vmatpush1.bf16.msra.mxu0 0
  %10012 = vmatprep.subr.bf16.mxu0 0
  %10013 = vmatpush1.bf16.msra.mxu0 0
  %10014 = vmatprep.subr.bf16.mxu0 0
  %10015 = vmatpush1.bf16.msra.mxu0 0
  %10016 = vmatprep.subr.bf16.mxu0 0
  %10017 = vmatpush1.bf16.msra.mxu0 0
  %10018 = vmatprep.mubr.bf16.mxu0 0
  %10019 = vmatmul.mubr.bf16.gmra.mrb[0].mxu0 %v9984
  %v10020 = vpop.f32.mrb[0].mxu0
  %v10021 = vadd.f32 %v9944, %v10020
  %v10022 = vpop.f32.mrb[0].mxu0
  %v10023 = vpop.f32.mrb[0].mxu0
  %v10024 = vpop.f32.mrb[0].mxu0
  %10025 = vdwg.mxu0
  %v10026 = vpack.c.bf16 %v9924, %v9924
  %v10027 = vld [vmem:[%s73] sm:$0xf]
  %v10028 = vld [vmem:[%s73 + $0x4] sm:$0xf]
  %v10029 = vld [vmem:[%s73 + $0x8] sm:$0xf]
  %v10030 = vld [vmem:[%s73 + $0xc] sm:$0xf]
  %v10031 = vld [vmem:[%s75] sm:$0x1]
  %v10033 = vlaneseq
  %v10034 = vshrl.u32 %v10033, 7
  %v10035 = vsub.s32 0, %v10034
  %v10036 = vrot.slane %v10031, %v10035
  %v10042 = vunpack.c.l.b16 %v10027
  %v10043 = vunpack.c.l.b16 %v10028
  %v10044 = vunpack.c.l.b16 %v10029
  %v10045 = vunpack.c.l.b16 %v10030
  %v10046 = vpack.c.b16 %v10043, %v10042
  %v10047 = vpack.c.b16 %v10045, %v10044
  %v10051 = vsel %vm1017, %v10026, 0
  %10053 = vmatprep.subr.bf16.mxu0 0
  %10054 = vmatpush1.bf16.msra.mxu0 %v10046
  %10055 = vmatprep.subr.bf16.mxu0 0
  %10056 = vmatpush1.bf16.msra.mxu0 %v10047
  %10057 = vmatprep.subr.bf16.mxu0 0
  %10058 = vmatpush1.bf16.msra.mxu0 0
  %10059 = vmatprep.subr.bf16.mxu0 0
  %10060 = vmatpush1.bf16.msra.mxu0 0
  %10061 = vmatprep.subr.bf16.mxu0 0
  %10062 = vmatpush1.bf16.msra.mxu0 0
  %10063 = vmatprep.subr.bf16.mxu0 0
  %10064 = vmatpush1.bf16.msra.mxu0 0
  %10065 = vmatprep.subr.bf16.mxu0 0
  %10066 = vmatpush1.bf16.msra.mxu0 0
  %10067 = vmatprep.subr.bf16.mxu0 0
  %10068 = vmatpush1.bf16.msra.mxu0 0
  %10069 = vmatprep.subr.bf16.mxu0 0
  %10070 = vmatpush1.bf16.msra.mxu0 0
  %10071 = vmatprep.subr.bf16.mxu0 0
  %10072 = vmatpush1.bf16.msra.mxu0 0
  %10073 = vmatprep.subr.bf16.mxu0 0
  %10074 = vmatpush1.bf16.msra.mxu0 0
  %10075 = vmatprep.subr.bf16.mxu0 0
  %10076 = vmatpush1.bf16.msra.mxu0 0
  %10077 = vmatprep.subr.bf16.mxu0 0
  %10078 = vmatpush1.bf16.msra.mxu0 0
  %10079 = vmatprep.subr.bf16.mxu0 0
  %10080 = vmatpush1.bf16.msra.mxu0 0
  %10081 = vmatprep.subr.bf16.mxu0 0
  %10082 = vmatpush1.bf16.msra.mxu0 0
  %10083 = vmatprep.subr.bf16.mxu0 0
  %10084 = vmatpush1.bf16.msra.mxu0 0
  %10085 = vmatprep.mubr.bf16.mxu0 0
  %10086 = vmatmul.mubr.bf16.gmra.mrb[0].mxu0 %v10051
  %v10087 = vpop.f32.mrb[0].mxu0
  %v10088 = vadd.f32 %v10036, %v10087
  %v10089 = vpop.f32.mrb[0].mxu0
  %v10090 = vpop.f32.mrb[0].mxu0
  %v10091 = vpop.f32.mrb[0].mxu0
  %10092 = vdwg.mxu0
  %v10093 = vadd.f32 %v10021, %v10088
  %v10094 = vxor.u32 %v10093, 2147483648
  %v10095 = vmul.f32 %v10094, 1.442695
  %v10096 = vpow.pop %v10095
  %v10097 = vadd.f32 %v10096, 1.0
  %v10098 = vrcp.pop %v10097
  %v10099 = vmul.f32 1.0, %v10098
  %10101 = vrot.lane.b32.xlu0 %v10088, 64
  %v10102 = vpop.permute.xlu0 %10101
  %v10104 = vmul.f32 %v10099, %v10102
  %10106 = vrot.lane.b32.xlu0 %v10104, 64
  %v10107 = vpop.permute.xlu0 %10106
  %v10109 = vadd.f32 %v10021, %v10107
  %v10110 = vtanh.pop %v10109
  %v10111 = vsub.f32 1.0, %v10099
  %10113 = vrot.lane.b32.xlu0 %v10110, 96
  %v10114 = vpop.permute.xlu0 %10113
  %v10116 = vmul.f32 %v10111, %v10114
  %10118 = vrot.lane.b32.xlu0 %v9924, 32
  %v10119 = vpop.permute.xlu0 %10118
  %v10121 = vmul.f32 %v10099, %v10119
  %v10122 = vadd.f32 %v10116, %v10121
  %10124 = vrot.lane.b32.xlu0 %v10122, 96
  %v10125 = vpop.permute.xlu0 %10124
  %vm10127 = vcmask 254976
  %10128 = vst.msk [vmem:[%s77] sm:$0x3] %vm10127, %v10125
  // Predicated region
  $region154: #{policy_forward.1} parent=0 // pred_check
    _
  $region155: #{policy_forward.1} parent=0 // pred_check_branch
    %10130 = sbr.rel (0) target = $region157
  $region156: #{policy_forward.1} parent=0 // pred_region
    _
  $region157: #{policy_forward.1} parent=0 // pred_fallthru
    _
  // Predicated region
  $region158: #{policy_forward.1} parent=0 // pred_check
    _
  $region159: #{policy_forward.1} parent=0 // pred_check_branch
    %10132 = sbr.rel (0) target = $region161
  $region160: #{policy_forward.1} parent=0 // pred_region
    _
  $region161: #{policy_forward.1} parent=0 // pred_fallthru
    _

</llo_original>
